<compile_context>
chip_gen: v6e
topology: v6e:2x2x1
jax: 0.10.0
libtpu: 0.0.40
codegen_flags: <defaults>
</compile_context>

<pallas_src>
import functools

import jax
import jax.numpy as jnp
import numpy as np
from jax.experimental import pallas as pl
from jax.experimental.pallas import tpu as pltpu

_HP = jax.lax.Precision.HIGHEST   # reference only
_LEFT = 8                         # left halo width of the mid scratch
                                  # (interior starts 8-sublane aligned)


# ----------------------------- Pallas kernel -------------------------------

def basic_block_kernel(x_ref, w1_ref, t1_ref, w2_ref, t2_ref, o_ref,
                       col1_ref, mid_ref, col2_ref, *,
                       stride, ho, wo, wo_p, cin, cmid, fused_shortcut):
    """Fused BasicBlock for one batch element.

    x_ref : (s*s, Hpp, Wpp, Cin) bf16   phase-decomposed, spatially padded input
    w1_ref: (9*Cin, N1) bf16            conv1 (+ fused 1x1 shortcut) weights,
                                        BN scales folded, N1 = Cmid or 2*Cmid
    t1_ref: (1, N1)   f32               BN1 shift (+bias) [| shortcut BN shift]
    w2_ref: (9*Cmid, Cmid) bf16         conv2 weights, BN2 scale folded
    t2_ref: (1, Cmid) f32
    o_ref : (Ho, Wo_p, Cmid) bf16
    col1_ref: VMEM (M, 9*Cin)  bf16     conv1 im2col slab, M = Ho*Wo_p
    mid_ref : VMEM (Ho+2, 8+Wo_p+1, Cmid) bf16  conv1 output + halo
    col2_ref: VMEM (M, 9*Cmid) bf16     conv2 im2col slab
    """
    s = stride
    m = ho * wo_p
    w_mid = mid_ref.shape[1]          # _LEFT + wo_p + 1

    def matmul(a, b):
        return jax.lax.dot_general(
            a, b, dimension_numbers=(((1,), (0,)), ((), ())),
            preferred_element_type=jnp.float32)

    # ---- im2col for conv1: one tap block per K slice of col1 ----
    xi = None
    for dy in range(3):
        for dx in range(3):
            phase = (dy % s) * s + (dx % s)
            r0, c0 = dy // s, dx // s
            xt = x_ref[phase, r0:r0 + ho, c0:c0 + wo_p, :].reshape(m, cin)
            if dy == 1 and dx == 1:
                xi = xt                       # centre tap == shortcut input
            k = dy * 3 + dx
            col1_ref[:, k * cin:(k + 1) * cin] = xt

    # ---- conv1 (+ fused 1x1 shortcut along N): ONE K = 9*Cin matmul ----
    y1 = matmul(col1_ref[...], w1_ref[...]) + t1_ref[...]
    if fused_shortcut:
        h = jnp.maximum(y1[:, :cmid], 0.0)            # BN1(+bias) folded, ReLU
        shortcut = y1[:, cmid:]                       # 1x1 conv + BN (folded)
    else:
        h = jnp.maximum(y1, 0.0)
        shortcut = xi.astype(jnp.float32)             # identity (no matmul)
        if cin < cmid:
            shortcut = jnp.concatenate(
                [shortcut, jnp.zeros((m, cmid - cin), jnp.float32)], axis=-1)

    # ---- conv1 output -> padded mid scratch (interior at aligned col 8) ----
    mid_ref[1:ho + 1, _LEFT:_LEFT + wo_p, :] = (
        h.reshape(ho, wo_p, cmid).astype(mid_ref.dtype))
    # Re-zero only the halo + W-padding columns (not the whole scratch).
    zrow = jnp.zeros((1, w_mid, cmid), mid_ref.dtype)
    mid_ref[0:1, :, :] = zrow                                   # top halo
    mid_ref[ho + 1:ho + 2, :, :] = zrow                         # bottom halo
    mid_ref[1:ho + 1, _LEFT - 1:_LEFT, :] = (                   # left halo col
        jnp.zeros((ho, 1, cmid), mid_ref.dtype))
    mid_ref[1:ho + 1, _LEFT + wo:w_mid, :] = (                  # right pad+halo
        jnp.zeros((ho, w_mid - _LEFT - wo, cmid), mid_ref.dtype))

    # ---- im2col for conv2 (lane-aligned Cmid tap blocks) ----
    for dy in range(3):
        for dx in range(3):
            mt = mid_ref[dy:dy + ho, _LEFT - 1 + dx:_LEFT - 1 + dx + wo_p, :]
            k = dy * 3 + dx
            col2_ref[:, k * cmid:(k + 1) * cmid] = mt.reshape(m, cmid)

    # ---- conv2: ONE K = 9*Cmid matmul + BN2 + residual add + ReLU ----
    y2 = matmul(col2_ref[...], w2_ref[...])
    out = jnp.maximum(y2 + t2_ref[...] + shortcut, 0.0)
    o_ref[...] = out.reshape(ho, wo_p, cmid).astype(o_ref.dtype)


# ------------------------------- JAX glue ----------------------------------

def _round_up(x, m):
    return (x + m - 1) // m * m


def _vmem_limit_bytes():
    """~3/4 of the per-core VMEM (96 MiB on 128 MiB parts, 48 MiB on v7x)."""
    try:
        cap = int(pltpu.get_tpu_info().vmem_capacity_bytes)
    except Exception:
        return 48 * 1024 * 1024
    return int(max(32 * 1024 * 1024, min(96 * 1024 * 1024, cap * 3 // 4)))


def _phase_decompose(xp, stride, ho, wo_p):
    """Split the padded NHWC input into stride*stride phase planes so every
    3x3 tap becomes a contiguous static window inside the kernel."""
    n, _, _, c = xp.shape
    s = stride
    hpp = (3 - 1) // s + ho
    wpp = (3 - 1) // s + wo_p
    planes = []
    for p in range(s):
        for q in range(s):
            plane = xp[:, p::s, q::s, :][:, :hpp, :wpp, :]
            plane = jnp.pad(plane, ((0, 0),
                                    (0, hpp - plane.shape[1]),
                                    (0, wpp - plane.shape[2]),
                                    (0, 0)))
            planes.append(plane)
    ph = jnp.stack(planes, axis=1)                      # (N, s*s, Hpp, Wpp, C)
    return ph.reshape(n * s * s, hpp, wpp, c), hpp, wpp


def basic_block_forward(x_nchw, kp, stride=1):
    """BasicBlock forward. x_nchw: (N, Cin, H, W) f32 -> (N, Cout, Ho, Wo) f32."""
    n, cin, h, w = x_nchw.shape
    planes = kp["planes"]
    cmid = kp["w2"].shape[-1]          # lane-padded channel count
    fused = kp["has_downsample"]
    s = stride
    ho = (h + 2 - 3) // s + 1
    wo = (w + 2 - 3) // s + 1
    wo_p = _round_up(wo, 8)            # 8-sublane aligned output width
    m = ho * wo_p

    x = jnp.transpose(x_nchw, (0, 2, 3, 1)).astype(jnp.bfloat16)   # NHWC bf16
    if s == 1:
        xph = jnp.pad(x, ((0, 0), (1, 1), (1, 1 + wo_p - wo), (0, 0)))
        hpp, wpp = ho + 2, wo_p + 2
    else:
        # TODO(synk): do strided taps in-kernel instead of this extra HBM pass.
        xp = jnp.pad(x, ((0, 0), (1, 1), (1, 1), (0, 0)))
        xph, hpp, wpp = _phase_decompose(xp, s, ho, wo_p)

    kernel = functools.partial(
        basic_block_kernel, stride=s, ho=ho, wo=wo, wo_p=wo_p,
        cin=cin, cmid=cmid, fused_shortcut=fused)

    out = pl.pallas_call(
        kernel,
        out_shape=jax.ShapeDtypeStruct((n, ho, wo_p, cmid), jnp.bfloat16),
        grid_spec=pltpu.PrefetchScalarGridSpec(
            num_scalar_prefetch=0,
            grid=(n,),
            in_specs=[
                pl.BlockSpec((s * s, hpp, wpp, cin), lambda b: (b, 0, 0, 0)),
                pl.BlockSpec(kp["w1"].shape, lambda b: (0, 0)),
                pl.BlockSpec(kp["t1"].shape, lambda b: (0, 0)),
                pl.BlockSpec(kp["w2"].shape, lambda b: (0, 0)),
                pl.BlockSpec(kp["t2"].shape, lambda b: (0, 0)),
            ],
            out_specs=pl.BlockSpec((None, ho, wo_p, cmid),
                                   lambda b: (b, 0, 0, 0)),
            scratch_shapes=[
                pltpu.VMEM((m, 9 * cin), jnp.bfloat16),                  # col1
                pltpu.VMEM((ho + 2, _LEFT + wo_p + 1, cmid), jnp.bfloat16),
                pltpu.VMEM((m, 9 * cmid), jnp.bfloat16),                 # col2
            ]),
        compiler_params=pltpu.CompilerParams(
            dimension_semantics=("parallel",),
            vmem_limit_bytes=_vmem_limit_bytes()),
    )(xph, kp["w1"], kp["t1"], kp["w2"], kp["t2"])

    out = out[:, :, :wo, :planes].astype(jnp.float32)   # drop lane/W padding
    return jnp.transpose(out, (0, 3, 1, 2))             # back to NCHW


# ------------------------- parameter construction --------------------------

def _fold_bn(gamma, beta, mean, var, eps=1e-5):
    s = gamma / jnp.sqrt(var + eps)
    return s, beta - mean * s


def make_raw_params(inplanes, planes, stride, key):
    ks = jax.random.split(key, 17)
    raw = {
        "w1_oihw": 0.2 * jax.random.normal(ks[0], (planes, inplanes, 3, 3), jnp.float32),
        "b1": 0.1 * jax.random.normal(ks[1], (planes,), jnp.float32),
        "g1": 1.0 + 0.1 * jax.random.normal(ks[2], (planes,), jnp.float32),
        "beta1": 0.1 * jax.random.normal(ks[3], (planes,), jnp.float32),
        "m1": 0.05 * jax.random.normal(ks[4], (planes,), jnp.float32),
        "v1": 0.5 + jax.random.uniform(ks[5], (planes,), jnp.float32),
        "w2_oihw": 0.2 * jax.random.normal(ks[6], (planes, planes, 3, 3), jnp.float32),
        "b2": 0.1 * jax.random.normal(ks[7], (planes,), jnp.float32),
        "g2": 1.0 + 0.1 * jax.random.normal(ks[8], (planes,), jnp.float32),
        "beta2": 0.1 * jax.random.normal(ks[9], (planes,), jnp.float32),
        "m2": 0.05 * jax.random.normal(ks[10], (planes,), jnp.float32),
        "v2": 0.5 + jax.random.uniform(ks[11], (planes,), jnp.float32),
    }
    if stride != 1 or inplanes != planes:
        raw["wd_oihw"] = 0.2 * jax.random.normal(ks[12], (planes, inplanes, 1, 1), jnp.float32)
        raw["gd"] = 1.0 + 0.1 * jax.random.normal(ks[13], (planes,), jnp.float32)
        raw["betad"] = 0.1 * jax.random.normal(ks[14], (planes,), jnp.float32)
        raw["md"] = 0.05 * jax.random.normal(ks[15], (planes,), jnp.float32)
        raw["vd"] = 0.5 + jax.random.uniform(ks[16], (planes,), jnp.float32)
    return raw


def prep_kernel_params(raw, inplanes, planes, stride):
    """Fold conv bias + BN into weights/shifts, lay weights out as flat-K
    (9*Cin, N) slabs for single-matmul convs, fuse the downsample 1x1 conv
    into conv1's N dimension, pad channels to a lane-dense multiple of 128."""
    cmid = _round_up(planes, 128)
    has_ds = (stride != 1) or (inplanes != planes)

    def pad_last(a):
        padw = [(0, 0)] * a.ndim
        padw[-1] = (0, cmid - a.shape[-1])
        return jnp.pad(a, padw)

    s1, t1 = _fold_bn(raw["g1"], raw["beta1"], raw["m1"], raw["v1"])
    s2, t2 = _fold_bn(raw["g2"], raw["beta2"], raw["m2"], raw["v2"])

    # conv1: OIHW -> (ky,kx,ci,co) -> (9*ci, co); BN1 scale folded; co padded.
    w1 = jnp.transpose(raw["w1_oihw"], (2, 3, 1, 0)) * s1[None, None, None, :]
    w1 = pad_last(w1.reshape(9 * inplanes, planes))
    t1v = pad_last((t1 + raw["b1"] * s1).reshape(1, planes))

    if has_ds:
        sd, td = _fold_bn(raw["gd"], raw["betad"], raw["md"], raw["vd"])
        wd = raw["wd_oihw"][:, :, 0, 0].T * sd[None, :]            # (ci, co)
        wsc = jnp.zeros((9 * inplanes, planes), jnp.float32)
        wsc = wsc.at[4 * inplanes:5 * inplanes, :].set(wd)         # centre tap
        w1 = jnp.concatenate([w1, pad_last(wsc)], axis=1)          # (9*ci, 2*cmid)
        t1v = jnp.concatenate([t1v, pad_last(td.reshape(1, planes))], axis=1)

    # conv2: (ky,kx,ci,co); BN2 scale folded; ci AND co padded -> (9*cmid, cmid).
    w2 = jnp.transpose(raw["w2_oihw"], (2, 3, 1, 0)) * s2[None, None, None, :]
    w2 = pad_last(w2)                                               # pad co
    w2 = jnp.pad(w2, ((0, 0), (0, 0), (0, cmid - planes), (0, 0)))  # pad ci
    w2 = w2.reshape(9 * cmid, cmid)
    t2v = pad_last((t2 + raw["b2"] * s2).reshape(1, planes))

    return {"w1": w1.astype(jnp.bfloat16), "t1": t1v.astype(jnp.float32),
            "w2": w2.astype(jnp.bfloat16), "t2": t2v.astype(jnp.float32),
            "planes": planes, "has_downsample": has_ds}


# ------------------------- pure-JAX reference (NCHW) ------------------------

def reference_forward(x_nchw, raw, stride):
    def conv(x, w, s, pad):
        return jax.lax.conv_general_dilated(
            x, w, (s, s), ((pad, pad), (pad, pad)),
            dimension_numbers=("NCHW", "OIHW", "NCHW"), precision=_HP)

    def bn(y, g, b, m, v, eps=1e-5):
        sh = lambda a: a.reshape(1, -1, 1, 1)
        return (y - sh(m)) / jnp.sqrt(sh(v) + eps) * sh(g) + sh(b)

    out = conv(x_nchw, raw["w1_oihw"], stride, 1) + raw["b1"].reshape(1, -1, 1, 1)
    out = jax.nn.relu(bn(out, raw["g1"], raw["beta1"], raw["m1"], raw["v1"]))
    out = conv(out, raw["w2_oihw"], 1, 1) + raw["b2"].reshape(1, -1, 1, 1)
    out = bn(out, raw["g2"], raw["beta2"], raw["m2"], raw["v2"])
    if "wd_oihw" in raw:
        ident = conv(x_nchw, raw["wd_oihw"], stride, 0)
        ident = bn(ident, raw["gd"], raw["betad"], raw["md"], raw["vd"])
    else:
        ident = x_nchw
    return jax.nn.relu(out + ident)


# ----------------------------------- main -----------------------------------

if __name__ == "__main__":
    configs = [
        # (inplanes, planes, stride, N, H, W)
        (4, 8, 1, 2, 16, 16),   # downsample (channel change), W already aligned
        (8, 8, 1, 2, 12, 12),   # identity shortcut, Wo=12 -> padded to 16
        (4, 4, 2, 2, 32, 32),   # stride-2 downsample (phase path), aligned
        (4, 4, 2, 2, 28, 28),   # stride-2 downsample, Wo=14 -> padded to 16
    ]
    key = jax.random.PRNGKey(0)
    for inplanes, planes, stride, n, h, w in configs:
        key, kx, kw = jax.random.split(key, 3)
        x = jax.random.normal(kx, (n, inplanes, h, w), jnp.float32)

        raw = make_raw_params(inplanes, planes, stride, kw)
        kparams = prep_kernel_params(raw, inplanes, planes, stride)

        out = jax.block_until_ready(basic_block_forward(x, kparams, stride=stride))
        ref = jax.block_until_ready(reference_forward(x, raw, stride))
        # bf16 MXU matmuls + bf16 intermediate/output => looser tolerance than f32.
        np.testing.assert_allclose(np.asarray(out), np.asarray(ref),
                                   rtol=5e-2, atol=5e-2)

    print("KERNEL_OK")
</pallas_src>

<mosaic_0001>
module attributes {stable_mosaic.version = 11 : i64} {
  func.func @basic_block_kernel(%arg0: i32, %arg1: memref<1x18x18x4xbf16, #tpu.memory_space<vmem>>, %arg2: memref<36x256xbf16, #tpu.memory_space<vmem>>, %arg3: memref<1x256xf32, #tpu.memory_space<vmem>>, %arg4: memref<1152x128xbf16, #tpu.memory_space<vmem>>, %arg5: memref<1x128xf32, #tpu.memory_space<vmem>>, %arg6: memref<1x16x16x128xbf16, #tpu.memory_space<vmem>>, %arg7: memref<256x36xbf16, #tpu.memory_space<vmem>>, %arg8: memref<18x25x128xbf16, #tpu.memory_space<vmem>>, %arg9: memref<256x1152xbf16, #tpu.memory_space<vmem>>) attributes {dimension_semantics = [#tpu.dimension_semantics<parallel>], iteration_bounds = array<i64: 2>, scalar_prefetch = 0 : i64, scratch_operands = 3 : i64, tpu.core_type = #tpu.core_type<tc>, window_params = [{transform_indices = @transform_0, window_bounds = array<i64: 1, 18, 18, 4>}, {pipeline_mode = #tpu.pipeline_mode<synchronous>, transform_indices = @transform_1, window_bounds = array<i64: 36, 256>}, {pipeline_mode = #tpu.pipeline_mode<synchronous>, transform_indices = @transform_2, window_bounds = array<i64: 1, 256>}, {pipeline_mode = #tpu.pipeline_mode<synchronous>, transform_indices = @transform_3, window_bounds = array<i64: 1152, 128>}, {pipeline_mode = #tpu.pipeline_mode<synchronous>, transform_indices = @transform_4, window_bounds = array<i64: 1, 128>}, {transform_indices = @transform_5, window_bounds = array<i64: 1, 16, 16, 128>}]} {
    %c0 = arith.constant 0 : index
    %c0_0 = arith.constant 0 : index
    %c0_1 = arith.constant 0 : index
    %c0_2 = arith.constant 0 : index
    %0 = vector.load %arg1[%c0, %c0_0, %c0_1, %c0_2] : memref<1x18x18x4xbf16, #tpu.memory_space<vmem>>, vector<1x16x16x4xbf16>
    %1 = vector.shape_cast %0 : vector<1x16x16x4xbf16> to vector<16x16x4xbf16>
    %2 = vector.shape_cast %1 : vector<16x16x4xbf16> to vector<256x4xbf16>
    %c0_3 = arith.constant 0 : index
    %c0_4 = arith.constant 0 : index
    %3 = vector.load %arg7[%c0_3, %c0_4] : memref<256x36xbf16, #tpu.memory_space<vmem>>, vector<256x4xbf16>
    tpu.vector_store %arg7[%c0_3, %c0_4], %2 {strides = array<i32>} : memref<256x36xbf16, #tpu.memory_space<vmem>>, vector<256x4xbf16>,
    %c0_5 = arith.constant 0 : index
    %c0_6 = arith.constant 0 : index
    %c1 = arith.constant 1 : index
    %c0_7 = arith.constant 0 : index
    %4 = vector.load %arg1[%c0_5, %c0_6, %c1, %c0_7] : memref<1x18x18x4xbf16, #tpu.memory_space<vmem>>, vector<1x16x16x4xbf16>
    %5 = vector.shape_cast %4 : vector<1x16x16x4xbf16> to vector<16x16x4xbf16>
    %6 = vector.shape_cast %5 : vector<16x16x4xbf16> to vector<256x4xbf16>
    %c0_8 = arith.constant 0 : index
    %c4 = arith.constant 4 : index
    %7 = vector.load %arg7[%c0_8, %c4] : memref<256x36xbf16, #tpu.memory_space<vmem>>, vector<256x4xbf16>
    tpu.vector_store %arg7[%c0_8, %c4], %6 {strides = array<i32>} : memref<256x36xbf16, #tpu.memory_space<vmem>>, vector<256x4xbf16>,
    %c0_9 = arith.constant 0 : index
    %c0_10 = arith.constant 0 : index
    %c2 = arith.constant 2 : index
    %c0_11 = arith.constant 0 : index
    %8 = vector.load %arg1[%c0_9, %c0_10, %c2, %c0_11] : memref<1x18x18x4xbf16, #tpu.memory_space<vmem>>, vector<1x16x16x4xbf16>
    %9 = vector.shape_cast %8 : vector<1x16x16x4xbf16> to vector<16x16x4xbf16>
    %10 = vector.shape_cast %9 : vector<16x16x4xbf16> to vector<256x4xbf16>
    %c0_12 = arith.constant 0 : index
    %c8 = arith.constant 8 : index
    %11 = vector.load %arg7[%c0_12, %c8] : memref<256x36xbf16, #tpu.memory_space<vmem>>, vector<256x4xbf16>
    tpu.vector_store %arg7[%c0_12, %c8], %10 {strides = array<i32>} : memref<256x36xbf16, #tpu.memory_space<vmem>>, vector<256x4xbf16>,
    %c0_13 = arith.constant 0 : index
    %c1_14 = arith.constant 1 : index
    %c0_15 = arith.constant 0 : index
    %c0_16 = arith.constant 0 : index
    %12 = vector.load %arg1[%c0_13, %c1_14, %c0_15, %c0_16] : memref<1x18x18x4xbf16, #tpu.memory_space<vmem>>, vector<1x16x16x4xbf16>
    %13 = vector.shape_cast %12 : vector<1x16x16x4xbf16> to vector<16x16x4xbf16>
    %14 = vector.shape_cast %13 : vector<16x16x4xbf16> to vector<256x4xbf16>
    %c0_17 = arith.constant 0 : index
    %c12 = arith.constant 12 : index
    %15 = vector.load %arg7[%c0_17, %c12] : memref<256x36xbf16, #tpu.memory_space<vmem>>, vector<256x4xbf16>
    tpu.vector_store %arg7[%c0_17, %c12], %14 {strides = array<i32>} : memref<256x36xbf16, #tpu.memory_space<vmem>>, vector<256x4xbf16>,
    %c0_18 = arith.constant 0 : index
    %c1_19 = arith.constant 1 : index
    %c1_20 = arith.constant 1 : index
    %c0_21 = arith.constant 0 : index
    %16 = vector.load %arg1[%c0_18, %c1_19, %c1_20, %c0_21] : memref<1x18x18x4xbf16, #tpu.memory_space<vmem>>, vector<1x16x16x4xbf16>
    %17 = vector.shape_cast %16 : vector<1x16x16x4xbf16> to vector<16x16x4xbf16>
    %18 = vector.shape_cast %17 : vector<16x16x4xbf16> to vector<256x4xbf16>
    %c0_22 = arith.constant 0 : index
    %c16 = arith.constant 16 : index
    %19 = vector.load %arg7[%c0_22, %c16] : memref<256x36xbf16, #tpu.memory_space<vmem>>, vector<256x4xbf16>
    tpu.vector_store %arg7[%c0_22, %c16], %18 {strides = array<i32>} : memref<256x36xbf16, #tpu.memory_space<vmem>>, vector<256x4xbf16>,
    %c0_23 = arith.constant 0 : index
    %c1_24 = arith.constant 1 : index
    %c2_25 = arith.constant 2 : index
    %c0_26 = arith.constant 0 : index
    %20 = vector.load %arg1[%c0_23, %c1_24, %c2_25, %c0_26] : memref<1x18x18x4xbf16, #tpu.memory_space<vmem>>, vector<1x16x16x4xbf16>
    %21 = vector.shape_cast %20 : vector<1x16x16x4xbf16> to vector<16x16x4xbf16>
    %22 = vector.shape_cast %21 : vector<16x16x4xbf16> to vector<256x4xbf16>
    %c0_27 = arith.constant 0 : index
    %c20 = arith.constant 20 : index
    %23 = vector.load %arg7[%c0_27, %c20] : memref<256x36xbf16, #tpu.memory_space<vmem>>, vector<256x4xbf16>
    tpu.vector_store %arg7[%c0_27, %c20], %22 {strides = array<i32>} : memref<256x36xbf16, #tpu.memory_space<vmem>>, vector<256x4xbf16>,
    %c0_28 = arith.constant 0 : index
    %c2_29 = arith.constant 2 : index
    %c0_30 = arith.constant 0 : index
    %c0_31 = arith.constant 0 : index
    %24 = vector.load %arg1[%c0_28, %c2_29, %c0_30, %c0_31] : memref<1x18x18x4xbf16, #tpu.memory_space<vmem>>, vector<1x16x16x4xbf16>
    %25 = vector.shape_cast %24 : vector<1x16x16x4xbf16> to vector<16x16x4xbf16>
    %26 = vector.shape_cast %25 : vector<16x16x4xbf16> to vector<256x4xbf16>
    %c0_32 = arith.constant 0 : index
    %c24 = arith.constant 24 : index
    %27 = vector.load %arg7[%c0_32, %c24] : memref<256x36xbf16, #tpu.memory_space<vmem>>, vector<256x4xbf16>
    tpu.vector_store %arg7[%c0_32, %c24], %26 {strides = array<i32>} : memref<256x36xbf16, #tpu.memory_space<vmem>>, vector<256x4xbf16>,
    %c0_33 = arith.constant 0 : index
    %c2_34 = arith.constant 2 : index
    %c1_35 = arith.constant 1 : index
    %c0_36 = arith.constant 0 : index
    %28 = vector.load %arg1[%c0_33, %c2_34, %c1_35, %c0_36] : memref<1x18x18x4xbf16, #tpu.memory_space<vmem>>, vector<1x16x16x4xbf16>
    %29 = vector.shape_cast %28 : vector<1x16x16x4xbf16> to vector<16x16x4xbf16>
    %30 = vector.shape_cast %29 : vector<16x16x4xbf16> to vector<256x4xbf16>
    %c0_37 = arith.constant 0 : index
    %c28 = arith.constant 28 : index
    %31 = vector.load %arg7[%c0_37, %c28] : memref<256x36xbf16, #tpu.memory_space<vmem>>, vector<256x4xbf16>
    tpu.vector_store %arg7[%c0_37, %c28], %30 {strides = array<i32>} : memref<256x36xbf16, #tpu.memory_space<vmem>>, vector<256x4xbf16>,
    %c0_38 = arith.constant 0 : index
    %c2_39 = arith.constant 2 : index
    %c2_40 = arith.constant 2 : index
    %c0_41 = arith.constant 0 : index
    %32 = vector.load %arg1[%c0_38, %c2_39, %c2_40, %c0_41] : memref<1x18x18x4xbf16, #tpu.memory_space<vmem>>, vector<1x16x16x4xbf16>
    %33 = vector.shape_cast %32 : vector<1x16x16x4xbf16> to vector<16x16x4xbf16>
    %34 = vector.shape_cast %33 : vector<16x16x4xbf16> to vector<256x4xbf16>
    %c0_42 = arith.constant 0 : index
    %c32 = arith.constant 32 : index
    %35 = vector.load %arg7[%c0_42, %c32] : memref<256x36xbf16, #tpu.memory_space<vmem>>, vector<256x4xbf16>
    tpu.vector_store %arg7[%c0_42, %c32], %34 {strides = array<i32>} : memref<256x36xbf16, #tpu.memory_space<vmem>>, vector<256x4xbf16>,
    %c0_43 = arith.constant 0 : index
    %c0_44 = arith.constant 0 : index
    %36 = vector.load %arg7[%c0_43, %c0_44] : memref<256x36xbf16, #tpu.memory_space<vmem>>, vector<256x36xbf16>
    %c0_45 = arith.constant 0 : index
    %c0_46 = arith.constant 0 : index
    %37 = vector.load %arg2[%c0_45, %c0_46] : memref<36x256xbf16, #tpu.memory_space<vmem>>, vector<36x256xbf16>
    %cst = arith.constant dense<0.000000e+00> : vector<256x256xf32>
    %38 = tpu.matmul %36, %37, %cst {dimension_numbers = #tpu.dot_dimension_numbers<[1], [0], [0], [1], [0, 0, 1, 1], [], []>} : vector<256x36xbf16>, vector<36x256xbf16>, vector<256x256xf32> -> vector<256x256xf32>
    %c0_47 = arith.constant 0 : index
    %c0_48 = arith.constant 0 : index
    %39 = vector.load %arg3[%c0_47, %c0_48] : memref<1x256xf32, #tpu.memory_space<vmem>>, vector<1x256xf32>
    %40 = vector.broadcast %39 : vector<1x256xf32> to vector<256x256xf32>
    %41 = arith.addf %38, %40 : vector<256x256xf32>
    %42 = vector.extract_strided_slice %41 {offsets = [0, 0], sizes = [256, 128], strides = [1, 1]} : vector<256x256xf32> to vector<256x128xf32>
    %cst_49 = arith.constant 0.000000e+00 : f32
    %43 = vector.broadcast %cst_49 : f32 to vector<256x128xf32>
    %44 = arith.maximumf %42, %43 : vector<256x128xf32>
    %45 = vector.extract_strided_slice %41 {offsets = [0, 128], sizes = [256, 128], strides = [1, 1]} : vector<256x256xf32> to vector<256x128xf32>
    %46 = vector.shape_cast %44 : vector<256x128xf32> to vector<16x16x128xf32>
    %47 = arith.truncf %46 : vector<16x16x128xf32> to vector<16x16x128xbf16>
    %c1_50 = arith.constant 1 : index
    %c8_51 = arith.constant 8 : index
    %c0_52 = arith.constant 0 : index
    %48 = vector.load %arg8[%c1_50, %c8_51, %c0_52] : memref<18x25x128xbf16, #tpu.memory_space<vmem>>, vector<16x16x128xbf16>
    tpu.vector_store %arg8[%c1_50, %c8_51, %c0_52], %47 {strides = array<i32>} : memref<18x25x128xbf16, #tpu.memory_space<vmem>>, vector<16x16x128xbf16>,
    %cst_53 = arith.constant 0.000000e+00 : bf16
    %49 = vector.broadcast %cst_53 : bf16 to vector<1x25x128xbf16>
    %c0_54 = arith.constant 0 : index
    %c0_55 = arith.constant 0 : index
    %c0_56 = arith.constant 0 : index
    %50 = vector.load %arg8[%c0_54, %c0_55, %c0_56] : memref<18x25x128xbf16, #tpu.memory_space<vmem>>, vector<1x25x128xbf16>
    tpu.vector_store %arg8[%c0_54, %c0_55, %c0_56], %49 {strides = array<i32>} : memref<18x25x128xbf16, #tpu.memory_space<vmem>>, vector<1x25x128xbf16>,
    %c17 = arith.constant 17 : index
    %c0_57 = arith.constant 0 : index
    %c0_58 = arith.constant 0 : index
    %51 = vector.load %arg8[%c17, %c0_57, %c0_58] : memref<18x25x128xbf16, #tpu.memory_space<vmem>>, vector<1x25x128xbf16>
    tpu.vector_store %arg8[%c17, %c0_57, %c0_58], %49 {strides = array<i32>} : memref<18x25x128xbf16, #tpu.memory_space<vmem>>, vector<1x25x128xbf16>,
    %cst_59 = arith.constant 0.000000e+00 : bf16
    %52 = vector.broadcast %cst_59 : bf16 to vector<16x1x128xbf16>
    %c1_60 = arith.constant 1 : index
    %c7 = arith.constant 7 : index
    %c0_61 = arith.constant 0 : index
    %53 = vector.load %arg8[%c1_60, %c7, %c0_61] : memref<18x25x128xbf16, #tpu.memory_space<vmem>>, vector<16x1x128xbf16>
    tpu.vector_store %arg8[%c1_60, %c7, %c0_61], %52 {strides = array<i32>} : memref<18x25x128xbf16, #tpu.memory_space<vmem>>, vector<16x1x128xbf16>,
    %cst_62 = arith.constant 0.000000e+00 : bf16
    %54 = vector.broadcast %cst_62 : bf16 to vector<16x1x128xbf16>
    %c1_63 = arith.constant 1 : index
    %c24_64 = arith.constant 24 : index
    %c0_65 = arith.constant 0 : index
    %55 = vector.load %arg8[%c1_63, %c24_64, %c0_65] : memref<18x25x128xbf16, #tpu.memory_space<vmem>>, vector<16x1x128xbf16>
    tpu.vector_store %arg8[%c1_63, %c24_64, %c0_65], %54 {strides = array<i32>} : memref<18x25x128xbf16, #tpu.memory_space<vmem>>, vector<16x1x128xbf16>,
    %c0_66 = arith.constant 0 : index
    %c7_67 = arith.constant 7 : index
    %c0_68 = arith.constant 0 : index
    %56 = vector.load %arg8[%c0_66, %c7_67, %c0_68] : memref<18x25x128xbf16, #tpu.memory_space<vmem>>, vector<16x16x128xbf16>
    %57 = vector.shape_cast %56 : vector<16x16x128xbf16> to vector<256x128xbf16>
    %c0_69 = arith.constant 0 : index
    %c0_70 = arith.constant 0 : index
    %58 = vector.load %arg9[%c0_69, %c0_70] : memref<256x1152xbf16, #tpu.memory_space<vmem>>, vector<256x128xbf16>
    tpu.vector_store %arg9[%c0_69, %c0_70], %57 {strides = array<i32>} : memref<256x1152xbf16, #tpu.memory_space<vmem>>, vector<256x128xbf16>,
    %c0_71 = arith.constant 0 : index
    %c8_72 = arith.constant 8 : index
    %c0_73 = arith.constant 0 : index
    %59 = vector.load %arg8[%c0_71, %c8_72, %c0_73] : memref<18x25x128xbf16, #tpu.memory_space<vmem>>, vector<16x16x128xbf16>
    %60 = vector.shape_cast %59 : vector<16x16x128xbf16> to vector<256x128xbf16>
    %c0_74 = arith.constant 0 : index
    %c128 = arith.constant 128 : index
    %61 = vector.load %arg9[%c0_74, %c128] : memref<256x1152xbf16, #tpu.memory_space<vmem>>, vector<256x128xbf16>
    tpu.vector_store %arg9[%c0_74, %c128], %60 {strides = array<i32>} : memref<256x1152xbf16, #tpu.memory_space<vmem>>, vector<256x128xbf16>,
    %c0_75 = arith.constant 0 : index
    %c9 = arith.constant 9 : index
    %c0_76 = arith.constant 0 : index
    %62 = vector.load %arg8[%c0_75, %c9, %c0_76] : memref<18x25x128xbf16, #tpu.memory_space<vmem>>, vector<16x16x128xbf16>
    %63 = vector.shape_cast %62 : vector<16x16x128xbf16> to vector<256x128xbf16>
    %c0_77 = arith.constant 0 : index
    %c256 = arith.constant 256 : index
    %64 = vector.load %arg9[%c0_77, %c256] : memref<256x1152xbf16, #tpu.memory_space<vmem>>, vector<256x128xbf16>
    tpu.vector_store %arg9[%c0_77, %c256], %63 {strides = array<i32>} : memref<256x1152xbf16, #tpu.memory_space<vmem>>, vector<256x128xbf16>,
    %c1_78 = arith.constant 1 : index
    %c7_79 = arith.constant 7 : index
    %c0_80 = arith.constant 0 : index
    %65 = vector.load %arg8[%c1_78, %c7_79, %c0_80] : memref<18x25x128xbf16, #tpu.memory_space<vmem>>, vector<16x16x128xbf16>
    %66 = vector.shape_cast %65 : vector<16x16x128xbf16> to vector<256x128xbf16>
    %c0_81 = arith.constant 0 : index
    %c384 = arith.constant 384 : index
    %67 = vector.load %arg9[%c0_81, %c384] : memref<256x1152xbf16, #tpu.memory_space<vmem>>, vector<256x128xbf16>
    tpu.vector_store %arg9[%c0_81, %c384], %66 {strides = array<i32>} : memref<256x1152xbf16, #tpu.memory_space<vmem>>, vector<256x128xbf16>,
    %c1_82 = arith.constant 1 : index
    %c8_83 = arith.constant 8 : index
    %c0_84 = arith.constant 0 : index
    %68 = vector.load %arg8[%c1_82, %c8_83, %c0_84] : memref<18x25x128xbf16, #tpu.memory_space<vmem>>, vector<16x16x128xbf16>
    %69 = vector.shape_cast %68 : vector<16x16x128xbf16> to vector<256x128xbf16>
    %c0_85 = arith.constant 0 : index
    %c512 = arith.constant 512 : index
    %70 = vector.load %arg9[%c0_85, %c512] : memref<256x1152xbf16, #tpu.memory_space<vmem>>, vector<256x128xbf16>
    tpu.vector_store %arg9[%c0_85, %c512], %69 {strides = array<i32>} : memref<256x1152xbf16, #tpu.memory_space<vmem>>, vector<256x128xbf16>,
    %c1_86 = arith.constant 1 : index
    %c9_87 = arith.constant 9 : index
    %c0_88 = arith.constant 0 : index
    %71 = vector.load %arg8[%c1_86, %c9_87, %c0_88] : memref<18x25x128xbf16, #tpu.memory_space<vmem>>, vector<16x16x128xbf16>
    %72 = vector.shape_cast %71 : vector<16x16x128xbf16> to vector<256x128xbf16>
    %c0_89 = arith.constant 0 : index
    %c640 = arith.constant 640 : index
    %73 = vector.load %arg9[%c0_89, %c640] : memref<256x1152xbf16, #tpu.memory_space<vmem>>, vector<256x128xbf16>
    tpu.vector_store %arg9[%c0_89, %c640], %72 {strides = array<i32>} : memref<256x1152xbf16, #tpu.memory_space<vmem>>, vector<256x128xbf16>,
    %c2_90 = arith.constant 2 : index
    %c7_91 = arith.constant 7 : index
    %c0_92 = arith.constant 0 : index
    %74 = vector.load %arg8[%c2_90, %c7_91, %c0_92] : memref<18x25x128xbf16, #tpu.memory_space<vmem>>, vector<16x16x128xbf16>
    %75 = vector.shape_cast %74 : vector<16x16x128xbf16> to vector<256x128xbf16>
    %c0_93 = arith.constant 0 : index
    %c768 = arith.constant 768 : index
    %76 = vector.load %arg9[%c0_93, %c768] : memref<256x1152xbf16, #tpu.memory_space<vmem>>, vector<256x128xbf16>
    tpu.vector_store %arg9[%c0_93, %c768], %75 {strides = array<i32>} : memref<256x1152xbf16, #tpu.memory_space<vmem>>, vector<256x128xbf16>,
    %c2_94 = arith.constant 2 : index
    %c8_95 = arith.constant 8 : index
    %c0_96 = arith.constant 0 : index
    %77 = vector.load %arg8[%c2_94, %c8_95, %c0_96] : memref<18x25x128xbf16, #tpu.memory_space<vmem>>, vector<16x16x128xbf16>
    %78 = vector.shape_cast %77 : vector<16x16x128xbf16> to vector<256x128xbf16>
    %c0_97 = arith.constant 0 : index
    %c896 = arith.constant 896 : index
    %79 = vector.load %arg9[%c0_97, %c896] : memref<256x1152xbf16, #tpu.memory_space<vmem>>, vector<256x128xbf16>
    tpu.vector_store %arg9[%c0_97, %c896], %78 {strides = array<i32>} : memref<256x1152xbf16, #tpu.memory_space<vmem>>, vector<256x128xbf16>,
    %c2_98 = arith.constant 2 : index
    %c9_99 = arith.constant 9 : index
    %c0_100 = arith.constant 0 : index
    %80 = vector.load %arg8[%c2_98, %c9_99, %c0_100] : memref<18x25x128xbf16, #tpu.memory_space<vmem>>, vector<16x16x128xbf16>
    %81 = vector.shape_cast %80 : vector<16x16x128xbf16> to vector<256x128xbf16>
    %c0_101 = arith.constant 0 : index
    %c1024 = arith.constant 1024 : index
    %82 = vector.load %arg9[%c0_101, %c1024] : memref<256x1152xbf16, #tpu.memory_space<vmem>>, vector<256x128xbf16>
    tpu.vector_store %arg9[%c0_101, %c1024], %81 {strides = array<i32>} : memref<256x1152xbf16, #tpu.memory_space<vmem>>, vector<256x128xbf16>,
    %c0_102 = arith.constant 0 : index
    %c0_103 = arith.constant 0 : index
    %83 = vector.load %arg9[%c0_102, %c0_103] : memref<256x1152xbf16, #tpu.memory_space<vmem>>, vector<256x1152xbf16>
    %c0_104 = arith.constant 0 : index
    %c0_105 = arith.constant 0 : index
    %84 = vector.load %arg4[%c0_104, %c0_105] : memref<1152x128xbf16, #tpu.memory_space<vmem>>, vector<1152x128xbf16>
    %cst_106 = arith.constant dense<0.000000e+00> : vector<256x128xf32>
    %85 = tpu.matmul %83, %84, %cst_106 {dimension_numbers = #tpu.dot_dimension_numbers<[1], [0], [0], [1], [0, 0, 1, 1], [], []>} : vector<256x1152xbf16>, vector<1152x128xbf16>, vector<256x128xf32> -> vector<256x128xf32>
    %c0_107 = arith.constant 0 : index
    %c0_108 = arith.constant 0 : index
    %86 = vector.load %arg5[%c0_107, %c0_108] : memref<1x128xf32, #tpu.memory_space<vmem>>, vector<1x128xf32>
    %87 = vector.broadcast %86 : vector<1x128xf32> to vector<256x128xf32>
    %88 = arith.addf %85, %87 : vector<256x128xf32>
    %89 = arith.addf %88, %45 : vector<256x128xf32>
    %cst_109 = arith.constant 0.000000e+00 : f32
    %90 = vector.broadcast %cst_109 : f32 to vector<256x128xf32>
    %91 = arith.maximumf %89, %90 : vector<256x128xf32>
    %92 = vector.shape_cast %91 : vector<256x128xf32> to vector<16x16x128xf32>
    %93 = arith.truncf %92 : vector<16x16x128xf32> to vector<16x16x128xbf16>
    %c0_110 = arith.constant 0 : index
    %c0_111 = arith.constant 0 : index
    %c0_112 = arith.constant 0 : index
    %c0_113 = arith.constant 0 : index
    %94 = vector.load %arg6[%c0_110, %c0_111, %c0_112, %c0_113] : memref<1x16x16x128xbf16, #tpu.memory_space<vmem>>, vector<1x16x16x128xbf16>
    %95 = vector.shape_cast %94 : vector<1x16x16x128xbf16> to vector<16x16x128xbf16>
    %96 = vector.shape_cast %93 : vector<16x16x128xbf16> to vector<1x16x16x128xbf16>
    tpu.vector_store %arg6[%c0_110, %c0_111, %c0_112, %c0_113], %96 {strides = array<i32>} : memref<1x16x16x128xbf16, #tpu.memory_space<vmem>>, vector<1x16x16x128xbf16>,
    return
  }
  func.func @transform_0(%arg0: i32) -> (i32, i32, i32, i32) {
    %c0_i32 = arith.constant 0 : i32
    %c0_i32_0 = arith.constant 0 : i32
    %c0_i32_1 = arith.constant 0 : i32
    %c0_i32_2 = arith.constant 0 : i32
    return %arg0, %c0_i32, %c0_i32_0, %c0_i32_1 : i32, i32, i32, i32
  }
  func.func @transform_1(%arg0: i32) -> (i32, i32) {
    %c0_i32 = arith.constant 0 : i32
    %c0_i32_0 = arith.constant 0 : i32
    %c0_i32_1 = arith.constant 0 : i32
    return %c0_i32, %c0_i32_0 : i32, i32
  }
  func.func @transform_2(%arg0: i32) -> (i32, i32) {
    %c0_i32 = arith.constant 0 : i32
    %c0_i32_0 = arith.constant 0 : i32
    %c0_i32_1 = arith.constant 0 : i32
    return %c0_i32, %c0_i32_0 : i32, i32
  }
  func.func @transform_3(%arg0: i32) -> (i32, i32) {
    %c0_i32 = arith.constant 0 : i32
    %c0_i32_0 = arith.constant 0 : i32
    %c0_i32_1 = arith.constant 0 : i32
    return %c0_i32, %c0_i32_0 : i32, i32
  }
  func.func @transform_4(%arg0: i32) -> (i32, i32) {
    %c0_i32 = arith.constant 0 : i32
    %c0_i32_0 = arith.constant 0 : i32
    %c0_i32_1 = arith.constant 0 : i32
    return %c0_i32, %c0_i32_0 : i32, i32
  }
  func.func @transform_5(%arg0: i32) -> (i32, i32, i32, i32) {
    %c0_i32 = arith.constant 0 : i32
    %c0_i32_0 = arith.constant 0 : i32
    %c0_i32_1 = arith.constant 0 : i32
    %c0_i32_2 = arith.constant 0 : i32
    return %arg0, %c0_i32, %c0_i32_0, %c0_i32_1 : i32, i32, i32, i32
  }
}

</mosaic_0001>

<llo_original>
// kernel: tpu_custom_call.1
$region0: #{tpu_custom_call.1}
  #allocation0 [shape = 'u32[]', space=smem, size = 0x4, offset = 0x4, fixed_abs, tag = 'smem constant byte address 0x4 - core index']
  #allocation1 [shape = 'u32[144,128]{1,0:T(1,128)}', space=vmem, size = 0x12000, scoped, tag = 'internal scratch']
  #allocation2 [shape = 'bf16[256,36]{1,0:T(8,128)(2,1)}', space=vmem, size = 0x10000, scoped, tag = 'scratch operand']
  #allocation3 [shape = 'bf16[18,25,128]{2,1,0:T(8,128)(2,1)}', space=vmem, size = 0x24000, scoped, tag = 'scratch operand']
  #allocation4 [shape = 'bf16[256,1152]{1,0:T(8,128)(2,1)}', space=vmem, size = 0x90000, scoped, tag = 'scratch operand']
  %s0 = inlined_call_operand.vmem [shape: bf16[2,18,18,4], index: 0, kind: input, shape index: {}]
  %s1 = inlined_call_operand.vmem [shape: bf16[36,256], index: 1, kind: input, shape index: {}]
  %s2 = inlined_call_operand.vmem [shape: f32[1,256], index: 2, kind: input, shape index: {}]
  %s3 = inlined_call_operand.hbm [shape: bf16[1152,128], index: 3, kind: input, shape index: {}]
  %s4 = inlined_call_operand.vmem [shape: f32[1,128], index: 4, kind: input, shape index: {}]
  %s5 = inlined_call_operand.hbm [shape: bf16[2,16,16,128], index: 5, kind: output, shape index: {}]
  %s6 = sld [smem:[#allocation0]]
  $region57: #{tpu_custom_call.1} parent=0
    _
  %s8 = ssub.s32 1, %s6
  %s9 = scalar_select 0, %s8, %s6
  $region1: #{tpu_custom_call.1} parent=0
    #allocation5 [shape = 'u8[294912]{0}', space=vmem, size = 0x48000, scoped, tag = 'input window, operand 3, single buffered']
    #allocation6 [shape = 's32[2]{0}', space=sflag, size = 0x8, scoped, tag = 'scoped memory for tpu_custom_call.1']
    #allocation7 [shape = 's32[2]{0}', space=sflag, size = 0x8, scoped, tag = 'scoped memory for tpu_custom_call.1']
    #allocation8 [shape = 'u8[131072]{0}', space=vmem, size = 0x20000, scoped, tag = 'output window, operand 0']
    %10 = vsyncpa [#allocation6], 0
    %11 = vsyncpa [#allocation7], 0
    %s12 = scalar_lea.sflag [#allocation7], 1
    %13 = vsyncpa %s12, 0
    loop: start=0, step=1, limit=4
    $region2: #{tpu_custom_call.1} parent=1 // loop_pre_header
      _
    $region3: #{tpu_custom_call.1} parent=1 // loop_header
      %s15 = sphi 0, %s19
      %p16 = scmp.ge.s32.totalorder %s15, 4
      %s25 = sphi 0, %s27
      %s28 = sphi 0, %s25
      %s29 = sphi 0, %s28
      %s45 = sphi 0, %s29
      %s49 = sphi 0, %s49
      %s51 = sphi 0, %s49
      %s52 = sphi 0, %s51
      %s66 = sphi 0, %s52
      %s70 = sphi 0, %s70
      %s72 = sphi 0, %s70
      %s73 = sphi 0, %s72
      %s87 = sphi 0, %s73
      %s91 = sphi 0, %s91
      %s93 = sphi 0, %s91
      %s94 = sphi 0, %s93
      %s108 = sphi 0, %s94
      %s112 = sphi 0, %s112
      %s114 = sphi 0, %s112
      %s115 = sphi 0, %s114
      %s129 = sphi 0, %s115
      %s135 = sphi 0, %s137
      %s138 = sphi 0, %s135
      %s139 = sphi 0, %s138
      %s155 = sphi 0, %s139
    $region4: #{tpu_custom_call.1} parent=1 // loop_header_branch
      %18 = sbr.rel (%p16) target = $region8
    $region5: #{tpu_custom_call.1} parent=1 // loop_body
      %s20 = ssub.s32 %s15, 1
      %s21 = ssub.s32 %s15, 2
      %s22 = sadd.s32 %s15, 1
      %s23 = ssub.s32 %s15, %s22
      %p24 = scmp.eq.s32.totalorder %s23, 0
      %s26 = sadd.s32 %s25, 1
      %s27 = scalar_select %p24, %s25, %s26
      %p30 = pneg %p24
      %p31 = scmp.eq.s32.totalorder %s15, 1
      %p32 = por %p30, %p31
      %p33 = scmp.ne.s32.totalorder %s25, %s28
      %p34 = scmp.eq.s32.totalorder %s15, 0
      %p35 = por %p33, %p34
      %p36 = scmp.ne.s32.totalorder %s25, %s28
      %p37 = scmp.eq.s32.totalorder %s20, 1
      %p38 = por %p36, %p37
      %p39 = scmp.ne.s32.totalorder %s28, %s29
      %p40 = scmp.eq.s32.totalorder %s20, 0
      %p41 = por %p39, %p40
      %p42 = scmp.ne.s32.totalorder %s28, %s29
      %p43 = scmp.eq.s32.totalorder %s21, 1
      %p44 = por %p42, %p43
      %p46 = scmp.ne.s32.totalorder %s29, %s45
      %p47 = scmp.eq.s32.totalorder %s21, 0
      %p48 = por %p46, %p47
      %s50 = sadd.s32 %s49, 1
      %p53 = scmp.eq.s32.totalorder %s15, 1
      %p54 = scmp.ne.s32.totalorder %s49, %s51
      %p55 = scmp.eq.s32.totalorder %s15, 0
      %p56 = por %p54, %p55
      %p57 = scmp.ne.s32.totalorder %s49, %s51
      %p58 = scmp.eq.s32.totalorder %s20, 1
      %p59 = por %p57, %p58
      %p60 = scmp.ne.s32.totalorder %s51, %s52
      %p61 = scmp.eq.s32.totalorder %s20, 0
      %p62 = por %p60, %p61
      %p63 = scmp.ne.s32.totalorder %s51, %s52
      %p64 = scmp.eq.s32.totalorder %s21, 1
      %p65 = por %p63, %p64
      %p67 = scmp.ne.s32.totalorder %s52, %s66
      %p68 = scmp.eq.s32.totalorder %s21, 0
      %p69 = por %p67, %p68
      %s71 = sadd.s32 %s70, 1
      %p74 = scmp.eq.s32.totalorder %s15, 1
      %p75 = scmp.ne.s32.totalorder %s70, %s72
      %p76 = scmp.eq.s32.totalorder %s15, 0
      %p77 = por %p75, %p76
      %p78 = scmp.ne.s32.totalorder %s70, %s72
      %p79 = scmp.eq.s32.totalorder %s20, 1
      %p80 = por %p78, %p79
      %p81 = scmp.ne.s32.totalorder %s72, %s73
      %p82 = scmp.eq.s32.totalorder %s20, 0
      %p83 = por %p81, %p82
      %p84 = scmp.ne.s32.totalorder %s72, %s73
      %p85 = scmp.eq.s32.totalorder %s21, 1
      %p86 = por %p84, %p85
      %p88 = scmp.ne.s32.totalorder %s73, %s87
      %p89 = scmp.eq.s32.totalorder %s21, 0
      %p90 = por %p88, %p89
      %s92 = sadd.s32 %s91, 1
      %p95 = scmp.eq.s32.totalorder %s15, 1
      %p96 = scmp.ne.s32.totalorder %s91, %s93
      %p97 = scmp.eq.s32.totalorder %s15, 0
      %p98 = por %p96, %p97
      %p99 = scmp.ne.s32.totalorder %s91, %s93
      %p100 = scmp.eq.s32.totalorder %s20, 1
      %p101 = por %p99, %p100
      %p102 = scmp.ne.s32.totalorder %s93, %s94
      %p103 = scmp.eq.s32.totalorder %s20, 0
      %p104 = por %p102, %p103
      %p105 = scmp.ne.s32.totalorder %s93, %s94
      %p106 = scmp.eq.s32.totalorder %s21, 1
      %p107 = por %p105, %p106
      %p109 = scmp.ne.s32.totalorder %s94, %s108
      %p110 = scmp.eq.s32.totalorder %s21, 0
      %p111 = por %p109, %p110
      %s113 = sadd.s32 %s112, 1
      %p116 = scmp.eq.s32.totalorder %s15, 1
      %p117 = scmp.ne.s32.totalorder %s112, %s114
      %p118 = scmp.eq.s32.totalorder %s15, 0
      %p119 = por %p117, %p118
      %p120 = scmp.ne.s32.totalorder %s112, %s114
      %p121 = scmp.eq.s32.totalorder %s20, 1
      %p122 = por %p120, %p121
      %p123 = scmp.ne.s32.totalorder %s114, %s115
      %p124 = scmp.eq.s32.totalorder %s20, 0
      %p125 = por %p123, %p124
      %p126 = scmp.ne.s32.totalorder %s114, %s115
      %p127 = scmp.eq.s32.totalorder %s21, 1
      %p128 = por %p126, %p127
      %p130 = scmp.ne.s32.totalorder %s115, %s129
      %p131 = scmp.eq.s32.totalorder %s21, 0
      %p132 = por %p130, %p131
      %s133 = ssub.s32 %s15, %s22
      %p134 = scmp.eq.s32.totalorder %s133, 0
      %s136 = sadd.s32 %s135, 1
      %s137 = scalar_select %p134, %s135, %s136
      %p140 = pneg %p134
      %p141 = scmp.eq.s32.totalorder %s15, 1
      %p142 = por %p140, %p141
      %p143 = scmp.ne.s32.totalorder %s135, %s138
      %p144 = scmp.eq.s32.totalorder %s15, 0
      %p145 = por %p143, %p144
      %p146 = scmp.ne.s32.totalorder %s135, %s138
      %p147 = scmp.eq.s32.totalorder %s20, 1
      %p148 = por %p146, %p147
      %p149 = scmp.ne.s32.totalorder %s138, %s139
      %p150 = scmp.eq.s32.totalorder %s20, 0
      %p151 = por %p149, %p150
      %p152 = scmp.ne.s32.totalorder %s138, %s139
      %p153 = scmp.eq.s32.totalorder %s21, 1
      %p154 = por %p152, %p153
      %p156 = scmp.ne.s32.totalorder %s139, %s155
      %p157 = scmp.eq.s32.totalorder %s21, 0
      %p158 = por %p156, %p157
      %p159 = scmp.le.s32.totalorder 1, %s15
      %p160 = scmp.lt.s32.totalorder %s15, 3
      %p161 = pnand %p159, %p160
      %p162 = pneg %p161
      // Predicated region
      $region9: #{tpu_custom_call.1} parent=5 // pred_check
        _
      $region10: #{tpu_custom_call.1} parent=5 // pred_check_branch
        %164 = sbr.rel (%p161) target = $region12
      $region11: #{tpu_custom_call.1} parent=5 // pred_region
        %s165 = ssub.s32 %s15, 1
        // Predicated region
        $region13: #{tpu_custom_call.1} parent=11 // pred_check
          %p166 = pneg %p62
        $region14: #{tpu_custom_call.1} parent=11 // pred_check_branch
          %168 = sbr.rel (%p166) target = $region16
        $region15: #{tpu_custom_call.1} parent=11 // pred_region
          _
        $region16: #{tpu_custom_call.1} parent=11 // pred_fallthru
          _
        // Predicated region
        $region17: #{tpu_custom_call.1} parent=11 // pred_check
          %p169 = pneg %p83
        $region18: #{tpu_custom_call.1} parent=11 // pred_check_branch
          %171 = sbr.rel (%p169) target = $region20
        $region19: #{tpu_custom_call.1} parent=11 // pred_region
          _
        $region20: #{tpu_custom_call.1} parent=11 // pred_fallthru
          _
        // Predicated region
        $region21: #{tpu_custom_call.1} parent=11 // pred_check
          %p172 = pneg %p104
        $region22: #{tpu_custom_call.1} parent=11 // pred_check_branch
          %174 = sbr.rel (%p172) target = $region24
        $region23: #{tpu_custom_call.1} parent=11 // pred_region
          %s176 = ssub.s32 9216, 9216
          %177 = vsyncadd [#allocation6], %s176
          %s178 = sshll.u32 [#allocation5], 4
          %s179 = int_to_ptr.vmem [resolvable:$true] %s178
          %184 = dma.hbm_to_vmem [thread:$0]  %s3, 9216, %s179, [#allocation6], 64, 64, 4
        $region24: #{tpu_custom_call.1} parent=11 // pred_fallthru
          _
        // Predicated region
        $region25: #{tpu_custom_call.1} parent=11 // pred_check
          %p185 = pneg %p125
        $region26: #{tpu_custom_call.1} parent=11 // pred_check_branch
          %187 = sbr.rel (%p185) target = $region28
        $region27: #{tpu_custom_call.1} parent=11 // pred_region
          _
        $region28: #{tpu_custom_call.1} parent=11 // pred_fallthru
          _
      $region12: #{tpu_custom_call.1} parent=5 // pred_fallthru
        _
      %p188 = scmp.lt.s32.totalorder %s15, 2
      // Predicated region
      $region29: #{tpu_custom_call.1} parent=5 // pred_check
        %p189 = pneg %p188
      $region30: #{tpu_custom_call.1} parent=5 // pred_check_branch
        %191 = sbr.rel (%p189) target = $region32
      $region31: #{tpu_custom_call.1} parent=5 // pred_region
        // Predicated region
        $region33: #{tpu_custom_call.1} parent=31 // pred_check
          %p192 = pneg %p35
        $region34: #{tpu_custom_call.1} parent=31 // pred_check_branch
          %194 = sbr.rel (%p192) target = $region36
        $region35: #{tpu_custom_call.1} parent=31 // pred_region
          %p195 = scmp.lt.s32.totalorder %s15, 1
          %s196 = scalar_select %p195, %s15, 1
          %s197 = smul.addr %s196, 54
          %s198 = smul.addr %s197, 4
          %s199 = scalar_lea.vmem %s0, %s198
        $region36: #{tpu_custom_call.1} parent=31 // pred_fallthru
          _
      $region32: #{tpu_custom_call.1} parent=5 // pred_fallthru
        _
      %p200 = scmp.le.s32.totalorder 1, %s15
      %p201 = scmp.lt.s32.totalorder %s15, 3
      %p202 = pnand %p200, %p201
      %p203 = pneg %p202
      // Predicated region
      $region37: #{tpu_custom_call.1} parent=5 // pred_check
        _
      $region38: #{tpu_custom_call.1} parent=5 // pred_check_branch
        %205 = sbr.rel (%p202) target = $region40
      $region39: #{tpu_custom_call.1} parent=5 // pred_region
        %s206 = ssub.s32 %s15, 1
        // Predicated region
        $region41: #{tpu_custom_call.1} parent=39 // pred_check
          %p207 = pneg %p104
        $region42: #{tpu_custom_call.1} parent=39 // pred_check_branch
          %209 = sbr.rel (%p207) target = $region44
        $region43: #{tpu_custom_call.1} parent=39 // pred_region
          %210 = dma.done [#allocation6], 9216
        $region44: #{tpu_custom_call.1} parent=39 // pred_fallthru
          _
        %p211 = scmp.lt.s32.totalorder %s20, 1
        %s212 = scalar_select %p211, %s20, 1
        %s213 = smul.addr %s212, 54
        %s214 = smul.addr %s213, 4
        %s215 = scalar_lea.vmem %s0, %s214
        %p216 = pneg %p41
        %p217 = pneg %p38
        %p218 = pneg %p62
        %p219 = pneg %p59
        %p220 = pneg %p83
        %p221 = pneg %p80
        %p222 = pneg %p104
        %p223 = pneg %p101
        %p224 = pneg %p125
        %p225 = pneg %p122
        %p226 = pneg %p151
        %p227 = pneg %p148
        %s228 = sand.u32 %s138, 1
        %s229 = scalar_lea.sflag [#allocation7], %s228
        %s230 = sand.u32 %s138, 1
        %s231 = smul.addr %s230, 128
        %s232 = scalar_lea.vmem [#allocation8], %s231
        %p233 = scmp.lt.s32.totalorder %s20, 1
        %s234 = scalar_select %p233, %s20, 1
        %s235 = smul.addr %s234, 54
        %s236 = smul.addr %s235, 4
        %s237 = scalar_lea.vmem %s0, %s236
        %v239 = vld [vmem:[%s237] sm:$0xf]
        %v240 = vld [vmem:[%s237 + $0x4] sm:$0xf]
        %v241 = vld [vmem:[%s237 + $0xc] sm:$0xf]
        %v242 = vld [vmem:[%s237 + $0x10] sm:$0xf]
        %v243 = vld [vmem:[%s237 + $0x18] sm:$0xf]
        %v244 = vld [vmem:[%s237 + $0x1c] sm:$0xf]
        %v245 = vld [vmem:[%s237 + $0x24] sm:$0xf]
        %v246 = vld [vmem:[%s237 + $0x28] sm:$0xf]
        %v247 = vld [vmem:[%s237 + $0x30] sm:$0xf]
        %v248 = vld [vmem:[%s237 + $0x34] sm:$0xf]
        %v249 = vld [vmem:[%s237 + $0x3c] sm:$0xf]
        %v250 = vld [vmem:[%s237 + $0x40] sm:$0xf]
        %v251 = vld [vmem:[%s237 + $0x48] sm:$0xf]
        %v252 = vld [vmem:[%s237 + $0x4c] sm:$0xf]
        %v253 = vld [vmem:[%s237 + $0x54] sm:$0xf]
        %v254 = vld [vmem:[%s237 + $0x58] sm:$0xf]
        %v255 = vld [vmem:[%s237 + $0x60] sm:$0xf]
        %v256 = vld [vmem:[%s237 + $0x64] sm:$0xf]
        %v257 = vld [vmem:[%s237 + $0x6c] sm:$0xf]
        %v258 = vld [vmem:[%s237 + $0x70] sm:$0xf]
        %v259 = vld [vmem:[%s237 + $0x78] sm:$0xf]
        %v260 = vld [vmem:[%s237 + $0x7c] sm:$0xf]
        %v261 = vld [vmem:[%s237 + $0x84] sm:$0xf]
        %v262 = vld [vmem:[%s237 + $0x88] sm:$0xf]
        %v263 = vld [vmem:[%s237 + $0x90] sm:$0xf]
        %v264 = vld [vmem:[%s237 + $0x94] sm:$0xf]
        %v265 = vld [vmem:[%s237 + $0x9c] sm:$0xf]
        %v266 = vld [vmem:[%s237 + $0xa0] sm:$0xf]
        %v267 = vld [vmem:[%s237 + $0xa8] sm:$0xf]
        %v268 = vld [vmem:[%s237 + $0xac] sm:$0xf]
        %v269 = vld [vmem:[%s237 + $0xb4] sm:$0xf]
        %v270 = vld [vmem:[%s237 + $0xb8] sm:$0xf]
        %vm271 = vcmask 27648
        %272 = vst.msk [vmem:[#allocation2] sm:$0xf] %vm271, %v239
        %273 = vst.msk [vmem:[#allocation2 + $0x4] sm:$0xf] %vm271, %v240
        %274 = vst.msk [vmem:[#allocation2 + $0x8] sm:$0xf] %vm271, %v241
        %275 = vst.msk [vmem:[#allocation2 + $0xc] sm:$0xf] %vm271, %v242
        %276 = vst.msk [vmem:[#allocation2 + $0x10] sm:$0xf] %vm271, %v243
        %277 = vst.msk [vmem:[#allocation2 + $0x14] sm:$0xf] %vm271, %v244
        %278 = vst.msk [vmem:[#allocation2 + $0x18] sm:$0xf] %vm271, %v245
        %279 = vst.msk [vmem:[#allocation2 + $0x1c] sm:$0xf] %vm271, %v246
        %280 = vst.msk [vmem:[#allocation2 + $0x20] sm:$0xf] %vm271, %v247
        %281 = vst.msk [vmem:[#allocation2 + $0x24] sm:$0xf] %vm271, %v248
        %282 = vst.msk [vmem:[#allocation2 + $0x28] sm:$0xf] %vm271, %v249
        %283 = vst.msk [vmem:[#allocation2 + $0x2c] sm:$0xf] %vm271, %v250
        %284 = vst.msk [vmem:[#allocation2 + $0x30] sm:$0xf] %vm271, %v251
        %285 = vst.msk [vmem:[#allocation2 + $0x34] sm:$0xf] %vm271, %v252
        %286 = vst.msk [vmem:[#allocation2 + $0x38] sm:$0xf] %vm271, %v253
        %287 = vst.msk [vmem:[#allocation2 + $0x3c] sm:$0xf] %vm271, %v254
        %288 = vst.msk [vmem:[#allocation2 + $0x40] sm:$0xf] %vm271, %v255
        %289 = vst.msk [vmem:[#allocation2 + $0x44] sm:$0xf] %vm271, %v256
        %290 = vst.msk [vmem:[#allocation2 + $0x48] sm:$0xf] %vm271, %v257
        %291 = vst.msk [vmem:[#allocation2 + $0x4c] sm:$0xf] %vm271, %v258
        %292 = vst.msk [vmem:[#allocation2 + $0x50] sm:$0xf] %vm271, %v259
        %293 = vst.msk [vmem:[#allocation2 + $0x54] sm:$0xf] %vm271, %v260
        %294 = vst.msk [vmem:[#allocation2 + $0x58] sm:$0xf] %vm271, %v261
        %295 = vst.msk [vmem:[#allocation2 + $0x5c] sm:$0xf] %vm271, %v262
        %296 = vst.msk [vmem:[#allocation2 + $0x60] sm:$0xf] %vm271, %v263
        %297 = vst.msk [vmem:[#allocation2 + $0x64] sm:$0xf] %vm271, %v264
        %298 = vst.msk [vmem:[#allocation2 + $0x68] sm:$0xf] %vm271, %v265
        %299 = vst.msk [vmem:[#allocation2 + $0x6c] sm:$0xf] %vm271, %v266
        %300 = vst.msk [vmem:[#allocation2 + $0x70] sm:$0xf] %vm271, %v267
        %301 = vst.msk [vmem:[#allocation2 + $0x74] sm:$0xf] %vm271, %v268
        %302 = vst.msk [vmem:[#allocation2 + $0x78] sm:$0xf] %vm271, %v269
        %303 = vst.msk [vmem:[#allocation2 + $0x7c] sm:$0xf] %vm271, %v270
        %v304 = vld [vmem:[%s237] sm:$0xf]
        %v305 = vld [vmem:[%s237 + $0x4] sm:$0xf]
        %v306 = vld [vmem:[%s237 + $0x8] sm:$0x1]
        %v307 = vld [vmem:[%s237 + $0xc] sm:$0xf]
        %v308 = vld [vmem:[%s237 + $0x10] sm:$0xf]
        %v309 = vld [vmem:[%s237 + $0x14] sm:$0x1]
        %v310 = vld [vmem:[%s237 + $0x18] sm:$0xf]
        %v311 = vld [vmem:[%s237 + $0x1c] sm:$0xf]
        %v312 = vld [vmem:[%s237 + $0x20] sm:$0x1]
        %v313 = vld [vmem:[%s237 + $0x24] sm:$0xf]
        %v314 = vld [vmem:[%s237 + $0x28] sm:$0xf]
        %v315 = vld [vmem:[%s237 + $0x2c] sm:$0x1]
        %v316 = vld [vmem:[%s237 + $0x30] sm:$0xf]
        %v317 = vld [vmem:[%s237 + $0x34] sm:$0xf]
        %v318 = vld [vmem:[%s237 + $0x38] sm:$0x1]
        %v319 = vld [vmem:[%s237 + $0x3c] sm:$0xf]
        %v320 = vld [vmem:[%s237 + $0x40] sm:$0xf]
        %v321 = vld [vmem:[%s237 + $0x44] sm:$0x1]
        %v322 = vld [vmem:[%s237 + $0x48] sm:$0xf]
        %v323 = vld [vmem:[%s237 + $0x4c] sm:$0xf]
        %v324 = vld [vmem:[%s237 + $0x50] sm:$0x1]
        %v325 = vld [vmem:[%s237 + $0x54] sm:$0xf]
        %v326 = vld [vmem:[%s237 + $0x58] sm:$0xf]
        %v327 = vld [vmem:[%s237 + $0x5c] sm:$0x1]
        %v328 = vld [vmem:[%s237 + $0x60] sm:$0xf]
        %v329 = vld [vmem:[%s237 + $0x64] sm:$0xf]
        %v330 = vld [vmem:[%s237 + $0x68] sm:$0x1]
        %v331 = vld [vmem:[%s237 + $0x6c] sm:$0xf]
        %v332 = vld [vmem:[%s237 + $0x70] sm:$0xf]
        %v333 = vld [vmem:[%s237 + $0x74] sm:$0x1]
        %v334 = vld [vmem:[%s237 + $0x78] sm:$0xf]
        %v335 = vld [vmem:[%s237 + $0x7c] sm:$0xf]
        %v336 = vld [vmem:[%s237 + $0x80] sm:$0x1]
        %v337 = vld [vmem:[%s237 + $0x84] sm:$0xf]
        %v338 = vld [vmem:[%s237 + $0x88] sm:$0xf]
        %v339 = vld [vmem:[%s237 + $0x8c] sm:$0x1]
        %v340 = vld [vmem:[%s237 + $0x90] sm:$0xf]
        %v341 = vld [vmem:[%s237 + $0x94] sm:$0xf]
        %v342 = vld [vmem:[%s237 + $0x98] sm:$0x1]
        %v343 = vld [vmem:[%s237 + $0x9c] sm:$0xf]
        %v344 = vld [vmem:[%s237 + $0xa0] sm:$0xf]
        %v345 = vld [vmem:[%s237 + $0xa4] sm:$0x1]
        %v346 = vld [vmem:[%s237 + $0xa8] sm:$0xf]
        %v347 = vld [vmem:[%s237 + $0xac] sm:$0xf]
        %v348 = vld [vmem:[%s237 + $0xb0] sm:$0x1]
        %v349 = vld [vmem:[%s237 + $0xb4] sm:$0xf]
        %v350 = vld [vmem:[%s237 + $0xb8] sm:$0xf]
        %v351 = vld [vmem:[%s237 + $0xbc] sm:$0x1]
        %vm352 = vsmask.f32 3328
        %vm353 = vsmask.f32 7440
        %vm354 = vmor %vm352, %vm353
        %v356 = vshrl.u32 %v304, 16
        %v358 = vrot.slane %v356, 4
        %v359 = vshll.u32 %v304, 16
        %v361 = vrot.slane %v359, 5
        %v362 = vor.u32 %v358, %v361
        %v363 = vrot.slane %v362, 4
        %v365 = vshll.u32 %v305, 16
        %v367 = vrot.slane %v365, 5
        %v368 = vsel %vm354, %v363, %v367
        %v369 = vshrl.u32 %v305, 16
        %v371 = vrot.slane %v369, 4
        %v372 = vor.u32 %v371, %v367
        %v373 = vrot.slane %v372, 4
        %v375 = vshll.u32 %v306, 16
        %v377 = vrot.slane %v375, 5
        %v378 = vsel %vm354, %v373, %v377
        %v380 = vshrl.u32 %v307, 16
        %v382 = vrot.slane %v380, 4
        %v383 = vshll.u32 %v307, 16
        %v385 = vrot.slane %v383, 5
        %v386 = vor.u32 %v382, %v385
        %v387 = vrot.slane %v386, 4
        %v389 = vshll.u32 %v308, 16
        %v391 = vrot.slane %v389, 5
        %v392 = vsel %vm354, %v387, %v391
        %v393 = vshrl.u32 %v308, 16
        %v395 = vrot.slane %v393, 4
        %v396 = vor.u32 %v395, %v391
        %v397 = vrot.slane %v396, 4
        %v399 = vshll.u32 %v309, 16
        %v401 = vrot.slane %v399, 5
        %v402 = vsel %vm354, %v397, %v401
        %v404 = vshrl.u32 %v310, 16
        %v406 = vrot.slane %v404, 4
        %v407 = vshll.u32 %v310, 16
        %v409 = vrot.slane %v407, 5
        %v410 = vor.u32 %v406, %v409
        %v411 = vrot.slane %v410, 4
        %v413 = vshll.u32 %v311, 16
        %v415 = vrot.slane %v413, 5
        %v416 = vsel %vm354, %v411, %v415
        %v417 = vshrl.u32 %v311, 16
        %v419 = vrot.slane %v417, 4
        %v420 = vor.u32 %v419, %v415
        %v421 = vrot.slane %v420, 4
        %v423 = vshll.u32 %v312, 16
        %v425 = vrot.slane %v423, 5
        %v426 = vsel %vm354, %v421, %v425
        %v428 = vshrl.u32 %v313, 16
        %v430 = vrot.slane %v428, 4
        %v431 = vshll.u32 %v313, 16
        %v433 = vrot.slane %v431, 5
        %v434 = vor.u32 %v430, %v433
        %v435 = vrot.slane %v434, 4
        %v437 = vshll.u32 %v314, 16
        %v439 = vrot.slane %v437, 5
        %v440 = vsel %vm354, %v435, %v439
        %v441 = vshrl.u32 %v314, 16
        %v443 = vrot.slane %v441, 4
        %v444 = vor.u32 %v443, %v439
        %v445 = vrot.slane %v444, 4
        %v447 = vshll.u32 %v315, 16
        %v449 = vrot.slane %v447, 5
        %v450 = vsel %vm354, %v445, %v449
        %v452 = vshrl.u32 %v316, 16
        %v454 = vrot.slane %v452, 4
        %v455 = vshll.u32 %v316, 16
        %v457 = vrot.slane %v455, 5
        %v458 = vor.u32 %v454, %v457
        %v459 = vrot.slane %v458, 4
        %v461 = vshll.u32 %v317, 16
        %v463 = vrot.slane %v461, 5
        %v464 = vsel %vm354, %v459, %v463
        %v465 = vshrl.u32 %v317, 16
        %v467 = vrot.slane %v465, 4
        %v468 = vor.u32 %v467, %v463
        %v469 = vrot.slane %v468, 4
        %v471 = vshll.u32 %v318, 16
        %v473 = vrot.slane %v471, 5
        %v474 = vsel %vm354, %v469, %v473
        %v476 = vshrl.u32 %v319, 16
        %v478 = vrot.slane %v476, 4
        %v479 = vshll.u32 %v319, 16
        %v481 = vrot.slane %v479, 5
        %v482 = vor.u32 %v478, %v481
        %v483 = vrot.slane %v482, 4
        %v485 = vshll.u32 %v320, 16
        %v487 = vrot.slane %v485, 5
        %v488 = vsel %vm354, %v483, %v487
        %v489 = vshrl.u32 %v320, 16
        %v491 = vrot.slane %v489, 4
        %v492 = vor.u32 %v491, %v487
        %v493 = vrot.slane %v492, 4
        %v495 = vshll.u32 %v321, 16
        %v497 = vrot.slane %v495, 5
        %v498 = vsel %vm354, %v493, %v497
        %v500 = vshrl.u32 %v322, 16
        %v502 = vrot.slane %v500, 4
        %v503 = vshll.u32 %v322, 16
        %v505 = vrot.slane %v503, 5
        %v506 = vor.u32 %v502, %v505
        %v507 = vrot.slane %v506, 4
        %v509 = vshll.u32 %v323, 16
        %v511 = vrot.slane %v509, 5
        %v512 = vsel %vm354, %v507, %v511
        %v513 = vshrl.u32 %v323, 16
        %v515 = vrot.slane %v513, 4
        %v516 = vor.u32 %v515, %v511
        %v517 = vrot.slane %v516, 4
        %v519 = vshll.u32 %v324, 16
        %v521 = vrot.slane %v519, 5
        %v522 = vsel %vm354, %v517, %v521
        %v524 = vshrl.u32 %v325, 16
        %v526 = vrot.slane %v524, 4
        %v527 = vshll.u32 %v325, 16
        %v529 = vrot.slane %v527, 5
        %v530 = vor.u32 %v526, %v529
        %v531 = vrot.slane %v530, 4
        %v533 = vshll.u32 %v326, 16
        %v535 = vrot.slane %v533, 5
        %v536 = vsel %vm354, %v531, %v535
        %v537 = vshrl.u32 %v326, 16
        %v539 = vrot.slane %v537, 4
        %v540 = vor.u32 %v539, %v535
        %v541 = vrot.slane %v540, 4
        %v543 = vshll.u32 %v327, 16
        %v545 = vrot.slane %v543, 5
        %v546 = vsel %vm354, %v541, %v545
        %v548 = vshrl.u32 %v328, 16
        %v550 = vrot.slane %v548, 4
        %v551 = vshll.u32 %v328, 16
        %v553 = vrot.slane %v551, 5
        %v554 = vor.u32 %v550, %v553
        %v555 = vrot.slane %v554, 4
        %v557 = vshll.u32 %v329, 16
        %v559 = vrot.slane %v557, 5
        %v560 = vsel %vm354, %v555, %v559
        %v561 = vshrl.u32 %v329, 16
        %v563 = vrot.slane %v561, 4
        %v564 = vor.u32 %v563, %v559
        %v565 = vrot.slane %v564, 4
        %v567 = vshll.u32 %v330, 16
        %v569 = vrot.slane %v567, 5
        %v570 = vsel %vm354, %v565, %v569
        %v572 = vshrl.u32 %v331, 16
        %v574 = vrot.slane %v572, 4
        %v575 = vshll.u32 %v331, 16
        %v577 = vrot.slane %v575, 5
        %v578 = vor.u32 %v574, %v577
        %v579 = vrot.slane %v578, 4
        %v581 = vshll.u32 %v332, 16
        %v583 = vrot.slane %v581, 5
        %v584 = vsel %vm354, %v579, %v583
        %v585 = vshrl.u32 %v332, 16
        %v587 = vrot.slane %v585, 4
        %v588 = vor.u32 %v587, %v583
        %v589 = vrot.slane %v588, 4
        %v591 = vshll.u32 %v333, 16
        %v593 = vrot.slane %v591, 5
        %v594 = vsel %vm354, %v589, %v593
        %v596 = vshrl.u32 %v334, 16
        %v598 = vrot.slane %v596, 4
        %v599 = vshll.u32 %v334, 16
        %v601 = vrot.slane %v599, 5
        %v602 = vor.u32 %v598, %v601
        %v603 = vrot.slane %v602, 4
        %v605 = vshll.u32 %v335, 16
        %v607 = vrot.slane %v605, 5
        %v608 = vsel %vm354, %v603, %v607
        %v609 = vshrl.u32 %v335, 16
        %v611 = vrot.slane %v609, 4
        %v612 = vor.u32 %v611, %v607
        %v613 = vrot.slane %v612, 4
        %v615 = vshll.u32 %v336, 16
        %v617 = vrot.slane %v615, 5
        %v618 = vsel %vm354, %v613, %v617
        %v620 = vshrl.u32 %v337, 16
        %v622 = vrot.slane %v620, 4
        %v623 = vshll.u32 %v337, 16
        %v625 = vrot.slane %v623, 5
        %v626 = vor.u32 %v622, %v625
        %v627 = vrot.slane %v626, 4
        %v629 = vshll.u32 %v338, 16
        %v631 = vrot.slane %v629, 5
        %v632 = vsel %vm354, %v627, %v631
        %v633 = vshrl.u32 %v338, 16
        %v635 = vrot.slane %v633, 4
        %v636 = vor.u32 %v635, %v631
        %v637 = vrot.slane %v636, 4
        %v639 = vshll.u32 %v339, 16
        %v641 = vrot.slane %v639, 5
        %v642 = vsel %vm354, %v637, %v641
        %v644 = vshrl.u32 %v340, 16
        %v646 = vrot.slane %v644, 4
        %v647 = vshll.u32 %v340, 16
        %v649 = vrot.slane %v647, 5
        %v650 = vor.u32 %v646, %v649
        %v651 = vrot.slane %v650, 4
        %v653 = vshll.u32 %v341, 16
        %v655 = vrot.slane %v653, 5
        %v656 = vsel %vm354, %v651, %v655
        %v657 = vshrl.u32 %v341, 16
        %v659 = vrot.slane %v657, 4
        %v660 = vor.u32 %v659, %v655
        %v661 = vrot.slane %v660, 4
        %v663 = vshll.u32 %v342, 16
        %v665 = vrot.slane %v663, 5
        %v666 = vsel %vm354, %v661, %v665
        %v668 = vshrl.u32 %v343, 16
        %v670 = vrot.slane %v668, 4
        %v671 = vshll.u32 %v343, 16
        %v673 = vrot.slane %v671, 5
        %v674 = vor.u32 %v670, %v673
        %v675 = vrot.slane %v674, 4
        %v677 = vshll.u32 %v344, 16
        %v679 = vrot.slane %v677, 5
        %v680 = vsel %vm354, %v675, %v679
        %v681 = vshrl.u32 %v344, 16
        %v683 = vrot.slane %v681, 4
        %v684 = vor.u32 %v683, %v679
        %v685 = vrot.slane %v684, 4
        %v687 = vshll.u32 %v345, 16
        %v689 = vrot.slane %v687, 5
        %v690 = vsel %vm354, %v685, %v689
        %v692 = vshrl.u32 %v346, 16
        %v694 = vrot.slane %v692, 4
        %v695 = vshll.u32 %v346, 16
        %v697 = vrot.slane %v695, 5
        %v698 = vor.u32 %v694, %v697
        %v699 = vrot.slane %v698, 4
        %v701 = vshll.u32 %v347, 16
        %v703 = vrot.slane %v701, 5
        %v704 = vsel %vm354, %v699, %v703
        %v705 = vshrl.u32 %v347, 16
        %v707 = vrot.slane %v705, 4
        %v708 = vor.u32 %v707, %v703
        %v709 = vrot.slane %v708, 4
        %v711 = vshll.u32 %v348, 16
        %v713 = vrot.slane %v711, 5
        %v714 = vsel %vm354, %v709, %v713
        %v716 = vshrl.u32 %v349, 16
        %v718 = vrot.slane %v716, 4
        %v719 = vshll.u32 %v349, 16
        %v721 = vrot.slane %v719, 5
        %v722 = vor.u32 %v718, %v721
        %v723 = vrot.slane %v722, 4
        %v725 = vshll.u32 %v350, 16
        %v727 = vrot.slane %v725, 5
        %v728 = vsel %vm354, %v723, %v727
        %v729 = vshrl.u32 %v350, 16
        %v731 = vrot.slane %v729, 4
        %v732 = vor.u32 %v731, %v727
        %v733 = vrot.slane %v732, 4
        %v735 = vshll.u32 %v351, 16
        %v737 = vrot.slane %v735, 5
        %v738 = vsel %vm354, %v733, %v737
        %739 = vrot.lane.b32.xlu0 %v368, 4
        %v740 = vpop.permute.xlu0 %739
        %741 = vrot.lane.b32.xlu0 %v378, 4
        %v742 = vpop.permute.xlu0 %741
        %743 = vrot.lane.b32.xlu0 %v392, 4
        %v744 = vpop.permute.xlu0 %743
        %745 = vrot.lane.b32.xlu0 %v402, 4
        %v746 = vpop.permute.xlu0 %745
        %747 = vrot.lane.b32.xlu0 %v416, 4
        %v748 = vpop.permute.xlu0 %747
        %749 = vrot.lane.b32.xlu0 %v426, 4
        %v750 = vpop.permute.xlu0 %749
        %751 = vrot.lane.b32.xlu0 %v440, 4
        %v752 = vpop.permute.xlu0 %751
        %753 = vrot.lane.b32.xlu0 %v450, 4
        %v754 = vpop.permute.xlu0 %753
        %755 = vrot.lane.b32.xlu0 %v464, 4
        %v756 = vpop.permute.xlu0 %755
        %757 = vrot.lane.b32.xlu0 %v474, 4
        %v758 = vpop.permute.xlu0 %757
        %759 = vrot.lane.b32.xlu0 %v488, 4
        %v760 = vpop.permute.xlu0 %759
        %761 = vrot.lane.b32.xlu0 %v498, 4
        %v762 = vpop.permute.xlu0 %761
        %763 = vrot.lane.b32.xlu0 %v512, 4
        %v764 = vpop.permute.xlu0 %763
        %765 = vrot.lane.b32.xlu0 %v522, 4
        %v766 = vpop.permute.xlu0 %765
        %767 = vrot.lane.b32.xlu0 %v536, 4
        %v768 = vpop.permute.xlu0 %767
        %769 = vrot.lane.b32.xlu0 %v546, 4
        %v770 = vpop.permute.xlu0 %769
        %771 = vrot.lane.b32.xlu0 %v560, 4
        %v772 = vpop.permute.xlu0 %771
        %773 = vrot.lane.b32.xlu0 %v570, 4
        %v774 = vpop.permute.xlu0 %773
        %775 = vrot.lane.b32.xlu0 %v584, 4
        %v776 = vpop.permute.xlu0 %775
        %777 = vrot.lane.b32.xlu0 %v594, 4
        %v778 = vpop.permute.xlu0 %777
        %779 = vrot.lane.b32.xlu0 %v608, 4
        %v780 = vpop.permute.xlu0 %779
        %781 = vrot.lane.b32.xlu0 %v618, 4
        %v782 = vpop.permute.xlu0 %781
        %783 = vrot.lane.b32.xlu0 %v632, 4
        %v784 = vpop.permute.xlu0 %783
        %785 = vrot.lane.b32.xlu0 %v642, 4
        %v786 = vpop.permute.xlu0 %785
        %787 = vrot.lane.b32.xlu0 %v656, 4
        %v788 = vpop.permute.xlu0 %787
        %789 = vrot.lane.b32.xlu0 %v666, 4
        %v790 = vpop.permute.xlu0 %789
        %791 = vrot.lane.b32.xlu0 %v680, 4
        %v792 = vpop.permute.xlu0 %791
        %793 = vrot.lane.b32.xlu0 %v690, 4
        %v794 = vpop.permute.xlu0 %793
        %795 = vrot.lane.b32.xlu0 %v704, 4
        %v796 = vpop.permute.xlu0 %795
        %797 = vrot.lane.b32.xlu0 %v714, 4
        %v798 = vpop.permute.xlu0 %797
        %799 = vrot.lane.b32.xlu0 %v728, 4
        %v800 = vpop.permute.xlu0 %799
        %801 = vrot.lane.b32.xlu0 %v738, 4
        %v802 = vpop.permute.xlu0 %801
        %vm835 = vcmask 60448
        %836 = vst.msk [vmem:[#allocation2] sm:$0xf] %vm835, %v740
        %837 = vst.msk [vmem:[#allocation2 + $0x4] sm:$0xf] %vm835, %v742
        %838 = vst.msk [vmem:[#allocation2 + $0x8] sm:$0xf] %vm835, %v744
        %839 = vst.msk [vmem:[#allocation2 + $0xc] sm:$0xf] %vm835, %v746
        %840 = vst.msk [vmem:[#allocation2 + $0x10] sm:$0xf] %vm835, %v748
        %841 = vst.msk [vmem:[#allocation2 + $0x14] sm:$0xf] %vm835, %v750
        %842 = vst.msk [vmem:[#allocation2 + $0x18] sm:$0xf] %vm835, %v752
        %843 = vst.msk [vmem:[#allocation2 + $0x1c] sm:$0xf] %vm835, %v754
        %844 = vst.msk [vmem:[#allocation2 + $0x20] sm:$0xf] %vm835, %v756
        %845 = vst.msk [vmem:[#allocation2 + $0x24] sm:$0xf] %vm835, %v758
        %846 = vst.msk [vmem:[#allocation2 + $0x28] sm:$0xf] %vm835, %v760
        %847 = vst.msk [vmem:[#allocation2 + $0x2c] sm:$0xf] %vm835, %v762
        %848 = vst.msk [vmem:[#allocation2 + $0x30] sm:$0xf] %vm835, %v764
        %849 = vst.msk [vmem:[#allocation2 + $0x34] sm:$0xf] %vm835, %v766
        %850 = vst.msk [vmem:[#allocation2 + $0x38] sm:$0xf] %vm835, %v768
        %851 = vst.msk [vmem:[#allocation2 + $0x3c] sm:$0xf] %vm835, %v770
        %852 = vst.msk [vmem:[#allocation2 + $0x40] sm:$0xf] %vm835, %v772
        %853 = vst.msk [vmem:[#allocation2 + $0x44] sm:$0xf] %vm835, %v774
        %854 = vst.msk [vmem:[#allocation2 + $0x48] sm:$0xf] %vm835, %v776
        %855 = vst.msk [vmem:[#allocation2 + $0x4c] sm:$0xf] %vm835, %v778
        %856 = vst.msk [vmem:[#allocation2 + $0x50] sm:$0xf] %vm835, %v780
        %857 = vst.msk [vmem:[#allocation2 + $0x54] sm:$0xf] %vm835, %v782
        %858 = vst.msk [vmem:[#allocation2 + $0x58] sm:$0xf] %vm835, %v784
        %859 = vst.msk [vmem:[#allocation2 + $0x5c] sm:$0xf] %vm835, %v786
        %860 = vst.msk [vmem:[#allocation2 + $0x60] sm:$0xf] %vm835, %v788
        %861 = vst.msk [vmem:[#allocation2 + $0x64] sm:$0xf] %vm835, %v790
        %862 = vst.msk [vmem:[#allocation2 + $0x68] sm:$0xf] %vm835, %v792
        %863 = vst.msk [vmem:[#allocation2 + $0x6c] sm:$0xf] %vm835, %v794
        %864 = vst.msk [vmem:[#allocation2 + $0x70] sm:$0xf] %vm835, %v796
        %865 = vst.msk [vmem:[#allocation2 + $0x74] sm:$0xf] %vm835, %v798
        %866 = vst.msk [vmem:[#allocation2 + $0x78] sm:$0xf] %vm835, %v800
        %867 = vst.msk [vmem:[#allocation2 + $0x7c] sm:$0xf] %vm835, %v802
        %v868 = vld [vmem:[%s237] sm:$0xe]
        %v869 = vld [vmem:[%s237 + $0x4] sm:$0xf]
        %v870 = vld [vmem:[%s237 + $0x8] sm:$0x1]
        %v871 = vld [vmem:[%s237 + $0xc] sm:$0xe]
        %v872 = vld [vmem:[%s237 + $0x10] sm:$0xf]
        %v873 = vld [vmem:[%s237 + $0x14] sm:$0x1]
        %v874 = vld [vmem:[%s237 + $0x18] sm:$0xe]
        %v875 = vld [vmem:[%s237 + $0x1c] sm:$0xf]
        %v876 = vld [vmem:[%s237 + $0x20] sm:$0x1]
        %v877 = vld [vmem:[%s237 + $0x24] sm:$0xe]
        %v878 = vld [vmem:[%s237 + $0x28] sm:$0xf]
        %v879 = vld [vmem:[%s237 + $0x2c] sm:$0x1]
        %v880 = vld [vmem:[%s237 + $0x30] sm:$0xe]
        %v881 = vld [vmem:[%s237 + $0x34] sm:$0xf]
        %v882 = vld [vmem:[%s237 + $0x38] sm:$0x1]
        %v883 = vld [vmem:[%s237 + $0x3c] sm:$0xe]
        %v884 = vld [vmem:[%s237 + $0x40] sm:$0xf]
        %v885 = vld [vmem:[%s237 + $0x44] sm:$0x1]
        %v886 = vld [vmem:[%s237 + $0x48] sm:$0xe]
        %v887 = vld [vmem:[%s237 + $0x4c] sm:$0xf]
        %v888 = vld [vmem:[%s237 + $0x50] sm:$0x1]
        %v889 = vld [vmem:[%s237 + $0x54] sm:$0xe]
        %v890 = vld [vmem:[%s237 + $0x58] sm:$0xf]
        %v891 = vld [vmem:[%s237 + $0x5c] sm:$0x1]
        %v892 = vld [vmem:[%s237 + $0x60] sm:$0xe]
        %v893 = vld [vmem:[%s237 + $0x64] sm:$0xf]
        %v894 = vld [vmem:[%s237 + $0x68] sm:$0x1]
        %v895 = vld [vmem:[%s237 + $0x6c] sm:$0xe]
        %v896 = vld [vmem:[%s237 + $0x70] sm:$0xf]
        %v897 = vld [vmem:[%s237 + $0x74] sm:$0x1]
        %v898 = vld [vmem:[%s237 + $0x78] sm:$0xe]
        %v899 = vld [vmem:[%s237 + $0x7c] sm:$0xf]
        %v900 = vld [vmem:[%s237 + $0x80] sm:$0x1]
        %v901 = vld [vmem:[%s237 + $0x84] sm:$0xe]
        %v902 = vld [vmem:[%s237 + $0x88] sm:$0xf]
        %v903 = vld [vmem:[%s237 + $0x8c] sm:$0x1]
        %v904 = vld [vmem:[%s237 + $0x90] sm:$0xe]
        %v905 = vld [vmem:[%s237 + $0x94] sm:$0xf]
        %v906 = vld [vmem:[%s237 + $0x98] sm:$0x1]
        %v907 = vld [vmem:[%s237 + $0x9c] sm:$0xe]
        %v908 = vld [vmem:[%s237 + $0xa0] sm:$0xf]
        %v909 = vld [vmem:[%s237 + $0xa4] sm:$0x1]
        %v910 = vld [vmem:[%s237 + $0xa8] sm:$0xe]
        %v911 = vld [vmem:[%s237 + $0xac] sm:$0xf]
        %v912 = vld [vmem:[%s237 + $0xb0] sm:$0x1]
        %v913 = vld [vmem:[%s237 + $0xb4] sm:$0xe]
        %v914 = vld [vmem:[%s237 + $0xb8] sm:$0xf]
        %v915 = vld [vmem:[%s237 + $0xbc] sm:$0x1]
        %vm964 = vcmask 1042432
        %vm965 = vcmask 1046532
        %vm966 = vmor %vm964, %vm965
        %v967 = vrot.slane %v868, 5
        %v968 = vrot.slane %v967, 4
        %v969 = vrot.slane %v869, 5
        %v970 = vsel %vm966, %v968, %v969
        %v971 = vrot.slane %v969, 4
        %v972 = vrot.slane %v870, 5
        %v973 = vsel %vm966, %v971, %v972
        %v974 = vrot.slane %v871, 5
        %v975 = vrot.slane %v974, 4
        %v976 = vrot.slane %v872, 5
        %v977 = vsel %vm966, %v975, %v976
        %v978 = vrot.slane %v976, 4
        %v979 = vrot.slane %v873, 5
        %v980 = vsel %vm966, %v978, %v979
        %v981 = vrot.slane %v874, 5
        %v982 = vrot.slane %v981, 4
        %v983 = vrot.slane %v875, 5
        %v984 = vsel %vm966, %v982, %v983
        %v985 = vrot.slane %v983, 4
        %v986 = vrot.slane %v876, 5
        %v987 = vsel %vm966, %v985, %v986
        %v988 = vrot.slane %v877, 5
        %v989 = vrot.slane %v988, 4
        %v990 = vrot.slane %v878, 5
        %v991 = vsel %vm966, %v989, %v990
        %v992 = vrot.slane %v990, 4
        %v993 = vrot.slane %v879, 5
        %v994 = vsel %vm966, %v992, %v993
        %v995 = vrot.slane %v880, 5
        %v996 = vrot.slane %v995, 4
        %v997 = vrot.slane %v881, 5
        %v998 = vsel %vm966, %v996, %v997
        %v999 = vrot.slane %v997, 4
        %v1000 = vrot.slane %v882, 5
        %v1001 = vsel %vm966, %v999, %v1000
        %v1002 = vrot.slane %v883, 5
        %v1003 = vrot.slane %v1002, 4
        %v1004 = vrot.slane %v884, 5
        %v1005 = vsel %vm966, %v1003, %v1004
        %v1006 = vrot.slane %v1004, 4
        %v1007 = vrot.slane %v885, 5
        %v1008 = vsel %vm966, %v1006, %v1007
        %v1009 = vrot.slane %v886, 5
        %v1010 = vrot.slane %v1009, 4
        %v1011 = vrot.slane %v887, 5
        %v1012 = vsel %vm966, %v1010, %v1011
        %v1013 = vrot.slane %v1011, 4
        %v1014 = vrot.slane %v888, 5
        %v1015 = vsel %vm966, %v1013, %v1014
        %v1016 = vrot.slane %v889, 5
        %v1017 = vrot.slane %v1016, 4
        %v1018 = vrot.slane %v890, 5
        %v1019 = vsel %vm966, %v1017, %v1018
        %v1020 = vrot.slane %v1018, 4
        %v1021 = vrot.slane %v891, 5
        %v1022 = vsel %vm966, %v1020, %v1021
        %v1023 = vrot.slane %v892, 5
        %v1024 = vrot.slane %v1023, 4
        %v1025 = vrot.slane %v893, 5
        %v1026 = vsel %vm966, %v1024, %v1025
        %v1027 = vrot.slane %v1025, 4
        %v1028 = vrot.slane %v894, 5
        %v1029 = vsel %vm966, %v1027, %v1028
        %v1030 = vrot.slane %v895, 5
        %v1031 = vrot.slane %v1030, 4
        %v1032 = vrot.slane %v896, 5
        %v1033 = vsel %vm966, %v1031, %v1032
        %v1034 = vrot.slane %v1032, 4
        %v1035 = vrot.slane %v897, 5
        %v1036 = vsel %vm966, %v1034, %v1035
        %v1037 = vrot.slane %v898, 5
        %v1038 = vrot.slane %v1037, 4
        %v1039 = vrot.slane %v899, 5
        %v1040 = vsel %vm966, %v1038, %v1039
        %v1041 = vrot.slane %v1039, 4
        %v1042 = vrot.slane %v900, 5
        %v1043 = vsel %vm966, %v1041, %v1042
        %v1044 = vrot.slane %v901, 5
        %v1045 = vrot.slane %v1044, 4
        %v1046 = vrot.slane %v902, 5
        %v1047 = vsel %vm966, %v1045, %v1046
        %v1048 = vrot.slane %v1046, 4
        %v1049 = vrot.slane %v903, 5
        %v1050 = vsel %vm966, %v1048, %v1049
        %v1051 = vrot.slane %v904, 5
        %v1052 = vrot.slane %v1051, 4
        %v1053 = vrot.slane %v905, 5
        %v1054 = vsel %vm966, %v1052, %v1053
        %v1055 = vrot.slane %v1053, 4
        %v1056 = vrot.slane %v906, 5
        %v1057 = vsel %vm966, %v1055, %v1056
        %v1058 = vrot.slane %v907, 5
        %v1059 = vrot.slane %v1058, 4
        %v1060 = vrot.slane %v908, 5
        %v1061 = vsel %vm966, %v1059, %v1060
        %v1062 = vrot.slane %v1060, 4
        %v1063 = vrot.slane %v909, 5
        %v1064 = vsel %vm966, %v1062, %v1063
        %v1065 = vrot.slane %v910, 5
        %v1066 = vrot.slane %v1065, 4
        %v1067 = vrot.slane %v911, 5
        %v1068 = vsel %vm966, %v1066, %v1067
        %v1069 = vrot.slane %v1067, 4
        %v1070 = vrot.slane %v912, 5
        %v1071 = vsel %vm966, %v1069, %v1070
        %v1072 = vrot.slane %v913, 5
        %v1073 = vrot.slane %v1072, 4
        %v1074 = vrot.slane %v914, 5
        %v1075 = vsel %vm966, %v1073, %v1074
        %v1076 = vrot.slane %v1074, 4
        %v1077 = vrot.slane %v915, 5
        %v1078 = vsel %vm966, %v1076, %v1077
        %1079 = vrot.lane.b32.xlu0 %v970, 8
        %v1080 = vpop.permute.xlu0 %1079
        %1081 = vrot.lane.b32.xlu0 %v973, 8
        %v1082 = vpop.permute.xlu0 %1081
        %1083 = vrot.lane.b32.xlu0 %v977, 8
        %v1084 = vpop.permute.xlu0 %1083
        %1085 = vrot.lane.b32.xlu0 %v980, 8
        %v1086 = vpop.permute.xlu0 %1085
        %1087 = vrot.lane.b32.xlu0 %v984, 8
        %v1088 = vpop.permute.xlu0 %1087
        %1089 = vrot.lane.b32.xlu0 %v987, 8
        %v1090 = vpop.permute.xlu0 %1089
        %1091 = vrot.lane.b32.xlu0 %v991, 8
        %v1092 = vpop.permute.xlu0 %1091
        %1093 = vrot.lane.b32.xlu0 %v994, 8
        %v1094 = vpop.permute.xlu0 %1093
        %1095 = vrot.lane.b32.xlu0 %v998, 8
        %v1096 = vpop.permute.xlu0 %1095
        %1097 = vrot.lane.b32.xlu0 %v1001, 8
        %v1098 = vpop.permute.xlu0 %1097
        %1099 = vrot.lane.b32.xlu0 %v1005, 8
        %v1100 = vpop.permute.xlu0 %1099
        %1101 = vrot.lane.b32.xlu0 %v1008, 8
        %v1102 = vpop.permute.xlu0 %1101
        %1103 = vrot.lane.b32.xlu0 %v1012, 8
        %v1104 = vpop.permute.xlu0 %1103
        %1105 = vrot.lane.b32.xlu0 %v1015, 8
        %v1106 = vpop.permute.xlu0 %1105
        %1107 = vrot.lane.b32.xlu0 %v1019, 8
        %v1108 = vpop.permute.xlu0 %1107
        %1109 = vrot.lane.b32.xlu0 %v1022, 8
        %v1110 = vpop.permute.xlu0 %1109
        %1111 = vrot.lane.b32.xlu0 %v1026, 8
        %v1112 = vpop.permute.xlu0 %1111
        %1113 = vrot.lane.b32.xlu0 %v1029, 8
        %v1114 = vpop.permute.xlu0 %1113
        %1115 = vrot.lane.b32.xlu0 %v1033, 8
        %v1116 = vpop.permute.xlu0 %1115
        %1117 = vrot.lane.b32.xlu0 %v1036, 8
        %v1118 = vpop.permute.xlu0 %1117
        %1119 = vrot.lane.b32.xlu0 %v1040, 8
        %v1120 = vpop.permute.xlu0 %1119
        %1121 = vrot.lane.b32.xlu0 %v1043, 8
        %v1122 = vpop.permute.xlu0 %1121
        %1123 = vrot.lane.b32.xlu0 %v1047, 8
        %v1124 = vpop.permute.xlu0 %1123
        %1125 = vrot.lane.b32.xlu0 %v1050, 8
        %v1126 = vpop.permute.xlu0 %1125
        %1127 = vrot.lane.b32.xlu0 %v1054, 8
        %v1128 = vpop.permute.xlu0 %1127
        %1129 = vrot.lane.b32.xlu0 %v1057, 8
        %v1130 = vpop.permute.xlu0 %1129
        %1131 = vrot.lane.b32.xlu0 %v1061, 8
        %v1132 = vpop.permute.xlu0 %1131
        %1133 = vrot.lane.b32.xlu0 %v1064, 8
        %v1134 = vpop.permute.xlu0 %1133
        %1135 = vrot.lane.b32.xlu0 %v1068, 8
        %v1136 = vpop.permute.xlu0 %1135
        %1137 = vrot.lane.b32.xlu0 %v1071, 8
        %v1138 = vpop.permute.xlu0 %1137
        %1139 = vrot.lane.b32.xlu0 %v1075, 8
        %v1140 = vpop.permute.xlu0 %1139
        %1141 = vrot.lane.b32.xlu0 %v1078, 8
        %v1142 = vpop.permute.xlu0 %1141
        %vm1175 = vcmask 93248
        %1176 = vst.msk [vmem:[#allocation2] sm:$0xf] %vm1175, %v1080
        %1177 = vst.msk [vmem:[#allocation2 + $0x4] sm:$0xf] %vm1175, %v1082
        %1178 = vst.msk [vmem:[#allocation2 + $0x8] sm:$0xf] %vm1175, %v1084
        %1179 = vst.msk [vmem:[#allocation2 + $0xc] sm:$0xf] %vm1175, %v1086
        %1180 = vst.msk [vmem:[#allocation2 + $0x10] sm:$0xf] %vm1175, %v1088
        %1181 = vst.msk [vmem:[#allocation2 + $0x14] sm:$0xf] %vm1175, %v1090
        %1182 = vst.msk [vmem:[#allocation2 + $0x18] sm:$0xf] %vm1175, %v1092
        %1183 = vst.msk [vmem:[#allocation2 + $0x1c] sm:$0xf] %vm1175, %v1094
        %1184 = vst.msk [vmem:[#allocation2 + $0x20] sm:$0xf] %vm1175, %v1096
        %1185 = vst.msk [vmem:[#allocation2 + $0x24] sm:$0xf] %vm1175, %v1098
        %1186 = vst.msk [vmem:[#allocation2 + $0x28] sm:$0xf] %vm1175, %v1100
        %1187 = vst.msk [vmem:[#allocation2 + $0x2c] sm:$0xf] %vm1175, %v1102
        %1188 = vst.msk [vmem:[#allocation2 + $0x30] sm:$0xf] %vm1175, %v1104
        %1189 = vst.msk [vmem:[#allocation2 + $0x34] sm:$0xf] %vm1175, %v1106
        %1190 = vst.msk [vmem:[#allocation2 + $0x38] sm:$0xf] %vm1175, %v1108
        %1191 = vst.msk [vmem:[#allocation2 + $0x3c] sm:$0xf] %vm1175, %v1110
        %1192 = vst.msk [vmem:[#allocation2 + $0x40] sm:$0xf] %vm1175, %v1112
        %1193 = vst.msk [vmem:[#allocation2 + $0x44] sm:$0xf] %vm1175, %v1114
        %1194 = vst.msk [vmem:[#allocation2 + $0x48] sm:$0xf] %vm1175, %v1116
        %1195 = vst.msk [vmem:[#allocation2 + $0x4c] sm:$0xf] %vm1175, %v1118
        %1196 = vst.msk [vmem:[#allocation2 + $0x50] sm:$0xf] %vm1175, %v1120
        %1197 = vst.msk [vmem:[#allocation2 + $0x54] sm:$0xf] %vm1175, %v1122
        %1198 = vst.msk [vmem:[#allocation2 + $0x58] sm:$0xf] %vm1175, %v1124
        %1199 = vst.msk [vmem:[#allocation2 + $0x5c] sm:$0xf] %vm1175, %v1126
        %1200 = vst.msk [vmem:[#allocation2 + $0x60] sm:$0xf] %vm1175, %v1128
        %1201 = vst.msk [vmem:[#allocation2 + $0x64] sm:$0xf] %vm1175, %v1130
        %1202 = vst.msk [vmem:[#allocation2 + $0x68] sm:$0xf] %vm1175, %v1132
        %1203 = vst.msk [vmem:[#allocation2 + $0x6c] sm:$0xf] %vm1175, %v1134
        %1204 = vst.msk [vmem:[#allocation2 + $0x70] sm:$0xf] %vm1175, %v1136
        %1205 = vst.msk [vmem:[#allocation2 + $0x74] sm:$0xf] %vm1175, %v1138
        %1206 = vst.msk [vmem:[#allocation2 + $0x78] sm:$0xf] %vm1175, %v1140
        %1207 = vst.msk [vmem:[#allocation2 + $0x7c] sm:$0xf] %vm1175, %v1142
        %s1208 = scalar_lea.vmem %s237, 12
        %v1209 = vld [vmem:[%s1208] sm:$0xf]
        %v1210 = vld [vmem:[%s1208 + $0x4] sm:$0xf]
        %v1211 = vld [vmem:[%s1208 + $0xc] sm:$0xf]
        %v1212 = vld [vmem:[%s1208 + $0x10] sm:$0xf]
        %v1213 = vld [vmem:[%s1208 + $0x18] sm:$0xf]
        %v1214 = vld [vmem:[%s1208 + $0x1c] sm:$0xf]
        %v1215 = vld [vmem:[%s1208 + $0x24] sm:$0xf]
        %v1216 = vld [vmem:[%s1208 + $0x28] sm:$0xf]
        %v1217 = vld [vmem:[%s1208 + $0x30] sm:$0xf]
        %v1218 = vld [vmem:[%s1208 + $0x34] sm:$0xf]
        %v1219 = vld [vmem:[%s1208 + $0x3c] sm:$0xf]
        %v1220 = vld [vmem:[%s1208 + $0x40] sm:$0xf]
        %v1221 = vld [vmem:[%s1208 + $0x48] sm:$0xf]
        %v1222 = vld [vmem:[%s1208 + $0x4c] sm:$0xf]
        %v1223 = vld [vmem:[%s1208 + $0x54] sm:$0xf]
        %v1224 = vld [vmem:[%s1208 + $0x58] sm:$0xf]
        %v1225 = vld [vmem:[%s1208 + $0x60] sm:$0xf]
        %v1226 = vld [vmem:[%s1208 + $0x64] sm:$0xf]
        %v1227 = vld [vmem:[%s1208 + $0x6c] sm:$0xf]
        %v1228 = vld [vmem:[%s1208 + $0x70] sm:$0xf]
        %v1229 = vld [vmem:[%s1208 + $0x78] sm:$0xf]
        %v1230 = vld [vmem:[%s1208 + $0x7c] sm:$0xf]
        %v1231 = vld [vmem:[%s1208 + $0x84] sm:$0xf]
        %v1232 = vld [vmem:[%s1208 + $0x88] sm:$0xf]
        %v1233 = vld [vmem:[%s1208 + $0x90] sm:$0xf]
        %v1234 = vld [vmem:[%s1208 + $0x94] sm:$0xf]
        %v1235 = vld [vmem:[%s1208 + $0x9c] sm:$0xf]
        %v1236 = vld [vmem:[%s1208 + $0xa0] sm:$0xf]
        %v1237 = vld [vmem:[%s1208 + $0xa8] sm:$0xf]
        %v1238 = vld [vmem:[%s1208 + $0xac] sm:$0xf]
        %v1239 = vld [vmem:[%s1208 + $0xb4] sm:$0xf]
        %v1240 = vld [vmem:[%s1208 + $0xb8] sm:$0xf]
        %1273 = vrot.lane.b32.xlu0 %v1209, 12
        %v1274 = vpop.permute.xlu0 %1273
        %1275 = vrot.lane.b32.xlu0 %v1210, 12
        %v1276 = vpop.permute.xlu0 %1275
        %1277 = vrot.lane.b32.xlu0 %v1211, 12
        %v1278 = vpop.permute.xlu0 %1277
        %1279 = vrot.lane.b32.xlu0 %v1212, 12
        %v1280 = vpop.permute.xlu0 %1279
        %1281 = vrot.lane.b32.xlu0 %v1213, 12
        %v1282 = vpop.permute.xlu0 %1281
        %1283 = vrot.lane.b32.xlu0 %v1214, 12
        %v1284 = vpop.permute.xlu0 %1283
        %1285 = vrot.lane.b32.xlu0 %v1215, 12
        %v1286 = vpop.permute.xlu0 %1285
        %1287 = vrot.lane.b32.xlu0 %v1216, 12
        %v1288 = vpop.permute.xlu0 %1287
        %1289 = vrot.lane.b32.xlu0 %v1217, 12
        %v1290 = vpop.permute.xlu0 %1289
        %1291 = vrot.lane.b32.xlu0 %v1218, 12
        %v1292 = vpop.permute.xlu0 %1291
        %1293 = vrot.lane.b32.xlu0 %v1219, 12
        %v1294 = vpop.permute.xlu0 %1293
        %1295 = vrot.lane.b32.xlu0 %v1220, 12
        %v1296 = vpop.permute.xlu0 %1295
        %1297 = vrot.lane.b32.xlu0 %v1221, 12
        %v1298 = vpop.permute.xlu0 %1297
        %1299 = vrot.lane.b32.xlu0 %v1222, 12
        %v1300 = vpop.permute.xlu0 %1299
        %1301 = vrot.lane.b32.xlu0 %v1223, 12
        %v1302 = vpop.permute.xlu0 %1301
        %1303 = vrot.lane.b32.xlu0 %v1224, 12
        %v1304 = vpop.permute.xlu0 %1303
        %1305 = vrot.lane.b32.xlu0 %v1225, 12
        %v1306 = vpop.permute.xlu0 %1305
        %1307 = vrot.lane.b32.xlu0 %v1226, 12
        %v1308 = vpop.permute.xlu0 %1307
        %1309 = vrot.lane.b32.xlu0 %v1227, 12
        %v1310 = vpop.permute.xlu0 %1309
        %1311 = vrot.lane.b32.xlu0 %v1228, 12
        %v1312 = vpop.permute.xlu0 %1311
        %1313 = vrot.lane.b32.xlu0 %v1229, 12
        %v1314 = vpop.permute.xlu0 %1313
        %1315 = vrot.lane.b32.xlu0 %v1230, 12
        %v1316 = vpop.permute.xlu0 %1315
        %1317 = vrot.lane.b32.xlu0 %v1231, 12
        %v1318 = vpop.permute.xlu0 %1317
        %1319 = vrot.lane.b32.xlu0 %v1232, 12
        %v1320 = vpop.permute.xlu0 %1319
        %1321 = vrot.lane.b32.xlu0 %v1233, 12
        %v1322 = vpop.permute.xlu0 %1321
        %1323 = vrot.lane.b32.xlu0 %v1234, 12
        %v1324 = vpop.permute.xlu0 %1323
        %1325 = vrot.lane.b32.xlu0 %v1235, 12
        %v1326 = vpop.permute.xlu0 %1325
        %1327 = vrot.lane.b32.xlu0 %v1236, 12
        %v1328 = vpop.permute.xlu0 %1327
        %1329 = vrot.lane.b32.xlu0 %v1237, 12
        %v1330 = vpop.permute.xlu0 %1329
        %1331 = vrot.lane.b32.xlu0 %v1238, 12
        %v1332 = vpop.permute.xlu0 %1331
        %1333 = vrot.lane.b32.xlu0 %v1239, 12
        %v1334 = vpop.permute.xlu0 %1333
        %1335 = vrot.lane.b32.xlu0 %v1240, 12
        %v1336 = vpop.permute.xlu0 %1335
        %vm1369 = vcmask 126048
        %1370 = vst.msk [vmem:[#allocation2] sm:$0xf] %vm1369, %v1274
        %1371 = vst.msk [vmem:[#allocation2 + $0x4] sm:$0xf] %vm1369, %v1276
        %1372 = vst.msk [vmem:[#allocation2 + $0x8] sm:$0xf] %vm1369, %v1278
        %1373 = vst.msk [vmem:[#allocation2 + $0xc] sm:$0xf] %vm1369, %v1280
        %1374 = vst.msk [vmem:[#allocation2 + $0x10] sm:$0xf] %vm1369, %v1282
        %1375 = vst.msk [vmem:[#allocation2 + $0x14] sm:$0xf] %vm1369, %v1284
        %1376 = vst.msk [vmem:[#allocation2 + $0x18] sm:$0xf] %vm1369, %v1286
        %1377 = vst.msk [vmem:[#allocation2 + $0x1c] sm:$0xf] %vm1369, %v1288
        %1378 = vst.msk [vmem:[#allocation2 + $0x20] sm:$0xf] %vm1369, %v1290
        %1379 = vst.msk [vmem:[#allocation2 + $0x24] sm:$0xf] %vm1369, %v1292
        %1380 = vst.msk [vmem:[#allocation2 + $0x28] sm:$0xf] %vm1369, %v1294
        %1381 = vst.msk [vmem:[#allocation2 + $0x2c] sm:$0xf] %vm1369, %v1296
        %1382 = vst.msk [vmem:[#allocation2 + $0x30] sm:$0xf] %vm1369, %v1298
        %1383 = vst.msk [vmem:[#allocation2 + $0x34] sm:$0xf] %vm1369, %v1300
        %1384 = vst.msk [vmem:[#allocation2 + $0x38] sm:$0xf] %vm1369, %v1302
        %1385 = vst.msk [vmem:[#allocation2 + $0x3c] sm:$0xf] %vm1369, %v1304
        %1386 = vst.msk [vmem:[#allocation2 + $0x40] sm:$0xf] %vm1369, %v1306
        %1387 = vst.msk [vmem:[#allocation2 + $0x44] sm:$0xf] %vm1369, %v1308
        %1388 = vst.msk [vmem:[#allocation2 + $0x48] sm:$0xf] %vm1369, %v1310
        %1389 = vst.msk [vmem:[#allocation2 + $0x4c] sm:$0xf] %vm1369, %v1312
        %1390 = vst.msk [vmem:[#allocation2 + $0x50] sm:$0xf] %vm1369, %v1314
        %1391 = vst.msk [vmem:[#allocation2 + $0x54] sm:$0xf] %vm1369, %v1316
        %1392 = vst.msk [vmem:[#allocation2 + $0x58] sm:$0xf] %vm1369, %v1318
        %1393 = vst.msk [vmem:[#allocation2 + $0x5c] sm:$0xf] %vm1369, %v1320
        %1394 = vst.msk [vmem:[#allocation2 + $0x60] sm:$0xf] %vm1369, %v1322
        %1395 = vst.msk [vmem:[#allocation2 + $0x64] sm:$0xf] %vm1369, %v1324
        %1396 = vst.msk [vmem:[#allocation2 + $0x68] sm:$0xf] %vm1369, %v1326
        %1397 = vst.msk [vmem:[#allocation2 + $0x6c] sm:$0xf] %vm1369, %v1328
        %1398 = vst.msk [vmem:[#allocation2 + $0x70] sm:$0xf] %vm1369, %v1330
        %1399 = vst.msk [vmem:[#allocation2 + $0x74] sm:$0xf] %vm1369, %v1332
        %1400 = vst.msk [vmem:[#allocation2 + $0x78] sm:$0xf] %vm1369, %v1334
        %1401 = vst.msk [vmem:[#allocation2 + $0x7c] sm:$0xf] %vm1369, %v1336
        %v1402 = vld [vmem:[%s1208] sm:$0xf]
        %v1403 = vld [vmem:[%s1208 + $0x4] sm:$0xf]
        %v1404 = vld [vmem:[%s1208 + $0x8] sm:$0x1]
        %v1405 = vld [vmem:[%s1208 + $0xc] sm:$0xf]
        %v1406 = vld [vmem:[%s1208 + $0x10] sm:$0xf]
        %v1407 = vld [vmem:[%s1208 + $0x14] sm:$0x1]
        %v1408 = vld [vmem:[%s1208 + $0x18] sm:$0xf]
        %v1409 = vld [vmem:[%s1208 + $0x1c] sm:$0xf]
        %v1410 = vld [vmem:[%s1208 + $0x20] sm:$0x1]
        %v1411 = vld [vmem:[%s1208 + $0x24] sm:$0xf]
        %v1412 = vld [vmem:[%s1208 + $0x28] sm:$0xf]
        %v1413 = vld [vmem:[%s1208 + $0x2c] sm:$0x1]
        %v1414 = vld [vmem:[%s1208 + $0x30] sm:$0xf]
        %v1415 = vld [vmem:[%s1208 + $0x34] sm:$0xf]
        %v1416 = vld [vmem:[%s1208 + $0x38] sm:$0x1]
        %v1417 = vld [vmem:[%s1208 + $0x3c] sm:$0xf]
        %v1418 = vld [vmem:[%s1208 + $0x40] sm:$0xf]
        %v1419 = vld [vmem:[%s1208 + $0x44] sm:$0x1]
        %v1420 = vld [vmem:[%s1208 + $0x48] sm:$0xf]
        %v1421 = vld [vmem:[%s1208 + $0x4c] sm:$0xf]
        %v1422 = vld [vmem:[%s1208 + $0x50] sm:$0x1]
        %v1423 = vld [vmem:[%s1208 + $0x54] sm:$0xf]
        %v1424 = vld [vmem:[%s1208 + $0x58] sm:$0xf]
        %v1425 = vld [vmem:[%s1208 + $0x5c] sm:$0x1]
        %v1426 = vld [vmem:[%s1208 + $0x60] sm:$0xf]
        %v1427 = vld [vmem:[%s1208 + $0x64] sm:$0xf]
        %v1428 = vld [vmem:[%s1208 + $0x68] sm:$0x1]
        %v1429 = vld [vmem:[%s1208 + $0x6c] sm:$0xf]
        %v1430 = vld [vmem:[%s1208 + $0x70] sm:$0xf]
        %v1431 = vld [vmem:[%s1208 + $0x74] sm:$0x1]
        %v1432 = vld [vmem:[%s1208 + $0x78] sm:$0xf]
        %v1433 = vld [vmem:[%s1208 + $0x7c] sm:$0xf]
        %v1434 = vld [vmem:[%s1208 + $0x80] sm:$0x1]
        %v1435 = vld [vmem:[%s1208 + $0x84] sm:$0xf]
        %v1436 = vld [vmem:[%s1208 + $0x88] sm:$0xf]
        %v1437 = vld [vmem:[%s1208 + $0x8c] sm:$0x1]
        %v1438 = vld [vmem:[%s1208 + $0x90] sm:$0xf]
        %v1439 = vld [vmem:[%s1208 + $0x94] sm:$0xf]
        %v1440 = vld [vmem:[%s1208 + $0x98] sm:$0x1]
        %v1441 = vld [vmem:[%s1208 + $0x9c] sm:$0xf]
        %v1442 = vld [vmem:[%s1208 + $0xa0] sm:$0xf]
        %v1443 = vld [vmem:[%s1208 + $0xa4] sm:$0x1]
        %v1444 = vld [vmem:[%s1208 + $0xa8] sm:$0xf]
        %v1445 = vld [vmem:[%s1208 + $0xac] sm:$0xf]
        %v1446 = vld [vmem:[%s1208 + $0xb0] sm:$0x1]
        %v1447 = vld [vmem:[%s1208 + $0xb4] sm:$0xf]
        %v1448 = vld [vmem:[%s1208 + $0xb8] sm:$0xf]
        %v1449 = vld [vmem:[%s1208 + $0xbc] sm:$0x1]
        %v1451 = vshrl.u32 %v1402, 16
        %v1453 = vrot.slane %v1451, 4
        %v1454 = vshll.u32 %v1402, 16
        %v1456 = vrot.slane %v1454, 5
        %v1457 = vor.u32 %v1453, %v1456
        %v1458 = vrot.slane %v1457, 4
        %v1460 = vshll.u32 %v1403, 16
        %v1462 = vrot.slane %v1460, 5
        %v1463 = vsel %vm354, %v1458, %v1462
        %v1464 = vshrl.u32 %v1403, 16
        %v1466 = vrot.slane %v1464, 4
        %v1467 = vor.u32 %v1466, %v1462
        %v1468 = vrot.slane %v1467, 4
        %v1470 = vshll.u32 %v1404, 16
        %v1472 = vrot.slane %v1470, 5
        %v1473 = vsel %vm354, %v1468, %v1472
        %v1475 = vshrl.u32 %v1405, 16
        %v1477 = vrot.slane %v1475, 4
        %v1478 = vshll.u32 %v1405, 16
        %v1480 = vrot.slane %v1478, 5
        %v1481 = vor.u32 %v1477, %v1480
        %v1482 = vrot.slane %v1481, 4
        %v1484 = vshll.u32 %v1406, 16
        %v1486 = vrot.slane %v1484, 5
        %v1487 = vsel %vm354, %v1482, %v1486
        %v1488 = vshrl.u32 %v1406, 16
        %v1490 = vrot.slane %v1488, 4
        %v1491 = vor.u32 %v1490, %v1486
        %v1492 = vrot.slane %v1491, 4
        %v1494 = vshll.u32 %v1407, 16
        %v1496 = vrot.slane %v1494, 5
        %v1497 = vsel %vm354, %v1492, %v1496
        %v1499 = vshrl.u32 %v1408, 16
        %v1501 = vrot.slane %v1499, 4
        %v1502 = vshll.u32 %v1408, 16
        %v1504 = vrot.slane %v1502, 5
        %v1505 = vor.u32 %v1501, %v1504
        %v1506 = vrot.slane %v1505, 4
        %v1508 = vshll.u32 %v1409, 16
        %v1510 = vrot.slane %v1508, 5
        %v1511 = vsel %vm354, %v1506, %v1510
        %v1512 = vshrl.u32 %v1409, 16
        %v1514 = vrot.slane %v1512, 4
        %v1515 = vor.u32 %v1514, %v1510
        %v1516 = vrot.slane %v1515, 4
        %v1518 = vshll.u32 %v1410, 16
        %v1520 = vrot.slane %v1518, 5
        %v1521 = vsel %vm354, %v1516, %v1520
        %v1523 = vshrl.u32 %v1411, 16
        %v1525 = vrot.slane %v1523, 4
        %v1526 = vshll.u32 %v1411, 16
        %v1528 = vrot.slane %v1526, 5
        %v1529 = vor.u32 %v1525, %v1528
        %v1530 = vrot.slane %v1529, 4
        %v1532 = vshll.u32 %v1412, 16
        %v1534 = vrot.slane %v1532, 5
        %v1535 = vsel %vm354, %v1530, %v1534
        %v1536 = vshrl.u32 %v1412, 16
        %v1538 = vrot.slane %v1536, 4
        %v1539 = vor.u32 %v1538, %v1534
        %v1540 = vrot.slane %v1539, 4
        %v1542 = vshll.u32 %v1413, 16
        %v1544 = vrot.slane %v1542, 5
        %v1545 = vsel %vm354, %v1540, %v1544
        %v1547 = vshrl.u32 %v1414, 16
        %v1549 = vrot.slane %v1547, 4
        %v1550 = vshll.u32 %v1414, 16
        %v1552 = vrot.slane %v1550, 5
        %v1553 = vor.u32 %v1549, %v1552
        %v1554 = vrot.slane %v1553, 4
        %v1556 = vshll.u32 %v1415, 16
        %v1558 = vrot.slane %v1556, 5
        %v1559 = vsel %vm354, %v1554, %v1558
        %v1560 = vshrl.u32 %v1415, 16
        %v1562 = vrot.slane %v1560, 4
        %v1563 = vor.u32 %v1562, %v1558
        %v1564 = vrot.slane %v1563, 4
        %v1566 = vshll.u32 %v1416, 16
        %v1568 = vrot.slane %v1566, 5
        %v1569 = vsel %vm354, %v1564, %v1568
        %v1571 = vshrl.u32 %v1417, 16
        %v1573 = vrot.slane %v1571, 4
        %v1574 = vshll.u32 %v1417, 16
        %v1576 = vrot.slane %v1574, 5
        %v1577 = vor.u32 %v1573, %v1576
        %v1578 = vrot.slane %v1577, 4
        %v1580 = vshll.u32 %v1418, 16
        %v1582 = vrot.slane %v1580, 5
        %v1583 = vsel %vm354, %v1578, %v1582
        %v1584 = vshrl.u32 %v1418, 16
        %v1586 = vrot.slane %v1584, 4
        %v1587 = vor.u32 %v1586, %v1582
        %v1588 = vrot.slane %v1587, 4
        %v1590 = vshll.u32 %v1419, 16
        %v1592 = vrot.slane %v1590, 5
        %v1593 = vsel %vm354, %v1588, %v1592
        %v1595 = vshrl.u32 %v1420, 16
        %v1597 = vrot.slane %v1595, 4
        %v1598 = vshll.u32 %v1420, 16
        %v1600 = vrot.slane %v1598, 5
        %v1601 = vor.u32 %v1597, %v1600
        %v1602 = vrot.slane %v1601, 4
        %v1604 = vshll.u32 %v1421, 16
        %v1606 = vrot.slane %v1604, 5
        %v1607 = vsel %vm354, %v1602, %v1606
        %v1608 = vshrl.u32 %v1421, 16
        %v1610 = vrot.slane %v1608, 4
        %v1611 = vor.u32 %v1610, %v1606
        %v1612 = vrot.slane %v1611, 4
        %v1614 = vshll.u32 %v1422, 16
        %v1616 = vrot.slane %v1614, 5
        %v1617 = vsel %vm354, %v1612, %v1616
        %v1619 = vshrl.u32 %v1423, 16
        %v1621 = vrot.slane %v1619, 4
        %v1622 = vshll.u32 %v1423, 16
        %v1624 = vrot.slane %v1622, 5
        %v1625 = vor.u32 %v1621, %v1624
        %v1626 = vrot.slane %v1625, 4
        %v1628 = vshll.u32 %v1424, 16
        %v1630 = vrot.slane %v1628, 5
        %v1631 = vsel %vm354, %v1626, %v1630
        %v1632 = vshrl.u32 %v1424, 16
        %v1634 = vrot.slane %v1632, 4
        %v1635 = vor.u32 %v1634, %v1630
        %v1636 = vrot.slane %v1635, 4
        %v1638 = vshll.u32 %v1425, 16
        %v1640 = vrot.slane %v1638, 5
        %v1641 = vsel %vm354, %v1636, %v1640
        %v1643 = vshrl.u32 %v1426, 16
        %v1645 = vrot.slane %v1643, 4
        %v1646 = vshll.u32 %v1426, 16
        %v1648 = vrot.slane %v1646, 5
        %v1649 = vor.u32 %v1645, %v1648
        %v1650 = vrot.slane %v1649, 4
        %v1652 = vshll.u32 %v1427, 16
        %v1654 = vrot.slane %v1652, 5
        %v1655 = vsel %vm354, %v1650, %v1654
        %v1656 = vshrl.u32 %v1427, 16
        %v1658 = vrot.slane %v1656, 4
        %v1659 = vor.u32 %v1658, %v1654
        %v1660 = vrot.slane %v1659, 4
        %v1662 = vshll.u32 %v1428, 16
        %v1664 = vrot.slane %v1662, 5
        %v1665 = vsel %vm354, %v1660, %v1664
        %v1667 = vshrl.u32 %v1429, 16
        %v1669 = vrot.slane %v1667, 4
        %v1670 = vshll.u32 %v1429, 16
        %v1672 = vrot.slane %v1670, 5
        %v1673 = vor.u32 %v1669, %v1672
        %v1674 = vrot.slane %v1673, 4
        %v1676 = vshll.u32 %v1430, 16
        %v1678 = vrot.slane %v1676, 5
        %v1679 = vsel %vm354, %v1674, %v1678
        %v1680 = vshrl.u32 %v1430, 16
        %v1682 = vrot.slane %v1680, 4
        %v1683 = vor.u32 %v1682, %v1678
        %v1684 = vrot.slane %v1683, 4
        %v1686 = vshll.u32 %v1431, 16
        %v1688 = vrot.slane %v1686, 5
        %v1689 = vsel %vm354, %v1684, %v1688
        %v1691 = vshrl.u32 %v1432, 16
        %v1693 = vrot.slane %v1691, 4
        %v1694 = vshll.u32 %v1432, 16
        %v1696 = vrot.slane %v1694, 5
        %v1697 = vor.u32 %v1693, %v1696
        %v1698 = vrot.slane %v1697, 4
        %v1700 = vshll.u32 %v1433, 16
        %v1702 = vrot.slane %v1700, 5
        %v1703 = vsel %vm354, %v1698, %v1702
        %v1704 = vshrl.u32 %v1433, 16
        %v1706 = vrot.slane %v1704, 4
        %v1707 = vor.u32 %v1706, %v1702
        %v1708 = vrot.slane %v1707, 4
        %v1710 = vshll.u32 %v1434, 16
        %v1712 = vrot.slane %v1710, 5
        %v1713 = vsel %vm354, %v1708, %v1712
        %v1715 = vshrl.u32 %v1435, 16
        %v1717 = vrot.slane %v1715, 4
        %v1718 = vshll.u32 %v1435, 16
        %v1720 = vrot.slane %v1718, 5
        %v1721 = vor.u32 %v1717, %v1720
        %v1722 = vrot.slane %v1721, 4
        %v1724 = vshll.u32 %v1436, 16
        %v1726 = vrot.slane %v1724, 5
        %v1727 = vsel %vm354, %v1722, %v1726
        %v1728 = vshrl.u32 %v1436, 16
        %v1730 = vrot.slane %v1728, 4
        %v1731 = vor.u32 %v1730, %v1726
        %v1732 = vrot.slane %v1731, 4
        %v1734 = vshll.u32 %v1437, 16
        %v1736 = vrot.slane %v1734, 5
        %v1737 = vsel %vm354, %v1732, %v1736
        %v1739 = vshrl.u32 %v1438, 16
        %v1741 = vrot.slane %v1739, 4
        %v1742 = vshll.u32 %v1438, 16
        %v1744 = vrot.slane %v1742, 5
        %v1745 = vor.u32 %v1741, %v1744
        %v1746 = vrot.slane %v1745, 4
        %v1748 = vshll.u32 %v1439, 16
        %v1750 = vrot.slane %v1748, 5
        %v1751 = vsel %vm354, %v1746, %v1750
        %v1752 = vshrl.u32 %v1439, 16
        %v1754 = vrot.slane %v1752, 4
        %v1755 = vor.u32 %v1754, %v1750
        %v1756 = vrot.slane %v1755, 4
        %v1758 = vshll.u32 %v1440, 16
        %v1760 = vrot.slane %v1758, 5
        %v1761 = vsel %vm354, %v1756, %v1760
        %v1763 = vshrl.u32 %v1441, 16
        %v1765 = vrot.slane %v1763, 4
        %v1766 = vshll.u32 %v1441, 16
        %v1768 = vrot.slane %v1766, 5
        %v1769 = vor.u32 %v1765, %v1768
        %v1770 = vrot.slane %v1769, 4
        %v1772 = vshll.u32 %v1442, 16
        %v1774 = vrot.slane %v1772, 5
        %v1775 = vsel %vm354, %v1770, %v1774
        %v1776 = vshrl.u32 %v1442, 16
        %v1778 = vrot.slane %v1776, 4
        %v1779 = vor.u32 %v1778, %v1774
        %v1780 = vrot.slane %v1779, 4
        %v1782 = vshll.u32 %v1443, 16
        %v1784 = vrot.slane %v1782, 5
        %v1785 = vsel %vm354, %v1780, %v1784
        %v1787 = vshrl.u32 %v1444, 16
        %v1789 = vrot.slane %v1787, 4
        %v1790 = vshll.u32 %v1444, 16
        %v1792 = vrot.slane %v1790, 5
        %v1793 = vor.u32 %v1789, %v1792
        %v1794 = vrot.slane %v1793, 4
        %v1796 = vshll.u32 %v1445, 16
        %v1798 = vrot.slane %v1796, 5
        %v1799 = vsel %vm354, %v1794, %v1798
        %v1800 = vshrl.u32 %v1445, 16
        %v1802 = vrot.slane %v1800, 4
        %v1803 = vor.u32 %v1802, %v1798
        %v1804 = vrot.slane %v1803, 4
        %v1806 = vshll.u32 %v1446, 16
        %v1808 = vrot.slane %v1806, 5
        %v1809 = vsel %vm354, %v1804, %v1808
        %v1811 = vshrl.u32 %v1447, 16
        %v1813 = vrot.slane %v1811, 4
        %v1814 = vshll.u32 %v1447, 16
        %v1816 = vrot.slane %v1814, 5
        %v1817 = vor.u32 %v1813, %v1816
        %v1818 = vrot.slane %v1817, 4
        %v1820 = vshll.u32 %v1448, 16
        %v1822 = vrot.slane %v1820, 5
        %v1823 = vsel %vm354, %v1818, %v1822
        %v1824 = vshrl.u32 %v1448, 16
        %v1826 = vrot.slane %v1824, 4
        %v1827 = vor.u32 %v1826, %v1822
        %v1828 = vrot.slane %v1827, 4
        %v1830 = vshll.u32 %v1449, 16
        %v1832 = vrot.slane %v1830, 5
        %v1833 = vsel %vm354, %v1828, %v1832
        %1834 = vrot.lane.b32.xlu0 %v1463, 16
        %v1835 = vpop.permute.xlu0 %1834
        %1836 = vrot.lane.b32.xlu0 %v1473, 16
        %v1837 = vpop.permute.xlu0 %1836
        %1838 = vrot.lane.b32.xlu0 %v1487, 16
        %v1839 = vpop.permute.xlu0 %1838
        %1840 = vrot.lane.b32.xlu0 %v1497, 16
        %v1841 = vpop.permute.xlu0 %1840
        %1842 = vrot.lane.b32.xlu0 %v1511, 16
        %v1843 = vpop.permute.xlu0 %1842
        %1844 = vrot.lane.b32.xlu0 %v1521, 16
        %v1845 = vpop.permute.xlu0 %1844
        %1846 = vrot.lane.b32.xlu0 %v1535, 16
        %v1847 = vpop.permute.xlu0 %1846
        %1848 = vrot.lane.b32.xlu0 %v1545, 16
        %v1849 = vpop.permute.xlu0 %1848
        %1850 = vrot.lane.b32.xlu0 %v1559, 16
        %v1851 = vpop.permute.xlu0 %1850
        %1852 = vrot.lane.b32.xlu0 %v1569, 16
        %v1853 = vpop.permute.xlu0 %1852
        %1854 = vrot.lane.b32.xlu0 %v1583, 16
        %v1855 = vpop.permute.xlu0 %1854
        %1856 = vrot.lane.b32.xlu0 %v1593, 16
        %v1857 = vpop.permute.xlu0 %1856
        %1858 = vrot.lane.b32.xlu0 %v1607, 16
        %v1859 = vpop.permute.xlu0 %1858
        %1860 = vrot.lane.b32.xlu0 %v1617, 16
        %v1861 = vpop.permute.xlu0 %1860
        %1862 = vrot.lane.b32.xlu0 %v1631, 16
        %v1863 = vpop.permute.xlu0 %1862
        %1864 = vrot.lane.b32.xlu0 %v1641, 16
        %v1865 = vpop.permute.xlu0 %1864
        %1866 = vrot.lane.b32.xlu0 %v1655, 16
        %v1867 = vpop.permute.xlu0 %1866
        %1868 = vrot.lane.b32.xlu0 %v1665, 16
        %v1869 = vpop.permute.xlu0 %1868
        %1870 = vrot.lane.b32.xlu0 %v1679, 16
        %v1871 = vpop.permute.xlu0 %1870
        %1872 = vrot.lane.b32.xlu0 %v1689, 16
        %v1873 = vpop.permute.xlu0 %1872
        %1874 = vrot.lane.b32.xlu0 %v1703, 16
        %v1875 = vpop.permute.xlu0 %1874
        %1876 = vrot.lane.b32.xlu0 %v1713, 16
        %v1877 = vpop.permute.xlu0 %1876
        %1878 = vrot.lane.b32.xlu0 %v1727, 16
        %v1879 = vpop.permute.xlu0 %1878
        %1880 = vrot.lane.b32.xlu0 %v1737, 16
        %v1881 = vpop.permute.xlu0 %1880
        %1882 = vrot.lane.b32.xlu0 %v1751, 16
        %v1883 = vpop.permute.xlu0 %1882
        %1884 = vrot.lane.b32.xlu0 %v1761, 16
        %v1885 = vpop.permute.xlu0 %1884
        %1886 = vrot.lane.b32.xlu0 %v1775, 16
        %v1887 = vpop.permute.xlu0 %1886
        %1888 = vrot.lane.b32.xlu0 %v1785, 16
        %v1889 = vpop.permute.xlu0 %1888
        %1890 = vrot.lane.b32.xlu0 %v1799, 16
        %v1891 = vpop.permute.xlu0 %1890
        %1892 = vrot.lane.b32.xlu0 %v1809, 16
        %v1893 = vpop.permute.xlu0 %1892
        %1894 = vrot.lane.b32.xlu0 %v1823, 16
        %v1895 = vpop.permute.xlu0 %1894
        %1896 = vrot.lane.b32.xlu0 %v1833, 16
        %v1897 = vpop.permute.xlu0 %1896
        %vm1930 = vcmask 158848
        %1931 = vst.msk [vmem:[#allocation2] sm:$0xf] %vm1930, %v1835
        %1932 = vst.msk [vmem:[#allocation2 + $0x4] sm:$0xf] %vm1930, %v1837
        %1933 = vst.msk [vmem:[#allocation2 + $0x8] sm:$0xf] %vm1930, %v1839
        %1934 = vst.msk [vmem:[#allocation2 + $0xc] sm:$0xf] %vm1930, %v1841
        %1935 = vst.msk [vmem:[#allocation2 + $0x10] sm:$0xf] %vm1930, %v1843
        %1936 = vst.msk [vmem:[#allocation2 + $0x14] sm:$0xf] %vm1930, %v1845
        %1937 = vst.msk [vmem:[#allocation2 + $0x18] sm:$0xf] %vm1930, %v1847
        %1938 = vst.msk [vmem:[#allocation2 + $0x1c] sm:$0xf] %vm1930, %v1849
        %1939 = vst.msk [vmem:[#allocation2 + $0x20] sm:$0xf] %vm1930, %v1851
        %1940 = vst.msk [vmem:[#allocation2 + $0x24] sm:$0xf] %vm1930, %v1853
        %1941 = vst.msk [vmem:[#allocation2 + $0x28] sm:$0xf] %vm1930, %v1855
        %1942 = vst.msk [vmem:[#allocation2 + $0x2c] sm:$0xf] %vm1930, %v1857
        %1943 = vst.msk [vmem:[#allocation2 + $0x30] sm:$0xf] %vm1930, %v1859
        %1944 = vst.msk [vmem:[#allocation2 + $0x34] sm:$0xf] %vm1930, %v1861
        %1945 = vst.msk [vmem:[#allocation2 + $0x38] sm:$0xf] %vm1930, %v1863
        %1946 = vst.msk [vmem:[#allocation2 + $0x3c] sm:$0xf] %vm1930, %v1865
        %1947 = vst.msk [vmem:[#allocation2 + $0x40] sm:$0xf] %vm1930, %v1867
        %1948 = vst.msk [vmem:[#allocation2 + $0x44] sm:$0xf] %vm1930, %v1869
        %1949 = vst.msk [vmem:[#allocation2 + $0x48] sm:$0xf] %vm1930, %v1871
        %1950 = vst.msk [vmem:[#allocation2 + $0x4c] sm:$0xf] %vm1930, %v1873
        %1951 = vst.msk [vmem:[#allocation2 + $0x50] sm:$0xf] %vm1930, %v1875
        %1952 = vst.msk [vmem:[#allocation2 + $0x54] sm:$0xf] %vm1930, %v1877
        %1953 = vst.msk [vmem:[#allocation2 + $0x58] sm:$0xf] %vm1930, %v1879
        %1954 = vst.msk [vmem:[#allocation2 + $0x5c] sm:$0xf] %vm1930, %v1881
        %1955 = vst.msk [vmem:[#allocation2 + $0x60] sm:$0xf] %vm1930, %v1883
        %1956 = vst.msk [vmem:[#allocation2 + $0x64] sm:$0xf] %vm1930, %v1885
        %1957 = vst.msk [vmem:[#allocation2 + $0x68] sm:$0xf] %vm1930, %v1887
        %1958 = vst.msk [vmem:[#allocation2 + $0x6c] sm:$0xf] %vm1930, %v1889
        %1959 = vst.msk [vmem:[#allocation2 + $0x70] sm:$0xf] %vm1930, %v1891
        %1960 = vst.msk [vmem:[#allocation2 + $0x74] sm:$0xf] %vm1930, %v1893
        %1961 = vst.msk [vmem:[#allocation2 + $0x78] sm:$0xf] %vm1930, %v1895
        %1962 = vst.msk [vmem:[#allocation2 + $0x7c] sm:$0xf] %vm1930, %v1897
        %v1963 = vld [vmem:[%s1208] sm:$0xe]
        %v1964 = vld [vmem:[%s1208 + $0x4] sm:$0xf]
        %v1965 = vld [vmem:[%s1208 + $0x8] sm:$0x1]
        %v1966 = vld [vmem:[%s1208 + $0xc] sm:$0xe]
        %v1967 = vld [vmem:[%s1208 + $0x10] sm:$0xf]
        %v1968 = vld [vmem:[%s1208 + $0x14] sm:$0x1]
        %v1969 = vld [vmem:[%s1208 + $0x18] sm:$0xe]
        %v1970 = vld [vmem:[%s1208 + $0x1c] sm:$0xf]
        %v1971 = vld [vmem:[%s1208 + $0x20] sm:$0x1]
        %v1972 = vld [vmem:[%s1208 + $0x24] sm:$0xe]
        %v1973 = vld [vmem:[%s1208 + $0x28] sm:$0xf]
        %v1974 = vld [vmem:[%s1208 + $0x2c] sm:$0x1]
        %v1975 = vld [vmem:[%s1208 + $0x30] sm:$0xe]
        %v1976 = vld [vmem:[%s1208 + $0x34] sm:$0xf]
        %v1977 = vld [vmem:[%s1208 + $0x38] sm:$0x1]
        %v1978 = vld [vmem:[%s1208 + $0x3c] sm:$0xe]
        %v1979 = vld [vmem:[%s1208 + $0x40] sm:$0xf]
        %v1980 = vld [vmem:[%s1208 + $0x44] sm:$0x1]
        %v1981 = vld [vmem:[%s1208 + $0x48] sm:$0xe]
        %v1982 = vld [vmem:[%s1208 + $0x4c] sm:$0xf]
        %v1983 = vld [vmem:[%s1208 + $0x50] sm:$0x1]
        %v1984 = vld [vmem:[%s1208 + $0x54] sm:$0xe]
        %v1985 = vld [vmem:[%s1208 + $0x58] sm:$0xf]
        %v1986 = vld [vmem:[%s1208 + $0x5c] sm:$0x1]
        %v1987 = vld [vmem:[%s1208 + $0x60] sm:$0xe]
        %v1988 = vld [vmem:[%s1208 + $0x64] sm:$0xf]
        %v1989 = vld [vmem:[%s1208 + $0x68] sm:$0x1]
        %v1990 = vld [vmem:[%s1208 + $0x6c] sm:$0xe]
        %v1991 = vld [vmem:[%s1208 + $0x70] sm:$0xf]
        %v1992 = vld [vmem:[%s1208 + $0x74] sm:$0x1]
        %v1993 = vld [vmem:[%s1208 + $0x78] sm:$0xe]
        %v1994 = vld [vmem:[%s1208 + $0x7c] sm:$0xf]
        %v1995 = vld [vmem:[%s1208 + $0x80] sm:$0x1]
        %v1996 = vld [vmem:[%s1208 + $0x84] sm:$0xe]
        %v1997 = vld [vmem:[%s1208 + $0x88] sm:$0xf]
        %v1998 = vld [vmem:[%s1208 + $0x8c] sm:$0x1]
        %v1999 = vld [vmem:[%s1208 + $0x90] sm:$0xe]
        %v2000 = vld [vmem:[%s1208 + $0x94] sm:$0xf]
        %v2001 = vld [vmem:[%s1208 + $0x98] sm:$0x1]
        %v2002 = vld [vmem:[%s1208 + $0x9c] sm:$0xe]
        %v2003 = vld [vmem:[%s1208 + $0xa0] sm:$0xf]
        %v2004 = vld [vmem:[%s1208 + $0xa4] sm:$0x1]
        %v2005 = vld [vmem:[%s1208 + $0xa8] sm:$0xe]
        %v2006 = vld [vmem:[%s1208 + $0xac] sm:$0xf]
        %v2007 = vld [vmem:[%s1208 + $0xb0] sm:$0x1]
        %v2008 = vld [vmem:[%s1208 + $0xb4] sm:$0xe]
        %v2009 = vld [vmem:[%s1208 + $0xb8] sm:$0xf]
        %v2010 = vld [vmem:[%s1208 + $0xbc] sm:$0x1]
        %v2059 = vrot.slane %v1963, 5
        %v2060 = vrot.slane %v2059, 4
        %v2061 = vrot.slane %v1964, 5
        %v2062 = vsel %vm966, %v2060, %v2061
        %v2063 = vrot.slane %v2061, 4
        %v2064 = vrot.slane %v1965, 5
        %v2065 = vsel %vm966, %v2063, %v2064
        %v2066 = vrot.slane %v1966, 5
        %v2067 = vrot.slane %v2066, 4
        %v2068 = vrot.slane %v1967, 5
        %v2069 = vsel %vm966, %v2067, %v2068
        %v2070 = vrot.slane %v2068, 4
        %v2071 = vrot.slane %v1968, 5
        %v2072 = vsel %vm966, %v2070, %v2071
        %v2073 = vrot.slane %v1969, 5
        %v2074 = vrot.slane %v2073, 4
        %v2075 = vrot.slane %v1970, 5
        %v2076 = vsel %vm966, %v2074, %v2075
        %v2077 = vrot.slane %v2075, 4
        %v2078 = vrot.slane %v1971, 5
        %v2079 = vsel %vm966, %v2077, %v2078
        %v2080 = vrot.slane %v1972, 5
        %v2081 = vrot.slane %v2080, 4
        %v2082 = vrot.slane %v1973, 5
        %v2083 = vsel %vm966, %v2081, %v2082
        %v2084 = vrot.slane %v2082, 4
        %v2085 = vrot.slane %v1974, 5
        %v2086 = vsel %vm966, %v2084, %v2085
        %v2087 = vrot.slane %v1975, 5
        %v2088 = vrot.slane %v2087, 4
        %v2089 = vrot.slane %v1976, 5
        %v2090 = vsel %vm966, %v2088, %v2089
        %v2091 = vrot.slane %v2089, 4
        %v2092 = vrot.slane %v1977, 5
        %v2093 = vsel %vm966, %v2091, %v2092
        %v2094 = vrot.slane %v1978, 5
        %v2095 = vrot.slane %v2094, 4
        %v2096 = vrot.slane %v1979, 5
        %v2097 = vsel %vm966, %v2095, %v2096
        %v2098 = vrot.slane %v2096, 4
        %v2099 = vrot.slane %v1980, 5
        %v2100 = vsel %vm966, %v2098, %v2099
        %v2101 = vrot.slane %v1981, 5
        %v2102 = vrot.slane %v2101, 4
        %v2103 = vrot.slane %v1982, 5
        %v2104 = vsel %vm966, %v2102, %v2103
        %v2105 = vrot.slane %v2103, 4
        %v2106 = vrot.slane %v1983, 5
        %v2107 = vsel %vm966, %v2105, %v2106
        %v2108 = vrot.slane %v1984, 5
        %v2109 = vrot.slane %v2108, 4
        %v2110 = vrot.slane %v1985, 5
        %v2111 = vsel %vm966, %v2109, %v2110
        %v2112 = vrot.slane %v2110, 4
        %v2113 = vrot.slane %v1986, 5
        %v2114 = vsel %vm966, %v2112, %v2113
        %v2115 = vrot.slane %v1987, 5
        %v2116 = vrot.slane %v2115, 4
        %v2117 = vrot.slane %v1988, 5
        %v2118 = vsel %vm966, %v2116, %v2117
        %v2119 = vrot.slane %v2117, 4
        %v2120 = vrot.slane %v1989, 5
        %v2121 = vsel %vm966, %v2119, %v2120
        %v2122 = vrot.slane %v1990, 5
        %v2123 = vrot.slane %v2122, 4
        %v2124 = vrot.slane %v1991, 5
        %v2125 = vsel %vm966, %v2123, %v2124
        %v2126 = vrot.slane %v2124, 4
        %v2127 = vrot.slane %v1992, 5
        %v2128 = vsel %vm966, %v2126, %v2127
        %v2129 = vrot.slane %v1993, 5
        %v2130 = vrot.slane %v2129, 4
        %v2131 = vrot.slane %v1994, 5
        %v2132 = vsel %vm966, %v2130, %v2131
        %v2133 = vrot.slane %v2131, 4
        %v2134 = vrot.slane %v1995, 5
        %v2135 = vsel %vm966, %v2133, %v2134
        %v2136 = vrot.slane %v1996, 5
        %v2137 = vrot.slane %v2136, 4
        %v2138 = vrot.slane %v1997, 5
        %v2139 = vsel %vm966, %v2137, %v2138
        %v2140 = vrot.slane %v2138, 4
        %v2141 = vrot.slane %v1998, 5
        %v2142 = vsel %vm966, %v2140, %v2141
        %v2143 = vrot.slane %v1999, 5
        %v2144 = vrot.slane %v2143, 4
        %v2145 = vrot.slane %v2000, 5
        %v2146 = vsel %vm966, %v2144, %v2145
        %v2147 = vrot.slane %v2145, 4
        %v2148 = vrot.slane %v2001, 5
        %v2149 = vsel %vm966, %v2147, %v2148
        %v2150 = vrot.slane %v2002, 5
        %v2151 = vrot.slane %v2150, 4
        %v2152 = vrot.slane %v2003, 5
        %v2153 = vsel %vm966, %v2151, %v2152
        %v2154 = vrot.slane %v2152, 4
        %v2155 = vrot.slane %v2004, 5
        %v2156 = vsel %vm966, %v2154, %v2155
        %v2157 = vrot.slane %v2005, 5
        %v2158 = vrot.slane %v2157, 4
        %v2159 = vrot.slane %v2006, 5
        %v2160 = vsel %vm966, %v2158, %v2159
        %v2161 = vrot.slane %v2159, 4
        %v2162 = vrot.slane %v2007, 5
        %v2163 = vsel %vm966, %v2161, %v2162
        %v2164 = vrot.slane %v2008, 5
        %v2165 = vrot.slane %v2164, 4
        %v2166 = vrot.slane %v2009, 5
        %v2167 = vsel %vm966, %v2165, %v2166
        %v2168 = vrot.slane %v2166, 4
        %v2169 = vrot.slane %v2010, 5
        %v2170 = vsel %vm966, %v2168, %v2169
        %2171 = vrot.lane.b32.xlu0 %v2062, 20
        %v2172 = vpop.permute.xlu0 %2171
        %2173 = vrot.lane.b32.xlu0 %v2065, 20
        %v2174 = vpop.permute.xlu0 %2173
        %2175 = vrot.lane.b32.xlu0 %v2069, 20
        %v2176 = vpop.permute.xlu0 %2175
        %2177 = vrot.lane.b32.xlu0 %v2072, 20
        %v2178 = vpop.permute.xlu0 %2177
        %2179 = vrot.lane.b32.xlu0 %v2076, 20
        %v2180 = vpop.permute.xlu0 %2179
        %2181 = vrot.lane.b32.xlu0 %v2079, 20
        %v2182 = vpop.permute.xlu0 %2181
        %2183 = vrot.lane.b32.xlu0 %v2083, 20
        %v2184 = vpop.permute.xlu0 %2183
        %2185 = vrot.lane.b32.xlu0 %v2086, 20
        %v2186 = vpop.permute.xlu0 %2185
        %2187 = vrot.lane.b32.xlu0 %v2090, 20
        %v2188 = vpop.permute.xlu0 %2187
        %2189 = vrot.lane.b32.xlu0 %v2093, 20
        %v2190 = vpop.permute.xlu0 %2189
        %2191 = vrot.lane.b32.xlu0 %v2097, 20
        %v2192 = vpop.permute.xlu0 %2191
        %2193 = vrot.lane.b32.xlu0 %v2100, 20
        %v2194 = vpop.permute.xlu0 %2193
        %2195 = vrot.lane.b32.xlu0 %v2104, 20
        %v2196 = vpop.permute.xlu0 %2195
        %2197 = vrot.lane.b32.xlu0 %v2107, 20
        %v2198 = vpop.permute.xlu0 %2197
        %2199 = vrot.lane.b32.xlu0 %v2111, 20
        %v2200 = vpop.permute.xlu0 %2199
        %2201 = vrot.lane.b32.xlu0 %v2114, 20
        %v2202 = vpop.permute.xlu0 %2201
        %2203 = vrot.lane.b32.xlu0 %v2118, 20
        %v2204 = vpop.permute.xlu0 %2203
        %2205 = vrot.lane.b32.xlu0 %v2121, 20
        %v2206 = vpop.permute.xlu0 %2205
        %2207 = vrot.lane.b32.xlu0 %v2125, 20
        %v2208 = vpop.permute.xlu0 %2207
        %2209 = vrot.lane.b32.xlu0 %v2128, 20
        %v2210 = vpop.permute.xlu0 %2209
        %2211 = vrot.lane.b32.xlu0 %v2132, 20
        %v2212 = vpop.permute.xlu0 %2211
        %2213 = vrot.lane.b32.xlu0 %v2135, 20
        %v2214 = vpop.permute.xlu0 %2213
        %2215 = vrot.lane.b32.xlu0 %v2139, 20
        %v2216 = vpop.permute.xlu0 %2215
        %2217 = vrot.lane.b32.xlu0 %v2142, 20
        %v2218 = vpop.permute.xlu0 %2217
        %2219 = vrot.lane.b32.xlu0 %v2146, 20
        %v2220 = vpop.permute.xlu0 %2219
        %2221 = vrot.lane.b32.xlu0 %v2149, 20
        %v2222 = vpop.permute.xlu0 %2221
        %2223 = vrot.lane.b32.xlu0 %v2153, 20
        %v2224 = vpop.permute.xlu0 %2223
        %2225 = vrot.lane.b32.xlu0 %v2156, 20
        %v2226 = vpop.permute.xlu0 %2225
        %2227 = vrot.lane.b32.xlu0 %v2160, 20
        %v2228 = vpop.permute.xlu0 %2227
        %2229 = vrot.lane.b32.xlu0 %v2163, 20
        %v2230 = vpop.permute.xlu0 %2229
        %2231 = vrot.lane.b32.xlu0 %v2167, 20
        %v2232 = vpop.permute.xlu0 %2231
        %2233 = vrot.lane.b32.xlu0 %v2170, 20
        %v2234 = vpop.permute.xlu0 %2233
        %vm2267 = vcmask 191648
        %2268 = vst.msk [vmem:[#allocation2] sm:$0xf] %vm2267, %v2172
        %2269 = vst.msk [vmem:[#allocation2 + $0x4] sm:$0xf] %vm2267, %v2174
        %2270 = vst.msk [vmem:[#allocation2 + $0x8] sm:$0xf] %vm2267, %v2176
        %2271 = vst.msk [vmem:[#allocation2 + $0xc] sm:$0xf] %vm2267, %v2178
        %2272 = vst.msk [vmem:[#allocation2 + $0x10] sm:$0xf] %vm2267, %v2180
        %2273 = vst.msk [vmem:[#allocation2 + $0x14] sm:$0xf] %vm2267, %v2182
        %2274 = vst.msk [vmem:[#allocation2 + $0x18] sm:$0xf] %vm2267, %v2184
        %2275 = vst.msk [vmem:[#allocation2 + $0x1c] sm:$0xf] %vm2267, %v2186
        %2276 = vst.msk [vmem:[#allocation2 + $0x20] sm:$0xf] %vm2267, %v2188
        %2277 = vst.msk [vmem:[#allocation2 + $0x24] sm:$0xf] %vm2267, %v2190
        %2278 = vst.msk [vmem:[#allocation2 + $0x28] sm:$0xf] %vm2267, %v2192
        %2279 = vst.msk [vmem:[#allocation2 + $0x2c] sm:$0xf] %vm2267, %v2194
        %2280 = vst.msk [vmem:[#allocation2 + $0x30] sm:$0xf] %vm2267, %v2196
        %2281 = vst.msk [vmem:[#allocation2 + $0x34] sm:$0xf] %vm2267, %v2198
        %2282 = vst.msk [vmem:[#allocation2 + $0x38] sm:$0xf] %vm2267, %v2200
        %2283 = vst.msk [vmem:[#allocation2 + $0x3c] sm:$0xf] %vm2267, %v2202
        %2284 = vst.msk [vmem:[#allocation2 + $0x40] sm:$0xf] %vm2267, %v2204
        %2285 = vst.msk [vmem:[#allocation2 + $0x44] sm:$0xf] %vm2267, %v2206
        %2286 = vst.msk [vmem:[#allocation2 + $0x48] sm:$0xf] %vm2267, %v2208
        %2287 = vst.msk [vmem:[#allocation2 + $0x4c] sm:$0xf] %vm2267, %v2210
        %2288 = vst.msk [vmem:[#allocation2 + $0x50] sm:$0xf] %vm2267, %v2212
        %2289 = vst.msk [vmem:[#allocation2 + $0x54] sm:$0xf] %vm2267, %v2214
        %2290 = vst.msk [vmem:[#allocation2 + $0x58] sm:$0xf] %vm2267, %v2216
        %2291 = vst.msk [vmem:[#allocation2 + $0x5c] sm:$0xf] %vm2267, %v2218
        %2292 = vst.msk [vmem:[#allocation2 + $0x60] sm:$0xf] %vm2267, %v2220
        %2293 = vst.msk [vmem:[#allocation2 + $0x64] sm:$0xf] %vm2267, %v2222
        %2294 = vst.msk [vmem:[#allocation2 + $0x68] sm:$0xf] %vm2267, %v2224
        %2295 = vst.msk [vmem:[#allocation2 + $0x6c] sm:$0xf] %vm2267, %v2226
        %2296 = vst.msk [vmem:[#allocation2 + $0x70] sm:$0xf] %vm2267, %v2228
        %2297 = vst.msk [vmem:[#allocation2 + $0x74] sm:$0xf] %vm2267, %v2230
        %2298 = vst.msk [vmem:[#allocation2 + $0x78] sm:$0xf] %vm2267, %v2232
        %2299 = vst.msk [vmem:[#allocation2 + $0x7c] sm:$0xf] %vm2267, %v2234
        %s2300 = scalar_lea.vmem %s237, 24
        %v2301 = vld [vmem:[%s2300] sm:$0xf]
        %v2302 = vld [vmem:[%s2300 + $0x4] sm:$0xf]
        %v2303 = vld [vmem:[%s2300 + $0xc] sm:$0xf]
        %v2304 = vld [vmem:[%s2300 + $0x10] sm:$0xf]
        %v2305 = vld [vmem:[%s2300 + $0x18] sm:$0xf]
        %v2306 = vld [vmem:[%s2300 + $0x1c] sm:$0xf]
        %v2307 = vld [vmem:[%s2300 + $0x24] sm:$0xf]
        %v2308 = vld [vmem:[%s2300 + $0x28] sm:$0xf]
        %v2309 = vld [vmem:[%s2300 + $0x30] sm:$0xf]
        %v2310 = vld [vmem:[%s2300 + $0x34] sm:$0xf]
        %v2311 = vld [vmem:[%s2300 + $0x3c] sm:$0xf]
        %v2312 = vld [vmem:[%s2300 + $0x40] sm:$0xf]
        %v2313 = vld [vmem:[%s2300 + $0x48] sm:$0xf]
        %v2314 = vld [vmem:[%s2300 + $0x4c] sm:$0xf]
        %v2315 = vld [vmem:[%s2300 + $0x54] sm:$0xf]
        %v2316 = vld [vmem:[%s2300 + $0x58] sm:$0xf]
        %v2317 = vld [vmem:[%s2300 + $0x60] sm:$0xf]
        %v2318 = vld [vmem:[%s2300 + $0x64] sm:$0xf]
        %v2319 = vld [vmem:[%s2300 + $0x6c] sm:$0xf]
        %v2320 = vld [vmem:[%s2300 + $0x70] sm:$0xf]
        %v2321 = vld [vmem:[%s2300 + $0x78] sm:$0xf]
        %v2322 = vld [vmem:[%s2300 + $0x7c] sm:$0xf]
        %v2323 = vld [vmem:[%s2300 + $0x84] sm:$0xf]
        %v2324 = vld [vmem:[%s2300 + $0x88] sm:$0xf]
        %v2325 = vld [vmem:[%s2300 + $0x90] sm:$0xf]
        %v2326 = vld [vmem:[%s2300 + $0x94] sm:$0xf]
        %v2327 = vld [vmem:[%s2300 + $0x9c] sm:$0xf]
        %v2328 = vld [vmem:[%s2300 + $0xa0] sm:$0xf]
        %v2329 = vld [vmem:[%s2300 + $0xa8] sm:$0xf]
        %v2330 = vld [vmem:[%s2300 + $0xac] sm:$0xf]
        %v2331 = vld [vmem:[%s2300 + $0xb4] sm:$0xf]
        %v2332 = vld [vmem:[%s2300 + $0xb8] sm:$0xf]
        %2365 = vrot.lane.b32.xlu0 %v2301, 24
        %v2366 = vpop.permute.xlu0 %2365
        %2367 = vrot.lane.b32.xlu0 %v2302, 24
        %v2368 = vpop.permute.xlu0 %2367
        %2369 = vrot.lane.b32.xlu0 %v2303, 24
        %v2370 = vpop.permute.xlu0 %2369
        %2371 = vrot.lane.b32.xlu0 %v2304, 24
        %v2372 = vpop.permute.xlu0 %2371
        %2373 = vrot.lane.b32.xlu0 %v2305, 24
        %v2374 = vpop.permute.xlu0 %2373
        %2375 = vrot.lane.b32.xlu0 %v2306, 24
        %v2376 = vpop.permute.xlu0 %2375
        %2377 = vrot.lane.b32.xlu0 %v2307, 24
        %v2378 = vpop.permute.xlu0 %2377
        %2379 = vrot.lane.b32.xlu0 %v2308, 24
        %v2380 = vpop.permute.xlu0 %2379
        %2381 = vrot.lane.b32.xlu0 %v2309, 24
        %v2382 = vpop.permute.xlu0 %2381
        %2383 = vrot.lane.b32.xlu0 %v2310, 24
        %v2384 = vpop.permute.xlu0 %2383
        %2385 = vrot.lane.b32.xlu0 %v2311, 24
        %v2386 = vpop.permute.xlu0 %2385
        %2387 = vrot.lane.b32.xlu0 %v2312, 24
        %v2388 = vpop.permute.xlu0 %2387
        %2389 = vrot.lane.b32.xlu0 %v2313, 24
        %v2390 = vpop.permute.xlu0 %2389
        %2391 = vrot.lane.b32.xlu0 %v2314, 24
        %v2392 = vpop.permute.xlu0 %2391
        %2393 = vrot.lane.b32.xlu0 %v2315, 24
        %v2394 = vpop.permute.xlu0 %2393
        %2395 = vrot.lane.b32.xlu0 %v2316, 24
        %v2396 = vpop.permute.xlu0 %2395
        %2397 = vrot.lane.b32.xlu0 %v2317, 24
        %v2398 = vpop.permute.xlu0 %2397
        %2399 = vrot.lane.b32.xlu0 %v2318, 24
        %v2400 = vpop.permute.xlu0 %2399
        %2401 = vrot.lane.b32.xlu0 %v2319, 24
        %v2402 = vpop.permute.xlu0 %2401
        %2403 = vrot.lane.b32.xlu0 %v2320, 24
        %v2404 = vpop.permute.xlu0 %2403
        %2405 = vrot.lane.b32.xlu0 %v2321, 24
        %v2406 = vpop.permute.xlu0 %2405
        %2407 = vrot.lane.b32.xlu0 %v2322, 24
        %v2408 = vpop.permute.xlu0 %2407
        %2409 = vrot.lane.b32.xlu0 %v2323, 24
        %v2410 = vpop.permute.xlu0 %2409
        %2411 = vrot.lane.b32.xlu0 %v2324, 24
        %v2412 = vpop.permute.xlu0 %2411
        %2413 = vrot.lane.b32.xlu0 %v2325, 24
        %v2414 = vpop.permute.xlu0 %2413
        %2415 = vrot.lane.b32.xlu0 %v2326, 24
        %v2416 = vpop.permute.xlu0 %2415
        %2417 = vrot.lane.b32.xlu0 %v2327, 24
        %v2418 = vpop.permute.xlu0 %2417
        %2419 = vrot.lane.b32.xlu0 %v2328, 24
        %v2420 = vpop.permute.xlu0 %2419
        %2421 = vrot.lane.b32.xlu0 %v2329, 24
        %v2422 = vpop.permute.xlu0 %2421
        %2423 = vrot.lane.b32.xlu0 %v2330, 24
        %v2424 = vpop.permute.xlu0 %2423
        %2425 = vrot.lane.b32.xlu0 %v2331, 24
        %v2426 = vpop.permute.xlu0 %2425
        %2427 = vrot.lane.b32.xlu0 %v2332, 24
        %v2428 = vpop.permute.xlu0 %2427
        %vm2461 = vcmask 224448
        %2462 = vst.msk [vmem:[#allocation2] sm:$0xf] %vm2461, %v2366
        %2463 = vst.msk [vmem:[#allocation2 + $0x4] sm:$0xf] %vm2461, %v2368
        %2464 = vst.msk [vmem:[#allocation2 + $0x8] sm:$0xf] %vm2461, %v2370
        %2465 = vst.msk [vmem:[#allocation2 + $0xc] sm:$0xf] %vm2461, %v2372
        %2466 = vst.msk [vmem:[#allocation2 + $0x10] sm:$0xf] %vm2461, %v2374
        %2467 = vst.msk [vmem:[#allocation2 + $0x14] sm:$0xf] %vm2461, %v2376
        %2468 = vst.msk [vmem:[#allocation2 + $0x18] sm:$0xf] %vm2461, %v2378
        %2469 = vst.msk [vmem:[#allocation2 + $0x1c] sm:$0xf] %vm2461, %v2380
        %2470 = vst.msk [vmem:[#allocation2 + $0x20] sm:$0xf] %vm2461, %v2382
        %2471 = vst.msk [vmem:[#allocation2 + $0x24] sm:$0xf] %vm2461, %v2384
        %2472 = vst.msk [vmem:[#allocation2 + $0x28] sm:$0xf] %vm2461, %v2386
        %2473 = vst.msk [vmem:[#allocation2 + $0x2c] sm:$0xf] %vm2461, %v2388
        %2474 = vst.msk [vmem:[#allocation2 + $0x30] sm:$0xf] %vm2461, %v2390
        %2475 = vst.msk [vmem:[#allocation2 + $0x34] sm:$0xf] %vm2461, %v2392
        %2476 = vst.msk [vmem:[#allocation2 + $0x38] sm:$0xf] %vm2461, %v2394
        %2477 = vst.msk [vmem:[#allocation2 + $0x3c] sm:$0xf] %vm2461, %v2396
        %2478 = vst.msk [vmem:[#allocation2 + $0x40] sm:$0xf] %vm2461, %v2398
        %2479 = vst.msk [vmem:[#allocation2 + $0x44] sm:$0xf] %vm2461, %v2400
        %2480 = vst.msk [vmem:[#allocation2 + $0x48] sm:$0xf] %vm2461, %v2402
        %2481 = vst.msk [vmem:[#allocation2 + $0x4c] sm:$0xf] %vm2461, %v2404
        %2482 = vst.msk [vmem:[#allocation2 + $0x50] sm:$0xf] %vm2461, %v2406
        %2483 = vst.msk [vmem:[#allocation2 + $0x54] sm:$0xf] %vm2461, %v2408
        %2484 = vst.msk [vmem:[#allocation2 + $0x58] sm:$0xf] %vm2461, %v2410
        %2485 = vst.msk [vmem:[#allocation2 + $0x5c] sm:$0xf] %vm2461, %v2412
        %2486 = vst.msk [vmem:[#allocation2 + $0x60] sm:$0xf] %vm2461, %v2414
        %2487 = vst.msk [vmem:[#allocation2 + $0x64] sm:$0xf] %vm2461, %v2416
        %2488 = vst.msk [vmem:[#allocation2 + $0x68] sm:$0xf] %vm2461, %v2418
        %2489 = vst.msk [vmem:[#allocation2 + $0x6c] sm:$0xf] %vm2461, %v2420
        %2490 = vst.msk [vmem:[#allocation2 + $0x70] sm:$0xf] %vm2461, %v2422
        %2491 = vst.msk [vmem:[#allocation2 + $0x74] sm:$0xf] %vm2461, %v2424
        %2492 = vst.msk [vmem:[#allocation2 + $0x78] sm:$0xf] %vm2461, %v2426
        %2493 = vst.msk [vmem:[#allocation2 + $0x7c] sm:$0xf] %vm2461, %v2428
        %v2494 = vld [vmem:[%s2300] sm:$0xf]
        %v2495 = vld [vmem:[%s2300 + $0x4] sm:$0xf]
        %v2496 = vld [vmem:[%s2300 + $0x8] sm:$0x1]
        %v2497 = vld [vmem:[%s2300 + $0xc] sm:$0xf]
        %v2498 = vld [vmem:[%s2300 + $0x10] sm:$0xf]
        %v2499 = vld [vmem:[%s2300 + $0x14] sm:$0x1]
        %v2500 = vld [vmem:[%s2300 + $0x18] sm:$0xf]
        %v2501 = vld [vmem:[%s2300 + $0x1c] sm:$0xf]
        %v2502 = vld [vmem:[%s2300 + $0x20] sm:$0x1]
        %v2503 = vld [vmem:[%s2300 + $0x24] sm:$0xf]
        %v2504 = vld [vmem:[%s2300 + $0x28] sm:$0xf]
        %v2505 = vld [vmem:[%s2300 + $0x2c] sm:$0x1]
        %v2506 = vld [vmem:[%s2300 + $0x30] sm:$0xf]
        %v2507 = vld [vmem:[%s2300 + $0x34] sm:$0xf]
        %v2508 = vld [vmem:[%s2300 + $0x38] sm:$0x1]
        %v2509 = vld [vmem:[%s2300 + $0x3c] sm:$0xf]
        %v2510 = vld [vmem:[%s2300 + $0x40] sm:$0xf]
        %v2511 = vld [vmem:[%s2300 + $0x44] sm:$0x1]
        %v2512 = vld [vmem:[%s2300 + $0x48] sm:$0xf]
        %v2513 = vld [vmem:[%s2300 + $0x4c] sm:$0xf]
        %v2514 = vld [vmem:[%s2300 + $0x50] sm:$0x1]
        %v2515 = vld [vmem:[%s2300 + $0x54] sm:$0xf]
        %v2516 = vld [vmem:[%s2300 + $0x58] sm:$0xf]
        %v2517 = vld [vmem:[%s2300 + $0x5c] sm:$0x1]
        %v2518 = vld [vmem:[%s2300 + $0x60] sm:$0xf]
        %v2519 = vld [vmem:[%s2300 + $0x64] sm:$0xf]
        %v2520 = vld [vmem:[%s2300 + $0x68] sm:$0x1]
        %v2521 = vld [vmem:[%s2300 + $0x6c] sm:$0xf]
        %v2522 = vld [vmem:[%s2300 + $0x70] sm:$0xf]
        %v2523 = vld [vmem:[%s2300 + $0x74] sm:$0x1]
        %v2524 = vld [vmem:[%s2300 + $0x78] sm:$0xf]
        %v2525 = vld [vmem:[%s2300 + $0x7c] sm:$0xf]
        %v2526 = vld [vmem:[%s2300 + $0x80] sm:$0x1]
        %v2527 = vld [vmem:[%s2300 + $0x84] sm:$0xf]
        %v2528 = vld [vmem:[%s2300 + $0x88] sm:$0xf]
        %v2529 = vld [vmem:[%s2300 + $0x8c] sm:$0x1]
        %v2530 = vld [vmem:[%s2300 + $0x90] sm:$0xf]
        %v2531 = vld [vmem:[%s2300 + $0x94] sm:$0xf]
        %v2532 = vld [vmem:[%s2300 + $0x98] sm:$0x1]
        %v2533 = vld [vmem:[%s2300 + $0x9c] sm:$0xf]
        %v2534 = vld [vmem:[%s2300 + $0xa0] sm:$0xf]
        %v2535 = vld [vmem:[%s2300 + $0xa4] sm:$0x1]
        %v2536 = vld [vmem:[%s2300 + $0xa8] sm:$0xf]
        %v2537 = vld [vmem:[%s2300 + $0xac] sm:$0xf]
        %v2538 = vld [vmem:[%s2300 + $0xb0] sm:$0x1]
        %v2539 = vld [vmem:[%s2300 + $0xb4] sm:$0xf]
        %v2540 = vld [vmem:[%s2300 + $0xb8] sm:$0xf]
        %v2541 = vld [vmem:[%s2300 + $0xbc] sm:$0x1]
        %v2543 = vshrl.u32 %v2494, 16
        %v2545 = vrot.slane %v2543, 4
        %v2546 = vshll.u32 %v2494, 16
        %v2548 = vrot.slane %v2546, 5
        %v2549 = vor.u32 %v2545, %v2548
        %v2550 = vrot.slane %v2549, 4
        %v2552 = vshll.u32 %v2495, 16
        %v2554 = vrot.slane %v2552, 5
        %v2555 = vsel %vm354, %v2550, %v2554
        %v2556 = vshrl.u32 %v2495, 16
        %v2558 = vrot.slane %v2556, 4
        %v2559 = vor.u32 %v2558, %v2554
        %v2560 = vrot.slane %v2559, 4
        %v2562 = vshll.u32 %v2496, 16
        %v2564 = vrot.slane %v2562, 5
        %v2565 = vsel %vm354, %v2560, %v2564
        %v2567 = vshrl.u32 %v2497, 16
        %v2569 = vrot.slane %v2567, 4
        %v2570 = vshll.u32 %v2497, 16
        %v2572 = vrot.slane %v2570, 5
        %v2573 = vor.u32 %v2569, %v2572
        %v2574 = vrot.slane %v2573, 4
        %v2576 = vshll.u32 %v2498, 16
        %v2578 = vrot.slane %v2576, 5
        %v2579 = vsel %vm354, %v2574, %v2578
        %v2580 = vshrl.u32 %v2498, 16
        %v2582 = vrot.slane %v2580, 4
        %v2583 = vor.u32 %v2582, %v2578
        %v2584 = vrot.slane %v2583, 4
        %v2586 = vshll.u32 %v2499, 16
        %v2588 = vrot.slane %v2586, 5
        %v2589 = vsel %vm354, %v2584, %v2588
        %v2591 = vshrl.u32 %v2500, 16
        %v2593 = vrot.slane %v2591, 4
        %v2594 = vshll.u32 %v2500, 16
        %v2596 = vrot.slane %v2594, 5
        %v2597 = vor.u32 %v2593, %v2596
        %v2598 = vrot.slane %v2597, 4
        %v2600 = vshll.u32 %v2501, 16
        %v2602 = vrot.slane %v2600, 5
        %v2603 = vsel %vm354, %v2598, %v2602
        %v2604 = vshrl.u32 %v2501, 16
        %v2606 = vrot.slane %v2604, 4
        %v2607 = vor.u32 %v2606, %v2602
        %v2608 = vrot.slane %v2607, 4
        %v2610 = vshll.u32 %v2502, 16
        %v2612 = vrot.slane %v2610, 5
        %v2613 = vsel %vm354, %v2608, %v2612
        %v2615 = vshrl.u32 %v2503, 16
        %v2617 = vrot.slane %v2615, 4
        %v2618 = vshll.u32 %v2503, 16
        %v2620 = vrot.slane %v2618, 5
        %v2621 = vor.u32 %v2617, %v2620
        %v2622 = vrot.slane %v2621, 4
        %v2624 = vshll.u32 %v2504, 16
        %v2626 = vrot.slane %v2624, 5
        %v2627 = vsel %vm354, %v2622, %v2626
        %v2628 = vshrl.u32 %v2504, 16
        %v2630 = vrot.slane %v2628, 4
        %v2631 = vor.u32 %v2630, %v2626
        %v2632 = vrot.slane %v2631, 4
        %v2634 = vshll.u32 %v2505, 16
        %v2636 = vrot.slane %v2634, 5
        %v2637 = vsel %vm354, %v2632, %v2636
        %v2639 = vshrl.u32 %v2506, 16
        %v2641 = vrot.slane %v2639, 4
        %v2642 = vshll.u32 %v2506, 16
        %v2644 = vrot.slane %v2642, 5
        %v2645 = vor.u32 %v2641, %v2644
        %v2646 = vrot.slane %v2645, 4
        %v2648 = vshll.u32 %v2507, 16
        %v2650 = vrot.slane %v2648, 5
        %v2651 = vsel %vm354, %v2646, %v2650
        %v2652 = vshrl.u32 %v2507, 16
        %v2654 = vrot.slane %v2652, 4
        %v2655 = vor.u32 %v2654, %v2650
        %v2656 = vrot.slane %v2655, 4
        %v2658 = vshll.u32 %v2508, 16
        %v2660 = vrot.slane %v2658, 5
        %v2661 = vsel %vm354, %v2656, %v2660
        %v2663 = vshrl.u32 %v2509, 16
        %v2665 = vrot.slane %v2663, 4
        %v2666 = vshll.u32 %v2509, 16
        %v2668 = vrot.slane %v2666, 5
        %v2669 = vor.u32 %v2665, %v2668
        %v2670 = vrot.slane %v2669, 4
        %v2672 = vshll.u32 %v2510, 16
        %v2674 = vrot.slane %v2672, 5
        %v2675 = vsel %vm354, %v2670, %v2674
        %v2676 = vshrl.u32 %v2510, 16
        %v2678 = vrot.slane %v2676, 4
        %v2679 = vor.u32 %v2678, %v2674
        %v2680 = vrot.slane %v2679, 4
        %v2682 = vshll.u32 %v2511, 16
        %v2684 = vrot.slane %v2682, 5
        %v2685 = vsel %vm354, %v2680, %v2684
        %v2687 = vshrl.u32 %v2512, 16
        %v2689 = vrot.slane %v2687, 4
        %v2690 = vshll.u32 %v2512, 16
        %v2692 = vrot.slane %v2690, 5
        %v2693 = vor.u32 %v2689, %v2692
        %v2694 = vrot.slane %v2693, 4
        %v2696 = vshll.u32 %v2513, 16
        %v2698 = vrot.slane %v2696, 5
        %v2699 = vsel %vm354, %v2694, %v2698
        %v2700 = vshrl.u32 %v2513, 16
        %v2702 = vrot.slane %v2700, 4
        %v2703 = vor.u32 %v2702, %v2698
        %v2704 = vrot.slane %v2703, 4
        %v2706 = vshll.u32 %v2514, 16
        %v2708 = vrot.slane %v2706, 5
        %v2709 = vsel %vm354, %v2704, %v2708
        %v2711 = vshrl.u32 %v2515, 16
        %v2713 = vrot.slane %v2711, 4
        %v2714 = vshll.u32 %v2515, 16
        %v2716 = vrot.slane %v2714, 5
        %v2717 = vor.u32 %v2713, %v2716
        %v2718 = vrot.slane %v2717, 4
        %v2720 = vshll.u32 %v2516, 16
        %v2722 = vrot.slane %v2720, 5
        %v2723 = vsel %vm354, %v2718, %v2722
        %v2724 = vshrl.u32 %v2516, 16
        %v2726 = vrot.slane %v2724, 4
        %v2727 = vor.u32 %v2726, %v2722
        %v2728 = vrot.slane %v2727, 4
        %v2730 = vshll.u32 %v2517, 16
        %v2732 = vrot.slane %v2730, 5
        %v2733 = vsel %vm354, %v2728, %v2732
        %v2735 = vshrl.u32 %v2518, 16
        %v2737 = vrot.slane %v2735, 4
        %v2738 = vshll.u32 %v2518, 16
        %v2740 = vrot.slane %v2738, 5
        %v2741 = vor.u32 %v2737, %v2740
        %v2742 = vrot.slane %v2741, 4
        %v2744 = vshll.u32 %v2519, 16
        %v2746 = vrot.slane %v2744, 5
        %v2747 = vsel %vm354, %v2742, %v2746
        %v2748 = vshrl.u32 %v2519, 16
        %v2750 = vrot.slane %v2748, 4
        %v2751 = vor.u32 %v2750, %v2746
        %v2752 = vrot.slane %v2751, 4
        %v2754 = vshll.u32 %v2520, 16
        %v2756 = vrot.slane %v2754, 5
        %v2757 = vsel %vm354, %v2752, %v2756
        %v2759 = vshrl.u32 %v2521, 16
        %v2761 = vrot.slane %v2759, 4
        %v2762 = vshll.u32 %v2521, 16
        %v2764 = vrot.slane %v2762, 5
        %v2765 = vor.u32 %v2761, %v2764
        %v2766 = vrot.slane %v2765, 4
        %v2768 = vshll.u32 %v2522, 16
        %v2770 = vrot.slane %v2768, 5
        %v2771 = vsel %vm354, %v2766, %v2770
        %v2772 = vshrl.u32 %v2522, 16
        %v2774 = vrot.slane %v2772, 4
        %v2775 = vor.u32 %v2774, %v2770
        %v2776 = vrot.slane %v2775, 4
        %v2778 = vshll.u32 %v2523, 16
        %v2780 = vrot.slane %v2778, 5
        %v2781 = vsel %vm354, %v2776, %v2780
        %v2783 = vshrl.u32 %v2524, 16
        %v2785 = vrot.slane %v2783, 4
        %v2786 = vshll.u32 %v2524, 16
        %v2788 = vrot.slane %v2786, 5
        %v2789 = vor.u32 %v2785, %v2788
        %v2790 = vrot.slane %v2789, 4
        %v2792 = vshll.u32 %v2525, 16
        %v2794 = vrot.slane %v2792, 5
        %v2795 = vsel %vm354, %v2790, %v2794
        %v2796 = vshrl.u32 %v2525, 16
        %v2798 = vrot.slane %v2796, 4
        %v2799 = vor.u32 %v2798, %v2794
        %v2800 = vrot.slane %v2799, 4
        %v2802 = vshll.u32 %v2526, 16
        %v2804 = vrot.slane %v2802, 5
        %v2805 = vsel %vm354, %v2800, %v2804
        %v2807 = vshrl.u32 %v2527, 16
        %v2809 = vrot.slane %v2807, 4
        %v2810 = vshll.u32 %v2527, 16
        %v2812 = vrot.slane %v2810, 5
        %v2813 = vor.u32 %v2809, %v2812
        %v2814 = vrot.slane %v2813, 4
        %v2816 = vshll.u32 %v2528, 16
        %v2818 = vrot.slane %v2816, 5
        %v2819 = vsel %vm354, %v2814, %v2818
        %v2820 = vshrl.u32 %v2528, 16
        %v2822 = vrot.slane %v2820, 4
        %v2823 = vor.u32 %v2822, %v2818
        %v2824 = vrot.slane %v2823, 4
        %v2826 = vshll.u32 %v2529, 16
        %v2828 = vrot.slane %v2826, 5
        %v2829 = vsel %vm354, %v2824, %v2828
        %v2831 = vshrl.u32 %v2530, 16
        %v2833 = vrot.slane %v2831, 4
        %v2834 = vshll.u32 %v2530, 16
        %v2836 = vrot.slane %v2834, 5
        %v2837 = vor.u32 %v2833, %v2836
        %v2838 = vrot.slane %v2837, 4
        %v2840 = vshll.u32 %v2531, 16
        %v2842 = vrot.slane %v2840, 5
        %v2843 = vsel %vm354, %v2838, %v2842
        %v2844 = vshrl.u32 %v2531, 16
        %v2846 = vrot.slane %v2844, 4
        %v2847 = vor.u32 %v2846, %v2842
        %v2848 = vrot.slane %v2847, 4
        %v2850 = vshll.u32 %v2532, 16
        %v2852 = vrot.slane %v2850, 5
        %v2853 = vsel %vm354, %v2848, %v2852
        %v2855 = vshrl.u32 %v2533, 16
        %v2857 = vrot.slane %v2855, 4
        %v2858 = vshll.u32 %v2533, 16
        %v2860 = vrot.slane %v2858, 5
        %v2861 = vor.u32 %v2857, %v2860
        %v2862 = vrot.slane %v2861, 4
        %v2864 = vshll.u32 %v2534, 16
        %v2866 = vrot.slane %v2864, 5
        %v2867 = vsel %vm354, %v2862, %v2866
        %v2868 = vshrl.u32 %v2534, 16
        %v2870 = vrot.slane %v2868, 4
        %v2871 = vor.u32 %v2870, %v2866
        %v2872 = vrot.slane %v2871, 4
        %v2874 = vshll.u32 %v2535, 16
        %v2876 = vrot.slane %v2874, 5
        %v2877 = vsel %vm354, %v2872, %v2876
        %v2879 = vshrl.u32 %v2536, 16
        %v2881 = vrot.slane %v2879, 4
        %v2882 = vshll.u32 %v2536, 16
        %v2884 = vrot.slane %v2882, 5
        %v2885 = vor.u32 %v2881, %v2884
        %v2886 = vrot.slane %v2885, 4
        %v2888 = vshll.u32 %v2537, 16
        %v2890 = vrot.slane %v2888, 5
        %v2891 = vsel %vm354, %v2886, %v2890
        %v2892 = vshrl.u32 %v2537, 16
        %v2894 = vrot.slane %v2892, 4
        %v2895 = vor.u32 %v2894, %v2890
        %v2896 = vrot.slane %v2895, 4
        %v2898 = vshll.u32 %v2538, 16
        %v2900 = vrot.slane %v2898, 5
        %v2901 = vsel %vm354, %v2896, %v2900
        %v2903 = vshrl.u32 %v2539, 16
        %v2905 = vrot.slane %v2903, 4
        %v2906 = vshll.u32 %v2539, 16
        %v2908 = vrot.slane %v2906, 5
        %v2909 = vor.u32 %v2905, %v2908
        %v2910 = vrot.slane %v2909, 4
        %v2912 = vshll.u32 %v2540, 16
        %v2914 = vrot.slane %v2912, 5
        %v2915 = vsel %vm354, %v2910, %v2914
        %v2916 = vshrl.u32 %v2540, 16
        %v2918 = vrot.slane %v2916, 4
        %v2919 = vor.u32 %v2918, %v2914
        %v2920 = vrot.slane %v2919, 4
        %v2922 = vshll.u32 %v2541, 16
        %v2924 = vrot.slane %v2922, 5
        %v2925 = vsel %vm354, %v2920, %v2924
        %2926 = vrot.lane.b32.xlu0 %v2555, 28
        %v2927 = vpop.permute.xlu0 %2926
        %2928 = vrot.lane.b32.xlu0 %v2565, 28
        %v2929 = vpop.permute.xlu0 %2928
        %2930 = vrot.lane.b32.xlu0 %v2579, 28
        %v2931 = vpop.permute.xlu0 %2930
        %2932 = vrot.lane.b32.xlu0 %v2589, 28
        %v2933 = vpop.permute.xlu0 %2932
        %2934 = vrot.lane.b32.xlu0 %v2603, 28
        %v2935 = vpop.permute.xlu0 %2934
        %2936 = vrot.lane.b32.xlu0 %v2613, 28
        %v2937 = vpop.permute.xlu0 %2936
        %2938 = vrot.lane.b32.xlu0 %v2627, 28
        %v2939 = vpop.permute.xlu0 %2938
        %2940 = vrot.lane.b32.xlu0 %v2637, 28
        %v2941 = vpop.permute.xlu0 %2940
        %2942 = vrot.lane.b32.xlu0 %v2651, 28
        %v2943 = vpop.permute.xlu0 %2942
        %2944 = vrot.lane.b32.xlu0 %v2661, 28
        %v2945 = vpop.permute.xlu0 %2944
        %2946 = vrot.lane.b32.xlu0 %v2675, 28
        %v2947 = vpop.permute.xlu0 %2946
        %2948 = vrot.lane.b32.xlu0 %v2685, 28
        %v2949 = vpop.permute.xlu0 %2948
        %2950 = vrot.lane.b32.xlu0 %v2699, 28
        %v2951 = vpop.permute.xlu0 %2950
        %2952 = vrot.lane.b32.xlu0 %v2709, 28
        %v2953 = vpop.permute.xlu0 %2952
        %2954 = vrot.lane.b32.xlu0 %v2723, 28
        %v2955 = vpop.permute.xlu0 %2954
        %2956 = vrot.lane.b32.xlu0 %v2733, 28
        %v2957 = vpop.permute.xlu0 %2956
        %2958 = vrot.lane.b32.xlu0 %v2747, 28
        %v2959 = vpop.permute.xlu0 %2958
        %2960 = vrot.lane.b32.xlu0 %v2757, 28
        %v2961 = vpop.permute.xlu0 %2960
        %2962 = vrot.lane.b32.xlu0 %v2771, 28
        %v2963 = vpop.permute.xlu0 %2962
        %2964 = vrot.lane.b32.xlu0 %v2781, 28
        %v2965 = vpop.permute.xlu0 %2964
        %2966 = vrot.lane.b32.xlu0 %v2795, 28
        %v2967 = vpop.permute.xlu0 %2966
        %2968 = vrot.lane.b32.xlu0 %v2805, 28
        %v2969 = vpop.permute.xlu0 %2968
        %2970 = vrot.lane.b32.xlu0 %v2819, 28
        %v2971 = vpop.permute.xlu0 %2970
        %2972 = vrot.lane.b32.xlu0 %v2829, 28
        %v2973 = vpop.permute.xlu0 %2972
        %2974 = vrot.lane.b32.xlu0 %v2843, 28
        %v2975 = vpop.permute.xlu0 %2974
        %2976 = vrot.lane.b32.xlu0 %v2853, 28
        %v2977 = vpop.permute.xlu0 %2976
        %2978 = vrot.lane.b32.xlu0 %v2867, 28
        %v2979 = vpop.permute.xlu0 %2978
        %2980 = vrot.lane.b32.xlu0 %v2877, 28
        %v2981 = vpop.permute.xlu0 %2980
        %2982 = vrot.lane.b32.xlu0 %v2891, 28
        %v2983 = vpop.permute.xlu0 %2982
        %2984 = vrot.lane.b32.xlu0 %v2901, 28
        %v2985 = vpop.permute.xlu0 %2984
        %2986 = vrot.lane.b32.xlu0 %v2915, 28
        %v2987 = vpop.permute.xlu0 %2986
        %2988 = vrot.lane.b32.xlu0 %v2925, 28
        %v2989 = vpop.permute.xlu0 %2988
        %vm3022 = vcmask 257248
        %3023 = vst.msk [vmem:[#allocation2] sm:$0xf] %vm3022, %v2927
        %3024 = vst.msk [vmem:[#allocation2 + $0x4] sm:$0xf] %vm3022, %v2929
        %3025 = vst.msk [vmem:[#allocation2 + $0x8] sm:$0xf] %vm3022, %v2931
        %3026 = vst.msk [vmem:[#allocation2 + $0xc] sm:$0xf] %vm3022, %v2933
        %3027 = vst.msk [vmem:[#allocation2 + $0x10] sm:$0xf] %vm3022, %v2935
        %3028 = vst.msk [vmem:[#allocation2 + $0x14] sm:$0xf] %vm3022, %v2937
        %3029 = vst.msk [vmem:[#allocation2 + $0x18] sm:$0xf] %vm3022, %v2939
        %3030 = vst.msk [vmem:[#allocation2 + $0x1c] sm:$0xf] %vm3022, %v2941
        %3031 = vst.msk [vmem:[#allocation2 + $0x20] sm:$0xf] %vm3022, %v2943
        %3032 = vst.msk [vmem:[#allocation2 + $0x24] sm:$0xf] %vm3022, %v2945
        %3033 = vst.msk [vmem:[#allocation2 + $0x28] sm:$0xf] %vm3022, %v2947
        %3034 = vst.msk [vmem:[#allocation2 + $0x2c] sm:$0xf] %vm3022, %v2949
        %3035 = vst.msk [vmem:[#allocation2 + $0x30] sm:$0xf] %vm3022, %v2951
        %3036 = vst.msk [vmem:[#allocation2 + $0x34] sm:$0xf] %vm3022, %v2953
        %3037 = vst.msk [vmem:[#allocation2 + $0x38] sm:$0xf] %vm3022, %v2955
        %3038 = vst.msk [vmem:[#allocation2 + $0x3c] sm:$0xf] %vm3022, %v2957
        %3039 = vst.msk [vmem:[#allocation2 + $0x40] sm:$0xf] %vm3022, %v2959
        %3040 = vst.msk [vmem:[#allocation2 + $0x44] sm:$0xf] %vm3022, %v2961
        %3041 = vst.msk [vmem:[#allocation2 + $0x48] sm:$0xf] %vm3022, %v2963
        %3042 = vst.msk [vmem:[#allocation2 + $0x4c] sm:$0xf] %vm3022, %v2965
        %3043 = vst.msk [vmem:[#allocation2 + $0x50] sm:$0xf] %vm3022, %v2967
        %3044 = vst.msk [vmem:[#allocation2 + $0x54] sm:$0xf] %vm3022, %v2969
        %3045 = vst.msk [vmem:[#allocation2 + $0x58] sm:$0xf] %vm3022, %v2971
        %3046 = vst.msk [vmem:[#allocation2 + $0x5c] sm:$0xf] %vm3022, %v2973
        %3047 = vst.msk [vmem:[#allocation2 + $0x60] sm:$0xf] %vm3022, %v2975
        %3048 = vst.msk [vmem:[#allocation2 + $0x64] sm:$0xf] %vm3022, %v2977
        %3049 = vst.msk [vmem:[#allocation2 + $0x68] sm:$0xf] %vm3022, %v2979
        %3050 = vst.msk [vmem:[#allocation2 + $0x6c] sm:$0xf] %vm3022, %v2981
        %3051 = vst.msk [vmem:[#allocation2 + $0x70] sm:$0xf] %vm3022, %v2983
        %3052 = vst.msk [vmem:[#allocation2 + $0x74] sm:$0xf] %vm3022, %v2985
        %3053 = vst.msk [vmem:[#allocation2 + $0x78] sm:$0xf] %vm3022, %v2987
        %3054 = vst.msk [vmem:[#allocation2 + $0x7c] sm:$0xf] %vm3022, %v2989
        %v3055 = vld [vmem:[%s2300] sm:$0xe]
        %v3056 = vld [vmem:[%s2300 + $0x4] sm:$0xf]
        %v3057 = vld [vmem:[%s2300 + $0x8] sm:$0x1]
        %v3058 = vld [vmem:[%s2300 + $0xc] sm:$0xe]
        %v3059 = vld [vmem:[%s2300 + $0x10] sm:$0xf]
        %v3060 = vld [vmem:[%s2300 + $0x14] sm:$0x1]
        %v3061 = vld [vmem:[%s2300 + $0x18] sm:$0xe]
        %v3062 = vld [vmem:[%s2300 + $0x1c] sm:$0xf]
        %v3063 = vld [vmem:[%s2300 + $0x20] sm:$0x1]
        %v3064 = vld [vmem:[%s2300 + $0x24] sm:$0xe]
        %v3065 = vld [vmem:[%s2300 + $0x28] sm:$0xf]
        %v3066 = vld [vmem:[%s2300 + $0x2c] sm:$0x1]
        %v3067 = vld [vmem:[%s2300 + $0x30] sm:$0xe]
        %v3068 = vld [vmem:[%s2300 + $0x34] sm:$0xf]
        %v3069 = vld [vmem:[%s2300 + $0x38] sm:$0x1]
        %v3070 = vld [vmem:[%s2300 + $0x3c] sm:$0xe]
        %v3071 = vld [vmem:[%s2300 + $0x40] sm:$0xf]
        %v3072 = vld [vmem:[%s2300 + $0x44] sm:$0x1]
        %v3073 = vld [vmem:[%s2300 + $0x48] sm:$0xe]
        %v3074 = vld [vmem:[%s2300 + $0x4c] sm:$0xf]
        %v3075 = vld [vmem:[%s2300 + $0x50] sm:$0x1]
        %v3076 = vld [vmem:[%s2300 + $0x54] sm:$0xe]
        %v3077 = vld [vmem:[%s2300 + $0x58] sm:$0xf]
        %v3078 = vld [vmem:[%s2300 + $0x5c] sm:$0x1]
        %v3079 = vld [vmem:[%s2300 + $0x60] sm:$0xe]
        %v3080 = vld [vmem:[%s2300 + $0x64] sm:$0xf]
        %v3081 = vld [vmem:[%s2300 + $0x68] sm:$0x1]
        %v3082 = vld [vmem:[%s2300 + $0x6c] sm:$0xe]
        %v3083 = vld [vmem:[%s2300 + $0x70] sm:$0xf]
        %v3084 = vld [vmem:[%s2300 + $0x74] sm:$0x1]
        %v3085 = vld [vmem:[%s2300 + $0x78] sm:$0xe]
        %v3086 = vld [vmem:[%s2300 + $0x7c] sm:$0xf]
        %v3087 = vld [vmem:[%s2300 + $0x80] sm:$0x1]
        %v3088 = vld [vmem:[%s2300 + $0x84] sm:$0xe]
        %v3089 = vld [vmem:[%s2300 + $0x88] sm:$0xf]
        %v3090 = vld [vmem:[%s2300 + $0x8c] sm:$0x1]
        %v3091 = vld [vmem:[%s2300 + $0x90] sm:$0xe]
        %v3092 = vld [vmem:[%s2300 + $0x94] sm:$0xf]
        %v3093 = vld [vmem:[%s2300 + $0x98] sm:$0x1]
        %v3094 = vld [vmem:[%s2300 + $0x9c] sm:$0xe]
        %v3095 = vld [vmem:[%s2300 + $0xa0] sm:$0xf]
        %v3096 = vld [vmem:[%s2300 + $0xa4] sm:$0x1]
        %v3097 = vld [vmem:[%s2300 + $0xa8] sm:$0xe]
        %v3098 = vld [vmem:[%s2300 + $0xac] sm:$0xf]
        %v3099 = vld [vmem:[%s2300 + $0xb0] sm:$0x1]
        %v3100 = vld [vmem:[%s2300 + $0xb4] sm:$0xe]
        %v3101 = vld [vmem:[%s2300 + $0xb8] sm:$0xf]
        %v3102 = vld [vmem:[%s2300 + $0xbc] sm:$0x1]
        %v3151 = vrot.slane %v3055, 5
        %v3152 = vrot.slane %v3151, 4
        %v3153 = vrot.slane %v3056, 5
        %v3154 = vsel %vm966, %v3152, %v3153
        %v3155 = vrot.slane %v3153, 4
        %v3156 = vrot.slane %v3057, 5
        %v3157 = vsel %vm966, %v3155, %v3156
        %v3158 = vrot.slane %v3058, 5
        %v3159 = vrot.slane %v3158, 4
        %v3160 = vrot.slane %v3059, 5
        %v3161 = vsel %vm966, %v3159, %v3160
        %v3162 = vrot.slane %v3160, 4
        %v3163 = vrot.slane %v3060, 5
        %v3164 = vsel %vm966, %v3162, %v3163
        %v3165 = vrot.slane %v3061, 5
        %v3166 = vrot.slane %v3165, 4
        %v3167 = vrot.slane %v3062, 5
        %v3168 = vsel %vm966, %v3166, %v3167
        %v3169 = vrot.slane %v3167, 4
        %v3170 = vrot.slane %v3063, 5
        %v3171 = vsel %vm966, %v3169, %v3170
        %v3172 = vrot.slane %v3064, 5
        %v3173 = vrot.slane %v3172, 4
        %v3174 = vrot.slane %v3065, 5
        %v3175 = vsel %vm966, %v3173, %v3174
        %v3176 = vrot.slane %v3174, 4
        %v3177 = vrot.slane %v3066, 5
        %v3178 = vsel %vm966, %v3176, %v3177
        %v3179 = vrot.slane %v3067, 5
        %v3180 = vrot.slane %v3179, 4
        %v3181 = vrot.slane %v3068, 5
        %v3182 = vsel %vm966, %v3180, %v3181
        %v3183 = vrot.slane %v3181, 4
        %v3184 = vrot.slane %v3069, 5
        %v3185 = vsel %vm966, %v3183, %v3184
        %v3186 = vrot.slane %v3070, 5
        %v3187 = vrot.slane %v3186, 4
        %v3188 = vrot.slane %v3071, 5
        %v3189 = vsel %vm966, %v3187, %v3188
        %v3190 = vrot.slane %v3188, 4
        %v3191 = vrot.slane %v3072, 5
        %v3192 = vsel %vm966, %v3190, %v3191
        %v3193 = vrot.slane %v3073, 5
        %v3194 = vrot.slane %v3193, 4
        %v3195 = vrot.slane %v3074, 5
        %v3196 = vsel %vm966, %v3194, %v3195
        %v3197 = vrot.slane %v3195, 4
        %v3198 = vrot.slane %v3075, 5
        %v3199 = vsel %vm966, %v3197, %v3198
        %v3200 = vrot.slane %v3076, 5
        %v3201 = vrot.slane %v3200, 4
        %v3202 = vrot.slane %v3077, 5
        %v3203 = vsel %vm966, %v3201, %v3202
        %v3204 = vrot.slane %v3202, 4
        %v3205 = vrot.slane %v3078, 5
        %v3206 = vsel %vm966, %v3204, %v3205
        %v3207 = vrot.slane %v3079, 5
        %v3208 = vrot.slane %v3207, 4
        %v3209 = vrot.slane %v3080, 5
        %v3210 = vsel %vm966, %v3208, %v3209
        %v3211 = vrot.slane %v3209, 4
        %v3212 = vrot.slane %v3081, 5
        %v3213 = vsel %vm966, %v3211, %v3212
        %v3214 = vrot.slane %v3082, 5
        %v3215 = vrot.slane %v3214, 4
        %v3216 = vrot.slane %v3083, 5
        %v3217 = vsel %vm966, %v3215, %v3216
        %v3218 = vrot.slane %v3216, 4
        %v3219 = vrot.slane %v3084, 5
        %v3220 = vsel %vm966, %v3218, %v3219
        %v3221 = vrot.slane %v3085, 5
        %v3222 = vrot.slane %v3221, 4
        %v3223 = vrot.slane %v3086, 5
        %v3224 = vsel %vm966, %v3222, %v3223
        %v3225 = vrot.slane %v3223, 4
        %v3226 = vrot.slane %v3087, 5
        %v3227 = vsel %vm966, %v3225, %v3226
        %v3228 = vrot.slane %v3088, 5
        %v3229 = vrot.slane %v3228, 4
        %v3230 = vrot.slane %v3089, 5
        %v3231 = vsel %vm966, %v3229, %v3230
        %v3232 = vrot.slane %v3230, 4
        %v3233 = vrot.slane %v3090, 5
        %v3234 = vsel %vm966, %v3232, %v3233
        %v3235 = vrot.slane %v3091, 5
        %v3236 = vrot.slane %v3235, 4
        %v3237 = vrot.slane %v3092, 5
        %v3238 = vsel %vm966, %v3236, %v3237
        %v3239 = vrot.slane %v3237, 4
        %v3240 = vrot.slane %v3093, 5
        %v3241 = vsel %vm966, %v3239, %v3240
        %v3242 = vrot.slane %v3094, 5
        %v3243 = vrot.slane %v3242, 4
        %v3244 = vrot.slane %v3095, 5
        %v3245 = vsel %vm966, %v3243, %v3244
        %v3246 = vrot.slane %v3244, 4
        %v3247 = vrot.slane %v3096, 5
        %v3248 = vsel %vm966, %v3246, %v3247
        %v3249 = vrot.slane %v3097, 5
        %v3250 = vrot.slane %v3249, 4
        %v3251 = vrot.slane %v3098, 5
        %v3252 = vsel %vm966, %v3250, %v3251
        %v3253 = vrot.slane %v3251, 4
        %v3254 = vrot.slane %v3099, 5
        %v3255 = vsel %vm966, %v3253, %v3254
        %v3256 = vrot.slane %v3100, 5
        %v3257 = vrot.slane %v3256, 4
        %v3258 = vrot.slane %v3101, 5
        %v3259 = vsel %vm966, %v3257, %v3258
        %v3260 = vrot.slane %v3258, 4
        %v3261 = vrot.slane %v3102, 5
        %v3262 = vsel %vm966, %v3260, %v3261
        %3263 = vrot.lane.b32.xlu0 %v3154, 32
        %v3264 = vpop.permute.xlu0 %3263
        %3265 = vrot.lane.b32.xlu0 %v3157, 32
        %v3266 = vpop.permute.xlu0 %3265
        %3267 = vrot.lane.b32.xlu0 %v3161, 32
        %v3268 = vpop.permute.xlu0 %3267
        %3269 = vrot.lane.b32.xlu0 %v3164, 32
        %v3270 = vpop.permute.xlu0 %3269
        %3271 = vrot.lane.b32.xlu0 %v3168, 32
        %v3272 = vpop.permute.xlu0 %3271
        %3273 = vrot.lane.b32.xlu0 %v3171, 32
        %v3274 = vpop.permute.xlu0 %3273
        %3275 = vrot.lane.b32.xlu0 %v3175, 32
        %v3276 = vpop.permute.xlu0 %3275
        %3277 = vrot.lane.b32.xlu0 %v3178, 32
        %v3278 = vpop.permute.xlu0 %3277
        %3279 = vrot.lane.b32.xlu0 %v3182, 32
        %v3280 = vpop.permute.xlu0 %3279
        %3281 = vrot.lane.b32.xlu0 %v3185, 32
        %v3282 = vpop.permute.xlu0 %3281
        %3283 = vrot.lane.b32.xlu0 %v3189, 32
        %v3284 = vpop.permute.xlu0 %3283
        %3285 = vrot.lane.b32.xlu0 %v3192, 32
        %v3286 = vpop.permute.xlu0 %3285
        %3287 = vrot.lane.b32.xlu0 %v3196, 32
        %v3288 = vpop.permute.xlu0 %3287
        %3289 = vrot.lane.b32.xlu0 %v3199, 32
        %v3290 = vpop.permute.xlu0 %3289
        %3291 = vrot.lane.b32.xlu0 %v3203, 32
        %v3292 = vpop.permute.xlu0 %3291
        %3293 = vrot.lane.b32.xlu0 %v3206, 32
        %v3294 = vpop.permute.xlu0 %3293
        %3295 = vrot.lane.b32.xlu0 %v3210, 32
        %v3296 = vpop.permute.xlu0 %3295
        %3297 = vrot.lane.b32.xlu0 %v3213, 32
        %v3298 = vpop.permute.xlu0 %3297
        %3299 = vrot.lane.b32.xlu0 %v3217, 32
        %v3300 = vpop.permute.xlu0 %3299
        %3301 = vrot.lane.b32.xlu0 %v3220, 32
        %v3302 = vpop.permute.xlu0 %3301
        %3303 = vrot.lane.b32.xlu0 %v3224, 32
        %v3304 = vpop.permute.xlu0 %3303
        %3305 = vrot.lane.b32.xlu0 %v3227, 32
        %v3306 = vpop.permute.xlu0 %3305
        %3307 = vrot.lane.b32.xlu0 %v3231, 32
        %v3308 = vpop.permute.xlu0 %3307
        %3309 = vrot.lane.b32.xlu0 %v3234, 32
        %v3310 = vpop.permute.xlu0 %3309
        %3311 = vrot.lane.b32.xlu0 %v3238, 32
        %v3312 = vpop.permute.xlu0 %3311
        %3313 = vrot.lane.b32.xlu0 %v3241, 32
        %v3314 = vpop.permute.xlu0 %3313
        %3315 = vrot.lane.b32.xlu0 %v3245, 32
        %v3316 = vpop.permute.xlu0 %3315
        %3317 = vrot.lane.b32.xlu0 %v3248, 32
        %v3318 = vpop.permute.xlu0 %3317
        %3319 = vrot.lane.b32.xlu0 %v3252, 32
        %v3320 = vpop.permute.xlu0 %3319
        %3321 = vrot.lane.b32.xlu0 %v3255, 32
        %v3322 = vpop.permute.xlu0 %3321
        %3323 = vrot.lane.b32.xlu0 %v3259, 32
        %v3324 = vpop.permute.xlu0 %3323
        %3325 = vrot.lane.b32.xlu0 %v3262, 32
        %v3326 = vpop.permute.xlu0 %3325
        %vm3359 = vcmask 290048
        %3360 = vst.msk [vmem:[#allocation2] sm:$0xf] %vm3359, %v3264
        %3361 = vst.msk [vmem:[#allocation2 + $0x4] sm:$0xf] %vm3359, %v3266
        %3362 = vst.msk [vmem:[#allocation2 + $0x8] sm:$0xf] %vm3359, %v3268
        %3363 = vst.msk [vmem:[#allocation2 + $0xc] sm:$0xf] %vm3359, %v3270
        %3364 = vst.msk [vmem:[#allocation2 + $0x10] sm:$0xf] %vm3359, %v3272
        %3365 = vst.msk [vmem:[#allocation2 + $0x14] sm:$0xf] %vm3359, %v3274
        %3366 = vst.msk [vmem:[#allocation2 + $0x18] sm:$0xf] %vm3359, %v3276
        %3367 = vst.msk [vmem:[#allocation2 + $0x1c] sm:$0xf] %vm3359, %v3278
        %3368 = vst.msk [vmem:[#allocation2 + $0x20] sm:$0xf] %vm3359, %v3280
        %3369 = vst.msk [vmem:[#allocation2 + $0x24] sm:$0xf] %vm3359, %v3282
        %3370 = vst.msk [vmem:[#allocation2 + $0x28] sm:$0xf] %vm3359, %v3284
        %3371 = vst.msk [vmem:[#allocation2 + $0x2c] sm:$0xf] %vm3359, %v3286
        %3372 = vst.msk [vmem:[#allocation2 + $0x30] sm:$0xf] %vm3359, %v3288
        %3373 = vst.msk [vmem:[#allocation2 + $0x34] sm:$0xf] %vm3359, %v3290
        %3374 = vst.msk [vmem:[#allocation2 + $0x38] sm:$0xf] %vm3359, %v3292
        %3375 = vst.msk [vmem:[#allocation2 + $0x3c] sm:$0xf] %vm3359, %v3294
        %3376 = vst.msk [vmem:[#allocation2 + $0x40] sm:$0xf] %vm3359, %v3296
        %3377 = vst.msk [vmem:[#allocation2 + $0x44] sm:$0xf] %vm3359, %v3298
        %3378 = vst.msk [vmem:[#allocation2 + $0x48] sm:$0xf] %vm3359, %v3300
        %3379 = vst.msk [vmem:[#allocation2 + $0x4c] sm:$0xf] %vm3359, %v3302
        %3380 = vst.msk [vmem:[#allocation2 + $0x50] sm:$0xf] %vm3359, %v3304
        %3381 = vst.msk [vmem:[#allocation2 + $0x54] sm:$0xf] %vm3359, %v3306
        %3382 = vst.msk [vmem:[#allocation2 + $0x58] sm:$0xf] %vm3359, %v3308
        %3383 = vst.msk [vmem:[#allocation2 + $0x5c] sm:$0xf] %vm3359, %v3310
        %3384 = vst.msk [vmem:[#allocation2 + $0x60] sm:$0xf] %vm3359, %v3312
        %3385 = vst.msk [vmem:[#allocation2 + $0x64] sm:$0xf] %vm3359, %v3314
        %3386 = vst.msk [vmem:[#allocation2 + $0x68] sm:$0xf] %vm3359, %v3316
        %3387 = vst.msk [vmem:[#allocation2 + $0x6c] sm:$0xf] %vm3359, %v3318
        %3388 = vst.msk [vmem:[#allocation2 + $0x70] sm:$0xf] %vm3359, %v3320
        %3389 = vst.msk [vmem:[#allocation2 + $0x74] sm:$0xf] %vm3359, %v3322
        %3390 = vst.msk [vmem:[#allocation2 + $0x78] sm:$0xf] %vm3359, %v3324
        %3391 = vst.msk [vmem:[#allocation2 + $0x7c] sm:$0xf] %vm3359, %v3326
        %v3392 = vld [vmem:[#allocation2] sm:$0xf]
        %v3393 = vld [vmem:[#allocation2 + $0x4] sm:$0xf]
        %v3394 = vld [vmem:[#allocation2 + $0x8] sm:$0xf]
        %v3395 = vld [vmem:[#allocation2 + $0xc] sm:$0xf]
        %v3396 = vld [vmem:[#allocation2 + $0x10] sm:$0xf]
        %v3397 = vld [vmem:[#allocation2 + $0x14] sm:$0xf]
        %v3398 = vld [vmem:[#allocation2 + $0x18] sm:$0xf]
        %v3399 = vld [vmem:[#allocation2 + $0x1c] sm:$0xf]
        %v3400 = vld [vmem:[#allocation2 + $0x20] sm:$0xf]
        %v3401 = vld [vmem:[#allocation2 + $0x24] sm:$0xf]
        %v3402 = vld [vmem:[#allocation2 + $0x28] sm:$0xf]
        %v3403 = vld [vmem:[#allocation2 + $0x2c] sm:$0xf]
        %v3404 = vld [vmem:[#allocation2 + $0x30] sm:$0xf]
        %v3405 = vld [vmem:[#allocation2 + $0x34] sm:$0xf]
        %v3406 = vld [vmem:[#allocation2 + $0x38] sm:$0xf]
        %v3407 = vld [vmem:[#allocation2 + $0x3c] sm:$0xf]
        %v3408 = vld [vmem:[#allocation2 + $0x40] sm:$0xf]
        %v3409 = vld [vmem:[#allocation2 + $0x44] sm:$0xf]
        %v3410 = vld [vmem:[#allocation2 + $0x48] sm:$0xf]
        %v3411 = vld [vmem:[#allocation2 + $0x4c] sm:$0xf]
        %v3412 = vld [vmem:[#allocation2 + $0x50] sm:$0xf]
        %v3413 = vld [vmem:[#allocation2 + $0x54] sm:$0xf]
        %v3414 = vld [vmem:[#allocation2 + $0x58] sm:$0xf]
        %v3415 = vld [vmem:[#allocation2 + $0x5c] sm:$0xf]
        %v3416 = vld [vmem:[#allocation2 + $0x60] sm:$0xf]
        %v3417 = vld [vmem:[#allocation2 + $0x64] sm:$0xf]
        %v3418 = vld [vmem:[#allocation2 + $0x68] sm:$0xf]
        %v3419 = vld [vmem:[#allocation2 + $0x6c] sm:$0xf]
        %v3420 = vld [vmem:[#allocation2 + $0x70] sm:$0xf]
        %v3421 = vld [vmem:[#allocation2 + $0x74] sm:$0xf]
        %v3422 = vld [vmem:[#allocation2 + $0x78] sm:$0xf]
        %v3423 = vld [vmem:[#allocation2 + $0x7c] sm:$0xf]
        %v3424 = vld [vmem:[%s1] sm:$0xff]
        %v3425 = vld [vmem:[%s1 + $0x8] sm:$0xff]
        %v3426 = vld [vmem:[%s1 + $0x10] sm:$0xff]
        %v3427 = vld [vmem:[%s1 + $0x18] sm:$0xff]
        %v3428 = vld [vmem:[%s1 + $0x20] sm:$0x33]
        %v3429 = vld [vmem:[%s2] sm:$0x3]
        %v3431 = vlaneseq
        %v3432 = vshrl.u32 %v3431, 7
        %v3433 = vsub.s32 0, %v3432
        %v3434 = vrot.slane %v3429, %v3433
        %v3435 = vlaneseq
        %v3436 = vshrl.u32 %v3435, 7
        %v3437 = vsub.s32 1, %v3436
        %v3438 = vrot.slane %v3429, %v3437
        %v3473 = vunpack.c.l.b16 %v3392
        %v3474 = vunpack.c.l.b16 %v3393
        %v3475 = vunpack.c.l.b16 %v3394
        %v3476 = vunpack.c.l.b16 %v3395
        %v3477 = vunpack.c.l.b16 %v3396
        %v3478 = vunpack.c.l.b16 %v3397
        %v3479 = vunpack.c.l.b16 %v3398
        %v3480 = vunpack.c.l.b16 %v3399
        %v3481 = vunpack.c.l.b16 %v3400
        %v3482 = vunpack.c.l.b16 %v3401
        %v3483 = vunpack.c.l.b16 %v3402
        %v3484 = vunpack.c.l.b16 %v3403
        %v3485 = vunpack.c.l.b16 %v3404
        %v3486 = vunpack.c.l.b16 %v3405
        %v3487 = vunpack.c.l.b16 %v3406
        %v3488 = vunpack.c.l.b16 %v3407
        %v3489 = vunpack.c.l.b16 %v3408
        %v3490 = vunpack.c.l.b16 %v3409
        %v3491 = vunpack.c.l.b16 %v3410
        %v3492 = vunpack.c.l.b16 %v3411
        %v3493 = vunpack.c.l.b16 %v3412
        %v3494 = vunpack.c.l.b16 %v3413
        %v3495 = vunpack.c.l.b16 %v3414
        %v3496 = vunpack.c.l.b16 %v3415
        %v3497 = vunpack.c.l.b16 %v3416
        %v3498 = vunpack.c.l.b16 %v3417
        %v3499 = vunpack.c.l.b16 %v3418
        %v3500 = vunpack.c.l.b16 %v3419
        %v3501 = vunpack.c.l.b16 %v3420
        %v3502 = vunpack.c.l.b16 %v3421
        %v3503 = vunpack.c.l.b16 %v3422
        %v3504 = vunpack.c.l.b16 %v3423
        %v3505 = vpack.c.b16 %v3474, %v3473
        %v3506 = vpack.c.b16 %v3476, %v3475
        %v3507 = vpack.c.b16 %v3478, %v3477
        %v3508 = vpack.c.b16 %v3480, %v3479
        %v3509 = vpack.c.b16 %v3482, %v3481
        %v3510 = vpack.c.b16 %v3484, %v3483
        %v3511 = vpack.c.b16 %v3486, %v3485
        %v3512 = vpack.c.b16 %v3488, %v3487
        %v3513 = vpack.c.b16 %v3490, %v3489
        %v3514 = vpack.c.b16 %v3492, %v3491
        %v3515 = vpack.c.b16 %v3494, %v3493
        %v3516 = vpack.c.b16 %v3496, %v3495
        %v3517 = vpack.c.b16 %v3498, %v3497
        %v3518 = vpack.c.b16 %v3500, %v3499
        %v3519 = vpack.c.b16 %v3502, %v3501
        %v3520 = vpack.c.b16 %v3504, %v3503
        %v3526 = vunpack.c.l.b16 %v3424
        %v3527 = vunpack.c.h.b16 %v3424
        %v3528 = vunpack.c.l.b16 %v3425
        %v3529 = vunpack.c.h.b16 %v3425
        %v3530 = vunpack.c.l.b16 %v3426
        %v3531 = vunpack.c.h.b16 %v3426
        %v3532 = vunpack.c.l.b16 %v3427
        %v3533 = vunpack.c.h.b16 %v3427
        %v3534 = vunpack.c.l.b16 %v3428
        %v3535 = vunpack.c.h.b16 %v3428
        %v3536 = vpack.c.b16 %v3528, %v3526
        %v3537 = vpack.c.b16 %v3529, %v3527
        %v3538 = vpack.c.b16 %v3532, %v3530
        %v3539 = vpack.c.b16 %v3533, %v3531
        %v3540 = vpack.c.b16 %v3534, %v3534
        %v3541 = vpack.c.b16 %v3535, %v3535
        %vm3546 = vcmask 293888
        %v3548 = vsel %vm3546, %v3505, 0
        %v3551 = vsel %vm3546, %v3506, 0
        %v3554 = vsel %vm3546, %v3507, 0
        %v3557 = vsel %vm3546, %v3508, 0
        %v3560 = vsel %vm3546, %v3509, 0
        %v3563 = vsel %vm3546, %v3510, 0
        %v3566 = vsel %vm3546, %v3511, 0
        %v3569 = vsel %vm3546, %v3512, 0
        %v3572 = vsel %vm3546, %v3513, 0
        %v3575 = vsel %vm3546, %v3514, 0
        %v3578 = vsel %vm3546, %v3515, 0
        %v3581 = vsel %vm3546, %v3516, 0
        %v3584 = vsel %vm3546, %v3517, 0
        %v3587 = vsel %vm3546, %v3518, 0
        %v3590 = vsel %vm3546, %v3519, 0
        %v3593 = vsel %vm3546, %v3520, 0
        %vm3595 = vcmask 1041408
        %v3597 = vsel %vm3595, %v3540, 0
        %v3600 = vsel %vm3595, %v3541, 0
        %3602 = vmatprep.subr.bf16.mxu0 0
        %3603 = vmatpush1.bf16.msra.mxu0 0
        %3604 = vmatprep.subr.bf16.mxu0 0
        %3605 = vmatpush1.bf16.msra.mxu0 0
        %3606 = vmatprep.subr.bf16.mxu0 0
        %3607 = vmatpush1.bf16.msra.mxu0 0
        %3608 = vmatprep.subr.bf16.mxu0 0
        %3609 = vmatpush1.bf16.msra.mxu0 0
        %3610 = vmatprep.subr.bf16.mxu0 0
        %3611 = vmatpush1.bf16.msra.mxu0 0
        %3612 = vmatprep.subr.bf16.mxu0 %v3600
        %3613 = vmatpush1.bf16.msra.mxu0 %v3597
        %3614 = vmatprep.subr.bf16.mxu0 %v3539
        %3615 = vmatpush1.bf16.msra.mxu0 %v3538
        %3616 = vmatprep.subr.bf16.mxu0 %v3537
        %3617 = vmatpush1.bf16.msra.mxu0 %v3536
        %3618 = vmatprep.subr.bf16.mxu0 0
        %3619 = vmatpush2.bf16.msra.mxu0 0
        %3620 = vmatprep.subr.bf16.mxu0 0
        %3621 = vmatpush2.bf16.msra.mxu0 0
        %3622 = vmatprep.subr.bf16.mxu0 0
        %3623 = vmatpush2.bf16.msra.mxu0 0
        %3624 = vmatprep.subr.bf16.mxu0 0
        %3625 = vmatpush2.bf16.msra.mxu0 0
        %3626 = vmatprep.subr.bf16.mxu0 0
        %3627 = vmatpush2.bf16.msra.mxu0 0
        %3628 = vmatprep.subr.bf16.mxu0 0
        %3629 = vmatpush2.bf16.msra.mxu0 0
        %3630 = vmatprep.subr.bf16.mxu0 0
        %3631 = vmatpush2.bf16.msra.mxu0 0
        %3632 = vmatprep.subr.bf16.mxu0 0
        %3633 = vmatpush2.bf16.msra.mxu0 0
        %3634 = vmatprep.mubr.bf16.mxu0 0
        %3635 = vmatmul.mubr.bf16.gmra.mxu0 %v3548
        %v3636 = vpop.f32.mrf.mxu0
        %v3637 = vadd.f32 %v3434, %v3636
        %v3638 = vpop.f32.mrf.mxu0
        %v3639 = vadd.f32 %v3438, %v3638
        %v3640 = vpop.f32.mrf.mxu0
        %v3641 = vadd.f32 %v3434, %v3640
        %v3642 = vpop.f32.mrf.mxu0
        %v3643 = vadd.f32 %v3438, %v3642
        %3644 = vmatprep.mubr.bf16.mxu0 0
        %3645 = vmatmul.mubr.bf16.gmra.mxu0 %v3551
        %v3646 = vpop.f32.mrf.mxu0
        %v3647 = vadd.f32 %v3434, %v3646
        %v3648 = vpop.f32.mrf.mxu0
        %v3649 = vadd.f32 %v3438, %v3648
        %v3650 = vpop.f32.mrf.mxu0
        %v3651 = vadd.f32 %v3434, %v3650
        %v3652 = vpop.f32.mrf.mxu0
        %v3653 = vadd.f32 %v3438, %v3652
        %3654 = vmatprep.mubr.bf16.mxu0 0
        %3655 = vmatmul.mubr.bf16.gmra.mxu0 %v3554
        %v3656 = vpop.f32.mrf.mxu0
        %v3657 = vadd.f32 %v3434, %v3656
        %v3658 = vpop.f32.mrf.mxu0
        %v3659 = vadd.f32 %v3438, %v3658
        %v3660 = vpop.f32.mrf.mxu0
        %v3661 = vadd.f32 %v3434, %v3660
        %v3662 = vpop.f32.mrf.mxu0
        %v3663 = vadd.f32 %v3438, %v3662
        %3664 = vmatprep.mubr.bf16.mxu0 0
        %3665 = vmatmul.mubr.bf16.gmra.mxu0 %v3557
        %v3666 = vpop.f32.mrf.mxu0
        %v3667 = vadd.f32 %v3434, %v3666
        %v3668 = vpop.f32.mrf.mxu0
        %v3669 = vadd.f32 %v3438, %v3668
        %v3670 = vpop.f32.mrf.mxu0
        %v3671 = vadd.f32 %v3434, %v3670
        %v3672 = vpop.f32.mrf.mxu0
        %v3673 = vadd.f32 %v3438, %v3672
        %3674 = vmatprep.mubr.bf16.mxu0 0
        %3675 = vmatmul.mubr.bf16.gmra.mxu0 %v3560
        %v3676 = vpop.f32.mrf.mxu0
        %v3677 = vadd.f32 %v3434, %v3676
        %v3678 = vpop.f32.mrf.mxu0
        %v3679 = vadd.f32 %v3438, %v3678
        %v3680 = vpop.f32.mrf.mxu0
        %v3681 = vadd.f32 %v3434, %v3680
        %v3682 = vpop.f32.mrf.mxu0
        %v3683 = vadd.f32 %v3438, %v3682
        %3684 = vmatprep.mubr.bf16.mxu0 0
        %3685 = vmatmul.mubr.bf16.gmra.mxu0 %v3563
        %v3686 = vpop.f32.mrf.mxu0
        %v3687 = vadd.f32 %v3434, %v3686
        %v3688 = vpop.f32.mrf.mxu0
        %v3689 = vadd.f32 %v3438, %v3688
        %v3690 = vpop.f32.mrf.mxu0
        %v3691 = vadd.f32 %v3434, %v3690
        %v3692 = vpop.f32.mrf.mxu0
        %v3693 = vadd.f32 %v3438, %v3692
        %3694 = vmatprep.mubr.bf16.mxu0 0
        %3695 = vmatmul.mubr.bf16.gmra.mxu0 %v3566
        %v3696 = vpop.f32.mrf.mxu0
        %v3697 = vadd.f32 %v3434, %v3696
        %v3698 = vpop.f32.mrf.mxu0
        %v3699 = vadd.f32 %v3438, %v3698
        %v3700 = vpop.f32.mrf.mxu0
        %v3701 = vadd.f32 %v3434, %v3700
        %v3702 = vpop.f32.mrf.mxu0
        %v3703 = vadd.f32 %v3438, %v3702
        %3704 = vmatprep.mubr.bf16.mxu0 0
        %3705 = vmatmul.mubr.bf16.gmra.mxu0 %v3569
        %v3706 = vpop.f32.mrf.mxu0
        %v3707 = vadd.f32 %v3434, %v3706
        %v3708 = vpop.f32.mrf.mxu0
        %v3709 = vadd.f32 %v3438, %v3708
        %v3710 = vpop.f32.mrf.mxu0
        %v3711 = vadd.f32 %v3434, %v3710
        %v3712 = vpop.f32.mrf.mxu0
        %v3713 = vadd.f32 %v3438, %v3712
        %3714 = vmatprep.mubr.bf16.mxu0 0
        %3715 = vmatmul.mubr.bf16.gmra.mxu0 %v3572
        %v3716 = vpop.f32.mrf.mxu0
        %v3717 = vadd.f32 %v3434, %v3716
        %v3718 = vpop.f32.mrf.mxu0
        %v3719 = vadd.f32 %v3438, %v3718
        %v3720 = vpop.f32.mrf.mxu0
        %v3721 = vadd.f32 %v3434, %v3720
        %v3722 = vpop.f32.mrf.mxu0
        %v3723 = vadd.f32 %v3438, %v3722
        %3724 = vmatprep.mubr.bf16.mxu0 0
        %3725 = vmatmul.mubr.bf16.gmra.mxu0 %v3575
        %v3726 = vpop.f32.mrf.mxu0
        %v3727 = vadd.f32 %v3434, %v3726
        %v3728 = vpop.f32.mrf.mxu0
        %v3729 = vadd.f32 %v3438, %v3728
        %v3730 = vpop.f32.mrf.mxu0
        %v3731 = vadd.f32 %v3434, %v3730
        %v3732 = vpop.f32.mrf.mxu0
        %v3733 = vadd.f32 %v3438, %v3732
        %3734 = vmatprep.mubr.bf16.mxu0 0
        %3735 = vmatmul.mubr.bf16.gmra.mxu0 %v3578
        %v3736 = vpop.f32.mrf.mxu0
        %v3737 = vadd.f32 %v3434, %v3736
        %v3738 = vpop.f32.mrf.mxu0
        %v3739 = vadd.f32 %v3438, %v3738
        %v3740 = vpop.f32.mrf.mxu0
        %v3741 = vadd.f32 %v3434, %v3740
        %v3742 = vpop.f32.mrf.mxu0
        %v3743 = vadd.f32 %v3438, %v3742
        %3744 = vmatprep.mubr.bf16.mxu0 0
        %3745 = vmatmul.mubr.bf16.gmra.mxu0 %v3581
        %v3746 = vpop.f32.mrf.mxu0
        %v3747 = vadd.f32 %v3434, %v3746
        %v3748 = vpop.f32.mrf.mxu0
        %v3749 = vadd.f32 %v3438, %v3748
        %v3750 = vpop.f32.mrf.mxu0
        %v3751 = vadd.f32 %v3434, %v3750
        %v3752 = vpop.f32.mrf.mxu0
        %v3753 = vadd.f32 %v3438, %v3752
        %3754 = vmatprep.mubr.bf16.mxu0 0
        %3755 = vmatmul.mubr.bf16.gmra.mxu0 %v3584
        %v3756 = vpop.f32.mrf.mxu0
        %v3757 = vadd.f32 %v3434, %v3756
        %v3758 = vpop.f32.mrf.mxu0
        %v3759 = vadd.f32 %v3438, %v3758
        %v3760 = vpop.f32.mrf.mxu0
        %v3761 = vadd.f32 %v3434, %v3760
        %v3762 = vpop.f32.mrf.mxu0
        %v3763 = vadd.f32 %v3438, %v3762
        %3764 = vmatprep.mubr.bf16.mxu0 0
        %3765 = vmatmul.mubr.bf16.gmra.mxu0 %v3587
        %v3766 = vpop.f32.mrf.mxu0
        %v3767 = vadd.f32 %v3434, %v3766
        %v3768 = vpop.f32.mrf.mxu0
        %v3769 = vadd.f32 %v3438, %v3768
        %v3770 = vpop.f32.mrf.mxu0
        %v3771 = vadd.f32 %v3434, %v3770
        %v3772 = vpop.f32.mrf.mxu0
        %v3773 = vadd.f32 %v3438, %v3772
        %3774 = vmatprep.mubr.bf16.mxu0 0
        %3775 = vmatmul.mubr.bf16.gmra.mxu0 %v3590
        %v3776 = vpop.f32.mrf.mxu0
        %v3777 = vadd.f32 %v3434, %v3776
        %v3778 = vpop.f32.mrf.mxu0
        %v3779 = vadd.f32 %v3438, %v3778
        %v3780 = vpop.f32.mrf.mxu0
        %v3781 = vadd.f32 %v3434, %v3780
        %v3782 = vpop.f32.mrf.mxu0
        %v3783 = vadd.f32 %v3438, %v3782
        %3784 = vmatprep.mubr.bf16.mxu0 0
        %3785 = vmatmul.mubr.bf16.gmra.mxu0 %v3593
        %v3786 = vpop.f32.mrf.mxu0
        %v3787 = vadd.f32 %v3434, %v3786
        %v3788 = vpop.f32.mrf.mxu0
        %v3789 = vadd.f32 %v3438, %v3788
        %v3790 = vpop.f32.mrf.mxu0
        %v3791 = vadd.f32 %v3434, %v3790
        %v3792 = vpop.f32.mrf.mxu0
        %v3793 = vadd.f32 %v3438, %v3792
        %3794 = vdwg.mxu0
        %v3795 = vmax.f32 %v3637, 0.0
        %v3796 = vmax.f32 %v3641, 0.0
        %v3797 = vmax.f32 %v3647, 0.0
        %v3798 = vmax.f32 %v3651, 0.0
        %v3799 = vmax.f32 %v3657, 0.0
        %v3800 = vmax.f32 %v3661, 0.0
        %v3801 = vmax.f32 %v3667, 0.0
        %v3802 = vmax.f32 %v3671, 0.0
        %v3803 = vmax.f32 %v3677, 0.0
        %v3804 = vmax.f32 %v3681, 0.0
        %v3805 = vmax.f32 %v3687, 0.0
        %v3806 = vmax.f32 %v3691, 0.0
        %v3807 = vmax.f32 %v3697, 0.0
        %v3808 = vmax.f32 %v3701, 0.0
        %v3809 = vmax.f32 %v3707, 0.0
        %v3810 = vmax.f32 %v3711, 0.0
        %v3811 = vmax.f32 %v3717, 0.0
        %v3812 = vmax.f32 %v3721, 0.0
        %v3813 = vmax.f32 %v3727, 0.0
        %v3814 = vmax.f32 %v3731, 0.0
        %v3815 = vmax.f32 %v3737, 0.0
        %v3816 = vmax.f32 %v3741, 0.0
        %v3817 = vmax.f32 %v3747, 0.0
        %v3818 = vmax.f32 %v3751, 0.0
        %v3819 = vmax.f32 %v3757, 0.0
        %v3820 = vmax.f32 %v3761, 0.0
        %v3821 = vmax.f32 %v3767, 0.0
        %v3822 = vmax.f32 %v3771, 0.0
        %v3823 = vmax.f32 %v3777, 0.0
        %v3824 = vmax.f32 %v3781, 0.0
        %v3825 = vmax.f32 %v3787, 0.0
        %v3826 = vmax.f32 %v3791, 0.0
        %v3827 = vpack.c.bf16 %v3796, %v3795
        %v3828 = vpack.c.bf16 %v3798, %v3797
        %v3829 = vpack.c.bf16 %v3800, %v3799
        %v3830 = vpack.c.bf16 %v3802, %v3801
        %v3831 = vpack.c.bf16 %v3804, %v3803
        %v3832 = vpack.c.bf16 %v3806, %v3805
        %v3833 = vpack.c.bf16 %v3808, %v3807
        %v3834 = vpack.c.bf16 %v3810, %v3809
        %v3835 = vpack.c.bf16 %v3812, %v3811
        %v3836 = vpack.c.bf16 %v3814, %v3813
        %v3837 = vpack.c.bf16 %v3816, %v3815
        %v3838 = vpack.c.bf16 %v3818, %v3817
        %v3839 = vpack.c.bf16 %v3820, %v3819
        %v3840 = vpack.c.bf16 %v3822, %v3821
        %v3841 = vpack.c.bf16 %v3824, %v3823
        %v3842 = vpack.c.bf16 %v3826, %v3825
        %v3859 = vunpack.c.l.b16 %v3827
        %v3860 = vunpack.c.h.b16 %v3827
        %v3861 = vunpack.c.l.b16 %v3828
        %v3862 = vunpack.c.h.b16 %v3828
        %v3863 = vunpack.c.l.b16 %v3829
        %v3864 = vunpack.c.h.b16 %v3829
        %v3865 = vunpack.c.l.b16 %v3830
        %v3866 = vunpack.c.h.b16 %v3830
        %v3867 = vunpack.c.l.b16 %v3831
        %v3868 = vunpack.c.h.b16 %v3831
        %v3869 = vunpack.c.l.b16 %v3832
        %v3870 = vunpack.c.h.b16 %v3832
        %v3871 = vunpack.c.l.b16 %v3833
        %v3872 = vunpack.c.h.b16 %v3833
        %v3873 = vunpack.c.l.b16 %v3834
        %v3874 = vunpack.c.h.b16 %v3834
        %v3875 = vunpack.c.l.b16 %v3835
        %v3876 = vunpack.c.h.b16 %v3835
        %v3877 = vunpack.c.l.b16 %v3836
        %v3878 = vunpack.c.h.b16 %v3836
        %v3879 = vunpack.c.l.b16 %v3837
        %v3880 = vunpack.c.h.b16 %v3837
        %v3881 = vunpack.c.l.b16 %v3838
        %v3882 = vunpack.c.h.b16 %v3838
        %v3883 = vunpack.c.l.b16 %v3839
        %v3884 = vunpack.c.h.b16 %v3839
        %v3885 = vunpack.c.l.b16 %v3840
        %v3886 = vunpack.c.h.b16 %v3840
        %v3887 = vunpack.c.l.b16 %v3841
        %v3888 = vunpack.c.h.b16 %v3841
        %v3889 = vunpack.c.l.b16 %v3842
        %v3890 = vunpack.c.h.b16 %v3842
        %v3891 = vpack.c.b16 %v3859, %v3859
        %v3892 = vpack.c.b16 %v3860, %v3860
        %v3893 = vpack.c.b16 %v3861, %v3861
        %v3894 = vpack.c.b16 %v3862, %v3862
        %v3895 = vpack.c.b16 %v3863, %v3863
        %v3896 = vpack.c.b16 %v3864, %v3864
        %v3897 = vpack.c.b16 %v3865, %v3865
        %v3898 = vpack.c.b16 %v3866, %v3866
        %v3899 = vpack.c.b16 %v3867, %v3867
        %v3900 = vpack.c.b16 %v3868, %v3868
        %v3901 = vpack.c.b16 %v3869, %v3869
        %v3902 = vpack.c.b16 %v3870, %v3870
        %v3903 = vpack.c.b16 %v3871, %v3871
        %v3904 = vpack.c.b16 %v3872, %v3872
        %v3905 = vpack.c.b16 %v3873, %v3873
        %v3906 = vpack.c.b16 %v3874, %v3874
        %v3907 = vpack.c.b16 %v3875, %v3875
        %v3908 = vpack.c.b16 %v3876, %v3876
        %v3909 = vpack.c.b16 %v3877, %v3877
        %v3910 = vpack.c.b16 %v3878, %v3878
        %v3911 = vpack.c.b16 %v3879, %v3879
        %v3912 = vpack.c.b16 %v3880, %v3880
        %v3913 = vpack.c.b16 %v3881, %v3881
        %v3914 = vpack.c.b16 %v3882, %v3882
        %v3915 = vpack.c.b16 %v3883, %v3883
        %v3916 = vpack.c.b16 %v3884, %v3884
        %v3917 = vpack.c.b16 %v3885, %v3885
        %v3918 = vpack.c.b16 %v3886, %v3886
        %v3919 = vpack.c.b16 %v3887, %v3887
        %v3920 = vpack.c.b16 %v3888, %v3888
        %v3921 = vpack.c.b16 %v3889, %v3889
        %v3922 = vpack.c.b16 %v3890, %v3890
        %s3955 = scalar_lea.vmem [#allocation3], 16
        %3956 = vst [vmem:[%s3955 + $0x4] sm:$0xf] %v3891
        %3957 = vst [vmem:[%s3955 + $0x8] sm:$0xf] %v3892
        %3958 = vst [vmem:[%s3955 + $0x14] sm:$0xf] %v3893
        %3959 = vst [vmem:[%s3955 + $0x18] sm:$0xf] %v3894
        %3960 = vst [vmem:[%s3955 + $0x24] sm:$0xf] %v3895
        %3961 = vst [vmem:[%s3955 + $0x28] sm:$0xf] %v3896
        %3962 = vst [vmem:[%s3955 + $0x34] sm:$0xf] %v3897
        %3963 = vst [vmem:[%s3955 + $0x38] sm:$0xf] %v3898
        %3964 = vst [vmem:[%s3955 + $0x44] sm:$0xf] %v3899
        %3965 = vst [vmem:[%s3955 + $0x48] sm:$0xf] %v3900
        %3966 = vst [vmem:[%s3955 + $0x54] sm:$0xf] %v3901
        %3967 = vst [vmem:[%s3955 + $0x58] sm:$0xf] %v3902
        %3968 = vst [vmem:[%s3955 + $0x64] sm:$0xf] %v3903
        %3969 = vst [vmem:[%s3955 + $0x68] sm:$0xf] %v3904
        %3970 = vst [vmem:[%s3955 + $0x74] sm:$0xf] %v3905
        %3971 = vst [vmem:[%s3955 + $0x78] sm:$0xf] %v3906
        %3972 = vst [vmem:[%s3955 + $0x84] sm:$0xf] %v3907
        %3973 = vst [vmem:[%s3955 + $0x88] sm:$0xf] %v3908
        %3974 = vst [vmem:[%s3955 + $0x94] sm:$0xf] %v3909
        %3975 = vst [vmem:[%s3955 + $0x98] sm:$0xf] %v3910
        %3976 = vst [vmem:[%s3955 + $0xa4] sm:$0xf] %v3911
        %3977 = vst [vmem:[%s3955 + $0xa8] sm:$0xf] %v3912
        %3978 = vst [vmem:[%s3955 + $0xb4] sm:$0xf] %v3913
        %3979 = vst [vmem:[%s3955 + $0xb8] sm:$0xf] %v3914
        %3980 = vst [vmem:[%s3955 + $0xc4] sm:$0xf] %v3915
        %3981 = vst [vmem:[%s3955 + $0xc8] sm:$0xf] %v3916
        %3982 = vst [vmem:[%s3955 + $0xd4] sm:$0xf] %v3917
        %3983 = vst [vmem:[%s3955 + $0xd8] sm:$0xf] %v3918
        %3984 = vst [vmem:[%s3955 + $0xe4] sm:$0xf] %v3919
        %3985 = vst [vmem:[%s3955 + $0xe8] sm:$0xf] %v3920
        %3986 = vst [vmem:[%s3955 + $0xf4] sm:$0xf] %v3921
        %3987 = vst [vmem:[%s3955 + $0xf8] sm:$0xf] %v3922
        %3988 = vst [vmem:[#allocation3] sm:$0xf] 0
        %3989 = vst [vmem:[#allocation3 + $0x4] sm:$0xf] 0
        %3990 = vst [vmem:[#allocation3 + $0x8] sm:$0xf] 0
        %vm3991 = vcmask 1040384
        %vm3992 = vsmask.f32 256
        %vm3993 = vmand %vm3991, %vm3992
        %v3994 = vld [vmem:[#allocation3 + $0xc] sm:$0x1]
        %v3995 = vsel %vm3993, 0, %v3994
        %3996 = vst [vmem:[#allocation3 + $0xc] sm:$0x1] %v3995
        %s3997 = scalar_lea.vmem [#allocation3], 272
        %3998 = vst [vmem:[%s3997] sm:$0xf] 0
        %3999 = vst [vmem:[%s3997 + $0x4] sm:$0xf] 0
        %4000 = vst [vmem:[%s3997 + $0x8] sm:$0xf] 0
        %v4001 = vld [vmem:[%s3997 + $0xc] sm:$0x1]
        %v4002 = vsel %vm3993, 0, %v4001
        %4003 = vst [vmem:[%s3997 + $0xc] sm:$0x1] %v4002
        %vm4004 = vcmask 1043459
        %vm4005 = vsmask.f32 7950
        %vm4006 = vmand %vm4004, %vm4005
        %v4007 = vld [vmem:[%s3955] sm:$0x8]
        %v4008 = vsel %vm4006, 0, %v4007
        %4009 = vst [vmem:[%s3955] sm:$0x8] %v4008
        %v4010 = vld [vmem:[%s3955 + $0x10] sm:$0x8]
        %v4011 = vsel %vm4006, 0, %v4010
        %4012 = vst [vmem:[%s3955 + $0x10] sm:$0x8] %v4011
        %v4013 = vld [vmem:[%s3955 + $0x20] sm:$0x8]
        %v4014 = vsel %vm4006, 0, %v4013
        %4015 = vst [vmem:[%s3955 + $0x20] sm:$0x8] %v4014
        %v4016 = vld [vmem:[%s3955 + $0x30] sm:$0x8]
        %v4017 = vsel %vm4006, 0, %v4016
        %4018 = vst [vmem:[%s3955 + $0x30] sm:$0x8] %v4017
        %v4019 = vld [vmem:[%s3955 + $0x40] sm:$0x8]
        %v4020 = vsel %vm4006, 0, %v4019
        %4021 = vst [vmem:[%s3955 + $0x40] sm:$0x8] %v4020
        %v4022 = vld [vmem:[%s3955 + $0x50] sm:$0x8]
        %v4023 = vsel %vm4006, 0, %v4022
        %4024 = vst [vmem:[%s3955 + $0x50] sm:$0x8] %v4023
        %v4025 = vld [vmem:[%s3955 + $0x60] sm:$0x8]
        %v4026 = vsel %vm4006, 0, %v4025
        %4027 = vst [vmem:[%s3955 + $0x60] sm:$0x8] %v4026
        %v4028 = vld [vmem:[%s3955 + $0x70] sm:$0x8]
        %v4029 = vsel %vm4006, 0, %v4028
        %4030 = vst [vmem:[%s3955 + $0x70] sm:$0x8] %v4029
        %v4031 = vld [vmem:[%s3955 + $0x80] sm:$0x8]
        %v4032 = vsel %vm4006, 0, %v4031
        %4033 = vst [vmem:[%s3955 + $0x80] sm:$0x8] %v4032
        %v4034 = vld [vmem:[%s3955 + $0x90] sm:$0x8]
        %v4035 = vsel %vm4006, 0, %v4034
        %4036 = vst [vmem:[%s3955 + $0x90] sm:$0x8] %v4035
        %v4037 = vld [vmem:[%s3955 + $0xa0] sm:$0x8]
        %v4038 = vsel %vm4006, 0, %v4037
        %4039 = vst [vmem:[%s3955 + $0xa0] sm:$0x8] %v4038
        %v4040 = vld [vmem:[%s3955 + $0xb0] sm:$0x8]
        %v4041 = vsel %vm4006, 0, %v4040
        %4042 = vst [vmem:[%s3955 + $0xb0] sm:$0x8] %v4041
        %v4043 = vld [vmem:[%s3955 + $0xc0] sm:$0x8]
        %v4044 = vsel %vm4006, 0, %v4043
        %4045 = vst [vmem:[%s3955 + $0xc0] sm:$0x8] %v4044
        %v4046 = vld [vmem:[%s3955 + $0xd0] sm:$0x8]
        %v4047 = vsel %vm4006, 0, %v4046
        %4048 = vst [vmem:[%s3955 + $0xd0] sm:$0x8] %v4047
        %v4049 = vld [vmem:[%s3955 + $0xe0] sm:$0x8]
        %v4050 = vsel %vm4006, 0, %v4049
        %4051 = vst [vmem:[%s3955 + $0xe0] sm:$0x8] %v4050
        %v4052 = vld [vmem:[%s3955 + $0xf0] sm:$0x8]
        %v4053 = vsel %vm4006, 0, %v4052
        %4054 = vst [vmem:[%s3955 + $0xf0] sm:$0x8] %v4053
        %v4055 = vld [vmem:[%s3955 + $0xc] sm:$0x1]
        %v4056 = vsel %vm3993, 0, %v4055
        %4057 = vst [vmem:[%s3955 + $0xc] sm:$0x1] %v4056
        %v4058 = vld [vmem:[%s3955 + $0x1c] sm:$0x1]
        %v4059 = vsel %vm3993, 0, %v4058
        %4060 = vst [vmem:[%s3955 + $0x1c] sm:$0x1] %v4059
        %v4061 = vld [vmem:[%s3955 + $0x2c] sm:$0x1]
        %v4062 = vsel %vm3993, 0, %v4061
        %4063 = vst [vmem:[%s3955 + $0x2c] sm:$0x1] %v4062
        %v4064 = vld [vmem:[%s3955 + $0x3c] sm:$0x1]
        %v4065 = vsel %vm3993, 0, %v4064
        %4066 = vst [vmem:[%s3955 + $0x3c] sm:$0x1] %v4065
        %v4067 = vld [vmem:[%s3955 + $0x4c] sm:$0x1]
        %v4068 = vsel %vm3993, 0, %v4067
        %4069 = vst [vmem:[%s3955 + $0x4c] sm:$0x1] %v4068
        %v4070 = vld [vmem:[%s3955 + $0x5c] sm:$0x1]
        %v4071 = vsel %vm3993, 0, %v4070
        %4072 = vst [vmem:[%s3955 + $0x5c] sm:$0x1] %v4071
        %v4073 = vld [vmem:[%s3955 + $0x6c] sm:$0x1]
        %v4074 = vsel %vm3993, 0, %v4073
        %4075 = vst [vmem:[%s3955 + $0x6c] sm:$0x1] %v4074
        %v4076 = vld [vmem:[%s3955 + $0x7c] sm:$0x1]
        %v4077 = vsel %vm3993, 0, %v4076
        %4078 = vst [vmem:[%s3955 + $0x7c] sm:$0x1] %v4077
        %v4079 = vld [vmem:[%s3955 + $0x8c] sm:$0x1]
        %v4080 = vsel %vm3993, 0, %v4079
        %4081 = vst [vmem:[%s3955 + $0x8c] sm:$0x1] %v4080
        %v4082 = vld [vmem:[%s3955 + $0x9c] sm:$0x1]
        %v4083 = vsel %vm3993, 0, %v4082
        %4084 = vst [vmem:[%s3955 + $0x9c] sm:$0x1] %v4083
        %v4085 = vld [vmem:[%s3955 + $0xac] sm:$0x1]
        %v4086 = vsel %vm3993, 0, %v4085
        %4087 = vst [vmem:[%s3955 + $0xac] sm:$0x1] %v4086
        %v4088 = vld [vmem:[%s3955 + $0xbc] sm:$0x1]
        %v4089 = vsel %vm3993, 0, %v4088
        %4090 = vst [vmem:[%s3955 + $0xbc] sm:$0x1] %v4089
        %v4091 = vld [vmem:[%s3955 + $0xcc] sm:$0x1]
        %v4092 = vsel %vm3993, 0, %v4091
        %4093 = vst [vmem:[%s3955 + $0xcc] sm:$0x1] %v4092
        %v4094 = vld [vmem:[%s3955 + $0xdc] sm:$0x1]
        %v4095 = vsel %vm3993, 0, %v4094
        %4096 = vst [vmem:[%s3955 + $0xdc] sm:$0x1] %v4095
        %v4097 = vld [vmem:[%s3955 + $0xec] sm:$0x1]
        %v4098 = vsel %vm3993, 0, %v4097
        %4099 = vst [vmem:[%s3955 + $0xec] sm:$0x1] %v4098
        %v4100 = vld [vmem:[%s3955 + $0xfc] sm:$0x1]
        %v4101 = vsel %vm3993, 0, %v4100
        %4102 = vst [vmem:[%s3955 + $0xfc] sm:$0x1] %v4101
        %v4103 = vld [vmem:[#allocation3] sm:$0x8]
        %v4104 = vld [vmem:[#allocation3 + $0x4] sm:$0xf]
        %v4105 = vld [vmem:[#allocation3 + $0x8] sm:$0xf]
        %v4106 = vld [vmem:[#allocation3 + $0x10] sm:$0x8]
        %v4107 = vld [vmem:[#allocation3 + $0x14] sm:$0xf]
        %v4108 = vld [vmem:[#allocation3 + $0x18] sm:$0xf]
        %v4109 = vld [vmem:[#allocation3 + $0x20] sm:$0x8]
        %v4110 = vld [vmem:[#allocation3 + $0x24] sm:$0xf]
        %v4111 = vld [vmem:[#allocation3 + $0x28] sm:$0xf]
        %v4112 = vld [vmem:[#allocation3 + $0x30] sm:$0x8]
        %v4113 = vld [vmem:[#allocation3 + $0x34] sm:$0xf]
        %v4114 = vld [vmem:[#allocation3 + $0x38] sm:$0xf]
        %v4115 = vld [vmem:[#allocation3 + $0x40] sm:$0x8]
        %v4116 = vld [vmem:[#allocation3 + $0x44] sm:$0xf]
        %v4117 = vld [vmem:[#allocation3 + $0x48] sm:$0xf]
        %v4118 = vld [vmem:[#allocation3 + $0x50] sm:$0x8]
        %v4119 = vld [vmem:[#allocation3 + $0x54] sm:$0xf]
        %v4120 = vld [vmem:[#allocation3 + $0x58] sm:$0xf]
        %v4121 = vld [vmem:[#allocation3 + $0x60] sm:$0x8]
        %v4122 = vld [vmem:[#allocation3 + $0x64] sm:$0xf]
        %v4123 = vld [vmem:[#allocation3 + $0x68] sm:$0xf]
        %v4124 = vld [vmem:[#allocation3 + $0x70] sm:$0x8]
        %v4125 = vld [vmem:[#allocation3 + $0x74] sm:$0xf]
        %v4126 = vld [vmem:[#allocation3 + $0x78] sm:$0xf]
        %v4127 = vld [vmem:[#allocation3 + $0x80] sm:$0x8]
        %v4128 = vld [vmem:[#allocation3 + $0x84] sm:$0xf]
        %v4129 = vld [vmem:[#allocation3 + $0x88] sm:$0xf]
        %v4130 = vld [vmem:[#allocation3 + $0x90] sm:$0x8]
        %v4131 = vld [vmem:[#allocation3 + $0x94] sm:$0xf]
        %v4132 = vld [vmem:[#allocation3 + $0x98] sm:$0xf]
        %v4133 = vld [vmem:[#allocation3 + $0xa0] sm:$0x8]
        %v4134 = vld [vmem:[#allocation3 + $0xa4] sm:$0xf]
        %v4135 = vld [vmem:[#allocation3 + $0xa8] sm:$0xf]
        %v4136 = vld [vmem:[#allocation3 + $0xb0] sm:$0x8]
        %v4137 = vld [vmem:[#allocation3 + $0xb4] sm:$0xf]
        %v4138 = vld [vmem:[#allocation3 + $0xb8] sm:$0xf]
        %v4139 = vld [vmem:[#allocation3 + $0xc0] sm:$0x8]
        %v4140 = vld [vmem:[#allocation3 + $0xc4] sm:$0xf]
        %v4141 = vld [vmem:[#allocation3 + $0xc8] sm:$0xf]
        %v4142 = vld [vmem:[#allocation3 + $0xd0] sm:$0x8]
        %v4143 = vld [vmem:[#allocation3 + $0xd4] sm:$0xf]
        %v4144 = vld [vmem:[#allocation3 + $0xd8] sm:$0xf]
        %v4145 = vld [vmem:[#allocation3 + $0xe0] sm:$0x8]
        %v4146 = vld [vmem:[#allocation3 + $0xe4] sm:$0xf]
        %v4147 = vld [vmem:[#allocation3 + $0xe8] sm:$0xf]
        %v4148 = vld [vmem:[#allocation3 + $0xf0] sm:$0x8]
        %v4149 = vld [vmem:[#allocation3 + $0xf4] sm:$0xf]
        %v4150 = vld [vmem:[#allocation3 + $0xf8] sm:$0xf]
        %vm4151 = vsmask.f32 4368
        %vm4152 = vmor %vm3992, %vm4151
        %v4154 = vshrl.u32 %v4103, 16
        %v4156 = vrot.slane %v4154, 7
        %v4157 = vrot.slane %v4156, 4
        %v4159 = vshrl.u32 %v4104, 16
        %v4161 = vrot.slane %v4159, 7
        %v4162 = vshll.u32 %v4104, 16
        %v4164 = vor.u32 %v4161, %v4162
        %v4165 = vsel %vm4152, %v4157, %v4164
        %v4166 = vrot.slane %v4161, 4
        %v4168 = vshrl.u32 %v4105, 16
        %v4170 = vrot.slane %v4168, 7
        %v4171 = vshll.u32 %v4105, 16
        %v4173 = vor.u32 %v4170, %v4171
        %v4174 = vsel %vm4152, %v4166, %v4173
        %v4176 = vshrl.u32 %v4106, 16
        %v4178 = vrot.slane %v4176, 7
        %v4179 = vrot.slane %v4178, 4
        %v4181 = vshrl.u32 %v4107, 16
        %v4183 = vrot.slane %v4181, 7
        %v4184 = vshll.u32 %v4107, 16
        %v4186 = vor.u32 %v4183, %v4184
        %v4187 = vsel %vm4152, %v4179, %v4186
        %v4188 = vrot.slane %v4183, 4
        %v4190 = vshrl.u32 %v4108, 16
        %v4192 = vrot.slane %v4190, 7
        %v4193 = vshll.u32 %v4108, 16
        %v4195 = vor.u32 %v4192, %v4193
        %v4196 = vsel %vm4152, %v4188, %v4195
        %v4198 = vshrl.u32 %v4109, 16
        %v4200 = vrot.slane %v4198, 7
        %v4201 = vrot.slane %v4200, 4
        %v4203 = vshrl.u32 %v4110, 16
        %v4205 = vrot.slane %v4203, 7
        %v4206 = vshll.u32 %v4110, 16
        %v4208 = vor.u32 %v4205, %v4206
        %v4209 = vsel %vm4152, %v4201, %v4208
        %v4210 = vrot.slane %v4205, 4
        %v4212 = vshrl.u32 %v4111, 16
        %v4214 = vrot.slane %v4212, 7
        %v4215 = vshll.u32 %v4111, 16
        %v4217 = vor.u32 %v4214, %v4215
        %v4218 = vsel %vm4152, %v4210, %v4217
        %v4220 = vshrl.u32 %v4112, 16
        %v4222 = vrot.slane %v4220, 7
        %v4223 = vrot.slane %v4222, 4
        %v4225 = vshrl.u32 %v4113, 16
        %v4227 = vrot.slane %v4225, 7
        %v4228 = vshll.u32 %v4113, 16
        %v4230 = vor.u32 %v4227, %v4228
        %v4231 = vsel %vm4152, %v4223, %v4230
        %v4232 = vrot.slane %v4227, 4
        %v4234 = vshrl.u32 %v4114, 16
        %v4236 = vrot.slane %v4234, 7
        %v4237 = vshll.u32 %v4114, 16
        %v4239 = vor.u32 %v4236, %v4237
        %v4240 = vsel %vm4152, %v4232, %v4239
        %v4242 = vshrl.u32 %v4115, 16
        %v4244 = vrot.slane %v4242, 7
        %v4245 = vrot.slane %v4244, 4
        %v4247 = vshrl.u32 %v4116, 16
        %v4249 = vrot.slane %v4247, 7
        %v4250 = vshll.u32 %v4116, 16
        %v4252 = vor.u32 %v4249, %v4250
        %v4253 = vsel %vm4152, %v4245, %v4252
        %v4254 = vrot.slane %v4249, 4
        %v4256 = vshrl.u32 %v4117, 16
        %v4258 = vrot.slane %v4256, 7
        %v4259 = vshll.u32 %v4117, 16
        %v4261 = vor.u32 %v4258, %v4259
        %v4262 = vsel %vm4152, %v4254, %v4261
        %v4264 = vshrl.u32 %v4118, 16
        %v4266 = vrot.slane %v4264, 7
        %v4267 = vrot.slane %v4266, 4
        %v4269 = vshrl.u32 %v4119, 16
        %v4271 = vrot.slane %v4269, 7
        %v4272 = vshll.u32 %v4119, 16
        %v4274 = vor.u32 %v4271, %v4272
        %v4275 = vsel %vm4152, %v4267, %v4274
        %v4276 = vrot.slane %v4271, 4
        %v4278 = vshrl.u32 %v4120, 16
        %v4280 = vrot.slane %v4278, 7
        %v4281 = vshll.u32 %v4120, 16
        %v4283 = vor.u32 %v4280, %v4281
        %v4284 = vsel %vm4152, %v4276, %v4283
        %v4286 = vshrl.u32 %v4121, 16
        %v4288 = vrot.slane %v4286, 7
        %v4289 = vrot.slane %v4288, 4
        %v4291 = vshrl.u32 %v4122, 16
        %v4293 = vrot.slane %v4291, 7
        %v4294 = vshll.u32 %v4122, 16
        %v4296 = vor.u32 %v4293, %v4294
        %v4297 = vsel %vm4152, %v4289, %v4296
        %v4298 = vrot.slane %v4293, 4
        %v4300 = vshrl.u32 %v4123, 16
        %v4302 = vrot.slane %v4300, 7
        %v4303 = vshll.u32 %v4123, 16
        %v4305 = vor.u32 %v4302, %v4303
        %v4306 = vsel %vm4152, %v4298, %v4305
        %v4308 = vshrl.u32 %v4124, 16
        %v4310 = vrot.slane %v4308, 7
        %v4311 = vrot.slane %v4310, 4
        %v4313 = vshrl.u32 %v4125, 16
        %v4315 = vrot.slane %v4313, 7
        %v4316 = vshll.u32 %v4125, 16
        %v4318 = vor.u32 %v4315, %v4316
        %v4319 = vsel %vm4152, %v4311, %v4318
        %v4320 = vrot.slane %v4315, 4
        %v4322 = vshrl.u32 %v4126, 16
        %v4324 = vrot.slane %v4322, 7
        %v4325 = vshll.u32 %v4126, 16
        %v4327 = vor.u32 %v4324, %v4325
        %v4328 = vsel %vm4152, %v4320, %v4327
        %v4330 = vshrl.u32 %v4127, 16
        %v4332 = vrot.slane %v4330, 7
        %v4333 = vrot.slane %v4332, 4
        %v4335 = vshrl.u32 %v4128, 16
        %v4337 = vrot.slane %v4335, 7
        %v4338 = vshll.u32 %v4128, 16
        %v4340 = vor.u32 %v4337, %v4338
        %v4341 = vsel %vm4152, %v4333, %v4340
        %v4342 = vrot.slane %v4337, 4
        %v4344 = vshrl.u32 %v4129, 16
        %v4346 = vrot.slane %v4344, 7
        %v4347 = vshll.u32 %v4129, 16
        %v4349 = vor.u32 %v4346, %v4347
        %v4350 = vsel %vm4152, %v4342, %v4349
        %v4352 = vshrl.u32 %v4130, 16
        %v4354 = vrot.slane %v4352, 7
        %v4355 = vrot.slane %v4354, 4
        %v4357 = vshrl.u32 %v4131, 16
        %v4359 = vrot.slane %v4357, 7
        %v4360 = vshll.u32 %v4131, 16
        %v4362 = vor.u32 %v4359, %v4360
        %v4363 = vsel %vm4152, %v4355, %v4362
        %v4364 = vrot.slane %v4359, 4
        %v4366 = vshrl.u32 %v4132, 16
        %v4368 = vrot.slane %v4366, 7
        %v4369 = vshll.u32 %v4132, 16
        %v4371 = vor.u32 %v4368, %v4369
        %v4372 = vsel %vm4152, %v4364, %v4371
        %v4374 = vshrl.u32 %v4133, 16
        %v4376 = vrot.slane %v4374, 7
        %v4377 = vrot.slane %v4376, 4
        %v4379 = vshrl.u32 %v4134, 16
        %v4381 = vrot.slane %v4379, 7
        %v4382 = vshll.u32 %v4134, 16
        %v4384 = vor.u32 %v4381, %v4382
        %v4385 = vsel %vm4152, %v4377, %v4384
        %v4386 = vrot.slane %v4381, 4
        %v4388 = vshrl.u32 %v4135, 16
        %v4390 = vrot.slane %v4388, 7
        %v4391 = vshll.u32 %v4135, 16
        %v4393 = vor.u32 %v4390, %v4391
        %v4394 = vsel %vm4152, %v4386, %v4393
        %v4396 = vshrl.u32 %v4136, 16
        %v4398 = vrot.slane %v4396, 7
        %v4399 = vrot.slane %v4398, 4
        %v4401 = vshrl.u32 %v4137, 16
        %v4403 = vrot.slane %v4401, 7
        %v4404 = vshll.u32 %v4137, 16
        %v4406 = vor.u32 %v4403, %v4404
        %v4407 = vsel %vm4152, %v4399, %v4406
        %v4408 = vrot.slane %v4403, 4
        %v4410 = vshrl.u32 %v4138, 16
        %v4412 = vrot.slane %v4410, 7
        %v4413 = vshll.u32 %v4138, 16
        %v4415 = vor.u32 %v4412, %v4413
        %v4416 = vsel %vm4152, %v4408, %v4415
        %v4418 = vshrl.u32 %v4139, 16
        %v4420 = vrot.slane %v4418, 7
        %v4421 = vrot.slane %v4420, 4
        %v4423 = vshrl.u32 %v4140, 16
        %v4425 = vrot.slane %v4423, 7
        %v4426 = vshll.u32 %v4140, 16
        %v4428 = vor.u32 %v4425, %v4426
        %v4429 = vsel %vm4152, %v4421, %v4428
        %v4430 = vrot.slane %v4425, 4
        %v4432 = vshrl.u32 %v4141, 16
        %v4434 = vrot.slane %v4432, 7
        %v4435 = vshll.u32 %v4141, 16
        %v4437 = vor.u32 %v4434, %v4435
        %v4438 = vsel %vm4152, %v4430, %v4437
        %v4440 = vshrl.u32 %v4142, 16
        %v4442 = vrot.slane %v4440, 7
        %v4443 = vrot.slane %v4442, 4
        %v4445 = vshrl.u32 %v4143, 16
        %v4447 = vrot.slane %v4445, 7
        %v4448 = vshll.u32 %v4143, 16
        %v4450 = vor.u32 %v4447, %v4448
        %v4451 = vsel %vm4152, %v4443, %v4450
        %v4452 = vrot.slane %v4447, 4
        %v4454 = vshrl.u32 %v4144, 16
        %v4456 = vrot.slane %v4454, 7
        %v4457 = vshll.u32 %v4144, 16
        %v4459 = vor.u32 %v4456, %v4457
        %v4460 = vsel %vm4152, %v4452, %v4459
        %v4462 = vshrl.u32 %v4145, 16
        %v4464 = vrot.slane %v4462, 7
        %v4465 = vrot.slane %v4464, 4
        %v4467 = vshrl.u32 %v4146, 16
        %v4469 = vrot.slane %v4467, 7
        %v4470 = vshll.u32 %v4146, 16
        %v4472 = vor.u32 %v4469, %v4470
        %v4473 = vsel %vm4152, %v4465, %v4472
        %v4474 = vrot.slane %v4469, 4
        %v4476 = vshrl.u32 %v4147, 16
        %v4478 = vrot.slane %v4476, 7
        %v4479 = vshll.u32 %v4147, 16
        %v4481 = vor.u32 %v4478, %v4479
        %v4482 = vsel %vm4152, %v4474, %v4481
        %v4484 = vshrl.u32 %v4148, 16
        %v4486 = vrot.slane %v4484, 7
        %v4487 = vrot.slane %v4486, 4
        %v4489 = vshrl.u32 %v4149, 16
        %v4491 = vrot.slane %v4489, 7
        %v4492 = vshll.u32 %v4149, 16
        %v4494 = vor.u32 %v4491, %v4492
        %v4495 = vsel %vm4152, %v4487, %v4494
        %v4496 = vrot.slane %v4491, 4
        %v4498 = vshrl.u32 %v4150, 16
        %v4500 = vrot.slane %v4498, 7
        %v4501 = vshll.u32 %v4150, 16
        %v4503 = vor.u32 %v4500, %v4501
        %v4504 = vsel %vm4152, %v4496, %v4503
        %4537 = vst [vmem:[#allocation4] sm:$0xf] %v4165
        %4538 = vst [vmem:[#allocation4 + $0x24] sm:$0xf] %v4174
        %4539 = vst [vmem:[#allocation4 + $0x48] sm:$0xf] %v4187
        %4540 = vst [vmem:[#allocation4 + $0x6c] sm:$0xf] %v4196
        %4541 = vst [vmem:[#allocation4 + $0x90] sm:$0xf] %v4209
        %4542 = vst [vmem:[#allocation4 + $0xb4] sm:$0xf] %v4218
        %4543 = vst [vmem:[#allocation4 + $0xd8] sm:$0xf] %v4231
        %4544 = vst [vmem:[#allocation4 + $0xfc] sm:$0xf] %v4240
        %4545 = vst [vmem:[#allocation4 + $0x120] sm:$0xf] %v4253
        %4546 = vst [vmem:[#allocation4 + $0x144] sm:$0xf] %v4262
        %4547 = vst [vmem:[#allocation4 + $0x168] sm:$0xf] %v4275
        %4548 = vst [vmem:[#allocation4 + $0x18c] sm:$0xf] %v4284
        %4549 = vst [vmem:[#allocation4 + $0x1b0] sm:$0xf] %v4297
        %4550 = vst [vmem:[#allocation4 + $0x1d4] sm:$0xf] %v4306
        %4551 = vst [vmem:[#allocation4 + $0x1f8] sm:$0xf] %v4319
        %4552 = vst [vmem:[#allocation4 + $0x21c] sm:$0xf] %v4328
        %4553 = vst [vmem:[#allocation4 + $0x240] sm:$0xf] %v4341
        %4554 = vst [vmem:[#allocation4 + $0x264] sm:$0xf] %v4350
        %4555 = vst [vmem:[#allocation4 + $0x288] sm:$0xf] %v4363
        %4556 = vst [vmem:[#allocation4 + $0x2ac] sm:$0xf] %v4372
        %4557 = vst [vmem:[#allocation4 + $0x2d0] sm:$0xf] %v4385
        %4558 = vst [vmem:[#allocation4 + $0x2f4] sm:$0xf] %v4394
        %4559 = vst [vmem:[#allocation4 + $0x318] sm:$0xf] %v4407
        %4560 = vst [vmem:[#allocation4 + $0x33c] sm:$0xf] %v4416
        %4561 = vst [vmem:[#allocation4 + $0x360] sm:$0xf] %v4429
        %4562 = vst [vmem:[#allocation4 + $0x384] sm:$0xf] %v4438
        %4563 = vst [vmem:[#allocation4 + $0x3a8] sm:$0xf] %v4451
        %4564 = vst [vmem:[#allocation4 + $0x3cc] sm:$0xf] %v4460
        %4565 = vst [vmem:[#allocation4 + $0x3f0] sm:$0xf] %v4473
        %4566 = vst [vmem:[#allocation4 + $0x414] sm:$0xf] %v4482
        %4567 = vst [vmem:[#allocation4 + $0x438] sm:$0xf] %v4495
        %4568 = vst [vmem:[#allocation4 + $0x45c] sm:$0xf] %v4504
        %v4569 = vld [vmem:[#allocation3 + $0x4] sm:$0xf]
        %v4570 = vld [vmem:[#allocation3 + $0x8] sm:$0xf]
        %v4571 = vld [vmem:[#allocation3 + $0x14] sm:$0xf]
        %v4572 = vld [vmem:[#allocation3 + $0x18] sm:$0xf]
        %v4573 = vld [vmem:[#allocation3 + $0x24] sm:$0xf]
        %v4574 = vld [vmem:[#allocation3 + $0x28] sm:$0xf]
        %v4575 = vld [vmem:[#allocation3 + $0x34] sm:$0xf]
        %v4576 = vld [vmem:[#allocation3 + $0x38] sm:$0xf]
        %v4577 = vld [vmem:[#allocation3 + $0x44] sm:$0xf]
        %v4578 = vld [vmem:[#allocation3 + $0x48] sm:$0xf]
        %v4579 = vld [vmem:[#allocation3 + $0x54] sm:$0xf]
        %v4580 = vld [vmem:[#allocation3 + $0x58] sm:$0xf]
        %v4581 = vld [vmem:[#allocation3 + $0x64] sm:$0xf]
        %v4582 = vld [vmem:[#allocation3 + $0x68] sm:$0xf]
        %v4583 = vld [vmem:[#allocation3 + $0x74] sm:$0xf]
        %v4584 = vld [vmem:[#allocation3 + $0x78] sm:$0xf]
        %v4585 = vld [vmem:[#allocation3 + $0x84] sm:$0xf]
        %v4586 = vld [vmem:[#allocation3 + $0x88] sm:$0xf]
        %v4587 = vld [vmem:[#allocation3 + $0x94] sm:$0xf]
        %v4588 = vld [vmem:[#allocation3 + $0x98] sm:$0xf]
        %v4589 = vld [vmem:[#allocation3 + $0xa4] sm:$0xf]
        %v4590 = vld [vmem:[#allocation3 + $0xa8] sm:$0xf]
        %v4591 = vld [vmem:[#allocation3 + $0xb4] sm:$0xf]
        %v4592 = vld [vmem:[#allocation3 + $0xb8] sm:$0xf]
        %v4593 = vld [vmem:[#allocation3 + $0xc4] sm:$0xf]
        %v4594 = vld [vmem:[#allocation3 + $0xc8] sm:$0xf]
        %v4595 = vld [vmem:[#allocation3 + $0xd4] sm:$0xf]
        %v4596 = vld [vmem:[#allocation3 + $0xd8] sm:$0xf]
        %v4597 = vld [vmem:[#allocation3 + $0xe4] sm:$0xf]
        %v4598 = vld [vmem:[#allocation3 + $0xe8] sm:$0xf]
        %v4599 = vld [vmem:[#allocation3 + $0xf4] sm:$0xf]
        %v4600 = vld [vmem:[#allocation3 + $0xf8] sm:$0xf]
        %4601 = vst [vmem:[#allocation4 + $0x4] sm:$0xf] %v4569
        %4602 = vst [vmem:[#allocation4 + $0x28] sm:$0xf] %v4570
        %4603 = vst [vmem:[#allocation4 + $0x4c] sm:$0xf] %v4571
        %4604 = vst [vmem:[#allocation4 + $0x70] sm:$0xf] %v4572
        %4605 = vst [vmem:[#allocation4 + $0x94] sm:$0xf] %v4573
        %4606 = vst [vmem:[#allocation4 + $0xb8] sm:$0xf] %v4574
        %4607 = vst [vmem:[#allocation4 + $0xdc] sm:$0xf] %v4575
        %4608 = vst [vmem:[#allocation4 + $0x100] sm:$0xf] %v4576
        %4609 = vst [vmem:[#allocation4 + $0x124] sm:$0xf] %v4577
        %4610 = vst [vmem:[#allocation4 + $0x148] sm:$0xf] %v4578
        %4611 = vst [vmem:[#allocation4 + $0x16c] sm:$0xf] %v4579
        %4612 = vst [vmem:[#allocation4 + $0x190] sm:$0xf] %v4580
        %4613 = vst [vmem:[#allocation4 + $0x1b4] sm:$0xf] %v4581
        %4614 = vst [vmem:[#allocation4 + $0x1d8] sm:$0xf] %v4582
        %4615 = vst [vmem:[#allocation4 + $0x1fc] sm:$0xf] %v4583
        %4616 = vst [vmem:[#allocation4 + $0x220] sm:$0xf] %v4584
        %4617 = vst [vmem:[#allocation4 + $0x244] sm:$0xf] %v4585
        %4618 = vst [vmem:[#allocation4 + $0x268] sm:$0xf] %v4586
        %4619 = vst [vmem:[#allocation4 + $0x28c] sm:$0xf] %v4587
        %4620 = vst [vmem:[#allocation4 + $0x2b0] sm:$0xf] %v4588
        %4621 = vst [vmem:[#allocation4 + $0x2d4] sm:$0xf] %v4589
        %4622 = vst [vmem:[#allocation4 + $0x2f8] sm:$0xf] %v4590
        %4623 = vst [vmem:[#allocation4 + $0x31c] sm:$0xf] %v4591
        %4624 = vst [vmem:[#allocation4 + $0x340] sm:$0xf] %v4592
        %4625 = vst [vmem:[#allocation4 + $0x364] sm:$0xf] %v4593
        %4626 = vst [vmem:[#allocation4 + $0x388] sm:$0xf] %v4594
        %4627 = vst [vmem:[#allocation4 + $0x3ac] sm:$0xf] %v4595
        %4628 = vst [vmem:[#allocation4 + $0x3d0] sm:$0xf] %v4596
        %4629 = vst [vmem:[#allocation4 + $0x3f4] sm:$0xf] %v4597
        %4630 = vst [vmem:[#allocation4 + $0x418] sm:$0xf] %v4598
        %4631 = vst [vmem:[#allocation4 + $0x43c] sm:$0xf] %v4599
        %4632 = vst [vmem:[#allocation4 + $0x460] sm:$0xf] %v4600
        %v4633 = vld [vmem:[#allocation3 + $0x4] sm:$0xf]
        %v4634 = vld [vmem:[#allocation3 + $0x8] sm:$0xf]
        %v4635 = vld [vmem:[#allocation3 + $0xc] sm:$0x1]
        %v4636 = vld [vmem:[#allocation3 + $0x14] sm:$0xf]
        %v4637 = vld [vmem:[#allocation3 + $0x18] sm:$0xf]
        %v4638 = vld [vmem:[#allocation3 + $0x1c] sm:$0x1]
        %v4639 = vld [vmem:[#allocation3 + $0x24] sm:$0xf]
        %v4640 = vld [vmem:[#allocation3 + $0x28] sm:$0xf]
        %v4641 = vld [vmem:[#allocation3 + $0x2c] sm:$0x1]
        %v4642 = vld [vmem:[#allocation3 + $0x34] sm:$0xf]
        %v4643 = vld [vmem:[#allocation3 + $0x38] sm:$0xf]
        %v4644 = vld [vmem:[#allocation3 + $0x3c] sm:$0x1]
        %v4645 = vld [vmem:[#allocation3 + $0x44] sm:$0xf]
        %v4646 = vld [vmem:[#allocation3 + $0x48] sm:$0xf]
        %v4647 = vld [vmem:[#allocation3 + $0x4c] sm:$0x1]
        %v4648 = vld [vmem:[#allocation3 + $0x54] sm:$0xf]
        %v4649 = vld [vmem:[#allocation3 + $0x58] sm:$0xf]
        %v4650 = vld [vmem:[#allocation3 + $0x5c] sm:$0x1]
        %v4651 = vld [vmem:[#allocation3 + $0x64] sm:$0xf]
        %v4652 = vld [vmem:[#allocation3 + $0x68] sm:$0xf]
        %v4653 = vld [vmem:[#allocation3 + $0x6c] sm:$0x1]
        %v4654 = vld [vmem:[#allocation3 + $0x74] sm:$0xf]
        %v4655 = vld [vmem:[#allocation3 + $0x78] sm:$0xf]
        %v4656 = vld [vmem:[#allocation3 + $0x7c] sm:$0x1]
        %v4657 = vld [vmem:[#allocation3 + $0x84] sm:$0xf]
        %v4658 = vld [vmem:[#allocation3 + $0x88] sm:$0xf]
        %v4659 = vld [vmem:[#allocation3 + $0x8c] sm:$0x1]
        %v4660 = vld [vmem:[#allocation3 + $0x94] sm:$0xf]
        %v4661 = vld [vmem:[#allocation3 + $0x98] sm:$0xf]
        %v4662 = vld [vmem:[#allocation3 + $0x9c] sm:$0x1]
        %v4663 = vld [vmem:[#allocation3 + $0xa4] sm:$0xf]
        %v4664 = vld [vmem:[#allocation3 + $0xa8] sm:$0xf]
        %v4665 = vld [vmem:[#allocation3 + $0xac] sm:$0x1]
        %v4666 = vld [vmem:[#allocation3 + $0xb4] sm:$0xf]
        %v4667 = vld [vmem:[#allocation3 + $0xb8] sm:$0xf]
        %v4668 = vld [vmem:[#allocation3 + $0xbc] sm:$0x1]
        %v4669 = vld [vmem:[#allocation3 + $0xc4] sm:$0xf]
        %v4670 = vld [vmem:[#allocation3 + $0xc8] sm:$0xf]
        %v4671 = vld [vmem:[#allocation3 + $0xcc] sm:$0x1]
        %v4672 = vld [vmem:[#allocation3 + $0xd4] sm:$0xf]
        %v4673 = vld [vmem:[#allocation3 + $0xd8] sm:$0xf]
        %v4674 = vld [vmem:[#allocation3 + $0xdc] sm:$0x1]
        %v4675 = vld [vmem:[#allocation3 + $0xe4] sm:$0xf]
        %v4676 = vld [vmem:[#allocation3 + $0xe8] sm:$0xf]
        %v4677 = vld [vmem:[#allocation3 + $0xec] sm:$0x1]
        %v4678 = vld [vmem:[#allocation3 + $0xf4] sm:$0xf]
        %v4679 = vld [vmem:[#allocation3 + $0xf8] sm:$0xf]
        %v4680 = vld [vmem:[#allocation3 + $0xfc] sm:$0x1]
        %v4682 = vshrl.u32 %v4633, 16
        %v4684 = vrot.slane %v4682, 4
        %v4685 = vshll.u32 %v4633, 16
        %v4687 = vrot.slane %v4685, 5
        %v4688 = vor.u32 %v4684, %v4687
        %v4689 = vrot.slane %v4688, 4
        %v4691 = vshll.u32 %v4634, 16
        %v4693 = vrot.slane %v4691, 5
        %v4694 = vsel %vm354, %v4689, %v4693
        %v4695 = vshrl.u32 %v4634, 16
        %v4697 = vrot.slane %v4695, 4
        %v4698 = vor.u32 %v4697, %v4693
        %v4699 = vrot.slane %v4698, 4
        %v4701 = vshll.u32 %v4635, 16
        %v4703 = vrot.slane %v4701, 5
        %v4704 = vsel %vm354, %v4699, %v4703
        %v4706 = vshrl.u32 %v4636, 16
        %v4708 = vrot.slane %v4706, 4
        %v4709 = vshll.u32 %v4636, 16
        %v4711 = vrot.slane %v4709, 5
        %v4712 = vor.u32 %v4708, %v4711
        %v4713 = vrot.slane %v4712, 4
        %v4715 = vshll.u32 %v4637, 16
        %v4717 = vrot.slane %v4715, 5
        %v4718 = vsel %vm354, %v4713, %v4717
        %v4719 = vshrl.u32 %v4637, 16
        %v4721 = vrot.slane %v4719, 4
        %v4722 = vor.u32 %v4721, %v4717
        %v4723 = vrot.slane %v4722, 4
        %v4725 = vshll.u32 %v4638, 16
        %v4727 = vrot.slane %v4725, 5
        %v4728 = vsel %vm354, %v4723, %v4727
        %v4730 = vshrl.u32 %v4639, 16
        %v4732 = vrot.slane %v4730, 4
        %v4733 = vshll.u32 %v4639, 16
        %v4735 = vrot.slane %v4733, 5
        %v4736 = vor.u32 %v4732, %v4735
        %v4737 = vrot.slane %v4736, 4
        %v4739 = vshll.u32 %v4640, 16
        %v4741 = vrot.slane %v4739, 5
        %v4742 = vsel %vm354, %v4737, %v4741
        %v4743 = vshrl.u32 %v4640, 16
        %v4745 = vrot.slane %v4743, 4
        %v4746 = vor.u32 %v4745, %v4741
        %v4747 = vrot.slane %v4746, 4
        %v4749 = vshll.u32 %v4641, 16
        %v4751 = vrot.slane %v4749, 5
        %v4752 = vsel %vm354, %v4747, %v4751
        %v4754 = vshrl.u32 %v4642, 16
        %v4756 = vrot.slane %v4754, 4
        %v4757 = vshll.u32 %v4642, 16
        %v4759 = vrot.slane %v4757, 5
        %v4760 = vor.u32 %v4756, %v4759
        %v4761 = vrot.slane %v4760, 4
        %v4763 = vshll.u32 %v4643, 16
        %v4765 = vrot.slane %v4763, 5
        %v4766 = vsel %vm354, %v4761, %v4765
        %v4767 = vshrl.u32 %v4643, 16
        %v4769 = vrot.slane %v4767, 4
        %v4770 = vor.u32 %v4769, %v4765
        %v4771 = vrot.slane %v4770, 4
        %v4773 = vshll.u32 %v4644, 16
        %v4775 = vrot.slane %v4773, 5
        %v4776 = vsel %vm354, %v4771, %v4775
        %v4778 = vshrl.u32 %v4645, 16
        %v4780 = vrot.slane %v4778, 4
        %v4781 = vshll.u32 %v4645, 16
        %v4783 = vrot.slane %v4781, 5
        %v4784 = vor.u32 %v4780, %v4783
        %v4785 = vrot.slane %v4784, 4
        %v4787 = vshll.u32 %v4646, 16
        %v4789 = vrot.slane %v4787, 5
        %v4790 = vsel %vm354, %v4785, %v4789
        %v4791 = vshrl.u32 %v4646, 16
        %v4793 = vrot.slane %v4791, 4
        %v4794 = vor.u32 %v4793, %v4789
        %v4795 = vrot.slane %v4794, 4
        %v4797 = vshll.u32 %v4647, 16
        %v4799 = vrot.slane %v4797, 5
        %v4800 = vsel %vm354, %v4795, %v4799
        %v4802 = vshrl.u32 %v4648, 16
        %v4804 = vrot.slane %v4802, 4
        %v4805 = vshll.u32 %v4648, 16
        %v4807 = vrot.slane %v4805, 5
        %v4808 = vor.u32 %v4804, %v4807
        %v4809 = vrot.slane %v4808, 4
        %v4811 = vshll.u32 %v4649, 16
        %v4813 = vrot.slane %v4811, 5
        %v4814 = vsel %vm354, %v4809, %v4813
        %v4815 = vshrl.u32 %v4649, 16
        %v4817 = vrot.slane %v4815, 4
        %v4818 = vor.u32 %v4817, %v4813
        %v4819 = vrot.slane %v4818, 4
        %v4821 = vshll.u32 %v4650, 16
        %v4823 = vrot.slane %v4821, 5
        %v4824 = vsel %vm354, %v4819, %v4823
        %v4826 = vshrl.u32 %v4651, 16
        %v4828 = vrot.slane %v4826, 4
        %v4829 = vshll.u32 %v4651, 16
        %v4831 = vrot.slane %v4829, 5
        %v4832 = vor.u32 %v4828, %v4831
        %v4833 = vrot.slane %v4832, 4
        %v4835 = vshll.u32 %v4652, 16
        %v4837 = vrot.slane %v4835, 5
        %v4838 = vsel %vm354, %v4833, %v4837
        %v4839 = vshrl.u32 %v4652, 16
        %v4841 = vrot.slane %v4839, 4
        %v4842 = vor.u32 %v4841, %v4837
        %v4843 = vrot.slane %v4842, 4
        %v4845 = vshll.u32 %v4653, 16
        %v4847 = vrot.slane %v4845, 5
        %v4848 = vsel %vm354, %v4843, %v4847
        %v4850 = vshrl.u32 %v4654, 16
        %v4852 = vrot.slane %v4850, 4
        %v4853 = vshll.u32 %v4654, 16
        %v4855 = vrot.slane %v4853, 5
        %v4856 = vor.u32 %v4852, %v4855
        %v4857 = vrot.slane %v4856, 4
        %v4859 = vshll.u32 %v4655, 16
        %v4861 = vrot.slane %v4859, 5
        %v4862 = vsel %vm354, %v4857, %v4861
        %v4863 = vshrl.u32 %v4655, 16
        %v4865 = vrot.slane %v4863, 4
        %v4866 = vor.u32 %v4865, %v4861
        %v4867 = vrot.slane %v4866, 4
        %v4869 = vshll.u32 %v4656, 16
        %v4871 = vrot.slane %v4869, 5
        %v4872 = vsel %vm354, %v4867, %v4871
        %v4874 = vshrl.u32 %v4657, 16
        %v4876 = vrot.slane %v4874, 4
        %v4877 = vshll.u32 %v4657, 16
        %v4879 = vrot.slane %v4877, 5
        %v4880 = vor.u32 %v4876, %v4879
        %v4881 = vrot.slane %v4880, 4
        %v4883 = vshll.u32 %v4658, 16
        %v4885 = vrot.slane %v4883, 5
        %v4886 = vsel %vm354, %v4881, %v4885
        %v4887 = vshrl.u32 %v4658, 16
        %v4889 = vrot.slane %v4887, 4
        %v4890 = vor.u32 %v4889, %v4885
        %v4891 = vrot.slane %v4890, 4
        %v4893 = vshll.u32 %v4659, 16
        %v4895 = vrot.slane %v4893, 5
        %v4896 = vsel %vm354, %v4891, %v4895
        %v4898 = vshrl.u32 %v4660, 16
        %v4900 = vrot.slane %v4898, 4
        %v4901 = vshll.u32 %v4660, 16
        %v4903 = vrot.slane %v4901, 5
        %v4904 = vor.u32 %v4900, %v4903
        %v4905 = vrot.slane %v4904, 4
        %v4907 = vshll.u32 %v4661, 16
        %v4909 = vrot.slane %v4907, 5
        %v4910 = vsel %vm354, %v4905, %v4909
        %v4911 = vshrl.u32 %v4661, 16
        %v4913 = vrot.slane %v4911, 4
        %v4914 = vor.u32 %v4913, %v4909
        %v4915 = vrot.slane %v4914, 4
        %v4917 = vshll.u32 %v4662, 16
        %v4919 = vrot.slane %v4917, 5
        %v4920 = vsel %vm354, %v4915, %v4919
        %v4922 = vshrl.u32 %v4663, 16
        %v4924 = vrot.slane %v4922, 4
        %v4925 = vshll.u32 %v4663, 16
        %v4927 = vrot.slane %v4925, 5
        %v4928 = vor.u32 %v4924, %v4927
        %v4929 = vrot.slane %v4928, 4
        %v4931 = vshll.u32 %v4664, 16
        %v4933 = vrot.slane %v4931, 5
        %v4934 = vsel %vm354, %v4929, %v4933
        %v4935 = vshrl.u32 %v4664, 16
        %v4937 = vrot.slane %v4935, 4
        %v4938 = vor.u32 %v4937, %v4933
        %v4939 = vrot.slane %v4938, 4
        %v4941 = vshll.u32 %v4665, 16
        %v4943 = vrot.slane %v4941, 5
        %v4944 = vsel %vm354, %v4939, %v4943
        %v4946 = vshrl.u32 %v4666, 16
        %v4948 = vrot.slane %v4946, 4
        %v4949 = vshll.u32 %v4666, 16
        %v4951 = vrot.slane %v4949, 5
        %v4952 = vor.u32 %v4948, %v4951
        %v4953 = vrot.slane %v4952, 4
        %v4955 = vshll.u32 %v4667, 16
        %v4957 = vrot.slane %v4955, 5
        %v4958 = vsel %vm354, %v4953, %v4957
        %v4959 = vshrl.u32 %v4667, 16
        %v4961 = vrot.slane %v4959, 4
        %v4962 = vor.u32 %v4961, %v4957
        %v4963 = vrot.slane %v4962, 4
        %v4965 = vshll.u32 %v4668, 16
        %v4967 = vrot.slane %v4965, 5
        %v4968 = vsel %vm354, %v4963, %v4967
        %v4970 = vshrl.u32 %v4669, 16
        %v4972 = vrot.slane %v4970, 4
        %v4973 = vshll.u32 %v4669, 16
        %v4975 = vrot.slane %v4973, 5
        %v4976 = vor.u32 %v4972, %v4975
        %v4977 = vrot.slane %v4976, 4
        %v4979 = vshll.u32 %v4670, 16
        %v4981 = vrot.slane %v4979, 5
        %v4982 = vsel %vm354, %v4977, %v4981
        %v4983 = vshrl.u32 %v4670, 16
        %v4985 = vrot.slane %v4983, 4
        %v4986 = vor.u32 %v4985, %v4981
        %v4987 = vrot.slane %v4986, 4
        %v4989 = vshll.u32 %v4671, 16
        %v4991 = vrot.slane %v4989, 5
        %v4992 = vsel %vm354, %v4987, %v4991
        %v4994 = vshrl.u32 %v4672, 16
        %v4996 = vrot.slane %v4994, 4
        %v4997 = vshll.u32 %v4672, 16
        %v4999 = vrot.slane %v4997, 5
        %v5000 = vor.u32 %v4996, %v4999
        %v5001 = vrot.slane %v5000, 4
        %v5003 = vshll.u32 %v4673, 16
        %v5005 = vrot.slane %v5003, 5
        %v5006 = vsel %vm354, %v5001, %v5005
        %v5007 = vshrl.u32 %v4673, 16
        %v5009 = vrot.slane %v5007, 4
        %v5010 = vor.u32 %v5009, %v5005
        %v5011 = vrot.slane %v5010, 4
        %v5013 = vshll.u32 %v4674, 16
        %v5015 = vrot.slane %v5013, 5
        %v5016 = vsel %vm354, %v5011, %v5015
        %v5018 = vshrl.u32 %v4675, 16
        %v5020 = vrot.slane %v5018, 4
        %v5021 = vshll.u32 %v4675, 16
        %v5023 = vrot.slane %v5021, 5
        %v5024 = vor.u32 %v5020, %v5023
        %v5025 = vrot.slane %v5024, 4
        %v5027 = vshll.u32 %v4676, 16
        %v5029 = vrot.slane %v5027, 5
        %v5030 = vsel %vm354, %v5025, %v5029
        %v5031 = vshrl.u32 %v4676, 16
        %v5033 = vrot.slane %v5031, 4
        %v5034 = vor.u32 %v5033, %v5029
        %v5035 = vrot.slane %v5034, 4
        %v5037 = vshll.u32 %v4677, 16
        %v5039 = vrot.slane %v5037, 5
        %v5040 = vsel %vm354, %v5035, %v5039
        %v5042 = vshrl.u32 %v4678, 16
        %v5044 = vrot.slane %v5042, 4
        %v5045 = vshll.u32 %v4678, 16
        %v5047 = vrot.slane %v5045, 5
        %v5048 = vor.u32 %v5044, %v5047
        %v5049 = vrot.slane %v5048, 4
        %v5051 = vshll.u32 %v4679, 16
        %v5053 = vrot.slane %v5051, 5
        %v5054 = vsel %vm354, %v5049, %v5053
        %v5055 = vshrl.u32 %v4679, 16
        %v5057 = vrot.slane %v5055, 4
        %v5058 = vor.u32 %v5057, %v5053
        %v5059 = vrot.slane %v5058, 4
        %v5061 = vshll.u32 %v4680, 16
        %v5063 = vrot.slane %v5061, 5
        %v5064 = vsel %vm354, %v5059, %v5063
        %5097 = vst [vmem:[#allocation4 + $0x8] sm:$0xf] %v4694
        %5098 = vst [vmem:[#allocation4 + $0x2c] sm:$0xf] %v4704
        %5099 = vst [vmem:[#allocation4 + $0x50] sm:$0xf] %v4718
        %5100 = vst [vmem:[#allocation4 + $0x74] sm:$0xf] %v4728
        %5101 = vst [vmem:[#allocation4 + $0x98] sm:$0xf] %v4742
        %5102 = vst [vmem:[#allocation4 + $0xbc] sm:$0xf] %v4752
        %5103 = vst [vmem:[#allocation4 + $0xe0] sm:$0xf] %v4766
        %5104 = vst [vmem:[#allocation4 + $0x104] sm:$0xf] %v4776
        %5105 = vst [vmem:[#allocation4 + $0x128] sm:$0xf] %v4790
        %5106 = vst [vmem:[#allocation4 + $0x14c] sm:$0xf] %v4800
        %5107 = vst [vmem:[#allocation4 + $0x170] sm:$0xf] %v4814
        %5108 = vst [vmem:[#allocation4 + $0x194] sm:$0xf] %v4824
        %5109 = vst [vmem:[#allocation4 + $0x1b8] sm:$0xf] %v4838
        %5110 = vst [vmem:[#allocation4 + $0x1dc] sm:$0xf] %v4848
        %5111 = vst [vmem:[#allocation4 + $0x200] sm:$0xf] %v4862
        %5112 = vst [vmem:[#allocation4 + $0x224] sm:$0xf] %v4872
        %5113 = vst [vmem:[#allocation4 + $0x248] sm:$0xf] %v4886
        %5114 = vst [vmem:[#allocation4 + $0x26c] sm:$0xf] %v4896
        %5115 = vst [vmem:[#allocation4 + $0x290] sm:$0xf] %v4910
        %5116 = vst [vmem:[#allocation4 + $0x2b4] sm:$0xf] %v4920
        %5117 = vst [vmem:[#allocation4 + $0x2d8] sm:$0xf] %v4934
        %5118 = vst [vmem:[#allocation4 + $0x2fc] sm:$0xf] %v4944
        %5119 = vst [vmem:[#allocation4 + $0x320] sm:$0xf] %v4958
        %5120 = vst [vmem:[#allocation4 + $0x344] sm:$0xf] %v4968
        %5121 = vst [vmem:[#allocation4 + $0x368] sm:$0xf] %v4982
        %5122 = vst [vmem:[#allocation4 + $0x38c] sm:$0xf] %v4992
        %5123 = vst [vmem:[#allocation4 + $0x3b0] sm:$0xf] %v5006
        %5124 = vst [vmem:[#allocation4 + $0x3d4] sm:$0xf] %v5016
        %5125 = vst [vmem:[#allocation4 + $0x3f8] sm:$0xf] %v5030
        %5126 = vst [vmem:[#allocation4 + $0x41c] sm:$0xf] %v5040
        %5127 = vst [vmem:[#allocation4 + $0x440] sm:$0xf] %v5054
        %5128 = vst [vmem:[#allocation4 + $0x464] sm:$0xf] %v5064
        %v5129 = vld [vmem:[%s3955] sm:$0x8]
        %v5130 = vld [vmem:[%s3955 + $0x4] sm:$0xf]
        %v5131 = vld [vmem:[%s3955 + $0x8] sm:$0xf]
        %v5132 = vld [vmem:[%s3955 + $0x10] sm:$0x8]
        %v5133 = vld [vmem:[%s3955 + $0x14] sm:$0xf]
        %v5134 = vld [vmem:[%s3955 + $0x18] sm:$0xf]
        %v5135 = vld [vmem:[%s3955 + $0x20] sm:$0x8]
        %v5136 = vld [vmem:[%s3955 + $0x24] sm:$0xf]
        %v5137 = vld [vmem:[%s3955 + $0x28] sm:$0xf]
        %v5138 = vld [vmem:[%s3955 + $0x30] sm:$0x8]
        %v5139 = vld [vmem:[%s3955 + $0x34] sm:$0xf]
        %v5140 = vld [vmem:[%s3955 + $0x38] sm:$0xf]
        %v5141 = vld [vmem:[%s3955 + $0x40] sm:$0x8]
        %v5142 = vld [vmem:[%s3955 + $0x44] sm:$0xf]
        %v5143 = vld [vmem:[%s3955 + $0x48] sm:$0xf]
        %v5144 = vld [vmem:[%s3955 + $0x50] sm:$0x8]
        %v5145 = vld [vmem:[%s3955 + $0x54] sm:$0xf]
        %v5146 = vld [vmem:[%s3955 + $0x58] sm:$0xf]
        %v5147 = vld [vmem:[%s3955 + $0x60] sm:$0x8]
        %v5148 = vld [vmem:[%s3955 + $0x64] sm:$0xf]
        %v5149 = vld [vmem:[%s3955 + $0x68] sm:$0xf]
        %v5150 = vld [vmem:[%s3955 + $0x70] sm:$0x8]
        %v5151 = vld [vmem:[%s3955 + $0x74] sm:$0xf]
        %v5152 = vld [vmem:[%s3955 + $0x78] sm:$0xf]
        %v5153 = vld [vmem:[%s3955 + $0x80] sm:$0x8]
        %v5154 = vld [vmem:[%s3955 + $0x84] sm:$0xf]
        %v5155 = vld [vmem:[%s3955 + $0x88] sm:$0xf]
        %v5156 = vld [vmem:[%s3955 + $0x90] sm:$0x8]
        %v5157 = vld [vmem:[%s3955 + $0x94] sm:$0xf]
        %v5158 = vld [vmem:[%s3955 + $0x98] sm:$0xf]
        %v5159 = vld [vmem:[%s3955 + $0xa0] sm:$0x8]
        %v5160 = vld [vmem:[%s3955 + $0xa4] sm:$0xf]
        %v5161 = vld [vmem:[%s3955 + $0xa8] sm:$0xf]
        %v5162 = vld [vmem:[%s3955 + $0xb0] sm:$0x8]
        %v5163 = vld [vmem:[%s3955 + $0xb4] sm:$0xf]
        %v5164 = vld [vmem:[%s3955 + $0xb8] sm:$0xf]
        %v5165 = vld [vmem:[%s3955 + $0xc0] sm:$0x8]
        %v5166 = vld [vmem:[%s3955 + $0xc4] sm:$0xf]
        %v5167 = vld [vmem:[%s3955 + $0xc8] sm:$0xf]
        %v5168 = vld [vmem:[%s3955 + $0xd0] sm:$0x8]
        %v5169 = vld [vmem:[%s3955 + $0xd4] sm:$0xf]
        %v5170 = vld [vmem:[%s3955 + $0xd8] sm:$0xf]
        %v5171 = vld [vmem:[%s3955 + $0xe0] sm:$0x8]
        %v5172 = vld [vmem:[%s3955 + $0xe4] sm:$0xf]
        %v5173 = vld [vmem:[%s3955 + $0xe8] sm:$0xf]
        %v5174 = vld [vmem:[%s3955 + $0xf0] sm:$0x8]
        %v5175 = vld [vmem:[%s3955 + $0xf4] sm:$0xf]
        %v5176 = vld [vmem:[%s3955 + $0xf8] sm:$0xf]
        %v5178 = vshrl.u32 %v5129, 16
        %v5180 = vrot.slane %v5178, 7
        %v5181 = vrot.slane %v5180, 4
        %v5183 = vshrl.u32 %v5130, 16
        %v5185 = vrot.slane %v5183, 7
        %v5186 = vshll.u32 %v5130, 16
        %v5188 = vor.u32 %v5185, %v5186
        %v5189 = vsel %vm4152, %v5181, %v5188
        %v5190 = vrot.slane %v5185, 4
        %v5192 = vshrl.u32 %v5131, 16
        %v5194 = vrot.slane %v5192, 7
        %v5195 = vshll.u32 %v5131, 16
        %v5197 = vor.u32 %v5194, %v5195
        %v5198 = vsel %vm4152, %v5190, %v5197
        %v5200 = vshrl.u32 %v5132, 16
        %v5202 = vrot.slane %v5200, 7
        %v5203 = vrot.slane %v5202, 4
        %v5205 = vshrl.u32 %v5133, 16
        %v5207 = vrot.slane %v5205, 7
        %v5208 = vshll.u32 %v5133, 16
        %v5210 = vor.u32 %v5207, %v5208
        %v5211 = vsel %vm4152, %v5203, %v5210
        %v5212 = vrot.slane %v5207, 4
        %v5214 = vshrl.u32 %v5134, 16
        %v5216 = vrot.slane %v5214, 7
        %v5217 = vshll.u32 %v5134, 16
        %v5219 = vor.u32 %v5216, %v5217
        %v5220 = vsel %vm4152, %v5212, %v5219
        %v5222 = vshrl.u32 %v5135, 16
        %v5224 = vrot.slane %v5222, 7
        %v5225 = vrot.slane %v5224, 4
        %v5227 = vshrl.u32 %v5136, 16
        %v5229 = vrot.slane %v5227, 7
        %v5230 = vshll.u32 %v5136, 16
        %v5232 = vor.u32 %v5229, %v5230
        %v5233 = vsel %vm4152, %v5225, %v5232
        %v5234 = vrot.slane %v5229, 4
        %v5236 = vshrl.u32 %v5137, 16
        %v5238 = vrot.slane %v5236, 7
        %v5239 = vshll.u32 %v5137, 16
        %v5241 = vor.u32 %v5238, %v5239
        %v5242 = vsel %vm4152, %v5234, %v5241
        %v5244 = vshrl.u32 %v5138, 16
        %v5246 = vrot.slane %v5244, 7
        %v5247 = vrot.slane %v5246, 4
        %v5249 = vshrl.u32 %v5139, 16
        %v5251 = vrot.slane %v5249, 7
        %v5252 = vshll.u32 %v5139, 16
        %v5254 = vor.u32 %v5251, %v5252
        %v5255 = vsel %vm4152, %v5247, %v5254
        %v5256 = vrot.slane %v5251, 4
        %v5258 = vshrl.u32 %v5140, 16
        %v5260 = vrot.slane %v5258, 7
        %v5261 = vshll.u32 %v5140, 16
        %v5263 = vor.u32 %v5260, %v5261
        %v5264 = vsel %vm4152, %v5256, %v5263
        %v5266 = vshrl.u32 %v5141, 16
        %v5268 = vrot.slane %v5266, 7
        %v5269 = vrot.slane %v5268, 4
        %v5271 = vshrl.u32 %v5142, 16
        %v5273 = vrot.slane %v5271, 7
        %v5274 = vshll.u32 %v5142, 16
        %v5276 = vor.u32 %v5273, %v5274
        %v5277 = vsel %vm4152, %v5269, %v5276
        %v5278 = vrot.slane %v5273, 4
        %v5280 = vshrl.u32 %v5143, 16
        %v5282 = vrot.slane %v5280, 7
        %v5283 = vshll.u32 %v5143, 16
        %v5285 = vor.u32 %v5282, %v5283
        %v5286 = vsel %vm4152, %v5278, %v5285
        %v5288 = vshrl.u32 %v5144, 16
        %v5290 = vrot.slane %v5288, 7
        %v5291 = vrot.slane %v5290, 4
        %v5293 = vshrl.u32 %v5145, 16
        %v5295 = vrot.slane %v5293, 7
        %v5296 = vshll.u32 %v5145, 16
        %v5298 = vor.u32 %v5295, %v5296
        %v5299 = vsel %vm4152, %v5291, %v5298
        %v5300 = vrot.slane %v5295, 4
        %v5302 = vshrl.u32 %v5146, 16
        %v5304 = vrot.slane %v5302, 7
        %v5305 = vshll.u32 %v5146, 16
        %v5307 = vor.u32 %v5304, %v5305
        %v5308 = vsel %vm4152, %v5300, %v5307
        %v5310 = vshrl.u32 %v5147, 16
        %v5312 = vrot.slane %v5310, 7
        %v5313 = vrot.slane %v5312, 4
        %v5315 = vshrl.u32 %v5148, 16
        %v5317 = vrot.slane %v5315, 7
        %v5318 = vshll.u32 %v5148, 16
        %v5320 = vor.u32 %v5317, %v5318
        %v5321 = vsel %vm4152, %v5313, %v5320
        %v5322 = vrot.slane %v5317, 4
        %v5324 = vshrl.u32 %v5149, 16
        %v5326 = vrot.slane %v5324, 7
        %v5327 = vshll.u32 %v5149, 16
        %v5329 = vor.u32 %v5326, %v5327
        %v5330 = vsel %vm4152, %v5322, %v5329
        %v5332 = vshrl.u32 %v5150, 16
        %v5334 = vrot.slane %v5332, 7
        %v5335 = vrot.slane %v5334, 4
        %v5337 = vshrl.u32 %v5151, 16
        %v5339 = vrot.slane %v5337, 7
        %v5340 = vshll.u32 %v5151, 16
        %v5342 = vor.u32 %v5339, %v5340
        %v5343 = vsel %vm4152, %v5335, %v5342
        %v5344 = vrot.slane %v5339, 4
        %v5346 = vshrl.u32 %v5152, 16
        %v5348 = vrot.slane %v5346, 7
        %v5349 = vshll.u32 %v5152, 16
        %v5351 = vor.u32 %v5348, %v5349
        %v5352 = vsel %vm4152, %v5344, %v5351
        %v5354 = vshrl.u32 %v5153, 16
        %v5356 = vrot.slane %v5354, 7
        %v5357 = vrot.slane %v5356, 4
        %v5359 = vshrl.u32 %v5154, 16
        %v5361 = vrot.slane %v5359, 7
        %v5362 = vshll.u32 %v5154, 16
        %v5364 = vor.u32 %v5361, %v5362
        %v5365 = vsel %vm4152, %v5357, %v5364
        %v5366 = vrot.slane %v5361, 4
        %v5368 = vshrl.u32 %v5155, 16
        %v5370 = vrot.slane %v5368, 7
        %v5371 = vshll.u32 %v5155, 16
        %v5373 = vor.u32 %v5370, %v5371
        %v5374 = vsel %vm4152, %v5366, %v5373
        %v5376 = vshrl.u32 %v5156, 16
        %v5378 = vrot.slane %v5376, 7
        %v5379 = vrot.slane %v5378, 4
        %v5381 = vshrl.u32 %v5157, 16
        %v5383 = vrot.slane %v5381, 7
        %v5384 = vshll.u32 %v5157, 16
        %v5386 = vor.u32 %v5383, %v5384
        %v5387 = vsel %vm4152, %v5379, %v5386
        %v5388 = vrot.slane %v5383, 4
        %v5390 = vshrl.u32 %v5158, 16
        %v5392 = vrot.slane %v5390, 7
        %v5393 = vshll.u32 %v5158, 16
        %v5395 = vor.u32 %v5392, %v5393
        %v5396 = vsel %vm4152, %v5388, %v5395
        %v5398 = vshrl.u32 %v5159, 16
        %v5400 = vrot.slane %v5398, 7
        %v5401 = vrot.slane %v5400, 4
        %v5403 = vshrl.u32 %v5160, 16
        %v5405 = vrot.slane %v5403, 7
        %v5406 = vshll.u32 %v5160, 16
        %v5408 = vor.u32 %v5405, %v5406
        %v5409 = vsel %vm4152, %v5401, %v5408
        %v5410 = vrot.slane %v5405, 4
        %v5412 = vshrl.u32 %v5161, 16
        %v5414 = vrot.slane %v5412, 7
        %v5415 = vshll.u32 %v5161, 16
        %v5417 = vor.u32 %v5414, %v5415
        %v5418 = vsel %vm4152, %v5410, %v5417
        %v5420 = vshrl.u32 %v5162, 16
        %v5422 = vrot.slane %v5420, 7
        %v5423 = vrot.slane %v5422, 4
        %v5425 = vshrl.u32 %v5163, 16
        %v5427 = vrot.slane %v5425, 7
        %v5428 = vshll.u32 %v5163, 16
        %v5430 = vor.u32 %v5427, %v5428
        %v5431 = vsel %vm4152, %v5423, %v5430
        %v5432 = vrot.slane %v5427, 4
        %v5434 = vshrl.u32 %v5164, 16
        %v5436 = vrot.slane %v5434, 7
        %v5437 = vshll.u32 %v5164, 16
        %v5439 = vor.u32 %v5436, %v5437
        %v5440 = vsel %vm4152, %v5432, %v5439
        %v5442 = vshrl.u32 %v5165, 16
        %v5444 = vrot.slane %v5442, 7
        %v5445 = vrot.slane %v5444, 4
        %v5447 = vshrl.u32 %v5166, 16
        %v5449 = vrot.slane %v5447, 7
        %v5450 = vshll.u32 %v5166, 16
        %v5452 = vor.u32 %v5449, %v5450
        %v5453 = vsel %vm4152, %v5445, %v5452
        %v5454 = vrot.slane %v5449, 4
        %v5456 = vshrl.u32 %v5167, 16
        %v5458 = vrot.slane %v5456, 7
        %v5459 = vshll.u32 %v5167, 16
        %v5461 = vor.u32 %v5458, %v5459
        %v5462 = vsel %vm4152, %v5454, %v5461
        %v5464 = vshrl.u32 %v5168, 16
        %v5466 = vrot.slane %v5464, 7
        %v5467 = vrot.slane %v5466, 4
        %v5469 = vshrl.u32 %v5169, 16
        %v5471 = vrot.slane %v5469, 7
        %v5472 = vshll.u32 %v5169, 16
        %v5474 = vor.u32 %v5471, %v5472
        %v5475 = vsel %vm4152, %v5467, %v5474
        %v5476 = vrot.slane %v5471, 4
        %v5478 = vshrl.u32 %v5170, 16
        %v5480 = vrot.slane %v5478, 7
        %v5481 = vshll.u32 %v5170, 16
        %v5483 = vor.u32 %v5480, %v5481
        %v5484 = vsel %vm4152, %v5476, %v5483
        %v5486 = vshrl.u32 %v5171, 16
        %v5488 = vrot.slane %v5486, 7
        %v5489 = vrot.slane %v5488, 4
        %v5491 = vshrl.u32 %v5172, 16
        %v5493 = vrot.slane %v5491, 7
        %v5494 = vshll.u32 %v5172, 16
        %v5496 = vor.u32 %v5493, %v5494
        %v5497 = vsel %vm4152, %v5489, %v5496
        %v5498 = vrot.slane %v5493, 4
        %v5500 = vshrl.u32 %v5173, 16
        %v5502 = vrot.slane %v5500, 7
        %v5503 = vshll.u32 %v5173, 16
        %v5505 = vor.u32 %v5502, %v5503
        %v5506 = vsel %vm4152, %v5498, %v5505
        %v5508 = vshrl.u32 %v5174, 16
        %v5510 = vrot.slane %v5508, 7
        %v5511 = vrot.slane %v5510, 4
        %v5513 = vshrl.u32 %v5175, 16
        %v5515 = vrot.slane %v5513, 7
        %v5516 = vshll.u32 %v5175, 16
        %v5518 = vor.u32 %v5515, %v5516
        %v5519 = vsel %vm4152, %v5511, %v5518
        %v5520 = vrot.slane %v5515, 4
        %v5522 = vshrl.u32 %v5176, 16
        %v5524 = vrot.slane %v5522, 7
        %v5525 = vshll.u32 %v5176, 16
        %v5527 = vor.u32 %v5524, %v5525
        %v5528 = vsel %vm4152, %v5520, %v5527
        %5561 = vst [vmem:[#allocation4 + $0xc] sm:$0xf] %v5189
        %5562 = vst [vmem:[#allocation4 + $0x30] sm:$0xf] %v5198
        %5563 = vst [vmem:[#allocation4 + $0x54] sm:$0xf] %v5211
        %5564 = vst [vmem:[#allocation4 + $0x78] sm:$0xf] %v5220
        %5565 = vst [vmem:[#allocation4 + $0x9c] sm:$0xf] %v5233
        %5566 = vst [vmem:[#allocation4 + $0xc0] sm:$0xf] %v5242
        %5567 = vst [vmem:[#allocation4 + $0xe4] sm:$0xf] %v5255
        %5568 = vst [vmem:[#allocation4 + $0x108] sm:$0xf] %v5264
        %5569 = vst [vmem:[#allocation4 + $0x12c] sm:$0xf] %v5277
        %5570 = vst [vmem:[#allocation4 + $0x150] sm:$0xf] %v5286
        %5571 = vst [vmem:[#allocation4 + $0x174] sm:$0xf] %v5299
        %5572 = vst [vmem:[#allocation4 + $0x198] sm:$0xf] %v5308
        %5573 = vst [vmem:[#allocation4 + $0x1bc] sm:$0xf] %v5321
        %5574 = vst [vmem:[#allocation4 + $0x1e0] sm:$0xf] %v5330
        %5575 = vst [vmem:[#allocation4 + $0x204] sm:$0xf] %v5343
        %5576 = vst [vmem:[#allocation4 + $0x228] sm:$0xf] %v5352
        %5577 = vst [vmem:[#allocation4 + $0x24c] sm:$0xf] %v5365
        %5578 = vst [vmem:[#allocation4 + $0x270] sm:$0xf] %v5374
        %5579 = vst [vmem:[#allocation4 + $0x294] sm:$0xf] %v5387
        %5580 = vst [vmem:[#allocation4 + $0x2b8] sm:$0xf] %v5396
        %5581 = vst [vmem:[#allocation4 + $0x2dc] sm:$0xf] %v5409
        %5582 = vst [vmem:[#allocation4 + $0x300] sm:$0xf] %v5418
        %5583 = vst [vmem:[#allocation4 + $0x324] sm:$0xf] %v5431
        %5584 = vst [vmem:[#allocation4 + $0x348] sm:$0xf] %v5440
        %5585 = vst [vmem:[#allocation4 + $0x36c] sm:$0xf] %v5453
        %5586 = vst [vmem:[#allocation4 + $0x390] sm:$0xf] %v5462
        %5587 = vst [vmem:[#allocation4 + $0x3b4] sm:$0xf] %v5475
        %5588 = vst [vmem:[#allocation4 + $0x3d8] sm:$0xf] %v5484
        %5589 = vst [vmem:[#allocation4 + $0x3fc] sm:$0xf] %v5497
        %5590 = vst [vmem:[#allocation4 + $0x420] sm:$0xf] %v5506
        %5591 = vst [vmem:[#allocation4 + $0x444] sm:$0xf] %v5519
        %5592 = vst [vmem:[#allocation4 + $0x468] sm:$0xf] %v5528
        %v5593 = vld [vmem:[%s3955 + $0x4] sm:$0xf]
        %v5594 = vld [vmem:[%s3955 + $0x8] sm:$0xf]
        %v5595 = vld [vmem:[%s3955 + $0x14] sm:$0xf]
        %v5596 = vld [vmem:[%s3955 + $0x18] sm:$0xf]
        %v5597 = vld [vmem:[%s3955 + $0x24] sm:$0xf]
        %v5598 = vld [vmem:[%s3955 + $0x28] sm:$0xf]
        %v5599 = vld [vmem:[%s3955 + $0x34] sm:$0xf]
        %v5600 = vld [vmem:[%s3955 + $0x38] sm:$0xf]
        %v5601 = vld [vmem:[%s3955 + $0x44] sm:$0xf]
        %v5602 = vld [vmem:[%s3955 + $0x48] sm:$0xf]
        %v5603 = vld [vmem:[%s3955 + $0x54] sm:$0xf]
        %v5604 = vld [vmem:[%s3955 + $0x58] sm:$0xf]
        %v5605 = vld [vmem:[%s3955 + $0x64] sm:$0xf]
        %v5606 = vld [vmem:[%s3955 + $0x68] sm:$0xf]
        %v5607 = vld [vmem:[%s3955 + $0x74] sm:$0xf]
        %v5608 = vld [vmem:[%s3955 + $0x78] sm:$0xf]
        %v5609 = vld [vmem:[%s3955 + $0x84] sm:$0xf]
        %v5610 = vld [vmem:[%s3955 + $0x88] sm:$0xf]
        %v5611 = vld [vmem:[%s3955 + $0x94] sm:$0xf]
        %v5612 = vld [vmem:[%s3955 + $0x98] sm:$0xf]
        %v5613 = vld [vmem:[%s3955 + $0xa4] sm:$0xf]
        %v5614 = vld [vmem:[%s3955 + $0xa8] sm:$0xf]
        %v5615 = vld [vmem:[%s3955 + $0xb4] sm:$0xf]
        %v5616 = vld [vmem:[%s3955 + $0xb8] sm:$0xf]
        %v5617 = vld [vmem:[%s3955 + $0xc4] sm:$0xf]
        %v5618 = vld [vmem:[%s3955 + $0xc8] sm:$0xf]
        %v5619 = vld [vmem:[%s3955 + $0xd4] sm:$0xf]
        %v5620 = vld [vmem:[%s3955 + $0xd8] sm:$0xf]
        %v5621 = vld [vmem:[%s3955 + $0xe4] sm:$0xf]
        %v5622 = vld [vmem:[%s3955 + $0xe8] sm:$0xf]
        %v5623 = vld [vmem:[%s3955 + $0xf4] sm:$0xf]
        %v5624 = vld [vmem:[%s3955 + $0xf8] sm:$0xf]
        %5625 = vst [vmem:[#allocation4 + $0x10] sm:$0xf] %v5593
        %5626 = vst [vmem:[#allocation4 + $0x34] sm:$0xf] %v5594
        %5627 = vst [vmem:[#allocation4 + $0x58] sm:$0xf] %v5595
        %5628 = vst [vmem:[#allocation4 + $0x7c] sm:$0xf] %v5596
        %5629 = vst [vmem:[#allocation4 + $0xa0] sm:$0xf] %v5597
        %5630 = vst [vmem:[#allocation4 + $0xc4] sm:$0xf] %v5598
        %5631 = vst [vmem:[#allocation4 + $0xe8] sm:$0xf] %v5599
        %5632 = vst [vmem:[#allocation4 + $0x10c] sm:$0xf] %v5600
        %5633 = vst [vmem:[#allocation4 + $0x130] sm:$0xf] %v5601
        %5634 = vst [vmem:[#allocation4 + $0x154] sm:$0xf] %v5602
        %5635 = vst [vmem:[#allocation4 + $0x178] sm:$0xf] %v5603
        %5636 = vst [vmem:[#allocation4 + $0x19c] sm:$0xf] %v5604
        %5637 = vst [vmem:[#allocation4 + $0x1c0] sm:$0xf] %v5605
        %5638 = vst [vmem:[#allocation4 + $0x1e4] sm:$0xf] %v5606
        %5639 = vst [vmem:[#allocation4 + $0x208] sm:$0xf] %v5607
        %5640 = vst [vmem:[#allocation4 + $0x22c] sm:$0xf] %v5608
        %5641 = vst [vmem:[#allocation4 + $0x250] sm:$0xf] %v5609
        %5642 = vst [vmem:[#allocation4 + $0x274] sm:$0xf] %v5610
        %5643 = vst [vmem:[#allocation4 + $0x298] sm:$0xf] %v5611
        %5644 = vst [vmem:[#allocation4 + $0x2bc] sm:$0xf] %v5612
        %5645 = vst [vmem:[#allocation4 + $0x2e0] sm:$0xf] %v5613
        %5646 = vst [vmem:[#allocation4 + $0x304] sm:$0xf] %v5614
        %5647 = vst [vmem:[#allocation4 + $0x328] sm:$0xf] %v5615
        %5648 = vst [vmem:[#allocation4 + $0x34c] sm:$0xf] %v5616
        %5649 = vst [vmem:[#allocation4 + $0x370] sm:$0xf] %v5617
        %5650 = vst [vmem:[#allocation4 + $0x394] sm:$0xf] %v5618
        %5651 = vst [vmem:[#allocation4 + $0x3b8] sm:$0xf] %v5619
        %5652 = vst [vmem:[#allocation4 + $0x3dc] sm:$0xf] %v5620
        %5653 = vst [vmem:[#allocation4 + $0x400] sm:$0xf] %v5621
        %5654 = vst [vmem:[#allocation4 + $0x424] sm:$0xf] %v5622
        %5655 = vst [vmem:[#allocation4 + $0x448] sm:$0xf] %v5623
        %5656 = vst [vmem:[#allocation4 + $0x46c] sm:$0xf] %v5624
        %v5657 = vld [vmem:[%s3955 + $0x4] sm:$0xf]
        %v5658 = vld [vmem:[%s3955 + $0x8] sm:$0xf]
        %v5659 = vld [vmem:[%s3955 + $0xc] sm:$0x1]
        %v5660 = vld [vmem:[%s3955 + $0x14] sm:$0xf]
        %v5661 = vld [vmem:[%s3955 + $0x18] sm:$0xf]
        %v5662 = vld [vmem:[%s3955 + $0x1c] sm:$0x1]
        %v5663 = vld [vmem:[%s3955 + $0x24] sm:$0xf]
        %v5664 = vld [vmem:[%s3955 + $0x28] sm:$0xf]
        %v5665 = vld [vmem:[%s3955 + $0x2c] sm:$0x1]
        %v5666 = vld [vmem:[%s3955 + $0x34] sm:$0xf]
        %v5667 = vld [vmem:[%s3955 + $0x38] sm:$0xf]
        %v5668 = vld [vmem:[%s3955 + $0x3c] sm:$0x1]
        %v5669 = vld [vmem:[%s3955 + $0x44] sm:$0xf]
        %v5670 = vld [vmem:[%s3955 + $0x48] sm:$0xf]
        %v5671 = vld [vmem:[%s3955 + $0x4c] sm:$0x1]
        %v5672 = vld [vmem:[%s3955 + $0x54] sm:$0xf]
        %v5673 = vld [vmem:[%s3955 + $0x58] sm:$0xf]
        %v5674 = vld [vmem:[%s3955 + $0x5c] sm:$0x1]
        %v5675 = vld [vmem:[%s3955 + $0x64] sm:$0xf]
        %v5676 = vld [vmem:[%s3955 + $0x68] sm:$0xf]
        %v5677 = vld [vmem:[%s3955 + $0x6c] sm:$0x1]
        %v5678 = vld [vmem:[%s3955 + $0x74] sm:$0xf]
        %v5679 = vld [vmem:[%s3955 + $0x78] sm:$0xf]
        %v5680 = vld [vmem:[%s3955 + $0x7c] sm:$0x1]
        %v5681 = vld [vmem:[%s3955 + $0x84] sm:$0xf]
        %v5682 = vld [vmem:[%s3955 + $0x88] sm:$0xf]
        %v5683 = vld [vmem:[%s3955 + $0x8c] sm:$0x1]
        %v5684 = vld [vmem:[%s3955 + $0x94] sm:$0xf]
        %v5685 = vld [vmem:[%s3955 + $0x98] sm:$0xf]
        %v5686 = vld [vmem:[%s3955 + $0x9c] sm:$0x1]
        %v5687 = vld [vmem:[%s3955 + $0xa4] sm:$0xf]
        %v5688 = vld [vmem:[%s3955 + $0xa8] sm:$0xf]
        %v5689 = vld [vmem:[%s3955 + $0xac] sm:$0x1]
        %v5690 = vld [vmem:[%s3955 + $0xb4] sm:$0xf]
        %v5691 = vld [vmem:[%s3955 + $0xb8] sm:$0xf]
        %v5692 = vld [vmem:[%s3955 + $0xbc] sm:$0x1]
        %v5693 = vld [vmem:[%s3955 + $0xc4] sm:$0xf]
        %v5694 = vld [vmem:[%s3955 + $0xc8] sm:$0xf]
        %v5695 = vld [vmem:[%s3955 + $0xcc] sm:$0x1]
        %v5696 = vld [vmem:[%s3955 + $0xd4] sm:$0xf]
        %v5697 = vld [vmem:[%s3955 + $0xd8] sm:$0xf]
        %v5698 = vld [vmem:[%s3955 + $0xdc] sm:$0x1]
        %v5699 = vld [vmem:[%s3955 + $0xe4] sm:$0xf]
        %v5700 = vld [vmem:[%s3955 + $0xe8] sm:$0xf]
        %v5701 = vld [vmem:[%s3955 + $0xec] sm:$0x1]
        %v5702 = vld [vmem:[%s3955 + $0xf4] sm:$0xf]
        %v5703 = vld [vmem:[%s3955 + $0xf8] sm:$0xf]
        %v5704 = vld [vmem:[%s3955 + $0xfc] sm:$0x1]
        %v5706 = vshrl.u32 %v5657, 16
        %v5708 = vrot.slane %v5706, 4
        %v5709 = vshll.u32 %v5657, 16
        %v5711 = vrot.slane %v5709, 5
        %v5712 = vor.u32 %v5708, %v5711
        %v5713 = vrot.slane %v5712, 4
        %v5715 = vshll.u32 %v5658, 16
        %v5717 = vrot.slane %v5715, 5
        %v5718 = vsel %vm354, %v5713, %v5717
        %v5719 = vshrl.u32 %v5658, 16
        %v5721 = vrot.slane %v5719, 4
        %v5722 = vor.u32 %v5721, %v5717
        %v5723 = vrot.slane %v5722, 4
        %v5725 = vshll.u32 %v5659, 16
        %v5727 = vrot.slane %v5725, 5
        %v5728 = vsel %vm354, %v5723, %v5727
        %v5730 = vshrl.u32 %v5660, 16
        %v5732 = vrot.slane %v5730, 4
        %v5733 = vshll.u32 %v5660, 16
        %v5735 = vrot.slane %v5733, 5
        %v5736 = vor.u32 %v5732, %v5735
        %v5737 = vrot.slane %v5736, 4
        %v5739 = vshll.u32 %v5661, 16
        %v5741 = vrot.slane %v5739, 5
        %v5742 = vsel %vm354, %v5737, %v5741
        %v5743 = vshrl.u32 %v5661, 16
        %v5745 = vrot.slane %v5743, 4
        %v5746 = vor.u32 %v5745, %v5741
        %v5747 = vrot.slane %v5746, 4
        %v5749 = vshll.u32 %v5662, 16
        %v5751 = vrot.slane %v5749, 5
        %v5752 = vsel %vm354, %v5747, %v5751
        %v5754 = vshrl.u32 %v5663, 16
        %v5756 = vrot.slane %v5754, 4
        %v5757 = vshll.u32 %v5663, 16
        %v5759 = vrot.slane %v5757, 5
        %v5760 = vor.u32 %v5756, %v5759
        %v5761 = vrot.slane %v5760, 4
        %v5763 = vshll.u32 %v5664, 16
        %v5765 = vrot.slane %v5763, 5
        %v5766 = vsel %vm354, %v5761, %v5765
        %v5767 = vshrl.u32 %v5664, 16
        %v5769 = vrot.slane %v5767, 4
        %v5770 = vor.u32 %v5769, %v5765
        %v5771 = vrot.slane %v5770, 4
        %v5773 = vshll.u32 %v5665, 16
        %v5775 = vrot.slane %v5773, 5
        %v5776 = vsel %vm354, %v5771, %v5775
        %v5778 = vshrl.u32 %v5666, 16
        %v5780 = vrot.slane %v5778, 4
        %v5781 = vshll.u32 %v5666, 16
        %v5783 = vrot.slane %v5781, 5
        %v5784 = vor.u32 %v5780, %v5783
        %v5785 = vrot.slane %v5784, 4
        %v5787 = vshll.u32 %v5667, 16
        %v5789 = vrot.slane %v5787, 5
        %v5790 = vsel %vm354, %v5785, %v5789
        %v5791 = vshrl.u32 %v5667, 16
        %v5793 = vrot.slane %v5791, 4
        %v5794 = vor.u32 %v5793, %v5789
        %v5795 = vrot.slane %v5794, 4
        %v5797 = vshll.u32 %v5668, 16
        %v5799 = vrot.slane %v5797, 5
        %v5800 = vsel %vm354, %v5795, %v5799
        %v5802 = vshrl.u32 %v5669, 16
        %v5804 = vrot.slane %v5802, 4
        %v5805 = vshll.u32 %v5669, 16
        %v5807 = vrot.slane %v5805, 5
        %v5808 = vor.u32 %v5804, %v5807
        %v5809 = vrot.slane %v5808, 4
        %v5811 = vshll.u32 %v5670, 16
        %v5813 = vrot.slane %v5811, 5
        %v5814 = vsel %vm354, %v5809, %v5813
        %v5815 = vshrl.u32 %v5670, 16
        %v5817 = vrot.slane %v5815, 4
        %v5818 = vor.u32 %v5817, %v5813
        %v5819 = vrot.slane %v5818, 4
        %v5821 = vshll.u32 %v5671, 16
        %v5823 = vrot.slane %v5821, 5
        %v5824 = vsel %vm354, %v5819, %v5823
        %v5826 = vshrl.u32 %v5672, 16
        %v5828 = vrot.slane %v5826, 4
        %v5829 = vshll.u32 %v5672, 16
        %v5831 = vrot.slane %v5829, 5
        %v5832 = vor.u32 %v5828, %v5831
        %v5833 = vrot.slane %v5832, 4
        %v5835 = vshll.u32 %v5673, 16
        %v5837 = vrot.slane %v5835, 5
        %v5838 = vsel %vm354, %v5833, %v5837
        %v5839 = vshrl.u32 %v5673, 16
        %v5841 = vrot.slane %v5839, 4
        %v5842 = vor.u32 %v5841, %v5837
        %v5843 = vrot.slane %v5842, 4
        %v5845 = vshll.u32 %v5674, 16
        %v5847 = vrot.slane %v5845, 5
        %v5848 = vsel %vm354, %v5843, %v5847
        %v5850 = vshrl.u32 %v5675, 16
        %v5852 = vrot.slane %v5850, 4
        %v5853 = vshll.u32 %v5675, 16
        %v5855 = vrot.slane %v5853, 5
        %v5856 = vor.u32 %v5852, %v5855
        %v5857 = vrot.slane %v5856, 4
        %v5859 = vshll.u32 %v5676, 16
        %v5861 = vrot.slane %v5859, 5
        %v5862 = vsel %vm354, %v5857, %v5861
        %v5863 = vshrl.u32 %v5676, 16
        %v5865 = vrot.slane %v5863, 4
        %v5866 = vor.u32 %v5865, %v5861
        %v5867 = vrot.slane %v5866, 4
        %v5869 = vshll.u32 %v5677, 16
        %v5871 = vrot.slane %v5869, 5
        %v5872 = vsel %vm354, %v5867, %v5871
        %v5874 = vshrl.u32 %v5678, 16
        %v5876 = vrot.slane %v5874, 4
        %v5877 = vshll.u32 %v5678, 16
        %v5879 = vrot.slane %v5877, 5
        %v5880 = vor.u32 %v5876, %v5879
        %v5881 = vrot.slane %v5880, 4
        %v5883 = vshll.u32 %v5679, 16
        %v5885 = vrot.slane %v5883, 5
        %v5886 = vsel %vm354, %v5881, %v5885
        %v5887 = vshrl.u32 %v5679, 16
        %v5889 = vrot.slane %v5887, 4
        %v5890 = vor.u32 %v5889, %v5885
        %v5891 = vrot.slane %v5890, 4
        %v5893 = vshll.u32 %v5680, 16
        %v5895 = vrot.slane %v5893, 5
        %v5896 = vsel %vm354, %v5891, %v5895
        %v5898 = vshrl.u32 %v5681, 16
        %v5900 = vrot.slane %v5898, 4
        %v5901 = vshll.u32 %v5681, 16
        %v5903 = vrot.slane %v5901, 5
        %v5904 = vor.u32 %v5900, %v5903
        %v5905 = vrot.slane %v5904, 4
        %v5907 = vshll.u32 %v5682, 16
        %v5909 = vrot.slane %v5907, 5
        %v5910 = vsel %vm354, %v5905, %v5909
        %v5911 = vshrl.u32 %v5682, 16
        %v5913 = vrot.slane %v5911, 4
        %v5914 = vor.u32 %v5913, %v5909
        %v5915 = vrot.slane %v5914, 4
        %v5917 = vshll.u32 %v5683, 16
        %v5919 = vrot.slane %v5917, 5
        %v5920 = vsel %vm354, %v5915, %v5919
        %v5922 = vshrl.u32 %v5684, 16
        %v5924 = vrot.slane %v5922, 4
        %v5925 = vshll.u32 %v5684, 16
        %v5927 = vrot.slane %v5925, 5
        %v5928 = vor.u32 %v5924, %v5927
        %v5929 = vrot.slane %v5928, 4
        %v5931 = vshll.u32 %v5685, 16
        %v5933 = vrot.slane %v5931, 5
        %v5934 = vsel %vm354, %v5929, %v5933
        %v5935 = vshrl.u32 %v5685, 16
        %v5937 = vrot.slane %v5935, 4
        %v5938 = vor.u32 %v5937, %v5933
        %v5939 = vrot.slane %v5938, 4
        %v5941 = vshll.u32 %v5686, 16
        %v5943 = vrot.slane %v5941, 5
        %v5944 = vsel %vm354, %v5939, %v5943
        %v5946 = vshrl.u32 %v5687, 16
        %v5948 = vrot.slane %v5946, 4
        %v5949 = vshll.u32 %v5687, 16
        %v5951 = vrot.slane %v5949, 5
        %v5952 = vor.u32 %v5948, %v5951
        %v5953 = vrot.slane %v5952, 4
        %v5955 = vshll.u32 %v5688, 16
        %v5957 = vrot.slane %v5955, 5
        %v5958 = vsel %vm354, %v5953, %v5957
        %v5959 = vshrl.u32 %v5688, 16
        %v5961 = vrot.slane %v5959, 4
        %v5962 = vor.u32 %v5961, %v5957
        %v5963 = vrot.slane %v5962, 4
        %v5965 = vshll.u32 %v5689, 16
        %v5967 = vrot.slane %v5965, 5
        %v5968 = vsel %vm354, %v5963, %v5967
        %v5970 = vshrl.u32 %v5690, 16
        %v5972 = vrot.slane %v5970, 4
        %v5973 = vshll.u32 %v5690, 16
        %v5975 = vrot.slane %v5973, 5
        %v5976 = vor.u32 %v5972, %v5975
        %v5977 = vrot.slane %v5976, 4
        %v5979 = vshll.u32 %v5691, 16
        %v5981 = vrot.slane %v5979, 5
        %v5982 = vsel %vm354, %v5977, %v5981
        %v5983 = vshrl.u32 %v5691, 16
        %v5985 = vrot.slane %v5983, 4
        %v5986 = vor.u32 %v5985, %v5981
        %v5987 = vrot.slane %v5986, 4
        %v5989 = vshll.u32 %v5692, 16
        %v5991 = vrot.slane %v5989, 5
        %v5992 = vsel %vm354, %v5987, %v5991
        %v5994 = vshrl.u32 %v5693, 16
        %v5996 = vrot.slane %v5994, 4
        %v5997 = vshll.u32 %v5693, 16
        %v5999 = vrot.slane %v5997, 5
        %v6000 = vor.u32 %v5996, %v5999
        %v6001 = vrot.slane %v6000, 4
        %v6003 = vshll.u32 %v5694, 16
        %v6005 = vrot.slane %v6003, 5
        %v6006 = vsel %vm354, %v6001, %v6005
        %v6007 = vshrl.u32 %v5694, 16
        %v6009 = vrot.slane %v6007, 4
        %v6010 = vor.u32 %v6009, %v6005
        %v6011 = vrot.slane %v6010, 4
        %v6013 = vshll.u32 %v5695, 16
        %v6015 = vrot.slane %v6013, 5
        %v6016 = vsel %vm354, %v6011, %v6015
        %v6018 = vshrl.u32 %v5696, 16
        %v6020 = vrot.slane %v6018, 4
        %v6021 = vshll.u32 %v5696, 16
        %v6023 = vrot.slane %v6021, 5
        %v6024 = vor.u32 %v6020, %v6023
        %v6025 = vrot.slane %v6024, 4
        %v6027 = vshll.u32 %v5697, 16
        %v6029 = vrot.slane %v6027, 5
        %v6030 = vsel %vm354, %v6025, %v6029
        %v6031 = vshrl.u32 %v5697, 16
        %v6033 = vrot.slane %v6031, 4
        %v6034 = vor.u32 %v6033, %v6029
        %v6035 = vrot.slane %v6034, 4
        %v6037 = vshll.u32 %v5698, 16
        %v6039 = vrot.slane %v6037, 5
        %v6040 = vsel %vm354, %v6035, %v6039
        %v6042 = vshrl.u32 %v5699, 16
        %v6044 = vrot.slane %v6042, 4
        %v6045 = vshll.u32 %v5699, 16
        %v6047 = vrot.slane %v6045, 5
        %v6048 = vor.u32 %v6044, %v6047
        %v6049 = vrot.slane %v6048, 4
        %v6051 = vshll.u32 %v5700, 16
        %v6053 = vrot.slane %v6051, 5
        %v6054 = vsel %vm354, %v6049, %v6053
        %v6055 = vshrl.u32 %v5700, 16
        %v6057 = vrot.slane %v6055, 4
        %v6058 = vor.u32 %v6057, %v6053
        %v6059 = vrot.slane %v6058, 4
        %v6061 = vshll.u32 %v5701, 16
        %v6063 = vrot.slane %v6061, 5
        %v6064 = vsel %vm354, %v6059, %v6063
        %v6066 = vshrl.u32 %v5702, 16
        %v6068 = vrot.slane %v6066, 4
        %v6069 = vshll.u32 %v5702, 16
        %v6071 = vrot.slane %v6069, 5
        %v6072 = vor.u32 %v6068, %v6071
        %v6073 = vrot.slane %v6072, 4
        %v6075 = vshll.u32 %v5703, 16
        %v6077 = vrot.slane %v6075, 5
        %v6078 = vsel %vm354, %v6073, %v6077
        %v6079 = vshrl.u32 %v5703, 16
        %v6081 = vrot.slane %v6079, 4
        %v6082 = vor.u32 %v6081, %v6077
        %v6083 = vrot.slane %v6082, 4
        %v6085 = vshll.u32 %v5704, 16
        %v6087 = vrot.slane %v6085, 5
        %v6088 = vsel %vm354, %v6083, %v6087
        %6121 = vst [vmem:[#allocation4 + $0x14] sm:$0xf] %v5718
        %6122 = vst [vmem:[#allocation4 + $0x38] sm:$0xf] %v5728
        %6123 = vst [vmem:[#allocation4 + $0x5c] sm:$0xf] %v5742
        %6124 = vst [vmem:[#allocation4 + $0x80] sm:$0xf] %v5752
        %6125 = vst [vmem:[#allocation4 + $0xa4] sm:$0xf] %v5766
        %6126 = vst [vmem:[#allocation4 + $0xc8] sm:$0xf] %v5776
        %6127 = vst [vmem:[#allocation4 + $0xec] sm:$0xf] %v5790
        %6128 = vst [vmem:[#allocation4 + $0x110] sm:$0xf] %v5800
        %6129 = vst [vmem:[#allocation4 + $0x134] sm:$0xf] %v5814
        %6130 = vst [vmem:[#allocation4 + $0x158] sm:$0xf] %v5824
        %6131 = vst [vmem:[#allocation4 + $0x17c] sm:$0xf] %v5838
        %6132 = vst [vmem:[#allocation4 + $0x1a0] sm:$0xf] %v5848
        %6133 = vst [vmem:[#allocation4 + $0x1c4] sm:$0xf] %v5862
        %6134 = vst [vmem:[#allocation4 + $0x1e8] sm:$0xf] %v5872
        %6135 = vst [vmem:[#allocation4 + $0x20c] sm:$0xf] %v5886
        %6136 = vst [vmem:[#allocation4 + $0x230] sm:$0xf] %v5896
        %6137 = vst [vmem:[#allocation4 + $0x254] sm:$0xf] %v5910
        %6138 = vst [vmem:[#allocation4 + $0x278] sm:$0xf] %v5920
        %6139 = vst [vmem:[#allocation4 + $0x29c] sm:$0xf] %v5934
        %6140 = vst [vmem:[#allocation4 + $0x2c0] sm:$0xf] %v5944
        %6141 = vst [vmem:[#allocation4 + $0x2e4] sm:$0xf] %v5958
        %6142 = vst [vmem:[#allocation4 + $0x308] sm:$0xf] %v5968
        %6143 = vst [vmem:[#allocation4 + $0x32c] sm:$0xf] %v5982
        %6144 = vst [vmem:[#allocation4 + $0x350] sm:$0xf] %v5992
        %6145 = vst [vmem:[#allocation4 + $0x374] sm:$0xf] %v6006
        %6146 = vst [vmem:[#allocation4 + $0x398] sm:$0xf] %v6016
        %6147 = vst [vmem:[#allocation4 + $0x3bc] sm:$0xf] %v6030
        %6148 = vst [vmem:[#allocation4 + $0x3e0] sm:$0xf] %v6040
        %6149 = vst [vmem:[#allocation4 + $0x404] sm:$0xf] %v6054
        %6150 = vst [vmem:[#allocation4 + $0x428] sm:$0xf] %v6064
        %6151 = vst [vmem:[#allocation4 + $0x44c] sm:$0xf] %v6078
        %6152 = vst [vmem:[#allocation4 + $0x470] sm:$0xf] %v6088
        %s6153 = scalar_lea.vmem [#allocation3], 32
        %v6154 = vld [vmem:[%s6153] sm:$0x8]
        %v6155 = vld [vmem:[%s6153 + $0x4] sm:$0xf]
        %v6156 = vld [vmem:[%s6153 + $0x8] sm:$0xf]
        %v6157 = vld [vmem:[%s6153 + $0x10] sm:$0x8]
        %v6158 = vld [vmem:[%s6153 + $0x14] sm:$0xf]
        %v6159 = vld [vmem:[%s6153 + $0x18] sm:$0xf]
        %v6160 = vld [vmem:[%s6153 + $0x20] sm:$0x8]
        %v6161 = vld [vmem:[%s6153 + $0x24] sm:$0xf]
        %v6162 = vld [vmem:[%s6153 + $0x28] sm:$0xf]
        %v6163 = vld [vmem:[%s6153 + $0x30] sm:$0x8]
        %v6164 = vld [vmem:[%s6153 + $0x34] sm:$0xf]
        %v6165 = vld [vmem:[%s6153 + $0x38] sm:$0xf]
        %v6166 = vld [vmem:[%s6153 + $0x40] sm:$0x8]
        %v6167 = vld [vmem:[%s6153 + $0x44] sm:$0xf]
        %v6168 = vld [vmem:[%s6153 + $0x48] sm:$0xf]
        %v6169 = vld [vmem:[%s6153 + $0x50] sm:$0x8]
        %v6170 = vld [vmem:[%s6153 + $0x54] sm:$0xf]
        %v6171 = vld [vmem:[%s6153 + $0x58] sm:$0xf]
        %v6172 = vld [vmem:[%s6153 + $0x60] sm:$0x8]
        %v6173 = vld [vmem:[%s6153 + $0x64] sm:$0xf]
        %v6174 = vld [vmem:[%s6153 + $0x68] sm:$0xf]
        %v6175 = vld [vmem:[%s6153 + $0x70] sm:$0x8]
        %v6176 = vld [vmem:[%s6153 + $0x74] sm:$0xf]
        %v6177 = vld [vmem:[%s6153 + $0x78] sm:$0xf]
        %v6178 = vld [vmem:[%s6153 + $0x80] sm:$0x8]
        %v6179 = vld [vmem:[%s6153 + $0x84] sm:$0xf]
        %v6180 = vld [vmem:[%s6153 + $0x88] sm:$0xf]
        %v6181 = vld [vmem:[%s6153 + $0x90] sm:$0x8]
        %v6182 = vld [vmem:[%s6153 + $0x94] sm:$0xf]
        %v6183 = vld [vmem:[%s6153 + $0x98] sm:$0xf]
        %v6184 = vld [vmem:[%s6153 + $0xa0] sm:$0x8]
        %v6185 = vld [vmem:[%s6153 + $0xa4] sm:$0xf]
        %v6186 = vld [vmem:[%s6153 + $0xa8] sm:$0xf]
        %v6187 = vld [vmem:[%s6153 + $0xb0] sm:$0x8]
        %v6188 = vld [vmem:[%s6153 + $0xb4] sm:$0xf]
        %v6189 = vld [vmem:[%s6153 + $0xb8] sm:$0xf]
        %v6190 = vld [vmem:[%s6153 + $0xc0] sm:$0x8]
        %v6191 = vld [vmem:[%s6153 + $0xc4] sm:$0xf]
        %v6192 = vld [vmem:[%s6153 + $0xc8] sm:$0xf]
        %v6193 = vld [vmem:[%s6153 + $0xd0] sm:$0x8]
        %v6194 = vld [vmem:[%s6153 + $0xd4] sm:$0xf]
        %v6195 = vld [vmem:[%s6153 + $0xd8] sm:$0xf]
        %v6196 = vld [vmem:[%s6153 + $0xe0] sm:$0x8]
        %v6197 = vld [vmem:[%s6153 + $0xe4] sm:$0xf]
        %v6198 = vld [vmem:[%s6153 + $0xe8] sm:$0xf]
        %v6199 = vld [vmem:[%s6153 + $0xf0] sm:$0x8]
        %v6200 = vld [vmem:[%s6153 + $0xf4] sm:$0xf]
        %v6201 = vld [vmem:[%s6153 + $0xf8] sm:$0xf]
        %v6203 = vshrl.u32 %v6154, 16
        %v6205 = vrot.slane %v6203, 7
        %v6206 = vrot.slane %v6205, 4
        %v6208 = vshrl.u32 %v6155, 16
        %v6210 = vrot.slane %v6208, 7
        %v6211 = vshll.u32 %v6155, 16
        %v6213 = vor.u32 %v6210, %v6211
        %v6214 = vsel %vm4152, %v6206, %v6213
        %v6215 = vrot.slane %v6210, 4
        %v6217 = vshrl.u32 %v6156, 16
        %v6219 = vrot.slane %v6217, 7
        %v6220 = vshll.u32 %v6156, 16
        %v6222 = vor.u32 %v6219, %v6220
        %v6223 = vsel %vm4152, %v6215, %v6222
        %v6225 = vshrl.u32 %v6157, 16
        %v6227 = vrot.slane %v6225, 7
        %v6228 = vrot.slane %v6227, 4
        %v6230 = vshrl.u32 %v6158, 16
        %v6232 = vrot.slane %v6230, 7
        %v6233 = vshll.u32 %v6158, 16
        %v6235 = vor.u32 %v6232, %v6233
        %v6236 = vsel %vm4152, %v6228, %v6235
        %v6237 = vrot.slane %v6232, 4
        %v6239 = vshrl.u32 %v6159, 16
        %v6241 = vrot.slane %v6239, 7
        %v6242 = vshll.u32 %v6159, 16
        %v6244 = vor.u32 %v6241, %v6242
        %v6245 = vsel %vm4152, %v6237, %v6244
        %v6247 = vshrl.u32 %v6160, 16
        %v6249 = vrot.slane %v6247, 7
        %v6250 = vrot.slane %v6249, 4
        %v6252 = vshrl.u32 %v6161, 16
        %v6254 = vrot.slane %v6252, 7
        %v6255 = vshll.u32 %v6161, 16
        %v6257 = vor.u32 %v6254, %v6255
        %v6258 = vsel %vm4152, %v6250, %v6257
        %v6259 = vrot.slane %v6254, 4
        %v6261 = vshrl.u32 %v6162, 16
        %v6263 = vrot.slane %v6261, 7
        %v6264 = vshll.u32 %v6162, 16
        %v6266 = vor.u32 %v6263, %v6264
        %v6267 = vsel %vm4152, %v6259, %v6266
        %v6269 = vshrl.u32 %v6163, 16
        %v6271 = vrot.slane %v6269, 7
        %v6272 = vrot.slane %v6271, 4
        %v6274 = vshrl.u32 %v6164, 16
        %v6276 = vrot.slane %v6274, 7
        %v6277 = vshll.u32 %v6164, 16
        %v6279 = vor.u32 %v6276, %v6277
        %v6280 = vsel %vm4152, %v6272, %v6279
        %v6281 = vrot.slane %v6276, 4
        %v6283 = vshrl.u32 %v6165, 16
        %v6285 = vrot.slane %v6283, 7
        %v6286 = vshll.u32 %v6165, 16
        %v6288 = vor.u32 %v6285, %v6286
        %v6289 = vsel %vm4152, %v6281, %v6288
        %v6291 = vshrl.u32 %v6166, 16
        %v6293 = vrot.slane %v6291, 7
        %v6294 = vrot.slane %v6293, 4
        %v6296 = vshrl.u32 %v6167, 16
        %v6298 = vrot.slane %v6296, 7
        %v6299 = vshll.u32 %v6167, 16
        %v6301 = vor.u32 %v6298, %v6299
        %v6302 = vsel %vm4152, %v6294, %v6301
        %v6303 = vrot.slane %v6298, 4
        %v6305 = vshrl.u32 %v6168, 16
        %v6307 = vrot.slane %v6305, 7
        %v6308 = vshll.u32 %v6168, 16
        %v6310 = vor.u32 %v6307, %v6308
        %v6311 = vsel %vm4152, %v6303, %v6310
        %v6313 = vshrl.u32 %v6169, 16
        %v6315 = vrot.slane %v6313, 7
        %v6316 = vrot.slane %v6315, 4
        %v6318 = vshrl.u32 %v6170, 16
        %v6320 = vrot.slane %v6318, 7
        %v6321 = vshll.u32 %v6170, 16
        %v6323 = vor.u32 %v6320, %v6321
        %v6324 = vsel %vm4152, %v6316, %v6323
        %v6325 = vrot.slane %v6320, 4
        %v6327 = vshrl.u32 %v6171, 16
        %v6329 = vrot.slane %v6327, 7
        %v6330 = vshll.u32 %v6171, 16
        %v6332 = vor.u32 %v6329, %v6330
        %v6333 = vsel %vm4152, %v6325, %v6332
        %v6335 = vshrl.u32 %v6172, 16
        %v6337 = vrot.slane %v6335, 7
        %v6338 = vrot.slane %v6337, 4
        %v6340 = vshrl.u32 %v6173, 16
        %v6342 = vrot.slane %v6340, 7
        %v6343 = vshll.u32 %v6173, 16
        %v6345 = vor.u32 %v6342, %v6343
        %v6346 = vsel %vm4152, %v6338, %v6345
        %v6347 = vrot.slane %v6342, 4
        %v6349 = vshrl.u32 %v6174, 16
        %v6351 = vrot.slane %v6349, 7
        %v6352 = vshll.u32 %v6174, 16
        %v6354 = vor.u32 %v6351, %v6352
        %v6355 = vsel %vm4152, %v6347, %v6354
        %v6357 = vshrl.u32 %v6175, 16
        %v6359 = vrot.slane %v6357, 7
        %v6360 = vrot.slane %v6359, 4
        %v6362 = vshrl.u32 %v6176, 16
        %v6364 = vrot.slane %v6362, 7
        %v6365 = vshll.u32 %v6176, 16
        %v6367 = vor.u32 %v6364, %v6365
        %v6368 = vsel %vm4152, %v6360, %v6367
        %v6369 = vrot.slane %v6364, 4
        %v6371 = vshrl.u32 %v6177, 16
        %v6373 = vrot.slane %v6371, 7
        %v6374 = vshll.u32 %v6177, 16
        %v6376 = vor.u32 %v6373, %v6374
        %v6377 = vsel %vm4152, %v6369, %v6376
        %v6379 = vshrl.u32 %v6178, 16
        %v6381 = vrot.slane %v6379, 7
        %v6382 = vrot.slane %v6381, 4
        %v6384 = vshrl.u32 %v6179, 16
        %v6386 = vrot.slane %v6384, 7
        %v6387 = vshll.u32 %v6179, 16
        %v6389 = vor.u32 %v6386, %v6387
        %v6390 = vsel %vm4152, %v6382, %v6389
        %v6391 = vrot.slane %v6386, 4
        %v6393 = vshrl.u32 %v6180, 16
        %v6395 = vrot.slane %v6393, 7
        %v6396 = vshll.u32 %v6180, 16
        %v6398 = vor.u32 %v6395, %v6396
        %v6399 = vsel %vm4152, %v6391, %v6398
        %v6401 = vshrl.u32 %v6181, 16
        %v6403 = vrot.slane %v6401, 7
        %v6404 = vrot.slane %v6403, 4
        %v6406 = vshrl.u32 %v6182, 16
        %v6408 = vrot.slane %v6406, 7
        %v6409 = vshll.u32 %v6182, 16
        %v6411 = vor.u32 %v6408, %v6409
        %v6412 = vsel %vm4152, %v6404, %v6411
        %v6413 = vrot.slane %v6408, 4
        %v6415 = vshrl.u32 %v6183, 16
        %v6417 = vrot.slane %v6415, 7
        %v6418 = vshll.u32 %v6183, 16
        %v6420 = vor.u32 %v6417, %v6418
        %v6421 = vsel %vm4152, %v6413, %v6420
        %v6423 = vshrl.u32 %v6184, 16
        %v6425 = vrot.slane %v6423, 7
        %v6426 = vrot.slane %v6425, 4
        %v6428 = vshrl.u32 %v6185, 16
        %v6430 = vrot.slane %v6428, 7
        %v6431 = vshll.u32 %v6185, 16
        %v6433 = vor.u32 %v6430, %v6431
        %v6434 = vsel %vm4152, %v6426, %v6433
        %v6435 = vrot.slane %v6430, 4
        %v6437 = vshrl.u32 %v6186, 16
        %v6439 = vrot.slane %v6437, 7
        %v6440 = vshll.u32 %v6186, 16
        %v6442 = vor.u32 %v6439, %v6440
        %v6443 = vsel %vm4152, %v6435, %v6442
        %v6445 = vshrl.u32 %v6187, 16
        %v6447 = vrot.slane %v6445, 7
        %v6448 = vrot.slane %v6447, 4
        %v6450 = vshrl.u32 %v6188, 16
        %v6452 = vrot.slane %v6450, 7
        %v6453 = vshll.u32 %v6188, 16
        %v6455 = vor.u32 %v6452, %v6453
        %v6456 = vsel %vm4152, %v6448, %v6455
        %v6457 = vrot.slane %v6452, 4
        %v6459 = vshrl.u32 %v6189, 16
        %v6461 = vrot.slane %v6459, 7
        %v6462 = vshll.u32 %v6189, 16
        %v6464 = vor.u32 %v6461, %v6462
        %v6465 = vsel %vm4152, %v6457, %v6464
        %v6467 = vshrl.u32 %v6190, 16
        %v6469 = vrot.slane %v6467, 7
        %v6470 = vrot.slane %v6469, 4
        %v6472 = vshrl.u32 %v6191, 16
        %v6474 = vrot.slane %v6472, 7
        %v6475 = vshll.u32 %v6191, 16
        %v6477 = vor.u32 %v6474, %v6475
        %v6478 = vsel %vm4152, %v6470, %v6477
        %v6479 = vrot.slane %v6474, 4
        %v6481 = vshrl.u32 %v6192, 16
        %v6483 = vrot.slane %v6481, 7
        %v6484 = vshll.u32 %v6192, 16
        %v6486 = vor.u32 %v6483, %v6484
        %v6487 = vsel %vm4152, %v6479, %v6486
        %v6489 = vshrl.u32 %v6193, 16
        %v6491 = vrot.slane %v6489, 7
        %v6492 = vrot.slane %v6491, 4
        %v6494 = vshrl.u32 %v6194, 16
        %v6496 = vrot.slane %v6494, 7
        %v6497 = vshll.u32 %v6194, 16
        %v6499 = vor.u32 %v6496, %v6497
        %v6500 = vsel %vm4152, %v6492, %v6499
        %v6501 = vrot.slane %v6496, 4
        %v6503 = vshrl.u32 %v6195, 16
        %v6505 = vrot.slane %v6503, 7
        %v6506 = vshll.u32 %v6195, 16
        %v6508 = vor.u32 %v6505, %v6506
        %v6509 = vsel %vm4152, %v6501, %v6508
        %v6511 = vshrl.u32 %v6196, 16
        %v6513 = vrot.slane %v6511, 7
        %v6514 = vrot.slane %v6513, 4
        %v6516 = vshrl.u32 %v6197, 16
        %v6518 = vrot.slane %v6516, 7
        %v6519 = vshll.u32 %v6197, 16
        %v6521 = vor.u32 %v6518, %v6519
        %v6522 = vsel %vm4152, %v6514, %v6521
        %v6523 = vrot.slane %v6518, 4
        %v6525 = vshrl.u32 %v6198, 16
        %v6527 = vrot.slane %v6525, 7
        %v6528 = vshll.u32 %v6198, 16
        %v6530 = vor.u32 %v6527, %v6528
        %v6531 = vsel %vm4152, %v6523, %v6530
        %v6533 = vshrl.u32 %v6199, 16
        %v6535 = vrot.slane %v6533, 7
        %v6536 = vrot.slane %v6535, 4
        %v6538 = vshrl.u32 %v6200, 16
        %v6540 = vrot.slane %v6538, 7
        %v6541 = vshll.u32 %v6200, 16
        %v6543 = vor.u32 %v6540, %v6541
        %v6544 = vsel %vm4152, %v6536, %v6543
        %v6545 = vrot.slane %v6540, 4
        %v6547 = vshrl.u32 %v6201, 16
        %v6549 = vrot.slane %v6547, 7
        %v6550 = vshll.u32 %v6201, 16
        %v6552 = vor.u32 %v6549, %v6550
        %v6553 = vsel %vm4152, %v6545, %v6552
        %6586 = vst [vmem:[#allocation4 + $0x18] sm:$0xf] %v6214
        %6587 = vst [vmem:[#allocation4 + $0x3c] sm:$0xf] %v6223
        %6588 = vst [vmem:[#allocation4 + $0x60] sm:$0xf] %v6236
        %6589 = vst [vmem:[#allocation4 + $0x84] sm:$0xf] %v6245
        %6590 = vst [vmem:[#allocation4 + $0xa8] sm:$0xf] %v6258
        %6591 = vst [vmem:[#allocation4 + $0xcc] sm:$0xf] %v6267
        %6592 = vst [vmem:[#allocation4 + $0xf0] sm:$0xf] %v6280
        %6593 = vst [vmem:[#allocation4 + $0x114] sm:$0xf] %v6289
        %6594 = vst [vmem:[#allocation4 + $0x138] sm:$0xf] %v6302
        %6595 = vst [vmem:[#allocation4 + $0x15c] sm:$0xf] %v6311
        %6596 = vst [vmem:[#allocation4 + $0x180] sm:$0xf] %v6324
        %6597 = vst [vmem:[#allocation4 + $0x1a4] sm:$0xf] %v6333
        %6598 = vst [vmem:[#allocation4 + $0x1c8] sm:$0xf] %v6346
        %6599 = vst [vmem:[#allocation4 + $0x1ec] sm:$0xf] %v6355
        %6600 = vst [vmem:[#allocation4 + $0x210] sm:$0xf] %v6368
        %6601 = vst [vmem:[#allocation4 + $0x234] sm:$0xf] %v6377
        %6602 = vst [vmem:[#allocation4 + $0x258] sm:$0xf] %v6390
        %6603 = vst [vmem:[#allocation4 + $0x27c] sm:$0xf] %v6399
        %6604 = vst [vmem:[#allocation4 + $0x2a0] sm:$0xf] %v6412
        %6605 = vst [vmem:[#allocation4 + $0x2c4] sm:$0xf] %v6421
        %6606 = vst [vmem:[#allocation4 + $0x2e8] sm:$0xf] %v6434
        %6607 = vst [vmem:[#allocation4 + $0x30c] sm:$0xf] %v6443
        %6608 = vst [vmem:[#allocation4 + $0x330] sm:$0xf] %v6456
        %6609 = vst [vmem:[#allocation4 + $0x354] sm:$0xf] %v6465
        %6610 = vst [vmem:[#allocation4 + $0x378] sm:$0xf] %v6478
        %6611 = vst [vmem:[#allocation4 + $0x39c] sm:$0xf] %v6487
        %6612 = vst [vmem:[#allocation4 + $0x3c0] sm:$0xf] %v6500
        %6613 = vst [vmem:[#allocation4 + $0x3e4] sm:$0xf] %v6509
        %6614 = vst [vmem:[#allocation4 + $0x408] sm:$0xf] %v6522
        %6615 = vst [vmem:[#allocation4 + $0x42c] sm:$0xf] %v6531
        %6616 = vst [vmem:[#allocation4 + $0x450] sm:$0xf] %v6544
        %6617 = vst [vmem:[#allocation4 + $0x474] sm:$0xf] %v6553
        %v6618 = vld [vmem:[%s6153 + $0x4] sm:$0xf]
        %v6619 = vld [vmem:[%s6153 + $0x8] sm:$0xf]
        %v6620 = vld [vmem:[%s6153 + $0x14] sm:$0xf]
        %v6621 = vld [vmem:[%s6153 + $0x18] sm:$0xf]
        %v6622 = vld [vmem:[%s6153 + $0x24] sm:$0xf]
        %v6623 = vld [vmem:[%s6153 + $0x28] sm:$0xf]
        %v6624 = vld [vmem:[%s6153 + $0x34] sm:$0xf]
        %v6625 = vld [vmem:[%s6153 + $0x38] sm:$0xf]
        %v6626 = vld [vmem:[%s6153 + $0x44] sm:$0xf]
        %v6627 = vld [vmem:[%s6153 + $0x48] sm:$0xf]
        %v6628 = vld [vmem:[%s6153 + $0x54] sm:$0xf]
        %v6629 = vld [vmem:[%s6153 + $0x58] sm:$0xf]
        %v6630 = vld [vmem:[%s6153 + $0x64] sm:$0xf]
        %v6631 = vld [vmem:[%s6153 + $0x68] sm:$0xf]
        %v6632 = vld [vmem:[%s6153 + $0x74] sm:$0xf]
        %v6633 = vld [vmem:[%s6153 + $0x78] sm:$0xf]
        %v6634 = vld [vmem:[%s6153 + $0x84] sm:$0xf]
        %v6635 = vld [vmem:[%s6153 + $0x88] sm:$0xf]
        %v6636 = vld [vmem:[%s6153 + $0x94] sm:$0xf]
        %v6637 = vld [vmem:[%s6153 + $0x98] sm:$0xf]
        %v6638 = vld [vmem:[%s6153 + $0xa4] sm:$0xf]
        %v6639 = vld [vmem:[%s6153 + $0xa8] sm:$0xf]
        %v6640 = vld [vmem:[%s6153 + $0xb4] sm:$0xf]
        %v6641 = vld [vmem:[%s6153 + $0xb8] sm:$0xf]
        %v6642 = vld [vmem:[%s6153 + $0xc4] sm:$0xf]
        %v6643 = vld [vmem:[%s6153 + $0xc8] sm:$0xf]
        %v6644 = vld [vmem:[%s6153 + $0xd4] sm:$0xf]
        %v6645 = vld [vmem:[%s6153 + $0xd8] sm:$0xf]
        %v6646 = vld [vmem:[%s6153 + $0xe4] sm:$0xf]
        %v6647 = vld [vmem:[%s6153 + $0xe8] sm:$0xf]
        %v6648 = vld [vmem:[%s6153 + $0xf4] sm:$0xf]
        %v6649 = vld [vmem:[%s6153 + $0xf8] sm:$0xf]
        %6650 = vst [vmem:[#allocation4 + $0x1c] sm:$0xf] %v6618
        %6651 = vst [vmem:[#allocation4 + $0x40] sm:$0xf] %v6619
        %6652 = vst [vmem:[#allocation4 + $0x64] sm:$0xf] %v6620
        %6653 = vst [vmem:[#allocation4 + $0x88] sm:$0xf] %v6621
        %6654 = vst [vmem:[#allocation4 + $0xac] sm:$0xf] %v6622
        %6655 = vst [vmem:[#allocation4 + $0xd0] sm:$0xf] %v6623
        %6656 = vst [vmem:[#allocation4 + $0xf4] sm:$0xf] %v6624
        %6657 = vst [vmem:[#allocation4 + $0x118] sm:$0xf] %v6625
        %6658 = vst [vmem:[#allocation4 + $0x13c] sm:$0xf] %v6626
        %6659 = vst [vmem:[#allocation4 + $0x160] sm:$0xf] %v6627
        %6660 = vst [vmem:[#allocation4 + $0x184] sm:$0xf] %v6628
        %6661 = vst [vmem:[#allocation4 + $0x1a8] sm:$0xf] %v6629
        %6662 = vst [vmem:[#allocation4 + $0x1cc] sm:$0xf] %v6630
        %6663 = vst [vmem:[#allocation4 + $0x1f0] sm:$0xf] %v6631
        %6664 = vst [vmem:[#allocation4 + $0x214] sm:$0xf] %v6632
        %6665 = vst [vmem:[#allocation4 + $0x238] sm:$0xf] %v6633
        %6666 = vst [vmem:[#allocation4 + $0x25c] sm:$0xf] %v6634
        %6667 = vst [vmem:[#allocation4 + $0x280] sm:$0xf] %v6635
        %6668 = vst [vmem:[#allocation4 + $0x2a4] sm:$0xf] %v6636
        %6669 = vst [vmem:[#allocation4 + $0x2c8] sm:$0xf] %v6637
        %6670 = vst [vmem:[#allocation4 + $0x2ec] sm:$0xf] %v6638
        %6671 = vst [vmem:[#allocation4 + $0x310] sm:$0xf] %v6639
        %6672 = vst [vmem:[#allocation4 + $0x334] sm:$0xf] %v6640
        %6673 = vst [vmem:[#allocation4 + $0x358] sm:$0xf] %v6641
        %6674 = vst [vmem:[#allocation4 + $0x37c] sm:$0xf] %v6642
        %6675 = vst [vmem:[#allocation4 + $0x3a0] sm:$0xf] %v6643
        %6676 = vst [vmem:[#allocation4 + $0x3c4] sm:$0xf] %v6644
        %6677 = vst [vmem:[#allocation4 + $0x3e8] sm:$0xf] %v6645
        %6678 = vst [vmem:[#allocation4 + $0x40c] sm:$0xf] %v6646
        %6679 = vst [vmem:[#allocation4 + $0x430] sm:$0xf] %v6647
        %6680 = vst [vmem:[#allocation4 + $0x454] sm:$0xf] %v6648
        %6681 = vst [vmem:[#allocation4 + $0x478] sm:$0xf] %v6649
        %v6682 = vld [vmem:[%s6153 + $0x4] sm:$0xf]
        %v6683 = vld [vmem:[%s6153 + $0x8] sm:$0xf]
        %v6684 = vld [vmem:[%s6153 + $0xc] sm:$0x1]
        %v6685 = vld [vmem:[%s6153 + $0x14] sm:$0xf]
        %v6686 = vld [vmem:[%s6153 + $0x18] sm:$0xf]
        %v6687 = vld [vmem:[%s6153 + $0x1c] sm:$0x1]
        %v6688 = vld [vmem:[%s6153 + $0x24] sm:$0xf]
        %v6689 = vld [vmem:[%s6153 + $0x28] sm:$0xf]
        %v6690 = vld [vmem:[%s6153 + $0x2c] sm:$0x1]
        %v6691 = vld [vmem:[%s6153 + $0x34] sm:$0xf]
        %v6692 = vld [vmem:[%s6153 + $0x38] sm:$0xf]
        %v6693 = vld [vmem:[%s6153 + $0x3c] sm:$0x1]
        %v6694 = vld [vmem:[%s6153 + $0x44] sm:$0xf]
        %v6695 = vld [vmem:[%s6153 + $0x48] sm:$0xf]
        %v6696 = vld [vmem:[%s6153 + $0x4c] sm:$0x1]
        %v6697 = vld [vmem:[%s6153 + $0x54] sm:$0xf]
        %v6698 = vld [vmem:[%s6153 + $0x58] sm:$0xf]
        %v6699 = vld [vmem:[%s6153 + $0x5c] sm:$0x1]
        %v6700 = vld [vmem:[%s6153 + $0x64] sm:$0xf]
        %v6701 = vld [vmem:[%s6153 + $0x68] sm:$0xf]
        %v6702 = vld [vmem:[%s6153 + $0x6c] sm:$0x1]
        %v6703 = vld [vmem:[%s6153 + $0x74] sm:$0xf]
        %v6704 = vld [vmem:[%s6153 + $0x78] sm:$0xf]
        %v6705 = vld [vmem:[%s6153 + $0x7c] sm:$0x1]
        %v6706 = vld [vmem:[%s6153 + $0x84] sm:$0xf]
        %v6707 = vld [vmem:[%s6153 + $0x88] sm:$0xf]
        %v6708 = vld [vmem:[%s6153 + $0x8c] sm:$0x1]
        %v6709 = vld [vmem:[%s6153 + $0x94] sm:$0xf]
        %v6710 = vld [vmem:[%s6153 + $0x98] sm:$0xf]
        %v6711 = vld [vmem:[%s6153 + $0x9c] sm:$0x1]
        %v6712 = vld [vmem:[%s6153 + $0xa4] sm:$0xf]
        %v6713 = vld [vmem:[%s6153 + $0xa8] sm:$0xf]
        %v6714 = vld [vmem:[%s6153 + $0xac] sm:$0x1]
        %v6715 = vld [vmem:[%s6153 + $0xb4] sm:$0xf]
        %v6716 = vld [vmem:[%s6153 + $0xb8] sm:$0xf]
        %v6717 = vld [vmem:[%s6153 + $0xbc] sm:$0x1]
        %v6718 = vld [vmem:[%s6153 + $0xc4] sm:$0xf]
        %v6719 = vld [vmem:[%s6153 + $0xc8] sm:$0xf]
        %v6720 = vld [vmem:[%s6153 + $0xcc] sm:$0x1]
        %v6721 = vld [vmem:[%s6153 + $0xd4] sm:$0xf]
        %v6722 = vld [vmem:[%s6153 + $0xd8] sm:$0xf]
        %v6723 = vld [vmem:[%s6153 + $0xdc] sm:$0x1]
        %v6724 = vld [vmem:[%s6153 + $0xe4] sm:$0xf]
        %v6725 = vld [vmem:[%s6153 + $0xe8] sm:$0xf]
        %v6726 = vld [vmem:[%s6153 + $0xec] sm:$0x1]
        %v6727 = vld [vmem:[%s6153 + $0xf4] sm:$0xf]
        %v6728 = vld [vmem:[%s6153 + $0xf8] sm:$0xf]
        %v6729 = vld [vmem:[%s6153 + $0xfc] sm:$0x1]
        %v6731 = vshrl.u32 %v6682, 16
        %v6733 = vrot.slane %v6731, 4
        %v6734 = vshll.u32 %v6682, 16
        %v6736 = vrot.slane %v6734, 5
        %v6737 = vor.u32 %v6733, %v6736
        %v6738 = vrot.slane %v6737, 4
        %v6740 = vshll.u32 %v6683, 16
        %v6742 = vrot.slane %v6740, 5
        %v6743 = vsel %vm354, %v6738, %v6742
        %v6744 = vshrl.u32 %v6683, 16
        %v6746 = vrot.slane %v6744, 4
        %v6747 = vor.u32 %v6746, %v6742
        %v6748 = vrot.slane %v6747, 4
        %v6750 = vshll.u32 %v6684, 16
        %v6752 = vrot.slane %v6750, 5
        %v6753 = vsel %vm354, %v6748, %v6752
        %v6755 = vshrl.u32 %v6685, 16
        %v6757 = vrot.slane %v6755, 4
        %v6758 = vshll.u32 %v6685, 16
        %v6760 = vrot.slane %v6758, 5
        %v6761 = vor.u32 %v6757, %v6760
        %v6762 = vrot.slane %v6761, 4
        %v6764 = vshll.u32 %v6686, 16
        %v6766 = vrot.slane %v6764, 5
        %v6767 = vsel %vm354, %v6762, %v6766
        %v6768 = vshrl.u32 %v6686, 16
        %v6770 = vrot.slane %v6768, 4
        %v6771 = vor.u32 %v6770, %v6766
        %v6772 = vrot.slane %v6771, 4
        %v6774 = vshll.u32 %v6687, 16
        %v6776 = vrot.slane %v6774, 5
        %v6777 = vsel %vm354, %v6772, %v6776
        %v6779 = vshrl.u32 %v6688, 16
        %v6781 = vrot.slane %v6779, 4
        %v6782 = vshll.u32 %v6688, 16
        %v6784 = vrot.slane %v6782, 5
        %v6785 = vor.u32 %v6781, %v6784
        %v6786 = vrot.slane %v6785, 4
        %v6788 = vshll.u32 %v6689, 16
        %v6790 = vrot.slane %v6788, 5
        %v6791 = vsel %vm354, %v6786, %v6790
        %v6792 = vshrl.u32 %v6689, 16
        %v6794 = vrot.slane %v6792, 4
        %v6795 = vor.u32 %v6794, %v6790
        %v6796 = vrot.slane %v6795, 4
        %v6798 = vshll.u32 %v6690, 16
        %v6800 = vrot.slane %v6798, 5
        %v6801 = vsel %vm354, %v6796, %v6800
        %v6803 = vshrl.u32 %v6691, 16
        %v6805 = vrot.slane %v6803, 4
        %v6806 = vshll.u32 %v6691, 16
        %v6808 = vrot.slane %v6806, 5
        %v6809 = vor.u32 %v6805, %v6808
        %v6810 = vrot.slane %v6809, 4
        %v6812 = vshll.u32 %v6692, 16
        %v6814 = vrot.slane %v6812, 5
        %v6815 = vsel %vm354, %v6810, %v6814
        %v6816 = vshrl.u32 %v6692, 16
        %v6818 = vrot.slane %v6816, 4
        %v6819 = vor.u32 %v6818, %v6814
        %v6820 = vrot.slane %v6819, 4
        %v6822 = vshll.u32 %v6693, 16
        %v6824 = vrot.slane %v6822, 5
        %v6825 = vsel %vm354, %v6820, %v6824
        %v6827 = vshrl.u32 %v6694, 16
        %v6829 = vrot.slane %v6827, 4
        %v6830 = vshll.u32 %v6694, 16
        %v6832 = vrot.slane %v6830, 5
        %v6833 = vor.u32 %v6829, %v6832
        %v6834 = vrot.slane %v6833, 4
        %v6836 = vshll.u32 %v6695, 16
        %v6838 = vrot.slane %v6836, 5
        %v6839 = vsel %vm354, %v6834, %v6838
        %v6840 = vshrl.u32 %v6695, 16
        %v6842 = vrot.slane %v6840, 4
        %v6843 = vor.u32 %v6842, %v6838
        %v6844 = vrot.slane %v6843, 4
        %v6846 = vshll.u32 %v6696, 16
        %v6848 = vrot.slane %v6846, 5
        %v6849 = vsel %vm354, %v6844, %v6848
        %v6851 = vshrl.u32 %v6697, 16
        %v6853 = vrot.slane %v6851, 4
        %v6854 = vshll.u32 %v6697, 16
        %v6856 = vrot.slane %v6854, 5
        %v6857 = vor.u32 %v6853, %v6856
        %v6858 = vrot.slane %v6857, 4
        %v6860 = vshll.u32 %v6698, 16
        %v6862 = vrot.slane %v6860, 5
        %v6863 = vsel %vm354, %v6858, %v6862
        %v6864 = vshrl.u32 %v6698, 16
        %v6866 = vrot.slane %v6864, 4
        %v6867 = vor.u32 %v6866, %v6862
        %v6868 = vrot.slane %v6867, 4
        %v6870 = vshll.u32 %v6699, 16
        %v6872 = vrot.slane %v6870, 5
        %v6873 = vsel %vm354, %v6868, %v6872
        %v6875 = vshrl.u32 %v6700, 16
        %v6877 = vrot.slane %v6875, 4
        %v6878 = vshll.u32 %v6700, 16
        %v6880 = vrot.slane %v6878, 5
        %v6881 = vor.u32 %v6877, %v6880
        %v6882 = vrot.slane %v6881, 4
        %v6884 = vshll.u32 %v6701, 16
        %v6886 = vrot.slane %v6884, 5
        %v6887 = vsel %vm354, %v6882, %v6886
        %v6888 = vshrl.u32 %v6701, 16
        %v6890 = vrot.slane %v6888, 4
        %v6891 = vor.u32 %v6890, %v6886
        %v6892 = vrot.slane %v6891, 4
        %v6894 = vshll.u32 %v6702, 16
        %v6896 = vrot.slane %v6894, 5
        %v6897 = vsel %vm354, %v6892, %v6896
        %v6899 = vshrl.u32 %v6703, 16
        %v6901 = vrot.slane %v6899, 4
        %v6902 = vshll.u32 %v6703, 16
        %v6904 = vrot.slane %v6902, 5
        %v6905 = vor.u32 %v6901, %v6904
        %v6906 = vrot.slane %v6905, 4
        %v6908 = vshll.u32 %v6704, 16
        %v6910 = vrot.slane %v6908, 5
        %v6911 = vsel %vm354, %v6906, %v6910
        %v6912 = vshrl.u32 %v6704, 16
        %v6914 = vrot.slane %v6912, 4
        %v6915 = vor.u32 %v6914, %v6910
        %v6916 = vrot.slane %v6915, 4
        %v6918 = vshll.u32 %v6705, 16
        %v6920 = vrot.slane %v6918, 5
        %v6921 = vsel %vm354, %v6916, %v6920
        %v6923 = vshrl.u32 %v6706, 16
        %v6925 = vrot.slane %v6923, 4
        %v6926 = vshll.u32 %v6706, 16
        %v6928 = vrot.slane %v6926, 5
        %v6929 = vor.u32 %v6925, %v6928
        %v6930 = vrot.slane %v6929, 4
        %v6932 = vshll.u32 %v6707, 16
        %v6934 = vrot.slane %v6932, 5
        %v6935 = vsel %vm354, %v6930, %v6934
        %v6936 = vshrl.u32 %v6707, 16
        %v6938 = vrot.slane %v6936, 4
        %v6939 = vor.u32 %v6938, %v6934
        %v6940 = vrot.slane %v6939, 4
        %v6942 = vshll.u32 %v6708, 16
        %v6944 = vrot.slane %v6942, 5
        %v6945 = vsel %vm354, %v6940, %v6944
        %v6947 = vshrl.u32 %v6709, 16
        %v6949 = vrot.slane %v6947, 4
        %v6950 = vshll.u32 %v6709, 16
        %v6952 = vrot.slane %v6950, 5
        %v6953 = vor.u32 %v6949, %v6952
        %v6954 = vrot.slane %v6953, 4
        %v6956 = vshll.u32 %v6710, 16
        %v6958 = vrot.slane %v6956, 5
        %v6959 = vsel %vm354, %v6954, %v6958
        %v6960 = vshrl.u32 %v6710, 16
        %v6962 = vrot.slane %v6960, 4
        %v6963 = vor.u32 %v6962, %v6958
        %v6964 = vrot.slane %v6963, 4
        %v6966 = vshll.u32 %v6711, 16
        %v6968 = vrot.slane %v6966, 5
        %v6969 = vsel %vm354, %v6964, %v6968
        %v6971 = vshrl.u32 %v6712, 16
        %v6973 = vrot.slane %v6971, 4
        %v6974 = vshll.u32 %v6712, 16
        %v6976 = vrot.slane %v6974, 5
        %v6977 = vor.u32 %v6973, %v6976
        %v6978 = vrot.slane %v6977, 4
        %v6980 = vshll.u32 %v6713, 16
        %v6982 = vrot.slane %v6980, 5
        %v6983 = vsel %vm354, %v6978, %v6982
        %v6984 = vshrl.u32 %v6713, 16
        %v6986 = vrot.slane %v6984, 4
        %v6987 = vor.u32 %v6986, %v6982
        %v6988 = vrot.slane %v6987, 4
        %v6990 = vshll.u32 %v6714, 16
        %v6992 = vrot.slane %v6990, 5
        %v6993 = vsel %vm354, %v6988, %v6992
        %v6995 = vshrl.u32 %v6715, 16
        %v6997 = vrot.slane %v6995, 4
        %v6998 = vshll.u32 %v6715, 16
        %v7000 = vrot.slane %v6998, 5
        %v7001 = vor.u32 %v6997, %v7000
        %v7002 = vrot.slane %v7001, 4
        %v7004 = vshll.u32 %v6716, 16
        %v7006 = vrot.slane %v7004, 5
        %v7007 = vsel %vm354, %v7002, %v7006
        %v7008 = vshrl.u32 %v6716, 16
        %v7010 = vrot.slane %v7008, 4
        %v7011 = vor.u32 %v7010, %v7006
        %v7012 = vrot.slane %v7011, 4
        %v7014 = vshll.u32 %v6717, 16
        %v7016 = vrot.slane %v7014, 5
        %v7017 = vsel %vm354, %v7012, %v7016
        %v7019 = vshrl.u32 %v6718, 16
        %v7021 = vrot.slane %v7019, 4
        %v7022 = vshll.u32 %v6718, 16
        %v7024 = vrot.slane %v7022, 5
        %v7025 = vor.u32 %v7021, %v7024
        %v7026 = vrot.slane %v7025, 4
        %v7028 = vshll.u32 %v6719, 16
        %v7030 = vrot.slane %v7028, 5
        %v7031 = vsel %vm354, %v7026, %v7030
        %v7032 = vshrl.u32 %v6719, 16
        %v7034 = vrot.slane %v7032, 4
        %v7035 = vor.u32 %v7034, %v7030
        %v7036 = vrot.slane %v7035, 4
        %v7038 = vshll.u32 %v6720, 16
        %v7040 = vrot.slane %v7038, 5
        %v7041 = vsel %vm354, %v7036, %v7040
        %v7043 = vshrl.u32 %v6721, 16
        %v7045 = vrot.slane %v7043, 4
        %v7046 = vshll.u32 %v6721, 16
        %v7048 = vrot.slane %v7046, 5
        %v7049 = vor.u32 %v7045, %v7048
        %v7050 = vrot.slane %v7049, 4
        %v7052 = vshll.u32 %v6722, 16
        %v7054 = vrot.slane %v7052, 5
        %v7055 = vsel %vm354, %v7050, %v7054
        %v7056 = vshrl.u32 %v6722, 16
        %v7058 = vrot.slane %v7056, 4
        %v7059 = vor.u32 %v7058, %v7054
        %v7060 = vrot.slane %v7059, 4
        %v7062 = vshll.u32 %v6723, 16
        %v7064 = vrot.slane %v7062, 5
        %v7065 = vsel %vm354, %v7060, %v7064
        %v7067 = vshrl.u32 %v6724, 16
        %v7069 = vrot.slane %v7067, 4
        %v7070 = vshll.u32 %v6724, 16
        %v7072 = vrot.slane %v7070, 5
        %v7073 = vor.u32 %v7069, %v7072
        %v7074 = vrot.slane %v7073, 4
        %v7076 = vshll.u32 %v6725, 16
        %v7078 = vrot.slane %v7076, 5
        %v7079 = vsel %vm354, %v7074, %v7078
        %v7080 = vshrl.u32 %v6725, 16
        %v7082 = vrot.slane %v7080, 4
        %v7083 = vor.u32 %v7082, %v7078
        %v7084 = vrot.slane %v7083, 4
        %v7086 = vshll.u32 %v6726, 16
        %v7088 = vrot.slane %v7086, 5
        %v7089 = vsel %vm354, %v7084, %v7088
        %v7091 = vshrl.u32 %v6727, 16
        %v7093 = vrot.slane %v7091, 4
        %v7094 = vshll.u32 %v6727, 16
        %v7096 = vrot.slane %v7094, 5
        %v7097 = vor.u32 %v7093, %v7096
        %v7098 = vrot.slane %v7097, 4
        %v7100 = vshll.u32 %v6728, 16
        %v7102 = vrot.slane %v7100, 5
        %v7103 = vsel %vm354, %v7098, %v7102
        %v7104 = vshrl.u32 %v6728, 16
        %v7106 = vrot.slane %v7104, 4
        %v7107 = vor.u32 %v7106, %v7102
        %v7108 = vrot.slane %v7107, 4
        %v7110 = vshll.u32 %v6729, 16
        %v7112 = vrot.slane %v7110, 5
        %v7113 = vsel %vm354, %v7108, %v7112
        %7146 = vst [vmem:[#allocation4 + $0x20] sm:$0xf] %v6743
        %7147 = vst [vmem:[#allocation4 + $0x44] sm:$0xf] %v6753
        %7148 = vst [vmem:[#allocation4 + $0x68] sm:$0xf] %v6767
        %7149 = vst [vmem:[#allocation4 + $0x8c] sm:$0xf] %v6777
        %7150 = vst [vmem:[#allocation4 + $0xb0] sm:$0xf] %v6791
        %7151 = vst [vmem:[#allocation4 + $0xd4] sm:$0xf] %v6801
        %7152 = vst [vmem:[#allocation4 + $0xf8] sm:$0xf] %v6815
        %7153 = vst [vmem:[#allocation4 + $0x11c] sm:$0xf] %v6825
        %7154 = vst [vmem:[#allocation4 + $0x140] sm:$0xf] %v6839
        %7155 = vst [vmem:[#allocation4 + $0x164] sm:$0xf] %v6849
        %7156 = vst [vmem:[#allocation4 + $0x188] sm:$0xf] %v6863
        %7157 = vst [vmem:[#allocation4 + $0x1ac] sm:$0xf] %v6873
        %7158 = vst [vmem:[#allocation4 + $0x1d0] sm:$0xf] %v6887
        %7159 = vst [vmem:[#allocation4 + $0x1f4] sm:$0xf] %v6897
        %7160 = vst [vmem:[#allocation4 + $0x218] sm:$0xf] %v6911
        %7161 = vst [vmem:[#allocation4 + $0x23c] sm:$0xf] %v6921
        %7162 = vst [vmem:[#allocation4 + $0x260] sm:$0xf] %v6935
        %7163 = vst [vmem:[#allocation4 + $0x284] sm:$0xf] %v6945
        %7164 = vst [vmem:[#allocation4 + $0x2a8] sm:$0xf] %v6959
        %7165 = vst [vmem:[#allocation4 + $0x2cc] sm:$0xf] %v6969
        %7166 = vst [vmem:[#allocation4 + $0x2f0] sm:$0xf] %v6983
        %7167 = vst [vmem:[#allocation4 + $0x314] sm:$0xf] %v6993
        %7168 = vst [vmem:[#allocation4 + $0x338] sm:$0xf] %v7007
        %7169 = vst [vmem:[#allocation4 + $0x35c] sm:$0xf] %v7017
        %7170 = vst [vmem:[#allocation4 + $0x380] sm:$0xf] %v7031
        %7171 = vst [vmem:[#allocation4 + $0x3a4] sm:$0xf] %v7041
        %7172 = vst [vmem:[#allocation4 + $0x3c8] sm:$0xf] %v7055
        %7173 = vst [vmem:[#allocation4 + $0x3ec] sm:$0xf] %v7065
        %7174 = vst [vmem:[#allocation4 + $0x410] sm:$0xf] %v7079
        %7175 = vst [vmem:[#allocation4 + $0x434] sm:$0xf] %v7089
        %7176 = vst [vmem:[#allocation4 + $0x458] sm:$0xf] %v7103
        %7177 = vst [vmem:[#allocation4 + $0x47c] sm:$0xf] %v7113
        %v7178 = vld [vmem:[#allocation4] sm:$0xff]
        %v7179 = vld [vmem:[#allocation4 + $0x8] sm:$0xff]
        %v7180 = vld [vmem:[#allocation4 + $0x10] sm:$0xff]
        %v7181 = vld [vmem:[#allocation4 + $0x18] sm:$0xff]
        %v7182 = vld [vmem:[#allocation4 + $0x20] sm:$0xf]
        %v7183 = vld [vmem:[#allocation4 + $0x24] sm:$0xff]
        %v7184 = vld [vmem:[#allocation4 + $0x2c] sm:$0xff]
        %v7185 = vld [vmem:[#allocation4 + $0x34] sm:$0xff]
        %v7186 = vld [vmem:[#allocation4 + $0x3c] sm:$0xff]
        %v7187 = vld [vmem:[#allocation4 + $0x44] sm:$0xf]
        %v7188 = vld [vmem:[#allocation4 + $0x48] sm:$0xff]
        %v7189 = vld [vmem:[#allocation4 + $0x50] sm:$0xff]
        %v7190 = vld [vmem:[#allocation4 + $0x58] sm:$0xff]
        %v7191 = vld [vmem:[#allocation4 + $0x60] sm:$0xff]
        %v7192 = vld [vmem:[#allocation4 + $0x68] sm:$0xf]
        %v7193 = vld [vmem:[#allocation4 + $0x6c] sm:$0xff]
        %v7194 = vld [vmem:[#allocation4 + $0x74] sm:$0xff]
        %v7195 = vld [vmem:[#allocation4 + $0x7c] sm:$0xff]
        %v7196 = vld [vmem:[#allocation4 + $0x84] sm:$0xff]
        %v7197 = vld [vmem:[#allocation4 + $0x8c] sm:$0xf]
        %v7198 = vld [vmem:[#allocation4 + $0x90] sm:$0xff]
        %v7199 = vld [vmem:[#allocation4 + $0x98] sm:$0xff]
        %v7200 = vld [vmem:[#allocation4 + $0xa0] sm:$0xff]
        %v7201 = vld [vmem:[#allocation4 + $0xa8] sm:$0xff]
        %v7202 = vld [vmem:[#allocation4 + $0xb0] sm:$0xf]
        %v7203 = vld [vmem:[#allocation4 + $0xb4] sm:$0xff]
        %v7204 = vld [vmem:[#allocation4 + $0xbc] sm:$0xff]
        %v7205 = vld [vmem:[#allocation4 + $0xc4] sm:$0xff]
        %v7206 = vld [vmem:[#allocation4 + $0xcc] sm:$0xff]
        %v7207 = vld [vmem:[#allocation4 + $0xd4] sm:$0xf]
        %v7208 = vld [vmem:[#allocation4 + $0xd8] sm:$0xff]
        %v7209 = vld [vmem:[#allocation4 + $0xe0] sm:$0xff]
        %v7210 = vld [vmem:[#allocation4 + $0xe8] sm:$0xff]
        %v7211 = vld [vmem:[#allocation4 + $0xf0] sm:$0xff]
        %v7212 = vld [vmem:[#allocation4 + $0xf8] sm:$0xf]
        %v7213 = vld [vmem:[#allocation4 + $0xfc] sm:$0xff]
        %v7214 = vld [vmem:[#allocation4 + $0x104] sm:$0xff]
        %v7215 = vld [vmem:[#allocation4 + $0x10c] sm:$0xff]
        %v7216 = vld [vmem:[#allocation4 + $0x114] sm:$0xff]
        %v7217 = vld [vmem:[#allocation4 + $0x11c] sm:$0xf]
        %v7218 = vld [vmem:[#allocation4 + $0x120] sm:$0xff]
        %v7219 = vld [vmem:[#allocation4 + $0x128] sm:$0xff]
        %v7220 = vld [vmem:[#allocation4 + $0x130] sm:$0xff]
        %v7221 = vld [vmem:[#allocation4 + $0x138] sm:$0xff]
        %v7222 = vld [vmem:[#allocation4 + $0x140] sm:$0xf]
        %v7223 = vld [vmem:[#allocation4 + $0x144] sm:$0xff]
        %v7224 = vld [vmem:[#allocation4 + $0x14c] sm:$0xff]
        %v7225 = vld [vmem:[#allocation4 + $0x154] sm:$0xff]
        %v7226 = vld [vmem:[#allocation4 + $0x15c] sm:$0xff]
        %v7227 = vld [vmem:[#allocation4 + $0x164] sm:$0xf]
        %v7228 = vld [vmem:[#allocation4 + $0x168] sm:$0xff]
        %v7229 = vld [vmem:[#allocation4 + $0x170] sm:$0xff]
        %v7230 = vld [vmem:[#allocation4 + $0x178] sm:$0xff]
        %v7231 = vld [vmem:[#allocation4 + $0x180] sm:$0xff]
        %v7232 = vld [vmem:[#allocation4 + $0x188] sm:$0xf]
        %v7233 = vld [vmem:[#allocation4 + $0x18c] sm:$0xff]
        %v7234 = vld [vmem:[#allocation4 + $0x194] sm:$0xff]
        %v7235 = vld [vmem:[#allocation4 + $0x19c] sm:$0xff]
        %v7236 = vld [vmem:[#allocation4 + $0x1a4] sm:$0xff]
        %v7237 = vld [vmem:[#allocation4 + $0x1ac] sm:$0xf]
        %v7238 = vld [vmem:[#allocation4 + $0x1b0] sm:$0xff]
        %v7239 = vld [vmem:[#allocation4 + $0x1b8] sm:$0xff]
        %v7240 = vld [vmem:[#allocation4 + $0x1c0] sm:$0xff]
        %v7241 = vld [vmem:[#allocation4 + $0x1c8] sm:$0xff]
        %v7242 = vld [vmem:[#allocation4 + $0x1d0] sm:$0xf]
        %v7243 = vld [vmem:[#allocation4 + $0x1d4] sm:$0xff]
        %v7244 = vld [vmem:[#allocation4 + $0x1dc] sm:$0xff]
        %v7245 = vld [vmem:[#allocation4 + $0x1e4] sm:$0xff]
        %v7246 = vld [vmem:[#allocation4 + $0x1ec] sm:$0xff]
        %v7247 = vld [vmem:[#allocation4 + $0x1f4] sm:$0xf]
        %v7248 = vld [vmem:[#allocation4 + $0x1f8] sm:$0xff]
        %v7249 = vld [vmem:[#allocation4 + $0x200] sm:$0xff]
        %v7250 = vld [vmem:[#allocation4 + $0x208] sm:$0xff]
        %v7251 = vld [vmem:[#allocation4 + $0x210] sm:$0xff]
        %v7252 = vld [vmem:[#allocation4 + $0x218] sm:$0xf]
        %v7253 = vld [vmem:[#allocation4 + $0x21c] sm:$0xff]
        %v7254 = vld [vmem:[#allocation4 + $0x224] sm:$0xff]
        %v7255 = vld [vmem:[#allocation4 + $0x22c] sm:$0xff]
        %v7256 = vld [vmem:[#allocation4 + $0x234] sm:$0xff]
        %v7257 = vld [vmem:[#allocation4 + $0x23c] sm:$0xf]
        %v7258 = vld [vmem:[#allocation4 + $0x240] sm:$0xff]
        %v7259 = vld [vmem:[#allocation4 + $0x248] sm:$0xff]
        %v7260 = vld [vmem:[#allocation4 + $0x250] sm:$0xff]
        %v7261 = vld [vmem:[#allocation4 + $0x258] sm:$0xff]
        %v7262 = vld [vmem:[#allocation4 + $0x260] sm:$0xf]
        %v7263 = vld [vmem:[#allocation4 + $0x264] sm:$0xff]
        %v7264 = vld [vmem:[#allocation4 + $0x26c] sm:$0xff]
        %v7265 = vld [vmem:[#allocation4 + $0x274] sm:$0xff]
        %v7266 = vld [vmem:[#allocation4 + $0x27c] sm:$0xff]
        %v7267 = vld [vmem:[#allocation4 + $0x284] sm:$0xf]
        %v7268 = vld [vmem:[#allocation4 + $0x288] sm:$0xff]
        %v7269 = vld [vmem:[#allocation4 + $0x290] sm:$0xff]
        %v7270 = vld [vmem:[#allocation4 + $0x298] sm:$0xff]
        %v7271 = vld [vmem:[#allocation4 + $0x2a0] sm:$0xff]
        %v7272 = vld [vmem:[#allocation4 + $0x2a8] sm:$0xf]
        %v7273 = vld [vmem:[#allocation4 + $0x2ac] sm:$0xff]
        %v7274 = vld [vmem:[#allocation4 + $0x2b4] sm:$0xff]
        %v7275 = vld [vmem:[#allocation4 + $0x2bc] sm:$0xff]
        %v7276 = vld [vmem:[#allocation4 + $0x2c4] sm:$0xff]
        %v7277 = vld [vmem:[#allocation4 + $0x2cc] sm:$0xf]
        %v7278 = vld [vmem:[#allocation4 + $0x2d0] sm:$0xff]
        %v7279 = vld [vmem:[#allocation4 + $0x2d8] sm:$0xff]
        %v7280 = vld [vmem:[#allocation4 + $0x2e0] sm:$0xff]
        %v7281 = vld [vmem:[#allocation4 + $0x2e8] sm:$0xff]
        %v7282 = vld [vmem:[#allocation4 + $0x2f0] sm:$0xf]
        %v7283 = vld [vmem:[#allocation4 + $0x2f4] sm:$0xff]
        %v7284 = vld [vmem:[#allocation4 + $0x2fc] sm:$0xff]
        %v7285 = vld [vmem:[#allocation4 + $0x304] sm:$0xff]
        %v7286 = vld [vmem:[#allocation4 + $0x30c] sm:$0xff]
        %v7287 = vld [vmem:[#allocation4 + $0x314] sm:$0xf]
        %v7288 = vld [vmem:[#allocation4 + $0x318] sm:$0xff]
        %v7289 = vld [vmem:[#allocation4 + $0x320] sm:$0xff]
        %v7290 = vld [vmem:[#allocation4 + $0x328] sm:$0xff]
        %v7291 = vld [vmem:[#allocation4 + $0x330] sm:$0xff]
        %v7292 = vld [vmem:[#allocation4 + $0x338] sm:$0xf]
        %v7293 = vld [vmem:[#allocation4 + $0x33c] sm:$0xff]
        %v7294 = vld [vmem:[#allocation4 + $0x344] sm:$0xff]
        %v7295 = vld [vmem:[#allocation4 + $0x34c] sm:$0xff]
        %v7296 = vld [vmem:[#allocation4 + $0x354] sm:$0xff]
        %v7297 = vld [vmem:[#allocation4 + $0x35c] sm:$0xf]
        %v7298 = vld [vmem:[#allocation4 + $0x360] sm:$0xff]
        %v7299 = vld [vmem:[#allocation4 + $0x368] sm:$0xff]
        %v7300 = vld [vmem:[#allocation4 + $0x370] sm:$0xff]
        %v7301 = vld [vmem:[#allocation4 + $0x378] sm:$0xff]
        %v7302 = vld [vmem:[#allocation4 + $0x380] sm:$0xf]
        %v7303 = vld [vmem:[#allocation4 + $0x384] sm:$0xff]
        %v7304 = vld [vmem:[#allocation4 + $0x38c] sm:$0xff]
        %v7305 = vld [vmem:[#allocation4 + $0x394] sm:$0xff]
        %v7306 = vld [vmem:[#allocation4 + $0x39c] sm:$0xff]
        %v7307 = vld [vmem:[#allocation4 + $0x3a4] sm:$0xf]
        %v7308 = vld [vmem:[#allocation4 + $0x3a8] sm:$0xff]
        %v7309 = vld [vmem:[#allocation4 + $0x3b0] sm:$0xff]
        %v7310 = vld [vmem:[#allocation4 + $0x3b8] sm:$0xff]
        %v7311 = vld [vmem:[#allocation4 + $0x3c0] sm:$0xff]
        %v7312 = vld [vmem:[#allocation4 + $0x3c8] sm:$0xf]
        %v7313 = vld [vmem:[#allocation4 + $0x3cc] sm:$0xff]
        %v7314 = vld [vmem:[#allocation4 + $0x3d4] sm:$0xff]
        %v7315 = vld [vmem:[#allocation4 + $0x3dc] sm:$0xff]
        %v7316 = vld [vmem:[#allocation4 + $0x3e4] sm:$0xff]
        %v7317 = vld [vmem:[#allocation4 + $0x3ec] sm:$0xf]
        %v7318 = vld [vmem:[#allocation4 + $0x3f0] sm:$0xff]
        %v7319 = vld [vmem:[#allocation4 + $0x3f8] sm:$0xff]
        %v7320 = vld [vmem:[#allocation4 + $0x400] sm:$0xff]
        %v7321 = vld [vmem:[#allocation4 + $0x408] sm:$0xff]
        %v7322 = vld [vmem:[#allocation4 + $0x410] sm:$0xf]
        %v7323 = vld [vmem:[#allocation4 + $0x414] sm:$0xff]
        %v7324 = vld [vmem:[#allocation4 + $0x41c] sm:$0xff]
        %v7325 = vld [vmem:[#allocation4 + $0x424] sm:$0xff]
        %v7326 = vld [vmem:[#allocation4 + $0x42c] sm:$0xff]
        %v7327 = vld [vmem:[#allocation4 + $0x434] sm:$0xf]
        %v7328 = vld [vmem:[#allocation4 + $0x438] sm:$0xff]
        %v7329 = vld [vmem:[#allocation4 + $0x440] sm:$0xff]
        %v7330 = vld [vmem:[#allocation4 + $0x448] sm:$0xff]
        %v7331 = vld [vmem:[#allocation4 + $0x450] sm:$0xff]
        %v7332 = vld [vmem:[#allocation4 + $0x458] sm:$0xf]
        %v7333 = vld [vmem:[#allocation4 + $0x45c] sm:$0xff]
        %v7334 = vld [vmem:[#allocation4 + $0x464] sm:$0xff]
        %v7335 = vld [vmem:[#allocation4 + $0x46c] sm:$0xff]
        %v7336 = vld [vmem:[#allocation4 + $0x474] sm:$0xff]
        %v7337 = vld [vmem:[#allocation4 + $0x47c] sm:$0xf]
        %v7338 = vld [vmem:[#allocation5] sm:$0xf]
        %v7339 = vld [vmem:[#allocation5 + $0x4] sm:$0xf]
        %v7340 = vld [vmem:[#allocation5 + $0x8] sm:$0xf]
        %v7341 = vld [vmem:[#allocation5 + $0xc] sm:$0xf]
        %v7342 = vld [vmem:[#allocation5 + $0x10] sm:$0xf]
        %v7343 = vld [vmem:[#allocation5 + $0x14] sm:$0xf]
        %v7344 = vld [vmem:[#allocation5 + $0x18] sm:$0xf]
        %v7345 = vld [vmem:[#allocation5 + $0x1c] sm:$0xf]
        %v7346 = vld [vmem:[#allocation5 + $0x20] sm:$0xf]
        %v7347 = vld [vmem:[#allocation5 + $0x24] sm:$0xf]
        %v7348 = vld [vmem:[#allocation5 + $0x28] sm:$0xf]
        %v7349 = vld [vmem:[#allocation5 + $0x2c] sm:$0xf]
        %v7350 = vld [vmem:[#allocation5 + $0x30] sm:$0xf]
        %v7351 = vld [vmem:[#allocation5 + $0x34] sm:$0xf]
        %v7352 = vld [vmem:[#allocation5 + $0x38] sm:$0xf]
        %v7353 = vld [vmem:[#allocation5 + $0x3c] sm:$0xf]
        %v7354 = vld [vmem:[#allocation5 + $0x40] sm:$0xf]
        %v7355 = vld [vmem:[#allocation5 + $0x44] sm:$0xf]
        %v7356 = vld [vmem:[#allocation5 + $0x48] sm:$0xf]
        %v7357 = vld [vmem:[#allocation5 + $0x4c] sm:$0xf]
        %v7358 = vld [vmem:[#allocation5 + $0x50] sm:$0xf]
        %v7359 = vld [vmem:[#allocation5 + $0x54] sm:$0xf]
        %v7360 = vld [vmem:[#allocation5 + $0x58] sm:$0xf]
        %v7361 = vld [vmem:[#allocation5 + $0x5c] sm:$0xf]
        %v7362 = vld [vmem:[#allocation5 + $0x60] sm:$0xf]
        %v7363 = vld [vmem:[#allocation5 + $0x64] sm:$0xf]
        %v7364 = vld [vmem:[#allocation5 + $0x68] sm:$0xf]
        %v7365 = vld [vmem:[#allocation5 + $0x6c] sm:$0xf]
        %v7366 = vld [vmem:[#allocation5 + $0x70] sm:$0xf]
        %v7367 = vld [vmem:[#allocation5 + $0x74] sm:$0xf]
        %v7368 = vld [vmem:[#allocation5 + $0x78] sm:$0xf]
        %v7369 = vld [vmem:[#allocation5 + $0x7c] sm:$0xf]
        %v7370 = vld [vmem:[#allocation5 + $0x80] sm:$0xf]
        %v7371 = vld [vmem:[#allocation5 + $0x84] sm:$0xf]
        %v7372 = vld [vmem:[#allocation5 + $0x88] sm:$0xf]
        %v7373 = vld [vmem:[#allocation5 + $0x8c] sm:$0xf]
        %v7374 = vld [vmem:[#allocation5 + $0x90] sm:$0xf]
        %v7375 = vld [vmem:[#allocation5 + $0x94] sm:$0xf]
        %v7376 = vld [vmem:[#allocation5 + $0x98] sm:$0xf]
        %v7377 = vld [vmem:[#allocation5 + $0x9c] sm:$0xf]
        %v7378 = vld [vmem:[#allocation5 + $0xa0] sm:$0xf]
        %v7379 = vld [vmem:[#allocation5 + $0xa4] sm:$0xf]
        %v7380 = vld [vmem:[#allocation5 + $0xa8] sm:$0xf]
        %v7381 = vld [vmem:[#allocation5 + $0xac] sm:$0xf]
        %v7382 = vld [vmem:[#allocation5 + $0xb0] sm:$0xf]
        %v7383 = vld [vmem:[#allocation5 + $0xb4] sm:$0xf]
        %v7384 = vld [vmem:[#allocation5 + $0xb8] sm:$0xf]
        %v7385 = vld [vmem:[#allocation5 + $0xbc] sm:$0xf]
        %v7386 = vld [vmem:[#allocation5 + $0xc0] sm:$0xf]
        %v7387 = vld [vmem:[#allocation5 + $0xc4] sm:$0xf]
        %v7388 = vld [vmem:[#allocation5 + $0xc8] sm:$0xf]
        %v7389 = vld [vmem:[#allocation5 + $0xcc] sm:$0xf]
        %v7390 = vld [vmem:[#allocation5 + $0xd0] sm:$0xf]
        %v7391 = vld [vmem:[#allocation5 + $0xd4] sm:$0xf]
        %v7392 = vld [vmem:[#allocation5 + $0xd8] sm:$0xf]
        %v7393 = vld [vmem:[#allocation5 + $0xdc] sm:$0xf]
        %v7394 = vld [vmem:[#allocation5 + $0xe0] sm:$0xf]
        %v7395 = vld [vmem:[#allocation5 + $0xe4] sm:$0xf]
        %v7396 = vld [vmem:[#allocation5 + $0xe8] sm:$0xf]
        %v7397 = vld [vmem:[#allocation5 + $0xec] sm:$0xf]
        %v7398 = vld [vmem:[#allocation5 + $0xf0] sm:$0xf]
        %v7399 = vld [vmem:[#allocation5 + $0xf4] sm:$0xf]
        %v7400 = vld [vmem:[#allocation5 + $0xf8] sm:$0xf]
        %v7401 = vld [vmem:[#allocation5 + $0xfc] sm:$0xf]
        %v7402 = vld [vmem:[#allocation5 + $0x100] sm:$0xf]
        %v7403 = vld [vmem:[#allocation5 + $0x104] sm:$0xf]
        %v7404 = vld [vmem:[#allocation5 + $0x108] sm:$0xf]
        %v7405 = vld [vmem:[#allocation5 + $0x10c] sm:$0xf]
        %v7406 = vld [vmem:[#allocation5 + $0x110] sm:$0xf]
        %v7407 = vld [vmem:[#allocation5 + $0x114] sm:$0xf]
        %v7408 = vld [vmem:[#allocation5 + $0x118] sm:$0xf]
        %v7409 = vld [vmem:[#allocation5 + $0x11c] sm:$0xf]
        %v7410 = vld [vmem:[#allocation5 + $0x120] sm:$0xf]
        %v7411 = vld [vmem:[#allocation5 + $0x124] sm:$0xf]
        %v7412 = vld [vmem:[#allocation5 + $0x128] sm:$0xf]
        %v7413 = vld [vmem:[#allocation5 + $0x12c] sm:$0xf]
        %v7414 = vld [vmem:[#allocation5 + $0x130] sm:$0xf]
        %v7415 = vld [vmem:[#allocation5 + $0x134] sm:$0xf]
        %v7416 = vld [vmem:[#allocation5 + $0x138] sm:$0xf]
        %v7417 = vld [vmem:[#allocation5 + $0x13c] sm:$0xf]
        %v7418 = vld [vmem:[#allocation5 + $0x140] sm:$0xf]
        %v7419 = vld [vmem:[#allocation5 + $0x144] sm:$0xf]
        %v7420 = vld [vmem:[#allocation5 + $0x148] sm:$0xf]
        %v7421 = vld [vmem:[#allocation5 + $0x14c] sm:$0xf]
        %v7422 = vld [vmem:[#allocation5 + $0x150] sm:$0xf]
        %v7423 = vld [vmem:[#allocation5 + $0x154] sm:$0xf]
        %v7424 = vld [vmem:[#allocation5 + $0x158] sm:$0xf]
        %v7425 = vld [vmem:[#allocation5 + $0x15c] sm:$0xf]
        %v7426 = vld [vmem:[#allocation5 + $0x160] sm:$0xf]
        %v7427 = vld [vmem:[#allocation5 + $0x164] sm:$0xf]
        %v7428 = vld [vmem:[#allocation5 + $0x168] sm:$0xf]
        %v7429 = vld [vmem:[#allocation5 + $0x16c] sm:$0xf]
        %v7430 = vld [vmem:[#allocation5 + $0x170] sm:$0xf]
        %v7431 = vld [vmem:[#allocation5 + $0x174] sm:$0xf]
        %v7432 = vld [vmem:[#allocation5 + $0x178] sm:$0xf]
        %v7433 = vld [vmem:[#allocation5 + $0x17c] sm:$0xf]
        %v7434 = vld [vmem:[#allocation5 + $0x180] sm:$0xf]
        %v7435 = vld [vmem:[#allocation5 + $0x184] sm:$0xf]
        %v7436 = vld [vmem:[#allocation5 + $0x188] sm:$0xf]
        %v7437 = vld [vmem:[#allocation5 + $0x18c] sm:$0xf]
        %v7438 = vld [vmem:[#allocation5 + $0x190] sm:$0xf]
        %v7439 = vld [vmem:[#allocation5 + $0x194] sm:$0xf]
        %v7440 = vld [vmem:[#allocation5 + $0x198] sm:$0xf]
        %v7441 = vld [vmem:[#allocation5 + $0x19c] sm:$0xf]
        %v7442 = vld [vmem:[#allocation5 + $0x1a0] sm:$0xf]
        %v7443 = vld [vmem:[#allocation5 + $0x1a4] sm:$0xf]
        %v7444 = vld [vmem:[#allocation5 + $0x1a8] sm:$0xf]
        %v7445 = vld [vmem:[#allocation5 + $0x1ac] sm:$0xf]
        %v7446 = vld [vmem:[#allocation5 + $0x1b0] sm:$0xf]
        %v7447 = vld [vmem:[#allocation5 + $0x1b4] sm:$0xf]
        %v7448 = vld [vmem:[#allocation5 + $0x1b8] sm:$0xf]
        %v7449 = vld [vmem:[#allocation5 + $0x1bc] sm:$0xf]
        %v7450 = vld [vmem:[#allocation5 + $0x1c0] sm:$0xf]
        %v7451 = vld [vmem:[#allocation5 + $0x1c4] sm:$0xf]
        %v7452 = vld [vmem:[#allocation5 + $0x1c8] sm:$0xf]
        %v7453 = vld [vmem:[#allocation5 + $0x1cc] sm:$0xf]
        %v7454 = vld [vmem:[#allocation5 + $0x1d0] sm:$0xf]
        %v7455 = vld [vmem:[#allocation5 + $0x1d4] sm:$0xf]
        %v7456 = vld [vmem:[#allocation5 + $0x1d8] sm:$0xf]
        %v7457 = vld [vmem:[#allocation5 + $0x1dc] sm:$0xf]
        %v7458 = vld [vmem:[#allocation5 + $0x1e0] sm:$0xf]
        %v7459 = vld [vmem:[#allocation5 + $0x1e4] sm:$0xf]
        %v7460 = vld [vmem:[#allocation5 + $0x1e8] sm:$0xf]
        %v7461 = vld [vmem:[#allocation5 + $0x1ec] sm:$0xf]
        %v7462 = vld [vmem:[#allocation5 + $0x1f0] sm:$0xf]
        %v7463 = vld [vmem:[#allocation5 + $0x1f4] sm:$0xf]
        %v7464 = vld [vmem:[#allocation5 + $0x1f8] sm:$0xf]
        %v7465 = vld [vmem:[#allocation5 + $0x1fc] sm:$0xf]
        %v7466 = vld [vmem:[#allocation5 + $0x200] sm:$0xf]
        %v7467 = vld [vmem:[#allocation5 + $0x204] sm:$0xf]
        %v7468 = vld [vmem:[#allocation5 + $0x208] sm:$0xf]
        %v7469 = vld [vmem:[#allocation5 + $0x20c] sm:$0xf]
        %v7470 = vld [vmem:[#allocation5 + $0x210] sm:$0xf]
        %v7471 = vld [vmem:[#allocation5 + $0x214] sm:$0xf]
        %v7472 = vld [vmem:[#allocation5 + $0x218] sm:$0xf]
        %v7473 = vld [vmem:[#allocation5 + $0x21c] sm:$0xf]
        %v7474 = vld [vmem:[#allocation5 + $0x220] sm:$0xf]
        %v7475 = vld [vmem:[#allocation5 + $0x224] sm:$0xf]
        %v7476 = vld [vmem:[#allocation5 + $0x228] sm:$0xf]
        %v7477 = vld [vmem:[#allocation5 + $0x22c] sm:$0xf]
        %v7478 = vld [vmem:[#allocation5 + $0x230] sm:$0xf]
        %v7479 = vld [vmem:[#allocation5 + $0x234] sm:$0xf]
        %v7480 = vld [vmem:[#allocation5 + $0x238] sm:$0xf]
        %v7481 = vld [vmem:[#allocation5 + $0x23c] sm:$0xf]
        %v7482 = vld [vmem:[%s4] sm:$0x1]
        %v7484 = vlaneseq
        %v7485 = vshrl.u32 %v7484, 7
        %v7486 = vsub.s32 0, %v7485
        %v7487 = vrot.slane %v7482, %v7486
        %v7649 = vunpack.c.l.b16 %v7178
        %v7650 = vunpack.c.h.b16 %v7178
        %v7651 = vunpack.c.l.b16 %v7179
        %v7652 = vunpack.c.h.b16 %v7179
        %v7653 = vunpack.c.l.b16 %v7180
        %v7654 = vunpack.c.h.b16 %v7180
        %v7655 = vunpack.c.l.b16 %v7181
        %v7656 = vunpack.c.h.b16 %v7181
        %v7657 = vunpack.c.l.b16 %v7182
        %v7658 = vunpack.c.l.b16 %v7183
        %v7659 = vunpack.c.h.b16 %v7183
        %v7660 = vunpack.c.l.b16 %v7184
        %v7661 = vunpack.c.h.b16 %v7184
        %v7662 = vunpack.c.l.b16 %v7185
        %v7663 = vunpack.c.h.b16 %v7185
        %v7664 = vunpack.c.l.b16 %v7186
        %v7665 = vunpack.c.h.b16 %v7186
        %v7666 = vunpack.c.l.b16 %v7187
        %v7667 = vunpack.c.l.b16 %v7188
        %v7668 = vunpack.c.h.b16 %v7188
        %v7669 = vunpack.c.l.b16 %v7189
        %v7670 = vunpack.c.h.b16 %v7189
        %v7671 = vunpack.c.l.b16 %v7190
        %v7672 = vunpack.c.h.b16 %v7190
        %v7673 = vunpack.c.l.b16 %v7191
        %v7674 = vunpack.c.h.b16 %v7191
        %v7675 = vunpack.c.l.b16 %v7192
        %v7676 = vunpack.c.l.b16 %v7193
        %v7677 = vunpack.c.h.b16 %v7193
        %v7678 = vunpack.c.l.b16 %v7194
        %v7679 = vunpack.c.h.b16 %v7194
        %v7680 = vunpack.c.l.b16 %v7195
        %v7681 = vunpack.c.h.b16 %v7195
        %v7682 = vunpack.c.l.b16 %v7196
        %v7683 = vunpack.c.h.b16 %v7196
        %v7684 = vunpack.c.l.b16 %v7197
        %v7685 = vunpack.c.l.b16 %v7198
        %v7686 = vunpack.c.h.b16 %v7198
        %v7687 = vunpack.c.l.b16 %v7199
        %v7688 = vunpack.c.h.b16 %v7199
        %v7689 = vunpack.c.l.b16 %v7200
        %v7690 = vunpack.c.h.b16 %v7200
        %v7691 = vunpack.c.l.b16 %v7201
        %v7692 = vunpack.c.h.b16 %v7201
        %v7693 = vunpack.c.l.b16 %v7202
        %v7694 = vunpack.c.l.b16 %v7203
        %v7695 = vunpack.c.h.b16 %v7203
        %v7696 = vunpack.c.l.b16 %v7204
        %v7697 = vunpack.c.h.b16 %v7204
        %v7698 = vunpack.c.l.b16 %v7205
        %v7699 = vunpack.c.h.b16 %v7205
        %v7700 = vunpack.c.l.b16 %v7206
        %v7701 = vunpack.c.h.b16 %v7206
        %v7702 = vunpack.c.l.b16 %v7207
        %v7703 = vunpack.c.l.b16 %v7208
        %v7704 = vunpack.c.h.b16 %v7208
        %v7705 = vunpack.c.l.b16 %v7209
        %v7706 = vunpack.c.h.b16 %v7209
        %v7707 = vunpack.c.l.b16 %v7210
        %v7708 = vunpack.c.h.b16 %v7210
        %v7709 = vunpack.c.l.b16 %v7211
        %v7710 = vunpack.c.h.b16 %v7211
        %v7711 = vunpack.c.l.b16 %v7212
        %v7712 = vunpack.c.l.b16 %v7213
        %v7713 = vunpack.c.h.b16 %v7213
        %v7714 = vunpack.c.l.b16 %v7214
        %v7715 = vunpack.c.h.b16 %v7214
        %v7716 = vunpack.c.l.b16 %v7215
        %v7717 = vunpack.c.h.b16 %v7215
        %v7718 = vunpack.c.l.b16 %v7216
        %v7719 = vunpack.c.h.b16 %v7216
        %v7720 = vunpack.c.l.b16 %v7217
        %v7721 = vunpack.c.l.b16 %v7218
        %v7722 = vunpack.c.h.b16 %v7218
        %v7723 = vunpack.c.l.b16 %v7219
        %v7724 = vunpack.c.h.b16 %v7219
        %v7725 = vunpack.c.l.b16 %v7220
        %v7726 = vunpack.c.h.b16 %v7220
        %v7727 = vunpack.c.l.b16 %v7221
        %v7728 = vunpack.c.h.b16 %v7221
        %v7729 = vunpack.c.l.b16 %v7222
        %v7730 = vunpack.c.l.b16 %v7223
        %v7731 = vunpack.c.h.b16 %v7223
        %v7732 = vunpack.c.l.b16 %v7224
        %v7733 = vunpack.c.h.b16 %v7224
        %v7734 = vunpack.c.l.b16 %v7225
        %v7735 = vunpack.c.h.b16 %v7225
        %v7736 = vunpack.c.l.b16 %v7226
        %v7737 = vunpack.c.h.b16 %v7226
        %v7738 = vunpack.c.l.b16 %v7227
        %v7739 = vunpack.c.l.b16 %v7228
        %v7740 = vunpack.c.h.b16 %v7228
        %v7741 = vunpack.c.l.b16 %v7229
        %v7742 = vunpack.c.h.b16 %v7229
        %v7743 = vunpack.c.l.b16 %v7230
        %v7744 = vunpack.c.h.b16 %v7230
        %v7745 = vunpack.c.l.b16 %v7231
        %v7746 = vunpack.c.h.b16 %v7231
        %v7747 = vunpack.c.l.b16 %v7232
        %v7748 = vunpack.c.l.b16 %v7233
        %v7749 = vunpack.c.h.b16 %v7233
        %v7750 = vunpack.c.l.b16 %v7234
        %v7751 = vunpack.c.h.b16 %v7234
        %v7752 = vunpack.c.l.b16 %v7235
        %v7753 = vunpack.c.h.b16 %v7235
        %v7754 = vunpack.c.l.b16 %v7236
        %v7755 = vunpack.c.h.b16 %v7236
        %v7756 = vunpack.c.l.b16 %v7237
        %v7757 = vunpack.c.l.b16 %v7238
        %v7758 = vunpack.c.h.b16 %v7238
        %v7759 = vunpack.c.l.b16 %v7239
        %v7760 = vunpack.c.h.b16 %v7239
        %v7761 = vunpack.c.l.b16 %v7240
        %v7762 = vunpack.c.h.b16 %v7240
        %v7763 = vunpack.c.l.b16 %v7241
        %v7764 = vunpack.c.h.b16 %v7241
        %v7765 = vunpack.c.l.b16 %v7242
        %v7766 = vunpack.c.l.b16 %v7243
        %v7767 = vunpack.c.h.b16 %v7243
        %v7768 = vunpack.c.l.b16 %v7244
        %v7769 = vunpack.c.h.b16 %v7244
        %v7770 = vunpack.c.l.b16 %v7245
        %v7771 = vunpack.c.h.b16 %v7245
        %v7772 = vunpack.c.l.b16 %v7246
        %v7773 = vunpack.c.h.b16 %v7246
        %v7774 = vunpack.c.l.b16 %v7247
        %v7775 = vunpack.c.l.b16 %v7248
        %v7776 = vunpack.c.h.b16 %v7248
        %v7777 = vunpack.c.l.b16 %v7249
        %v7778 = vunpack.c.h.b16 %v7249
        %v7779 = vunpack.c.l.b16 %v7250
        %v7780 = vunpack.c.h.b16 %v7250
        %v7781 = vunpack.c.l.b16 %v7251
        %v7782 = vunpack.c.h.b16 %v7251
        %v7783 = vunpack.c.l.b16 %v7252
        %v7784 = vunpack.c.l.b16 %v7253
        %v7785 = vunpack.c.h.b16 %v7253
        %v7786 = vunpack.c.l.b16 %v7254
        %v7787 = vunpack.c.h.b16 %v7254
        %v7788 = vunpack.c.l.b16 %v7255
        %v7789 = vunpack.c.h.b16 %v7255
        %v7790 = vunpack.c.l.b16 %v7256
        %v7791 = vunpack.c.h.b16 %v7256
        %v7792 = vunpack.c.l.b16 %v7257
        %v7793 = vunpack.c.l.b16 %v7258
        %v7794 = vunpack.c.h.b16 %v7258
        %v7795 = vunpack.c.l.b16 %v7259
        %v7796 = vunpack.c.h.b16 %v7259
        %v7797 = vunpack.c.l.b16 %v7260
        %v7798 = vunpack.c.h.b16 %v7260
        %v7799 = vunpack.c.l.b16 %v7261
        %v7800 = vunpack.c.h.b16 %v7261
        %v7801 = vunpack.c.l.b16 %v7262
        %v7802 = vunpack.c.l.b16 %v7263
        %v7803 = vunpack.c.h.b16 %v7263
        %v7804 = vunpack.c.l.b16 %v7264
        %v7805 = vunpack.c.h.b16 %v7264
        %v7806 = vunpack.c.l.b16 %v7265
        %v7807 = vunpack.c.h.b16 %v7265
        %v7808 = vunpack.c.l.b16 %v7266
        %v7809 = vunpack.c.h.b16 %v7266
        %v7810 = vunpack.c.l.b16 %v7267
        %v7811 = vunpack.c.l.b16 %v7268
        %v7812 = vunpack.c.h.b16 %v7268
        %v7813 = vunpack.c.l.b16 %v7269
        %v7814 = vunpack.c.h.b16 %v7269
        %v7815 = vunpack.c.l.b16 %v7270
        %v7816 = vunpack.c.h.b16 %v7270
        %v7817 = vunpack.c.l.b16 %v7271
        %v7818 = vunpack.c.h.b16 %v7271
        %v7819 = vunpack.c.l.b16 %v7272
        %v7820 = vunpack.c.l.b16 %v7273
        %v7821 = vunpack.c.h.b16 %v7273
        %v7822 = vunpack.c.l.b16 %v7274
        %v7823 = vunpack.c.h.b16 %v7274
        %v7824 = vunpack.c.l.b16 %v7275
        %v7825 = vunpack.c.h.b16 %v7275
        %v7826 = vunpack.c.l.b16 %v7276
        %v7827 = vunpack.c.h.b16 %v7276
        %v7828 = vunpack.c.l.b16 %v7277
        %v7829 = vunpack.c.l.b16 %v7278
        %v7830 = vunpack.c.h.b16 %v7278
        %v7831 = vunpack.c.l.b16 %v7279
        %v7832 = vunpack.c.h.b16 %v7279
        %v7833 = vunpack.c.l.b16 %v7280
        %v7834 = vunpack.c.h.b16 %v7280
        %v7835 = vunpack.c.l.b16 %v7281
        %v7836 = vunpack.c.h.b16 %v7281
        %v7837 = vunpack.c.l.b16 %v7282
        %v7838 = vunpack.c.l.b16 %v7283
        %v7839 = vunpack.c.h.b16 %v7283
        %v7840 = vunpack.c.l.b16 %v7284
        %v7841 = vunpack.c.h.b16 %v7284
        %v7842 = vunpack.c.l.b16 %v7285
        %v7843 = vunpack.c.h.b16 %v7285
        %v7844 = vunpack.c.l.b16 %v7286
        %v7845 = vunpack.c.h.b16 %v7286
        %v7846 = vunpack.c.l.b16 %v7287
        %v7847 = vunpack.c.l.b16 %v7288
        %v7848 = vunpack.c.h.b16 %v7288
        %v7849 = vunpack.c.l.b16 %v7289
        %v7850 = vunpack.c.h.b16 %v7289
        %v7851 = vunpack.c.l.b16 %v7290
        %v7852 = vunpack.c.h.b16 %v7290
        %v7853 = vunpack.c.l.b16 %v7291
        %v7854 = vunpack.c.h.b16 %v7291
        %v7855 = vunpack.c.l.b16 %v7292
        %v7856 = vunpack.c.l.b16 %v7293
        %v7857 = vunpack.c.h.b16 %v7293
        %v7858 = vunpack.c.l.b16 %v7294
        %v7859 = vunpack.c.h.b16 %v7294
        %v7860 = vunpack.c.l.b16 %v7295
        %v7861 = vunpack.c.h.b16 %v7295
        %v7862 = vunpack.c.l.b16 %v7296
        %v7863 = vunpack.c.h.b16 %v7296
        %v7864 = vunpack.c.l.b16 %v7297
        %v7865 = vunpack.c.l.b16 %v7298
        %v7866 = vunpack.c.h.b16 %v7298
        %v7867 = vunpack.c.l.b16 %v7299
        %v7868 = vunpack.c.h.b16 %v7299
        %v7869 = vunpack.c.l.b16 %v7300
        %v7870 = vunpack.c.h.b16 %v7300
        %v7871 = vunpack.c.l.b16 %v7301
        %v7872 = vunpack.c.h.b16 %v7301
        %v7873 = vunpack.c.l.b16 %v7302
        %v7874 = vunpack.c.l.b16 %v7303
        %v7875 = vunpack.c.h.b16 %v7303
        %v7876 = vunpack.c.l.b16 %v7304
        %v7877 = vunpack.c.h.b16 %v7304
        %v7878 = vunpack.c.l.b16 %v7305
        %v7879 = vunpack.c.h.b16 %v7305
        %v7880 = vunpack.c.l.b16 %v7306
        %v7881 = vunpack.c.h.b16 %v7306
        %v7882 = vunpack.c.l.b16 %v7307
        %v7883 = vunpack.c.l.b16 %v7308
        %v7884 = vunpack.c.h.b16 %v7308
        %v7885 = vunpack.c.l.b16 %v7309
        %v7886 = vunpack.c.h.b16 %v7309
        %v7887 = vunpack.c.l.b16 %v7310
        %v7888 = vunpack.c.h.b16 %v7310
        %v7889 = vunpack.c.l.b16 %v7311
        %v7890 = vunpack.c.h.b16 %v7311
        %v7891 = vunpack.c.l.b16 %v7312
        %v7892 = vunpack.c.l.b16 %v7313
        %v7893 = vunpack.c.h.b16 %v7313
        %v7894 = vunpack.c.l.b16 %v7314
        %v7895 = vunpack.c.h.b16 %v7314
        %v7896 = vunpack.c.l.b16 %v7315
        %v7897 = vunpack.c.h.b16 %v7315
        %v7898 = vunpack.c.l.b16 %v7316
        %v7899 = vunpack.c.h.b16 %v7316
        %v7900 = vunpack.c.l.b16 %v7317
        %v7901 = vunpack.c.l.b16 %v7318
        %v7902 = vunpack.c.h.b16 %v7318
        %v7903 = vunpack.c.l.b16 %v7319
        %v7904 = vunpack.c.h.b16 %v7319
        %v7905 = vunpack.c.l.b16 %v7320
        %v7906 = vunpack.c.h.b16 %v7320
        %v7907 = vunpack.c.l.b16 %v7321
        %v7908 = vunpack.c.h.b16 %v7321
        %v7909 = vunpack.c.l.b16 %v7322
        %v7910 = vunpack.c.l.b16 %v7323
        %v7911 = vunpack.c.h.b16 %v7323
        %v7912 = vunpack.c.l.b16 %v7324
        %v7913 = vunpack.c.h.b16 %v7324
        %v7914 = vunpack.c.l.b16 %v7325
        %v7915 = vunpack.c.h.b16 %v7325
        %v7916 = vunpack.c.l.b16 %v7326
        %v7917 = vunpack.c.h.b16 %v7326
        %v7918 = vunpack.c.l.b16 %v7327
        %v7919 = vunpack.c.l.b16 %v7328
        %v7920 = vunpack.c.h.b16 %v7328
        %v7921 = vunpack.c.l.b16 %v7329
        %v7922 = vunpack.c.h.b16 %v7329
        %v7923 = vunpack.c.l.b16 %v7330
        %v7924 = vunpack.c.h.b16 %v7330
        %v7925 = vunpack.c.l.b16 %v7331
        %v7926 = vunpack.c.h.b16 %v7331
        %v7927 = vunpack.c.l.b16 %v7332
        %v7928 = vunpack.c.l.b16 %v7333
        %v7929 = vunpack.c.h.b16 %v7333
        %v7930 = vunpack.c.l.b16 %v7334
        %v7931 = vunpack.c.h.b16 %v7334
        %v7932 = vunpack.c.l.b16 %v7335
        %v7933 = vunpack.c.h.b16 %v7335
        %v7934 = vunpack.c.l.b16 %v7336
        %v7935 = vunpack.c.h.b16 %v7336
        %v7936 = vunpack.c.l.b16 %v7337
        %v7937 = vpack.c.b16 %v7658, %v7649
        %v7938 = vpack.c.b16 %v7659, %v7650
        %v7939 = vpack.c.b16 %v7660, %v7651
        %v7940 = vpack.c.b16 %v7661, %v7652
        %v7941 = vpack.c.b16 %v7662, %v7653
        %v7942 = vpack.c.b16 %v7663, %v7654
        %v7943 = vpack.c.b16 %v7664, %v7655
        %v7944 = vpack.c.b16 %v7665, %v7656
        %v7945 = vpack.c.b16 %v7666, %v7657
        %v7946 = vpack.c.b16 %v7676, %v7667
        %v7947 = vpack.c.b16 %v7677, %v7668
        %v7948 = vpack.c.b16 %v7678, %v7669
        %v7949 = vpack.c.b16 %v7679, %v7670
        %v7950 = vpack.c.b16 %v7680, %v7671
        %v7951 = vpack.c.b16 %v7681, %v7672
        %v7952 = vpack.c.b16 %v7682, %v7673
        %v7953 = vpack.c.b16 %v7683, %v7674
        %v7954 = vpack.c.b16 %v7684, %v7675
        %v7955 = vpack.c.b16 %v7694, %v7685
        %v7956 = vpack.c.b16 %v7695, %v7686
        %v7957 = vpack.c.b16 %v7696, %v7687
        %v7958 = vpack.c.b16 %v7697, %v7688
        %v7959 = vpack.c.b16 %v7698, %v7689
        %v7960 = vpack.c.b16 %v7699, %v7690
        %v7961 = vpack.c.b16 %v7700, %v7691
        %v7962 = vpack.c.b16 %v7701, %v7692
        %v7963 = vpack.c.b16 %v7702, %v7693
        %v7964 = vpack.c.b16 %v7712, %v7703
        %v7965 = vpack.c.b16 %v7713, %v7704
        %v7966 = vpack.c.b16 %v7714, %v7705
        %v7967 = vpack.c.b16 %v7715, %v7706
        %v7968 = vpack.c.b16 %v7716, %v7707
        %v7969 = vpack.c.b16 %v7717, %v7708
        %v7970 = vpack.c.b16 %v7718, %v7709
        %v7971 = vpack.c.b16 %v7719, %v7710
        %v7972 = vpack.c.b16 %v7720, %v7711
        %v7973 = vpack.c.b16 %v7730, %v7721
        %v7974 = vpack.c.b16 %v7731, %v7722
        %v7975 = vpack.c.b16 %v7732, %v7723
        %v7976 = vpack.c.b16 %v7733, %v7724
        %v7977 = vpack.c.b16 %v7734, %v7725
        %v7978 = vpack.c.b16 %v7735, %v7726
        %v7979 = vpack.c.b16 %v7736, %v7727
        %v7980 = vpack.c.b16 %v7737, %v7728
        %v7981 = vpack.c.b16 %v7738, %v7729
        %v7982 = vpack.c.b16 %v7748, %v7739
        %v7983 = vpack.c.b16 %v7749, %v7740
        %v7984 = vpack.c.b16 %v7750, %v7741
        %v7985 = vpack.c.b16 %v7751, %v7742
        %v7986 = vpack.c.b16 %v7752, %v7743
        %v7987 = vpack.c.b16 %v7753, %v7744
        %v7988 = vpack.c.b16 %v7754, %v7745
        %v7989 = vpack.c.b16 %v7755, %v7746
        %v7990 = vpack.c.b16 %v7756, %v7747
        %v7991 = vpack.c.b16 %v7766, %v7757
        %v7992 = vpack.c.b16 %v7767, %v7758
        %v7993 = vpack.c.b16 %v7768, %v7759
        %v7994 = vpack.c.b16 %v7769, %v7760
        %v7995 = vpack.c.b16 %v7770, %v7761
        %v7996 = vpack.c.b16 %v7771, %v7762
        %v7997 = vpack.c.b16 %v7772, %v7763
        %v7998 = vpack.c.b16 %v7773, %v7764
        %v7999 = vpack.c.b16 %v7774, %v7765
        %v8000 = vpack.c.b16 %v7784, %v7775
        %v8001 = vpack.c.b16 %v7785, %v7776
        %v8002 = vpack.c.b16 %v7786, %v7777
        %v8003 = vpack.c.b16 %v7787, %v7778
        %v8004 = vpack.c.b16 %v7788, %v7779
        %v8005 = vpack.c.b16 %v7789, %v7780
        %v8006 = vpack.c.b16 %v7790, %v7781
        %v8007 = vpack.c.b16 %v7791, %v7782
        %v8008 = vpack.c.b16 %v7792, %v7783
        %v8009 = vpack.c.b16 %v7802, %v7793
        %v8010 = vpack.c.b16 %v7803, %v7794
        %v8011 = vpack.c.b16 %v7804, %v7795
        %v8012 = vpack.c.b16 %v7805, %v7796
        %v8013 = vpack.c.b16 %v7806, %v7797
        %v8014 = vpack.c.b16 %v7807, %v7798
        %v8015 = vpack.c.b16 %v7808, %v7799
        %v8016 = vpack.c.b16 %v7809, %v7800
        %v8017 = vpack.c.b16 %v7810, %v7801
        %v8018 = vpack.c.b16 %v7820, %v7811
        %v8019 = vpack.c.b16 %v7821, %v7812
        %v8020 = vpack.c.b16 %v7822, %v7813
        %v8021 = vpack.c.b16 %v7823, %v7814
        %v8022 = vpack.c.b16 %v7824, %v7815
        %v8023 = vpack.c.b16 %v7825, %v7816
        %v8024 = vpack.c.b16 %v7826, %v7817
        %v8025 = vpack.c.b16 %v7827, %v7818
        %v8026 = vpack.c.b16 %v7828, %v7819
        %v8027 = vpack.c.b16 %v7838, %v7829
        %v8028 = vpack.c.b16 %v7839, %v7830
        %v8029 = vpack.c.b16 %v7840, %v7831
        %v8030 = vpack.c.b16 %v7841, %v7832
        %v8031 = vpack.c.b16 %v7842, %v7833
        %v8032 = vpack.c.b16 %v7843, %v7834
        %v8033 = vpack.c.b16 %v7844, %v7835
        %v8034 = vpack.c.b16 %v7845, %v7836
        %v8035 = vpack.c.b16 %v7846, %v7837
        %v8036 = vpack.c.b16 %v7856, %v7847
        %v8037 = vpack.c.b16 %v7857, %v7848
        %v8038 = vpack.c.b16 %v7858, %v7849
        %v8039 = vpack.c.b16 %v7859, %v7850
        %v8040 = vpack.c.b16 %v7860, %v7851
        %v8041 = vpack.c.b16 %v7861, %v7852
        %v8042 = vpack.c.b16 %v7862, %v7853
        %v8043 = vpack.c.b16 %v7863, %v7854
        %v8044 = vpack.c.b16 %v7864, %v7855
        %v8045 = vpack.c.b16 %v7874, %v7865
        %v8046 = vpack.c.b16 %v7875, %v7866
        %v8047 = vpack.c.b16 %v7876, %v7867
        %v8048 = vpack.c.b16 %v7877, %v7868
        %v8049 = vpack.c.b16 %v7878, %v7869
        %v8050 = vpack.c.b16 %v7879, %v7870
        %v8051 = vpack.c.b16 %v7880, %v7871
        %v8052 = vpack.c.b16 %v7881, %v7872
        %v8053 = vpack.c.b16 %v7882, %v7873
        %v8054 = vpack.c.b16 %v7892, %v7883
        %v8055 = vpack.c.b16 %v7893, %v7884
        %v8056 = vpack.c.b16 %v7894, %v7885
        %v8057 = vpack.c.b16 %v7895, %v7886
        %v8058 = vpack.c.b16 %v7896, %v7887
        %v8059 = vpack.c.b16 %v7897, %v7888
        %v8060 = vpack.c.b16 %v7898, %v7889
        %v8061 = vpack.c.b16 %v7899, %v7890
        %v8062 = vpack.c.b16 %v7900, %v7891
        %v8063 = vpack.c.b16 %v7910, %v7901
        %v8064 = vpack.c.b16 %v7911, %v7902
        %v8065 = vpack.c.b16 %v7912, %v7903
        %v8066 = vpack.c.b16 %v7913, %v7904
        %v8067 = vpack.c.b16 %v7914, %v7905
        %v8068 = vpack.c.b16 %v7915, %v7906
        %v8069 = vpack.c.b16 %v7916, %v7907
        %v8070 = vpack.c.b16 %v7917, %v7908
        %v8071 = vpack.c.b16 %v7918, %v7909
        %v8072 = vpack.c.b16 %v7928, %v7919
        %v8073 = vpack.c.b16 %v7929, %v7920
        %v8074 = vpack.c.b16 %v7930, %v7921
        %v8075 = vpack.c.b16 %v7931, %v7922
        %v8076 = vpack.c.b16 %v7932, %v7923
        %v8077 = vpack.c.b16 %v7933, %v7924
        %v8078 = vpack.c.b16 %v7934, %v7925
        %v8079 = vpack.c.b16 %v7935, %v7926
        %v8080 = vpack.c.b16 %v7936, %v7927
        %v8369 = vunpack.c.l.b16 %v7338
        %v8370 = vunpack.c.l.b16 %v7339
        %v8371 = vunpack.c.l.b16 %v7340
        %v8372 = vunpack.c.l.b16 %v7341
        %v8373 = vunpack.c.l.b16 %v7342
        %v8374 = vunpack.c.l.b16 %v7343
        %v8375 = vunpack.c.l.b16 %v7344
        %v8376 = vunpack.c.l.b16 %v7345
        %v8377 = vunpack.c.l.b16 %v7346
        %v8378 = vunpack.c.l.b16 %v7347
        %v8379 = vunpack.c.l.b16 %v7348
        %v8380 = vunpack.c.l.b16 %v7349
        %v8381 = vunpack.c.l.b16 %v7350
        %v8382 = vunpack.c.l.b16 %v7351
        %v8383 = vunpack.c.l.b16 %v7352
        %v8384 = vunpack.c.l.b16 %v7353
        %v8385 = vunpack.c.l.b16 %v7354
        %v8386 = vunpack.c.l.b16 %v7355
        %v8387 = vunpack.c.l.b16 %v7356
        %v8388 = vunpack.c.l.b16 %v7357
        %v8389 = vunpack.c.l.b16 %v7358
        %v8390 = vunpack.c.l.b16 %v7359
        %v8391 = vunpack.c.l.b16 %v7360
        %v8392 = vunpack.c.l.b16 %v7361
        %v8393 = vunpack.c.l.b16 %v7362
        %v8394 = vunpack.c.l.b16 %v7363
        %v8395 = vunpack.c.l.b16 %v7364
        %v8396 = vunpack.c.l.b16 %v7365
        %v8397 = vunpack.c.l.b16 %v7366
        %v8398 = vunpack.c.l.b16 %v7367
        %v8399 = vunpack.c.l.b16 %v7368
        %v8400 = vunpack.c.l.b16 %v7369
        %v8401 = vunpack.c.l.b16 %v7370
        %v8402 = vunpack.c.l.b16 %v7371
        %v8403 = vunpack.c.l.b16 %v7372
        %v8404 = vunpack.c.l.b16 %v7373
        %v8405 = vunpack.c.l.b16 %v7374
        %v8406 = vunpack.c.l.b16 %v7375
        %v8407 = vunpack.c.l.b16 %v7376
        %v8408 = vunpack.c.l.b16 %v7377
        %v8409 = vunpack.c.l.b16 %v7378
        %v8410 = vunpack.c.l.b16 %v7379
        %v8411 = vunpack.c.l.b16 %v7380
        %v8412 = vunpack.c.l.b16 %v7381
        %v8413 = vunpack.c.l.b16 %v7382
        %v8414 = vunpack.c.l.b16 %v7383
        %v8415 = vunpack.c.l.b16 %v7384
        %v8416 = vunpack.c.l.b16 %v7385
        %v8417 = vunpack.c.l.b16 %v7386
        %v8418 = vunpack.c.l.b16 %v7387
        %v8419 = vunpack.c.l.b16 %v7388
        %v8420 = vunpack.c.l.b16 %v7389
        %v8421 = vunpack.c.l.b16 %v7390
        %v8422 = vunpack.c.l.b16 %v7391
        %v8423 = vunpack.c.l.b16 %v7392
        %v8424 = vunpack.c.l.b16 %v7393
        %v8425 = vunpack.c.l.b16 %v7394
        %v8426 = vunpack.c.l.b16 %v7395
        %v8427 = vunpack.c.l.b16 %v7396
        %v8428 = vunpack.c.l.b16 %v7397
        %v8429 = vunpack.c.l.b16 %v7398
        %v8430 = vunpack.c.l.b16 %v7399
        %v8431 = vunpack.c.l.b16 %v7400
        %v8432 = vunpack.c.l.b16 %v7401
        %v8433 = vunpack.c.l.b16 %v7402
        %v8434 = vunpack.c.l.b16 %v7403
        %v8435 = vunpack.c.l.b16 %v7404
        %v8436 = vunpack.c.l.b16 %v7405
        %v8437 = vunpack.c.l.b16 %v7406
        %v8438 = vunpack.c.l.b16 %v7407
        %v8439 = vunpack.c.l.b16 %v7408
        %v8440 = vunpack.c.l.b16 %v7409
        %v8441 = vunpack.c.l.b16 %v7410
        %v8442 = vunpack.c.l.b16 %v7411
        %v8443 = vunpack.c.l.b16 %v7412
        %v8444 = vunpack.c.l.b16 %v7413
        %v8445 = vunpack.c.l.b16 %v7414
        %v8446 = vunpack.c.l.b16 %v7415
        %v8447 = vunpack.c.l.b16 %v7416
        %v8448 = vunpack.c.l.b16 %v7417
        %v8449 = vunpack.c.l.b16 %v7418
        %v8450 = vunpack.c.l.b16 %v7419
        %v8451 = vunpack.c.l.b16 %v7420
        %v8452 = vunpack.c.l.b16 %v7421
        %v8453 = vunpack.c.l.b16 %v7422
        %v8454 = vunpack.c.l.b16 %v7423
        %v8455 = vunpack.c.l.b16 %v7424
        %v8456 = vunpack.c.l.b16 %v7425
        %v8457 = vunpack.c.l.b16 %v7426
        %v8458 = vunpack.c.l.b16 %v7427
        %v8459 = vunpack.c.l.b16 %v7428
        %v8460 = vunpack.c.l.b16 %v7429
        %v8461 = vunpack.c.l.b16 %v7430
        %v8462 = vunpack.c.l.b16 %v7431
        %v8463 = vunpack.c.l.b16 %v7432
        %v8464 = vunpack.c.l.b16 %v7433
        %v8465 = vunpack.c.l.b16 %v7434
        %v8466 = vunpack.c.l.b16 %v7435
        %v8467 = vunpack.c.l.b16 %v7436
        %v8468 = vunpack.c.l.b16 %v7437
        %v8469 = vunpack.c.l.b16 %v7438
        %v8470 = vunpack.c.l.b16 %v7439
        %v8471 = vunpack.c.l.b16 %v7440
        %v8472 = vunpack.c.l.b16 %v7441
        %v8473 = vunpack.c.l.b16 %v7442
        %v8474 = vunpack.c.l.b16 %v7443
        %v8475 = vunpack.c.l.b16 %v7444
        %v8476 = vunpack.c.l.b16 %v7445
        %v8477 = vunpack.c.l.b16 %v7446
        %v8478 = vunpack.c.l.b16 %v7447
        %v8479 = vunpack.c.l.b16 %v7448
        %v8480 = vunpack.c.l.b16 %v7449
        %v8481 = vunpack.c.l.b16 %v7450
        %v8482 = vunpack.c.l.b16 %v7451
        %v8483 = vunpack.c.l.b16 %v7452
        %v8484 = vunpack.c.l.b16 %v7453
        %v8485 = vunpack.c.l.b16 %v7454
        %v8486 = vunpack.c.l.b16 %v7455
        %v8487 = vunpack.c.l.b16 %v7456
        %v8488 = vunpack.c.l.b16 %v7457
        %v8489 = vunpack.c.l.b16 %v7458
        %v8490 = vunpack.c.l.b16 %v7459
        %v8491 = vunpack.c.l.b16 %v7460
        %v8492 = vunpack.c.l.b16 %v7461
        %v8493 = vunpack.c.l.b16 %v7462
        %v8494 = vunpack.c.l.b16 %v7463
        %v8495 = vunpack.c.l.b16 %v7464
        %v8496 = vunpack.c.l.b16 %v7465
        %v8497 = vunpack.c.l.b16 %v7466
        %v8498 = vunpack.c.l.b16 %v7467
        %v8499 = vunpack.c.l.b16 %v7468
        %v8500 = vunpack.c.l.b16 %v7469
        %v8501 = vunpack.c.l.b16 %v7470
        %v8502 = vunpack.c.l.b16 %v7471
        %v8503 = vunpack.c.l.b16 %v7472
        %v8504 = vunpack.c.l.b16 %v7473
        %v8505 = vunpack.c.l.b16 %v7474
        %v8506 = vunpack.c.l.b16 %v7475
        %v8507 = vunpack.c.l.b16 %v7476
        %v8508 = vunpack.c.l.b16 %v7477
        %v8509 = vunpack.c.l.b16 %v7478
        %v8510 = vunpack.c.l.b16 %v7479
        %v8511 = vunpack.c.l.b16 %v7480
        %v8512 = vunpack.c.l.b16 %v7481
        %v8513 = vpack.c.b16 %v8370, %v8369
        %v8514 = vpack.c.b16 %v8372, %v8371
        %v8515 = vpack.c.b16 %v8374, %v8373
        %v8516 = vpack.c.b16 %v8376, %v8375
        %v8517 = vpack.c.b16 %v8378, %v8377
        %v8518 = vpack.c.b16 %v8380, %v8379
        %v8519 = vpack.c.b16 %v8382, %v8381
        %v8520 = vpack.c.b16 %v8384, %v8383
        %v8521 = vpack.c.b16 %v8386, %v8385
        %v8522 = vpack.c.b16 %v8388, %v8387
        %v8523 = vpack.c.b16 %v8390, %v8389
        %v8524 = vpack.c.b16 %v8392, %v8391
        %v8525 = vpack.c.b16 %v8394, %v8393
        %v8526 = vpack.c.b16 %v8396, %v8395
        %v8527 = vpack.c.b16 %v8398, %v8397
        %v8528 = vpack.c.b16 %v8400, %v8399
        %v8529 = vpack.c.b16 %v8402, %v8401
        %v8530 = vpack.c.b16 %v8404, %v8403
        %v8531 = vpack.c.b16 %v8406, %v8405
        %v8532 = vpack.c.b16 %v8408, %v8407
        %v8533 = vpack.c.b16 %v8410, %v8409
        %v8534 = vpack.c.b16 %v8412, %v8411
        %v8535 = vpack.c.b16 %v8414, %v8413
        %v8536 = vpack.c.b16 %v8416, %v8415
        %v8537 = vpack.c.b16 %v8418, %v8417
        %v8538 = vpack.c.b16 %v8420, %v8419
        %v8539 = vpack.c.b16 %v8422, %v8421
        %v8540 = vpack.c.b16 %v8424, %v8423
        %v8541 = vpack.c.b16 %v8426, %v8425
        %v8542 = vpack.c.b16 %v8428, %v8427
        %v8543 = vpack.c.b16 %v8430, %v8429
        %v8544 = vpack.c.b16 %v8432, %v8431
        %v8545 = vpack.c.b16 %v8434, %v8433
        %v8546 = vpack.c.b16 %v8436, %v8435
        %v8547 = vpack.c.b16 %v8438, %v8437
        %v8548 = vpack.c.b16 %v8440, %v8439
        %v8549 = vpack.c.b16 %v8442, %v8441
        %v8550 = vpack.c.b16 %v8444, %v8443
        %v8551 = vpack.c.b16 %v8446, %v8445
        %v8552 = vpack.c.b16 %v8448, %v8447
        %v8553 = vpack.c.b16 %v8450, %v8449
        %v8554 = vpack.c.b16 %v8452, %v8451
        %v8555 = vpack.c.b16 %v8454, %v8453
        %v8556 = vpack.c.b16 %v8456, %v8455
        %v8557 = vpack.c.b16 %v8458, %v8457
        %v8558 = vpack.c.b16 %v8460, %v8459
        %v8559 = vpack.c.b16 %v8462, %v8461
        %v8560 = vpack.c.b16 %v8464, %v8463
        %v8561 = vpack.c.b16 %v8466, %v8465
        %v8562 = vpack.c.b16 %v8468, %v8467
        %v8563 = vpack.c.b16 %v8470, %v8469
        %v8564 = vpack.c.b16 %v8472, %v8471
        %v8565 = vpack.c.b16 %v8474, %v8473
        %v8566 = vpack.c.b16 %v8476, %v8475
        %v8567 = vpack.c.b16 %v8478, %v8477
        %v8568 = vpack.c.b16 %v8480, %v8479
        %v8569 = vpack.c.b16 %v8482, %v8481
        %v8570 = vpack.c.b16 %v8484, %v8483
        %v8571 = vpack.c.b16 %v8486, %v8485
        %v8572 = vpack.c.b16 %v8488, %v8487
        %v8573 = vpack.c.b16 %v8490, %v8489
        %v8574 = vpack.c.b16 %v8492, %v8491
        %v8575 = vpack.c.b16 %v8494, %v8493
        %v8576 = vpack.c.b16 %v8496, %v8495
        %v8577 = vpack.c.b16 %v8498, %v8497
        %v8578 = vpack.c.b16 %v8500, %v8499
        %v8579 = vpack.c.b16 %v8502, %v8501
        %v8580 = vpack.c.b16 %v8504, %v8503
        %v8581 = vpack.c.b16 %v8506, %v8505
        %v8582 = vpack.c.b16 %v8508, %v8507
        %v8583 = vpack.c.b16 %v8510, %v8509
        %v8584 = vpack.c.b16 %v8512, %v8511
        %8657 = vmatprep.subr.bf16.mxu0 0
        %8658 = vmatpush1.bf16.msra.mxu0 %v8520
        %8659 = vmatprep.subr.bf16.mxu0 0
        %8660 = vmatpush1.bf16.msra.mxu0 %v8519
        %8661 = vmatprep.subr.bf16.mxu0 0
        %8662 = vmatpush1.bf16.msra.mxu0 %v8518
        %8663 = vmatprep.subr.bf16.mxu0 0
        %8664 = vmatpush1.bf16.msra.mxu0 %v8517
        %8665 = vmatprep.subr.bf16.mxu0 0
        %8666 = vmatpush1.bf16.msra.mxu0 %v8516
        %8667 = vmatprep.subr.bf16.mxu0 0
        %8668 = vmatpush1.bf16.msra.mxu0 %v8515
        %8669 = vmatprep.subr.bf16.mxu0 0
        %8670 = vmatpush1.bf16.msra.mxu0 %v8514
        %8671 = vmatprep.subr.bf16.mxu0 0
        %8672 = vmatpush1.bf16.msra.mxu0 %v8513
        %8673 = vmatprep.subr.bf16.mxu0 0
        %8674 = vmatpush2.bf16.msra.mxu0 %v8528
        %8675 = vmatprep.subr.bf16.mxu0 0
        %8676 = vmatpush2.bf16.msra.mxu0 %v8527
        %8677 = vmatprep.subr.bf16.mxu0 0
        %8678 = vmatpush2.bf16.msra.mxu0 %v8526
        %8679 = vmatprep.subr.bf16.mxu0 0
        %8680 = vmatpush2.bf16.msra.mxu0 %v8525
        %8681 = vmatprep.subr.bf16.mxu0 0
        %8682 = vmatpush2.bf16.msra.mxu0 %v8524
        %8683 = vmatprep.subr.bf16.mxu0 0
        %8684 = vmatpush2.bf16.msra.mxu0 %v8523
        %8685 = vmatprep.subr.bf16.mxu0 0
        %8686 = vmatpush2.bf16.msra.mxu0 %v8522
        %8687 = vmatprep.subr.bf16.mxu0 0
        %8688 = vmatpush2.bf16.msra.mxu0 %v8521
        %8689 = vmatprep.mubr.bf16.mxu0 %v7938
        %8690 = vmatmul.mubr.bf16.gmra.mxu0 %v7937
        %v8691 = vpop.f32.mrf.mxu0
        %v8692 = vadd.f32 %v7487, %v8691
        %v8693 = vpop.f32.mrf.mxu0
        %v8694 = vpop.f32.mrf.mxu0
        %v8695 = vadd.f32 %v7487, %v8694
        %v8696 = vpop.f32.mrf.mxu0
        %8697 = vmatprep.mubr.bf16.mxu0 %v7947
        %8698 = vmatmul.mubr.bf16.gmra.mxu0 %v7946
        %v8699 = vpop.f32.mrf.mxu0
        %v8700 = vadd.f32 %v7487, %v8699
        %v8701 = vpop.f32.mrf.mxu0
        %v8702 = vpop.f32.mrf.mxu0
        %v8703 = vadd.f32 %v7487, %v8702
        %v8704 = vpop.f32.mrf.mxu0
        %8705 = vmatprep.mubr.bf16.mxu0 %v7956
        %8706 = vmatmul.mubr.bf16.gmra.mxu0 %v7955
        %v8707 = vpop.f32.mrf.mxu0
        %v8708 = vadd.f32 %v7487, %v8707
        %v8709 = vpop.f32.mrf.mxu0
        %v8710 = vpop.f32.mrf.mxu0
        %v8711 = vadd.f32 %v7487, %v8710
        %v8712 = vpop.f32.mrf.mxu0
        %8713 = vmatprep.mubr.bf16.mxu0 %v7965
        %8714 = vmatmul.mubr.bf16.gmra.mxu0 %v7964
        %v8715 = vpop.f32.mrf.mxu0
        %v8716 = vadd.f32 %v7487, %v8715
        %v8717 = vpop.f32.mrf.mxu0
        %v8718 = vpop.f32.mrf.mxu0
        %v8719 = vadd.f32 %v7487, %v8718
        %v8720 = vpop.f32.mrf.mxu0
        %8721 = vmatprep.mubr.bf16.mxu0 %v7974
        %8722 = vmatmul.mubr.bf16.gmra.mxu0 %v7973
        %v8723 = vpop.f32.mrf.mxu0
        %v8724 = vadd.f32 %v7487, %v8723
        %v8725 = vpop.f32.mrf.mxu0
        %v8726 = vpop.f32.mrf.mxu0
        %v8727 = vadd.f32 %v7487, %v8726
        %v8728 = vpop.f32.mrf.mxu0
        %8729 = vmatprep.mubr.bf16.mxu0 %v7983
        %8730 = vmatmul.mubr.bf16.gmra.mxu0 %v7982
        %v8731 = vpop.f32.mrf.mxu0
        %v8732 = vadd.f32 %v7487, %v8731
        %v8733 = vpop.f32.mrf.mxu0
        %v8734 = vpop.f32.mrf.mxu0
        %v8735 = vadd.f32 %v7487, %v8734
        %v8736 = vpop.f32.mrf.mxu0
        %8737 = vmatprep.mubr.bf16.mxu0 %v7992
        %8738 = vmatmul.mubr.bf16.gmra.mxu0 %v7991
        %v8739 = vpop.f32.mrf.mxu0
        %v8740 = vadd.f32 %v7487, %v8739
        %v8741 = vpop.f32.mrf.mxu0
        %v8742 = vpop.f32.mrf.mxu0
        %v8743 = vadd.f32 %v7487, %v8742
        %v8744 = vpop.f32.mrf.mxu0
        %8745 = vmatprep.mubr.bf16.mxu0 %v8001
        %8746 = vmatmul.mubr.bf16.gmra.mxu0 %v8000
        %v8747 = vpop.f32.mrf.mxu0
        %v8748 = vadd.f32 %v7487, %v8747
        %v8749 = vpop.f32.mrf.mxu0
        %v8750 = vpop.f32.mrf.mxu0
        %v8751 = vadd.f32 %v7487, %v8750
        %v8752 = vpop.f32.mrf.mxu0
        %8753 = vmatprep.mubr.bf16.mxu0 %v8010
        %8754 = vmatmul.mubr.bf16.gmra.mxu0 %v8009
        %v8755 = vpop.f32.mrf.mxu0
        %v8756 = vadd.f32 %v7487, %v8755
        %v8757 = vpop.f32.mrf.mxu0
        %v8758 = vpop.f32.mrf.mxu0
        %v8759 = vadd.f32 %v7487, %v8758
        %v8760 = vpop.f32.mrf.mxu0
        %8761 = vmatprep.mubr.bf16.mxu0 %v8019
        %8762 = vmatmul.mubr.bf16.gmra.mxu0 %v8018
        %v8763 = vpop.f32.mrf.mxu0
        %v8764 = vadd.f32 %v7487, %v8763
        %v8765 = vpop.f32.mrf.mxu0
        %v8766 = vpop.f32.mrf.mxu0
        %v8767 = vadd.f32 %v7487, %v8766
        %v8768 = vpop.f32.mrf.mxu0
        %8769 = vmatprep.mubr.bf16.mxu0 %v8028
        %8770 = vmatmul.mubr.bf16.gmra.mxu0 %v8027
        %v8771 = vpop.f32.mrf.mxu0
        %v8772 = vadd.f32 %v7487, %v8771
        %v8773 = vpop.f32.mrf.mxu0
        %v8774 = vpop.f32.mrf.mxu0
        %v8775 = vadd.f32 %v7487, %v8774
        %v8776 = vpop.f32.mrf.mxu0
        %8777 = vmatprep.mubr.bf16.mxu0 %v8037
        %8778 = vmatmul.mubr.bf16.gmra.mxu0 %v8036
        %v8779 = vpop.f32.mrf.mxu0
        %v8780 = vadd.f32 %v7487, %v8779
        %v8781 = vpop.f32.mrf.mxu0
        %v8782 = vpop.f32.mrf.mxu0
        %v8783 = vadd.f32 %v7487, %v8782
        %v8784 = vpop.f32.mrf.mxu0
        %8785 = vmatprep.mubr.bf16.mxu0 %v8046
        %8786 = vmatmul.mubr.bf16.gmra.mxu0 %v8045
        %v8787 = vpop.f32.mrf.mxu0
        %v8788 = vadd.f32 %v7487, %v8787
        %v8789 = vpop.f32.mrf.mxu0
        %v8790 = vpop.f32.mrf.mxu0
        %v8791 = vadd.f32 %v7487, %v8790
        %v8792 = vpop.f32.mrf.mxu0
        %8793 = vmatprep.mubr.bf16.mxu0 %v8055
        %8794 = vmatmul.mubr.bf16.gmra.mxu0 %v8054
        %v8795 = vpop.f32.mrf.mxu0
        %v8796 = vadd.f32 %v7487, %v8795
        %v8797 = vpop.f32.mrf.mxu0
        %v8798 = vpop.f32.mrf.mxu0
        %v8799 = vadd.f32 %v7487, %v8798
        %v8800 = vpop.f32.mrf.mxu0
        %8801 = vmatprep.mubr.bf16.mxu0 %v8064
        %8802 = vmatmul.mubr.bf16.gmra.mxu0 %v8063
        %v8803 = vpop.f32.mrf.mxu0
        %v8804 = vadd.f32 %v7487, %v8803
        %v8805 = vpop.f32.mrf.mxu0
        %v8806 = vpop.f32.mrf.mxu0
        %v8807 = vadd.f32 %v7487, %v8806
        %v8808 = vpop.f32.mrf.mxu0
        %8809 = vmatprep.mubr.bf16.mxu0 %v8073
        %8810 = vmatmul.mubr.bf16.gmra.mxu0 %v8072
        %v8811 = vpop.f32.mrf.mxu0
        %v8812 = vadd.f32 %v7487, %v8811
        %v8813 = vpop.f32.mrf.mxu0
        %v8814 = vpop.f32.mrf.mxu0
        %v8815 = vadd.f32 %v7487, %v8814
        %v8816 = vpop.f32.mrf.mxu0
        %8817 = vdwg.mxu0
        %8818 = vmatprep.subr.bf16.mxu0 0
        %8819 = vmatpush1.bf16.msra.mxu0 %v8536
        %8820 = vmatprep.subr.bf16.mxu0 0
        %8821 = vmatpush1.bf16.msra.mxu0 %v8535
        %8822 = vmatprep.subr.bf16.mxu0 0
        %8823 = vmatpush1.bf16.msra.mxu0 %v8534
        %8824 = vmatprep.subr.bf16.mxu0 0
        %8825 = vmatpush1.bf16.msra.mxu0 %v8533
        %8826 = vmatprep.subr.bf16.mxu0 0
        %8827 = vmatpush1.bf16.msra.mxu0 %v8532
        %8828 = vmatprep.subr.bf16.mxu0 0
        %8829 = vmatpush1.bf16.msra.mxu0 %v8531
        %8830 = vmatprep.subr.bf16.mxu0 0
        %8831 = vmatpush1.bf16.msra.mxu0 %v8530
        %8832 = vmatprep.subr.bf16.mxu0 0
        %8833 = vmatpush1.bf16.msra.mxu0 %v8529
        %8834 = vmatprep.subr.bf16.mxu0 0
        %8835 = vmatpush2.bf16.msra.mxu0 %v8544
        %8836 = vmatprep.subr.bf16.mxu0 0
        %8837 = vmatpush2.bf16.msra.mxu0 %v8543
        %8838 = vmatprep.subr.bf16.mxu0 0
        %8839 = vmatpush2.bf16.msra.mxu0 %v8542
        %8840 = vmatprep.subr.bf16.mxu0 0
        %8841 = vmatpush2.bf16.msra.mxu0 %v8541
        %8842 = vmatprep.subr.bf16.mxu0 0
        %8843 = vmatpush2.bf16.msra.mxu0 %v8540
        %8844 = vmatprep.subr.bf16.mxu0 0
        %8845 = vmatpush2.bf16.msra.mxu0 %v8539
        %8846 = vmatprep.subr.bf16.mxu0 0
        %8847 = vmatpush2.bf16.msra.mxu0 %v8538
        %8848 = vmatprep.subr.bf16.mxu0 0
        %8849 = vmatpush2.bf16.msra.mxu0 %v8537
        %8850 = vmatprep.mubr.bf16.mxu0 %v7940
        %8851 = vmatmul.mubr.bf16.gmra.mxu0 %v7939
        %v8852 = vpop.f32.mrf.mxu0
        %v8853 = vadd.f32 %v8692, %v8852
        %v8854 = vpop.f32.mrf.mxu0
        %v8855 = vpop.f32.mrf.mxu0
        %v8856 = vadd.f32 %v8695, %v8855
        %v8857 = vpop.f32.mrf.mxu0
        %8858 = vmatprep.mubr.bf16.mxu0 %v7949
        %8859 = vmatmul.mubr.bf16.gmra.mxu0 %v7948
        %v8860 = vpop.f32.mrf.mxu0
        %v8861 = vadd.f32 %v8700, %v8860
        %v8862 = vpop.f32.mrf.mxu0
        %v8863 = vpop.f32.mrf.mxu0
        %v8864 = vadd.f32 %v8703, %v8863
        %v8865 = vpop.f32.mrf.mxu0
        %8866 = vmatprep.mubr.bf16.mxu0 %v7958
        %8867 = vmatmul.mubr.bf16.gmra.mxu0 %v7957
        %v8868 = vpop.f32.mrf.mxu0
        %v8869 = vadd.f32 %v8708, %v8868
        %v8870 = vpop.f32.mrf.mxu0
        %v8871 = vpop.f32.mrf.mxu0
        %v8872 = vadd.f32 %v8711, %v8871
        %v8873 = vpop.f32.mrf.mxu0
        %8874 = vmatprep.mubr.bf16.mxu0 %v7967
        %8875 = vmatmul.mubr.bf16.gmra.mxu0 %v7966
        %v8876 = vpop.f32.mrf.mxu0
        %v8877 = vadd.f32 %v8716, %v8876
        %v8878 = vpop.f32.mrf.mxu0
        %v8879 = vpop.f32.mrf.mxu0
        %v8880 = vadd.f32 %v8719, %v8879
        %v8881 = vpop.f32.mrf.mxu0
        %8882 = vmatprep.mubr.bf16.mxu0 %v7976
        %8883 = vmatmul.mubr.bf16.gmra.mxu0 %v7975
        %v8884 = vpop.f32.mrf.mxu0
        %v8885 = vadd.f32 %v8724, %v8884
        %v8886 = vpop.f32.mrf.mxu0
        %v8887 = vpop.f32.mrf.mxu0
        %v8888 = vadd.f32 %v8727, %v8887
        %v8889 = vpop.f32.mrf.mxu0
        %8890 = vmatprep.mubr.bf16.mxu0 %v7985
        %8891 = vmatmul.mubr.bf16.gmra.mxu0 %v7984
        %v8892 = vpop.f32.mrf.mxu0
        %v8893 = vadd.f32 %v8732, %v8892
        %v8894 = vpop.f32.mrf.mxu0
        %v8895 = vpop.f32.mrf.mxu0
        %v8896 = vadd.f32 %v8735, %v8895
        %v8897 = vpop.f32.mrf.mxu0
        %8898 = vmatprep.mubr.bf16.mxu0 %v7994
        %8899 = vmatmul.mubr.bf16.gmra.mxu0 %v7993
        %v8900 = vpop.f32.mrf.mxu0
        %v8901 = vadd.f32 %v8740, %v8900
        %v8902 = vpop.f32.mrf.mxu0
        %v8903 = vpop.f32.mrf.mxu0
        %v8904 = vadd.f32 %v8743, %v8903
        %v8905 = vpop.f32.mrf.mxu0
        %8906 = vmatprep.mubr.bf16.mxu0 %v8003
        %8907 = vmatmul.mubr.bf16.gmra.mxu0 %v8002
        %v8908 = vpop.f32.mrf.mxu0
        %v8909 = vadd.f32 %v8748, %v8908
        %v8910 = vpop.f32.mrf.mxu0
        %v8911 = vpop.f32.mrf.mxu0
        %v8912 = vadd.f32 %v8751, %v8911
        %v8913 = vpop.f32.mrf.mxu0
        %8914 = vmatprep.mubr.bf16.mxu0 %v8012
        %8915 = vmatmul.mubr.bf16.gmra.mxu0 %v8011
        %v8916 = vpop.f32.mrf.mxu0
        %v8917 = vadd.f32 %v8756, %v8916
        %v8918 = vpop.f32.mrf.mxu0
        %v8919 = vpop.f32.mrf.mxu0
        %v8920 = vadd.f32 %v8759, %v8919
        %v8921 = vpop.f32.mrf.mxu0
        %8922 = vmatprep.mubr.bf16.mxu0 %v8021
        %8923 = vmatmul.mubr.bf16.gmra.mxu0 %v8020
        %v8924 = vpop.f32.mrf.mxu0
        %v8925 = vadd.f32 %v8764, %v8924
        %v8926 = vpop.f32.mrf.mxu0
        %v8927 = vpop.f32.mrf.mxu0
        %v8928 = vadd.f32 %v8767, %v8927
        %v8929 = vpop.f32.mrf.mxu0
        %8930 = vmatprep.mubr.bf16.mxu0 %v8030
        %8931 = vmatmul.mubr.bf16.gmra.mxu0 %v8029
        %v8932 = vpop.f32.mrf.mxu0
        %v8933 = vadd.f32 %v8772, %v8932
        %v8934 = vpop.f32.mrf.mxu0
        %v8935 = vpop.f32.mrf.mxu0
        %v8936 = vadd.f32 %v8775, %v8935
        %v8937 = vpop.f32.mrf.mxu0
        %8938 = vmatprep.mubr.bf16.mxu0 %v8039
        %8939 = vmatmul.mubr.bf16.gmra.mxu0 %v8038
        %v8940 = vpop.f32.mrf.mxu0
        %v8941 = vadd.f32 %v8780, %v8940
        %v8942 = vpop.f32.mrf.mxu0
        %v8943 = vpop.f32.mrf.mxu0
        %v8944 = vadd.f32 %v8783, %v8943
        %v8945 = vpop.f32.mrf.mxu0
        %8946 = vmatprep.mubr.bf16.mxu0 %v8048
        %8947 = vmatmul.mubr.bf16.gmra.mxu0 %v8047
        %v8948 = vpop.f32.mrf.mxu0
        %v8949 = vadd.f32 %v8788, %v8948
        %v8950 = vpop.f32.mrf.mxu0
        %v8951 = vpop.f32.mrf.mxu0
        %v8952 = vadd.f32 %v8791, %v8951
        %v8953 = vpop.f32.mrf.mxu0
        %8954 = vmatprep.mubr.bf16.mxu0 %v8057
        %8955 = vmatmul.mubr.bf16.gmra.mxu0 %v8056
        %v8956 = vpop.f32.mrf.mxu0
        %v8957 = vadd.f32 %v8796, %v8956
        %v8958 = vpop.f32.mrf.mxu0
        %v8959 = vpop.f32.mrf.mxu0
        %v8960 = vadd.f32 %v8799, %v8959
        %v8961 = vpop.f32.mrf.mxu0
        %8962 = vmatprep.mubr.bf16.mxu0 %v8066
        %8963 = vmatmul.mubr.bf16.gmra.mxu0 %v8065
        %v8964 = vpop.f32.mrf.mxu0
        %v8965 = vadd.f32 %v8804, %v8964
        %v8966 = vpop.f32.mrf.mxu0
        %v8967 = vpop.f32.mrf.mxu0
        %v8968 = vadd.f32 %v8807, %v8967
        %v8969 = vpop.f32.mrf.mxu0
        %8970 = vmatprep.mubr.bf16.mxu0 %v8075
        %8971 = vmatmul.mubr.bf16.gmra.mxu0 %v8074
        %v8972 = vpop.f32.mrf.mxu0
        %v8973 = vadd.f32 %v8812, %v8972
        %v8974 = vpop.f32.mrf.mxu0
        %v8975 = vpop.f32.mrf.mxu0
        %v8976 = vadd.f32 %v8815, %v8975
        %v8977 = vpop.f32.mrf.mxu0
        %8978 = vdwg.mxu0
        %8979 = vmatprep.subr.bf16.mxu0 0
        %8980 = vmatpush1.bf16.msra.mxu0 %v8552
        %8981 = vmatprep.subr.bf16.mxu0 0
        %8982 = vmatpush1.bf16.msra.mxu0 %v8551
        %8983 = vmatprep.subr.bf16.mxu0 0
        %8984 = vmatpush1.bf16.msra.mxu0 %v8550
        %8985 = vmatprep.subr.bf16.mxu0 0
        %8986 = vmatpush1.bf16.msra.mxu0 %v8549
        %8987 = vmatprep.subr.bf16.mxu0 0
        %8988 = vmatpush1.bf16.msra.mxu0 %v8548
        %8989 = vmatprep.subr.bf16.mxu0 0
        %8990 = vmatpush1.bf16.msra.mxu0 %v8547
        %8991 = vmatprep.subr.bf16.mxu0 0
        %8992 = vmatpush1.bf16.msra.mxu0 %v8546
        %8993 = vmatprep.subr.bf16.mxu0 0
        %8994 = vmatpush1.bf16.msra.mxu0 %v8545
        %8995 = vmatprep.subr.bf16.mxu0 0
        %8996 = vmatpush2.bf16.msra.mxu0 %v8560
        %8997 = vmatprep.subr.bf16.mxu0 0
        %8998 = vmatpush2.bf16.msra.mxu0 %v8559
        %8999 = vmatprep.subr.bf16.mxu0 0
        %9000 = vmatpush2.bf16.msra.mxu0 %v8558
        %9001 = vmatprep.subr.bf16.mxu0 0
        %9002 = vmatpush2.bf16.msra.mxu0 %v8557
        %9003 = vmatprep.subr.bf16.mxu0 0
        %9004 = vmatpush2.bf16.msra.mxu0 %v8556
        %9005 = vmatprep.subr.bf16.mxu0 0
        %9006 = vmatpush2.bf16.msra.mxu0 %v8555
        %9007 = vmatprep.subr.bf16.mxu0 0
        %9008 = vmatpush2.bf16.msra.mxu0 %v8554
        %9009 = vmatprep.subr.bf16.mxu0 0
        %9010 = vmatpush2.bf16.msra.mxu0 %v8553
        %9011 = vmatprep.mubr.bf16.mxu0 %v7942
        %9012 = vmatmul.mubr.bf16.gmra.mxu0 %v7941
        %v9013 = vpop.f32.mrf.mxu0
        %v9014 = vadd.f32 %v8853, %v9013
        %v9015 = vpop.f32.mrf.mxu0
        %v9016 = vpop.f32.mrf.mxu0
        %v9017 = vadd.f32 %v8856, %v9016
        %v9018 = vpop.f32.mrf.mxu0
        %9019 = vmatprep.mubr.bf16.mxu0 %v7951
        %9020 = vmatmul.mubr.bf16.gmra.mxu0 %v7950
        %v9021 = vpop.f32.mrf.mxu0
        %v9022 = vadd.f32 %v8861, %v9021
        %v9023 = vpop.f32.mrf.mxu0
        %v9024 = vpop.f32.mrf.mxu0
        %v9025 = vadd.f32 %v8864, %v9024
        %v9026 = vpop.f32.mrf.mxu0
        %9027 = vmatprep.mubr.bf16.mxu0 %v7960
        %9028 = vmatmul.mubr.bf16.gmra.mxu0 %v7959
        %v9029 = vpop.f32.mrf.mxu0
        %v9030 = vadd.f32 %v8869, %v9029
        %v9031 = vpop.f32.mrf.mxu0
        %v9032 = vpop.f32.mrf.mxu0
        %v9033 = vadd.f32 %v8872, %v9032
        %v9034 = vpop.f32.mrf.mxu0
        %9035 = vmatprep.mubr.bf16.mxu0 %v7969
        %9036 = vmatmul.mubr.bf16.gmra.mxu0 %v7968
        %v9037 = vpop.f32.mrf.mxu0
        %v9038 = vadd.f32 %v8877, %v9037
        %v9039 = vpop.f32.mrf.mxu0
        %v9040 = vpop.f32.mrf.mxu0
        %v9041 = vadd.f32 %v8880, %v9040
        %v9042 = vpop.f32.mrf.mxu0
        %9043 = vmatprep.mubr.bf16.mxu0 %v7978
        %9044 = vmatmul.mubr.bf16.gmra.mxu0 %v7977
        %v9045 = vpop.f32.mrf.mxu0
        %v9046 = vadd.f32 %v8885, %v9045
        %v9047 = vpop.f32.mrf.mxu0
        %v9048 = vpop.f32.mrf.mxu0
        %v9049 = vadd.f32 %v8888, %v9048
        %v9050 = vpop.f32.mrf.mxu0
        %9051 = vmatprep.mubr.bf16.mxu0 %v7987
        %9052 = vmatmul.mubr.bf16.gmra.mxu0 %v7986
        %v9053 = vpop.f32.mrf.mxu0
        %v9054 = vadd.f32 %v8893, %v9053
        %v9055 = vpop.f32.mrf.mxu0
        %v9056 = vpop.f32.mrf.mxu0
        %v9057 = vadd.f32 %v8896, %v9056
        %v9058 = vpop.f32.mrf.mxu0
        %9059 = vmatprep.mubr.bf16.mxu0 %v7996
        %9060 = vmatmul.mubr.bf16.gmra.mxu0 %v7995
        %v9061 = vpop.f32.mrf.mxu0
        %v9062 = vadd.f32 %v8901, %v9061
        %v9063 = vpop.f32.mrf.mxu0
        %v9064 = vpop.f32.mrf.mxu0
        %v9065 = vadd.f32 %v8904, %v9064
        %v9066 = vpop.f32.mrf.mxu0
        %9067 = vmatprep.mubr.bf16.mxu0 %v8005
        %9068 = vmatmul.mubr.bf16.gmra.mxu0 %v8004
        %v9069 = vpop.f32.mrf.mxu0
        %v9070 = vadd.f32 %v8909, %v9069
        %v9071 = vpop.f32.mrf.mxu0
        %v9072 = vpop.f32.mrf.mxu0
        %v9073 = vadd.f32 %v8912, %v9072
        %v9074 = vpop.f32.mrf.mxu0
        %9075 = vmatprep.mubr.bf16.mxu0 %v8014
        %9076 = vmatmul.mubr.bf16.gmra.mxu0 %v8013
        %v9077 = vpop.f32.mrf.mxu0
        %v9078 = vadd.f32 %v8917, %v9077
        %v9079 = vpop.f32.mrf.mxu0
        %v9080 = vpop.f32.mrf.mxu0
        %v9081 = vadd.f32 %v8920, %v9080
        %v9082 = vpop.f32.mrf.mxu0
        %9083 = vmatprep.mubr.bf16.mxu0 %v8023
        %9084 = vmatmul.mubr.bf16.gmra.mxu0 %v8022
        %v9085 = vpop.f32.mrf.mxu0
        %v9086 = vadd.f32 %v8925, %v9085
        %v9087 = vpop.f32.mrf.mxu0
        %v9088 = vpop.f32.mrf.mxu0
        %v9089 = vadd.f32 %v8928, %v9088
        %v9090 = vpop.f32.mrf.mxu0
        %9091 = vmatprep.mubr.bf16.mxu0 %v8032
        %9092 = vmatmul.mubr.bf16.gmra.mxu0 %v8031
        %v9093 = vpop.f32.mrf.mxu0
        %v9094 = vadd.f32 %v8933, %v9093
        %v9095 = vpop.f32.mrf.mxu0
        %v9096 = vpop.f32.mrf.mxu0
        %v9097 = vadd.f32 %v8936, %v9096
        %v9098 = vpop.f32.mrf.mxu0
        %9099 = vmatprep.mubr.bf16.mxu0 %v8041
        %9100 = vmatmul.mubr.bf16.gmra.mxu0 %v8040
        %v9101 = vpop.f32.mrf.mxu0
        %v9102 = vadd.f32 %v8941, %v9101
        %v9103 = vpop.f32.mrf.mxu0
        %v9104 = vpop.f32.mrf.mxu0
        %v9105 = vadd.f32 %v8944, %v9104
        %v9106 = vpop.f32.mrf.mxu0
        %9107 = vmatprep.mubr.bf16.mxu0 %v8050
        %9108 = vmatmul.mubr.bf16.gmra.mxu0 %v8049
        %v9109 = vpop.f32.mrf.mxu0
        %v9110 = vadd.f32 %v8949, %v9109
        %v9111 = vpop.f32.mrf.mxu0
        %v9112 = vpop.f32.mrf.mxu0
        %v9113 = vadd.f32 %v8952, %v9112
        %v9114 = vpop.f32.mrf.mxu0
        %9115 = vmatprep.mubr.bf16.mxu0 %v8059
        %9116 = vmatmul.mubr.bf16.gmra.mxu0 %v8058
        %v9117 = vpop.f32.mrf.mxu0
        %v9118 = vadd.f32 %v8957, %v9117
        %v9119 = vpop.f32.mrf.mxu0
        %v9120 = vpop.f32.mrf.mxu0
        %v9121 = vadd.f32 %v8960, %v9120
        %v9122 = vpop.f32.mrf.mxu0
        %9123 = vmatprep.mubr.bf16.mxu0 %v8068
        %9124 = vmatmul.mubr.bf16.gmra.mxu0 %v8067
        %v9125 = vpop.f32.mrf.mxu0
        %v9126 = vadd.f32 %v8965, %v9125
        %v9127 = vpop.f32.mrf.mxu0
        %v9128 = vpop.f32.mrf.mxu0
        %v9129 = vadd.f32 %v8968, %v9128
        %v9130 = vpop.f32.mrf.mxu0
        %9131 = vmatprep.mubr.bf16.mxu0 %v8077
        %9132 = vmatmul.mubr.bf16.gmra.mxu0 %v8076
        %v9133 = vpop.f32.mrf.mxu0
        %v9134 = vadd.f32 %v8973, %v9133
        %v9135 = vpop.f32.mrf.mxu0
        %v9136 = vpop.f32.mrf.mxu0
        %v9137 = vadd.f32 %v8976, %v9136
        %v9138 = vpop.f32.mrf.mxu0
        %9139 = vdwg.mxu0
        %9140 = vmatprep.subr.bf16.mxu0 0
        %9141 = vmatpush1.bf16.msra.mxu0 %v8568
        %9142 = vmatprep.subr.bf16.mxu0 0
        %9143 = vmatpush1.bf16.msra.mxu0 %v8567
        %9144 = vmatprep.subr.bf16.mxu0 0
        %9145 = vmatpush1.bf16.msra.mxu0 %v8566
        %9146 = vmatprep.subr.bf16.mxu0 0
        %9147 = vmatpush1.bf16.msra.mxu0 %v8565
        %9148 = vmatprep.subr.bf16.mxu0 0
        %9149 = vmatpush1.bf16.msra.mxu0 %v8564
        %9150 = vmatprep.subr.bf16.mxu0 0
        %9151 = vmatpush1.bf16.msra.mxu0 %v8563
        %9152 = vmatprep.subr.bf16.mxu0 0
        %9153 = vmatpush1.bf16.msra.mxu0 %v8562
        %9154 = vmatprep.subr.bf16.mxu0 0
        %9155 = vmatpush1.bf16.msra.mxu0 %v8561
        %9156 = vmatprep.subr.bf16.mxu0 0
        %9157 = vmatpush2.bf16.msra.mxu0 %v8576
        %9158 = vmatprep.subr.bf16.mxu0 0
        %9159 = vmatpush2.bf16.msra.mxu0 %v8575
        %9160 = vmatprep.subr.bf16.mxu0 0
        %9161 = vmatpush2.bf16.msra.mxu0 %v8574
        %9162 = vmatprep.subr.bf16.mxu0 0
        %9163 = vmatpush2.bf16.msra.mxu0 %v8573
        %9164 = vmatprep.subr.bf16.mxu0 0
        %9165 = vmatpush2.bf16.msra.mxu0 %v8572
        %9166 = vmatprep.subr.bf16.mxu0 0
        %9167 = vmatpush2.bf16.msra.mxu0 %v8571
        %9168 = vmatprep.subr.bf16.mxu0 0
        %9169 = vmatpush2.bf16.msra.mxu0 %v8570
        %9170 = vmatprep.subr.bf16.mxu0 0
        %9171 = vmatpush2.bf16.msra.mxu0 %v8569
        %9172 = vmatprep.mubr.bf16.mxu0 %v7944
        %9173 = vmatmul.mubr.bf16.gmra.mxu0 %v7943
        %v9174 = vpop.f32.mrf.mxu0
        %v9175 = vadd.f32 %v9014, %v9174
        %v9176 = vpop.f32.mrf.mxu0
        %v9177 = vpop.f32.mrf.mxu0
        %v9178 = vadd.f32 %v9017, %v9177
        %v9179 = vpop.f32.mrf.mxu0
        %9180 = vmatprep.mubr.bf16.mxu0 %v7953
        %9181 = vmatmul.mubr.bf16.gmra.mxu0 %v7952
        %v9182 = vpop.f32.mrf.mxu0
        %v9183 = vadd.f32 %v9022, %v9182
        %v9184 = vpop.f32.mrf.mxu0
        %v9185 = vpop.f32.mrf.mxu0
        %v9186 = vadd.f32 %v9025, %v9185
        %v9187 = vpop.f32.mrf.mxu0
        %9188 = vmatprep.mubr.bf16.mxu0 %v7962
        %9189 = vmatmul.mubr.bf16.gmra.mxu0 %v7961
        %v9190 = vpop.f32.mrf.mxu0
        %v9191 = vadd.f32 %v9030, %v9190
        %v9192 = vpop.f32.mrf.mxu0
        %v9193 = vpop.f32.mrf.mxu0
        %v9194 = vadd.f32 %v9033, %v9193
        %v9195 = vpop.f32.mrf.mxu0
        %9196 = vmatprep.mubr.bf16.mxu0 %v7971
        %9197 = vmatmul.mubr.bf16.gmra.mxu0 %v7970
        %v9198 = vpop.f32.mrf.mxu0
        %v9199 = vadd.f32 %v9038, %v9198
        %v9200 = vpop.f32.mrf.mxu0
        %v9201 = vpop.f32.mrf.mxu0
        %v9202 = vadd.f32 %v9041, %v9201
        %v9203 = vpop.f32.mrf.mxu0
        %9204 = vmatprep.mubr.bf16.mxu0 %v7980
        %9205 = vmatmul.mubr.bf16.gmra.mxu0 %v7979
        %v9206 = vpop.f32.mrf.mxu0
        %v9207 = vadd.f32 %v9046, %v9206
        %v9208 = vpop.f32.mrf.mxu0
        %v9209 = vpop.f32.mrf.mxu0
        %v9210 = vadd.f32 %v9049, %v9209
        %v9211 = vpop.f32.mrf.mxu0
        %9212 = vmatprep.mubr.bf16.mxu0 %v7989
        %9213 = vmatmul.mubr.bf16.gmra.mxu0 %v7988
        %v9214 = vpop.f32.mrf.mxu0
        %v9215 = vadd.f32 %v9054, %v9214
        %v9216 = vpop.f32.mrf.mxu0
        %v9217 = vpop.f32.mrf.mxu0
        %v9218 = vadd.f32 %v9057, %v9217
        %v9219 = vpop.f32.mrf.mxu0
        %9220 = vmatprep.mubr.bf16.mxu0 %v7998
        %9221 = vmatmul.mubr.bf16.gmra.mxu0 %v7997
        %v9222 = vpop.f32.mrf.mxu0
        %v9223 = vadd.f32 %v9062, %v9222
        %v9224 = vpop.f32.mrf.mxu0
        %v9225 = vpop.f32.mrf.mxu0
        %v9226 = vadd.f32 %v9065, %v9225
        %v9227 = vpop.f32.mrf.mxu0
        %9228 = vmatprep.mubr.bf16.mxu0 %v8007
        %9229 = vmatmul.mubr.bf16.gmra.mxu0 %v8006
        %v9230 = vpop.f32.mrf.mxu0
        %v9231 = vadd.f32 %v9070, %v9230
        %v9232 = vpop.f32.mrf.mxu0
        %v9233 = vpop.f32.mrf.mxu0
        %v9234 = vadd.f32 %v9073, %v9233
        %v9235 = vpop.f32.mrf.mxu0
        %9236 = vmatprep.mubr.bf16.mxu0 %v8016
        %9237 = vmatmul.mubr.bf16.gmra.mxu0 %v8015
        %v9238 = vpop.f32.mrf.mxu0
        %v9239 = vadd.f32 %v9078, %v9238
        %v9240 = vpop.f32.mrf.mxu0
        %v9241 = vpop.f32.mrf.mxu0
        %v9242 = vadd.f32 %v9081, %v9241
        %v9243 = vpop.f32.mrf.mxu0
        %9244 = vmatprep.mubr.bf16.mxu0 %v8025
        %9245 = vmatmul.mubr.bf16.gmra.mxu0 %v8024
        %v9246 = vpop.f32.mrf.mxu0
        %v9247 = vadd.f32 %v9086, %v9246
        %v9248 = vpop.f32.mrf.mxu0
        %v9249 = vpop.f32.mrf.mxu0
        %v9250 = vadd.f32 %v9089, %v9249
        %v9251 = vpop.f32.mrf.mxu0
        %9252 = vmatprep.mubr.bf16.mxu0 %v8034
        %9253 = vmatmul.mubr.bf16.gmra.mxu0 %v8033
        %v9254 = vpop.f32.mrf.mxu0
        %v9255 = vadd.f32 %v9094, %v9254
        %v9256 = vpop.f32.mrf.mxu0
        %v9257 = vpop.f32.mrf.mxu0
        %v9258 = vadd.f32 %v9097, %v9257
        %v9259 = vpop.f32.mrf.mxu0
        %9260 = vmatprep.mubr.bf16.mxu0 %v8043
        %9261 = vmatmul.mubr.bf16.gmra.mxu0 %v8042
        %v9262 = vpop.f32.mrf.mxu0
        %v9263 = vadd.f32 %v9102, %v9262
        %v9264 = vpop.f32.mrf.mxu0
        %v9265 = vpop.f32.mrf.mxu0
        %v9266 = vadd.f32 %v9105, %v9265
        %v9267 = vpop.f32.mrf.mxu0
        %9268 = vmatprep.mubr.bf16.mxu0 %v8052
        %9269 = vmatmul.mubr.bf16.gmra.mxu0 %v8051
        %v9270 = vpop.f32.mrf.mxu0
        %v9271 = vadd.f32 %v9110, %v9270
        %v9272 = vpop.f32.mrf.mxu0
        %v9273 = vpop.f32.mrf.mxu0
        %v9274 = vadd.f32 %v9113, %v9273
        %v9275 = vpop.f32.mrf.mxu0
        %9276 = vmatprep.mubr.bf16.mxu0 %v8061
        %9277 = vmatmul.mubr.bf16.gmra.mxu0 %v8060
        %v9278 = vpop.f32.mrf.mxu0
        %v9279 = vadd.f32 %v9118, %v9278
        %v9280 = vpop.f32.mrf.mxu0
        %v9281 = vpop.f32.mrf.mxu0
        %v9282 = vadd.f32 %v9121, %v9281
        %v9283 = vpop.f32.mrf.mxu0
        %9284 = vmatprep.mubr.bf16.mxu0 %v8070
        %9285 = vmatmul.mubr.bf16.gmra.mxu0 %v8069
        %v9286 = vpop.f32.mrf.mxu0
        %v9287 = vadd.f32 %v9126, %v9286
        %v9288 = vpop.f32.mrf.mxu0
        %v9289 = vpop.f32.mrf.mxu0
        %v9290 = vadd.f32 %v9129, %v9289
        %v9291 = vpop.f32.mrf.mxu0
        %9292 = vmatprep.mubr.bf16.mxu0 %v8079
        %9293 = vmatmul.mubr.bf16.gmra.mxu0 %v8078
        %v9294 = vpop.f32.mrf.mxu0
        %v9295 = vadd.f32 %v9134, %v9294
        %v9296 = vpop.f32.mrf.mxu0
        %v9297 = vpop.f32.mrf.mxu0
        %v9298 = vadd.f32 %v9137, %v9297
        %v9299 = vpop.f32.mrf.mxu0
        %9300 = vdwg.mxu0
        %9301 = vmatprep.subr.bf16.mxu0 0
        %9302 = vmatpush1.bf16.msra.mxu0 %v8584
        %9303 = vmatprep.subr.bf16.mxu0 0
        %9304 = vmatpush1.bf16.msra.mxu0 %v8583
        %9305 = vmatprep.subr.bf16.mxu0 0
        %9306 = vmatpush1.bf16.msra.mxu0 %v8582
        %9307 = vmatprep.subr.bf16.mxu0 0
        %9308 = vmatpush1.bf16.msra.mxu0 %v8581
        %9309 = vmatprep.subr.bf16.mxu0 0
        %9310 = vmatpush1.bf16.msra.mxu0 %v8580
        %9311 = vmatprep.subr.bf16.mxu0 0
        %9312 = vmatpush1.bf16.msra.mxu0 %v8579
        %9313 = vmatprep.subr.bf16.mxu0 0
        %9314 = vmatpush1.bf16.msra.mxu0 %v8578
        %9315 = vmatprep.subr.bf16.mxu0 0
        %9316 = vmatpush1.bf16.msra.mxu0 %v8577
        %9317 = vmatprep.subr.bf16.mxu0 0
        %9318 = vmatpush2.bf16.msra.mxu0 0
        %9319 = vmatprep.subr.bf16.mxu0 0
        %9320 = vmatpush2.bf16.msra.mxu0 0
        %9321 = vmatprep.subr.bf16.mxu0 0
        %9322 = vmatpush2.bf16.msra.mxu0 0
        %9323 = vmatprep.subr.bf16.mxu0 0
        %9324 = vmatpush2.bf16.msra.mxu0 0
        %9325 = vmatprep.subr.bf16.mxu0 0
        %9326 = vmatpush2.bf16.msra.mxu0 0
        %9327 = vmatprep.subr.bf16.mxu0 0
        %9328 = vmatpush2.bf16.msra.mxu0 0
        %9329 = vmatprep.subr.bf16.mxu0 0
        %9330 = vmatpush2.bf16.msra.mxu0 0
        %9331 = vmatprep.subr.bf16.mxu0 0
        %9332 = vmatpush2.bf16.msra.mxu0 0
        %9333 = vmatprep.mubr.bf16.mxu0 0
        %9334 = vmatmul.mubr.bf16.gmra.mxu0 %v7945
        %v9335 = vpop.f32.mrf.mxu0
        %v9336 = vadd.f32 %v9175, %v9335
        %v9337 = vpop.f32.mrf.mxu0
        %v9338 = vpop.f32.mrf.mxu0
        %v9339 = vadd.f32 %v9178, %v9338
        %v9340 = vpop.f32.mrf.mxu0
        %9341 = vmatprep.mubr.bf16.mxu0 0
        %9342 = vmatmul.mubr.bf16.gmra.mxu0 %v7954
        %v9343 = vpop.f32.mrf.mxu0
        %v9344 = vadd.f32 %v9183, %v9343
        %v9345 = vpop.f32.mrf.mxu0
        %v9346 = vpop.f32.mrf.mxu0
        %v9347 = vadd.f32 %v9186, %v9346
        %v9348 = vpop.f32.mrf.mxu0
        %9349 = vmatprep.mubr.bf16.mxu0 0
        %9350 = vmatmul.mubr.bf16.gmra.mxu0 %v7963
        %v9351 = vpop.f32.mrf.mxu0
        %v9352 = vadd.f32 %v9191, %v9351
        %v9353 = vpop.f32.mrf.mxu0
        %v9354 = vpop.f32.mrf.mxu0
        %v9355 = vadd.f32 %v9194, %v9354
        %v9356 = vpop.f32.mrf.mxu0
        %9357 = vmatprep.mubr.bf16.mxu0 0
        %9358 = vmatmul.mubr.bf16.gmra.mxu0 %v7972
        %v9359 = vpop.f32.mrf.mxu0
        %v9360 = vadd.f32 %v9199, %v9359
        %v9361 = vpop.f32.mrf.mxu0
        %v9362 = vpop.f32.mrf.mxu0
        %v9363 = vadd.f32 %v9202, %v9362
        %v9364 = vpop.f32.mrf.mxu0
        %9365 = vmatprep.mubr.bf16.mxu0 0
        %9366 = vmatmul.mubr.bf16.gmra.mxu0 %v7981
        %v9367 = vpop.f32.mrf.mxu0
        %v9368 = vadd.f32 %v9207, %v9367
        %v9369 = vpop.f32.mrf.mxu0
        %v9370 = vpop.f32.mrf.mxu0
        %v9371 = vadd.f32 %v9210, %v9370
        %v9372 = vpop.f32.mrf.mxu0
        %9373 = vmatprep.mubr.bf16.mxu0 0
        %9374 = vmatmul.mubr.bf16.gmra.mxu0 %v7990
        %v9375 = vpop.f32.mrf.mxu0
        %v9376 = vadd.f32 %v9215, %v9375
        %v9377 = vpop.f32.mrf.mxu0
        %v9378 = vpop.f32.mrf.mxu0
        %v9379 = vadd.f32 %v9218, %v9378
        %v9380 = vpop.f32.mrf.mxu0
        %9381 = vmatprep.mubr.bf16.mxu0 0
        %9382 = vmatmul.mubr.bf16.gmra.mxu0 %v7999
        %v9383 = vpop.f32.mrf.mxu0
        %v9384 = vadd.f32 %v9223, %v9383
        %v9385 = vpop.f32.mrf.mxu0
        %v9386 = vpop.f32.mrf.mxu0
        %v9387 = vadd.f32 %v9226, %v9386
        %v9388 = vpop.f32.mrf.mxu0
        %9389 = vmatprep.mubr.bf16.mxu0 0
        %9390 = vmatmul.mubr.bf16.gmra.mxu0 %v8008
        %v9391 = vpop.f32.mrf.mxu0
        %v9392 = vadd.f32 %v9231, %v9391
        %v9393 = vpop.f32.mrf.mxu0
        %v9394 = vpop.f32.mrf.mxu0
        %v9395 = vadd.f32 %v9234, %v9394
        %v9396 = vpop.f32.mrf.mxu0
        %9397 = vmatprep.mubr.bf16.mxu0 0
        %9398 = vmatmul.mubr.bf16.gmra.mxu0 %v8017
        %v9399 = vpop.f32.mrf.mxu0
        %v9400 = vadd.f32 %v9239, %v9399
        %v9401 = vpop.f32.mrf.mxu0
        %v9402 = vpop.f32.mrf.mxu0
        %v9403 = vadd.f32 %v9242, %v9402
        %v9404 = vpop.f32.mrf.mxu0
        %9405 = vmatprep.mubr.bf16.mxu0 0
        %9406 = vmatmul.mubr.bf16.gmra.mxu0 %v8026
        %v9407 = vpop.f32.mrf.mxu0
        %v9408 = vadd.f32 %v9247, %v9407
        %v9409 = vpop.f32.mrf.mxu0
        %v9410 = vpop.f32.mrf.mxu0
        %v9411 = vadd.f32 %v9250, %v9410
        %v9412 = vpop.f32.mrf.mxu0
        %9413 = vmatprep.mubr.bf16.mxu0 0
        %9414 = vmatmul.mubr.bf16.gmra.mxu0 %v8035
        %v9415 = vpop.f32.mrf.mxu0
        %v9416 = vadd.f32 %v9255, %v9415
        %v9417 = vpop.f32.mrf.mxu0
        %v9418 = vpop.f32.mrf.mxu0
        %v9419 = vadd.f32 %v9258, %v9418
        %v9420 = vpop.f32.mrf.mxu0
        %9421 = vmatprep.mubr.bf16.mxu0 0
        %9422 = vmatmul.mubr.bf16.gmra.mxu0 %v8044
        %v9423 = vpop.f32.mrf.mxu0
        %v9424 = vadd.f32 %v9263, %v9423
        %v9425 = vpop.f32.mrf.mxu0
        %v9426 = vpop.f32.mrf.mxu0
        %v9427 = vadd.f32 %v9266, %v9426
        %v9428 = vpop.f32.mrf.mxu0
        %9429 = vmatprep.mubr.bf16.mxu0 0
        %9430 = vmatmul.mubr.bf16.gmra.mxu0 %v8053
        %v9431 = vpop.f32.mrf.mxu0
        %v9432 = vadd.f32 %v9271, %v9431
        %v9433 = vpop.f32.mrf.mxu0
        %v9434 = vpop.f32.mrf.mxu0
        %v9435 = vadd.f32 %v9274, %v9434
        %v9436 = vpop.f32.mrf.mxu0
        %9437 = vmatprep.mubr.bf16.mxu0 0
        %9438 = vmatmul.mubr.bf16.gmra.mxu0 %v8062
        %v9439 = vpop.f32.mrf.mxu0
        %v9440 = vadd.f32 %v9279, %v9439
        %v9441 = vpop.f32.mrf.mxu0
        %v9442 = vpop.f32.mrf.mxu0
        %v9443 = vadd.f32 %v9282, %v9442
        %v9444 = vpop.f32.mrf.mxu0
        %9445 = vmatprep.mubr.bf16.mxu0 0
        %9446 = vmatmul.mubr.bf16.gmra.mxu0 %v8071
        %v9447 = vpop.f32.mrf.mxu0
        %v9448 = vadd.f32 %v9287, %v9447
        %v9449 = vpop.f32.mrf.mxu0
        %v9450 = vpop.f32.mrf.mxu0
        %v9451 = vadd.f32 %v9290, %v9450
        %v9452 = vpop.f32.mrf.mxu0
        %9453 = vmatprep.mubr.bf16.mxu0 0
        %9454 = vmatmul.mubr.bf16.gmra.mxu0 %v8080
        %v9455 = vpop.f32.mrf.mxu0
        %v9456 = vadd.f32 %v9295, %v9455
        %v9457 = vpop.f32.mrf.mxu0
        %v9458 = vpop.f32.mrf.mxu0
        %v9459 = vadd.f32 %v9298, %v9458
        %v9460 = vpop.f32.mrf.mxu0
        %9461 = vdwg.mxu0
        %v9462 = vadd.f32 %v9336, %v3639
        %v9463 = vadd.f32 %v9339, %v3643
        %v9464 = vadd.f32 %v9344, %v3649
        %v9465 = vadd.f32 %v9347, %v3653
        %v9466 = vadd.f32 %v9352, %v3659
        %v9467 = vadd.f32 %v9355, %v3663
        %v9468 = vadd.f32 %v9360, %v3669
        %v9469 = vadd.f32 %v9363, %v3673
        %v9470 = vadd.f32 %v9368, %v3679
        %v9471 = vadd.f32 %v9371, %v3683
        %v9472 = vadd.f32 %v9376, %v3689
        %v9473 = vadd.f32 %v9379, %v3693
        %v9474 = vadd.f32 %v9384, %v3699
        %v9475 = vadd.f32 %v9387, %v3703
        %v9476 = vadd.f32 %v9392, %v3709
        %v9477 = vadd.f32 %v9395, %v3713
        %v9478 = vadd.f32 %v9400, %v3719
        %v9479 = vadd.f32 %v9403, %v3723
        %v9480 = vadd.f32 %v9408, %v3729
        %v9481 = vadd.f32 %v9411, %v3733
        %v9482 = vadd.f32 %v9416, %v3739
        %v9483 = vadd.f32 %v9419, %v3743
        %v9484 = vadd.f32 %v9424, %v3749
        %v9485 = vadd.f32 %v9427, %v3753
        %v9486 = vadd.f32 %v9432, %v3759
        %v9487 = vadd.f32 %v9435, %v3763
        %v9488 = vadd.f32 %v9440, %v3769
        %v9489 = vadd.f32 %v9443, %v3773
        %v9490 = vadd.f32 %v9448, %v3779
        %v9491 = vadd.f32 %v9451, %v3783
        %v9492 = vadd.f32 %v9456, %v3789
        %v9493 = vadd.f32 %v9459, %v3793
        %v9494 = vmax.f32 %v9462, 0.0
        %v9495 = vmax.f32 %v9463, 0.0
        %v9496 = vmax.f32 %v9464, 0.0
        %v9497 = vmax.f32 %v9465, 0.0
        %v9498 = vmax.f32 %v9466, 0.0
        %v9499 = vmax.f32 %v9467, 0.0
        %v9500 = vmax.f32 %v9468, 0.0
        %v9501 = vmax.f32 %v9469, 0.0
        %v9502 = vmax.f32 %v9470, 0.0
        %v9503 = vmax.f32 %v9471, 0.0
        %v9504 = vmax.f32 %v9472, 0.0
        %v9505 = vmax.f32 %v9473, 0.0
        %v9506 = vmax.f32 %v9474, 0.0
        %v9507 = vmax.f32 %v9475, 0.0
        %v9508 = vmax.f32 %v9476, 0.0
        %v9509 = vmax.f32 %v9477, 0.0
        %v9510 = vmax.f32 %v9478, 0.0
        %v9511 = vmax.f32 %v9479, 0.0
        %v9512 = vmax.f32 %v9480, 0.0
        %v9513 = vmax.f32 %v9481, 0.0
        %v9514 = vmax.f32 %v9482, 0.0
        %v9515 = vmax.f32 %v9483, 0.0
        %v9516 = vmax.f32 %v9484, 0.0
        %v9517 = vmax.f32 %v9485, 0.0
        %v9518 = vmax.f32 %v9486, 0.0
        %v9519 = vmax.f32 %v9487, 0.0
        %v9520 = vmax.f32 %v9488, 0.0
        %v9521 = vmax.f32 %v9489, 0.0
        %v9522 = vmax.f32 %v9490, 0.0
        %v9523 = vmax.f32 %v9491, 0.0
        %v9524 = vmax.f32 %v9492, 0.0
        %v9525 = vmax.f32 %v9493, 0.0
        %v9526 = vpack.c.bf16 %v9495, %v9494
        %v9527 = vpack.c.bf16 %v9497, %v9496
        %v9528 = vpack.c.bf16 %v9499, %v9498
        %v9529 = vpack.c.bf16 %v9501, %v9500
        %v9530 = vpack.c.bf16 %v9503, %v9502
        %v9531 = vpack.c.bf16 %v9505, %v9504
        %v9532 = vpack.c.bf16 %v9507, %v9506
        %v9533 = vpack.c.bf16 %v9509, %v9508
        %v9534 = vpack.c.bf16 %v9511, %v9510
        %v9535 = vpack.c.bf16 %v9513, %v9512
        %v9536 = vpack.c.bf16 %v9515, %v9514
        %v9537 = vpack.c.bf16 %v9517, %v9516
        %v9538 = vpack.c.bf16 %v9519, %v9518
        %v9539 = vpack.c.bf16 %v9521, %v9520
        %v9540 = vpack.c.bf16 %v9523, %v9522
        %v9541 = vpack.c.bf16 %v9525, %v9524
        %v9558 = vunpack.c.l.b16 %v9526
        %v9559 = vunpack.c.h.b16 %v9526
        %v9560 = vunpack.c.l.b16 %v9527
        %v9561 = vunpack.c.h.b16 %v9527
        %v9562 = vunpack.c.l.b16 %v9528
        %v9563 = vunpack.c.h.b16 %v9528
        %v9564 = vunpack.c.l.b16 %v9529
        %v9565 = vunpack.c.h.b16 %v9529
        %v9566 = vunpack.c.l.b16 %v9530
        %v9567 = vunpack.c.h.b16 %v9530
        %v9568 = vunpack.c.l.b16 %v9531
        %v9569 = vunpack.c.h.b16 %v9531
        %v9570 = vunpack.c.l.b16 %v9532
        %v9571 = vunpack.c.h.b16 %v9532
        %v9572 = vunpack.c.l.b16 %v9533
        %v9573 = vunpack.c.h.b16 %v9533
        %v9574 = vunpack.c.l.b16 %v9534
        %v9575 = vunpack.c.h.b16 %v9534
        %v9576 = vunpack.c.l.b16 %v9535
        %v9577 = vunpack.c.h.b16 %v9535
        %v9578 = vunpack.c.l.b16 %v9536
        %v9579 = vunpack.c.h.b16 %v9536
        %v9580 = vunpack.c.l.b16 %v9537
        %v9581 = vunpack.c.h.b16 %v9537
        %v9582 = vunpack.c.l.b16 %v9538
        %v9583 = vunpack.c.h.b16 %v9538
        %v9584 = vunpack.c.l.b16 %v9539
        %v9585 = vunpack.c.h.b16 %v9539
        %v9586 = vunpack.c.l.b16 %v9540
        %v9587 = vunpack.c.h.b16 %v9540
        %v9588 = vunpack.c.l.b16 %v9541
        %v9589 = vunpack.c.h.b16 %v9541
        %v9590 = vpack.c.b16 %v9558, %v9558
        %v9591 = vpack.c.b16 %v9559, %v9559
        %v9592 = vpack.c.b16 %v9560, %v9560
        %v9593 = vpack.c.b16 %v9561, %v9561
        %v9594 = vpack.c.b16 %v9562, %v9562
        %v9595 = vpack.c.b16 %v9563, %v9563
        %v9596 = vpack.c.b16 %v9564, %v9564
        %v9597 = vpack.c.b16 %v9565, %v9565
        %v9598 = vpack.c.b16 %v9566, %v9566
        %v9599 = vpack.c.b16 %v9567, %v9567
        %v9600 = vpack.c.b16 %v9568, %v9568
        %v9601 = vpack.c.b16 %v9569, %v9569
        %v9602 = vpack.c.b16 %v9570, %v9570
        %v9603 = vpack.c.b16 %v9571, %v9571
        %v9604 = vpack.c.b16 %v9572, %v9572
        %v9605 = vpack.c.b16 %v9573, %v9573
        %v9606 = vpack.c.b16 %v9574, %v9574
        %v9607 = vpack.c.b16 %v9575, %v9575
        %v9608 = vpack.c.b16 %v9576, %v9576
        %v9609 = vpack.c.b16 %v9577, %v9577
        %v9610 = vpack.c.b16 %v9578, %v9578
        %v9611 = vpack.c.b16 %v9579, %v9579
        %v9612 = vpack.c.b16 %v9580, %v9580
        %v9613 = vpack.c.b16 %v9581, %v9581
        %v9614 = vpack.c.b16 %v9582, %v9582
        %v9615 = vpack.c.b16 %v9583, %v9583
        %v9616 = vpack.c.b16 %v9584, %v9584
        %v9617 = vpack.c.b16 %v9585, %v9585
        %v9618 = vpack.c.b16 %v9586, %v9586
        %v9619 = vpack.c.b16 %v9587, %v9587
        %v9620 = vpack.c.b16 %v9588, %v9588
        %v9621 = vpack.c.b16 %v9589, %v9589
        %9654 = vst [vmem:[%s232] sm:$0xf] %v9590
        %9655 = vst [vmem:[%s232 + $0x4] sm:$0xf] %v9591
        %9656 = vst [vmem:[%s232 + $0x8] sm:$0xf] %v9592
        %9657 = vst [vmem:[%s232 + $0xc] sm:$0xf] %v9593
        %9658 = vst [vmem:[%s232 + $0x10] sm:$0xf] %v9594
        %9659 = vst [vmem:[%s232 + $0x14] sm:$0xf] %v9595
        %9660 = vst [vmem:[%s232 + $0x18] sm:$0xf] %v9596
        %9661 = vst [vmem:[%s232 + $0x1c] sm:$0xf] %v9597
        %9662 = vst [vmem:[%s232 + $0x20] sm:$0xf] %v9598
        %9663 = vst [vmem:[%s232 + $0x24] sm:$0xf] %v9599
        %9664 = vst [vmem:[%s232 + $0x28] sm:$0xf] %v9600
        %9665 = vst [vmem:[%s232 + $0x2c] sm:$0xf] %v9601
        %9666 = vst [vmem:[%s232 + $0x30] sm:$0xf] %v9602
        %9667 = vst [vmem:[%s232 + $0x34] sm:$0xf] %v9603
        %9668 = vst [vmem:[%s232 + $0x38] sm:$0xf] %v9604
        %9669 = vst [vmem:[%s232 + $0x3c] sm:$0xf] %v9605
        %9670 = vst [vmem:[%s232 + $0x40] sm:$0xf] %v9606
        %9671 = vst [vmem:[%s232 + $0x44] sm:$0xf] %v9607
        %9672 = vst [vmem:[%s232 + $0x48] sm:$0xf] %v9608
        %9673 = vst [vmem:[%s232 + $0x4c] sm:$0xf] %v9609
        %9674 = vst [vmem:[%s232 + $0x50] sm:$0xf] %v9610
        %9675 = vst [vmem:[%s232 + $0x54] sm:$0xf] %v9611
        %9676 = vst [vmem:[%s232 + $0x58] sm:$0xf] %v9612
        %9677 = vst [vmem:[%s232 + $0x5c] sm:$0xf] %v9613
        %9678 = vst [vmem:[%s232 + $0x60] sm:$0xf] %v9614
        %9679 = vst [vmem:[%s232 + $0x64] sm:$0xf] %v9615
        %9680 = vst [vmem:[%s232 + $0x68] sm:$0xf] %v9616
        %9681 = vst [vmem:[%s232 + $0x6c] sm:$0xf] %v9617
        %9682 = vst [vmem:[%s232 + $0x70] sm:$0xf] %v9618
        %9683 = vst [vmem:[%s232 + $0x74] sm:$0xf] %v9619
        %9684 = vst [vmem:[%s232 + $0x78] sm:$0xf] %v9620
        %9685 = vst [vmem:[%s232 + $0x7c] sm:$0xf] %v9621
        %s9686 = sand.u32 %s138, 1
        %s9687 = scalar_lea.sflag [#allocation7], %s9686
        %s9688 = sand.u32 %s138, 1
        %s9689 = smul.addr %s9688, 128
        %s9690 = scalar_lea.vmem [#allocation8], %s9689
        // Predicated region
        $region45: #{tpu_custom_call.1} parent=39 // pred_check
          %p9691 = pneg %p148
        $region46: #{tpu_custom_call.1} parent=39 // pred_check_branch
          %9693 = sbr.rel (%p9691) target = $region48
        $region47: #{tpu_custom_call.1} parent=39 // pred_region
          %s9695 = ssub.s32 2048, 2048
          %9696 = vsyncadd %s9687, %s9695
          %s9697 = smul.addr %s20, 32
          %s9698 = smul.addr %s9697, 64
          %s9699 = scalar_lea.hbm %s5, %s9698
          %s9700 = sshll.u32 %s9690, 4
          %s9701 = int_to_ptr.vmem [resolvable:$true] %s9700
          %9706 = dma.vmem_to_hbm [thread:$0]  %s9701, 2048, %s9699, %s9687, 64, 64, 4
        $region48: #{tpu_custom_call.1} parent=39 // pred_fallthru
          _
      $region40: #{tpu_custom_call.1} parent=5 // pred_fallthru
        _
      %p9707 = scmp.le.s32.totalorder 2, %s15
      // Predicated region
      $region49: #{tpu_custom_call.1} parent=5 // pred_check
        %p9708 = pneg %p9707
      $region50: #{tpu_custom_call.1} parent=5 // pred_check_branch
        %9710 = sbr.rel (%p9708) target = $region52
      $region51: #{tpu_custom_call.1} parent=5 // pred_region
        %s9711 = ssub.s32 %s15, 2
        // Predicated region
        $region53: #{tpu_custom_call.1} parent=51 // pred_check
          %p9712 = pneg %p154
        $region54: #{tpu_custom_call.1} parent=51 // pred_check_branch
          %9714 = sbr.rel (%p9712) target = $region56
        $region55: #{tpu_custom_call.1} parent=51 // pred_region
          %s9715 = sand.u32 %s139, 1
          %s9716 = scalar_lea.sflag [#allocation7], %s9715
          %s9717 = sand.u32 %s139, 1
          %s9718 = smul.addr %s9717, 128
          %s9719 = scalar_lea.vmem [#allocation8], %s9718
          %9720 = dma.done %s9716, 2048
        $region56: #{tpu_custom_call.1} parent=51 // pred_fallthru
          _
      $region52: #{tpu_custom_call.1} parent=5 // pred_fallthru
        _
    $region6: #{tpu_custom_call.1} parent=1 // loop_footer
      %s19 = sadd.s32 1, %s15
    $region7: #{tpu_custom_call.1} parent=1 // loop_footer_branch
      %14 = sbr.rel target = $region3
    $region8: #{tpu_custom_call.1} parent=1 // loop_exit
      _
    %9721 = vsyncpa [#allocation6], 1
    %s9722 = scalar_lea.sflag [#allocation6], 1
    %9723 = vsyncpa %s9722, 1
    %9724 = vsyncpa [#allocation7], 1
    %s9725 = scalar_lea.sflag [#allocation7], 1
    %9726 = vsyncpa %s9725, 1

</llo_original>
